<compile_context>
chip_gen: v7x
topology: tpu7x:2x2x1
jax: 0.10.0
libtpu: 0.0.40
codegen_flags: <defaults>
</compile_context>

<pallas_src>
import functools

import jax
import jax.numpy as jnp
from jax.experimental import pallas as pl
from jax.experimental.pallas import tpu as pltpu

BN_EPS = 1e-5


def _vmem_spec():
    return pl.BlockSpec(memory_space=pltpu.MemorySpace.VMEM)


# ---------------------------------------------------------------------------
# Pallas kernels
# ---------------------------------------------------------------------------
def _conv_bn_relu_kernel(xps_ref, w_ref, g_ref, beta_ref, mask_ref, o_ref,
                         p_ref, *, k, Ho, Wo, Wq, B, Cin):
    """One Conv2d(k, stride=2) + BatchNorm2d(train) + ReLU block.

    xps_ref : (2, 2, Hq*Wq*B, Cin) bf16 phase-split, zero-padded input.
              Flat row index is (qh*Wq + qw)*B + b where the padded pixel is
              (h, w) = (2*qh + ph, 2*qw + pw).
    w_ref   : (k*k*Cin, Cout) bf16, rows ordered (kh, kw, cin).
    g_ref / beta_ref : (1, Cout) f32 BatchNorm gamma / beta.
    mask_ref: (M, 1) f32, 1.0 for valid rows (j < Wo), 0.0 for the stride
              "garbage" rows that pad each output row to width Wq.
    o_ref   : (M, Cout) bf16, rows ordered (i, j, b) with j in [0, Wq).
    p_ref   : (M, k*k*Cin) bf16 VMEM scratch (in-kernel im2col patch matrix).
    """
    M = Ho * Wq * B

    # In-VMEM im2col: each tap of the kernel window is one contiguous row-span
    # of the phase-split input, deposited into a lane-slice of the patch
    # matrix (columns ordered (kh, kw, cin) to match w_ref).
    for kh in range(k):
        for kw in range(k):
            t = kh * k + kw
            start = ((kh // 2) * Wq + (kw // 2)) * B
            p_ref[:, t * Cin:(t + 1) * Cin] = xps_ref[kh % 2, kw % 2,
                                                      pl.ds(start, M), :]

    # Single MXU matmul with K = k*k*Cin (bf16 operands, f32 accumulation).
    y = jnp.dot(p_ref[...], w_ref[...], preferred_element_type=jnp.float32)

    # Train-mode BatchNorm over the (B, Ho, Wo) rows (garbage rows masked),
    # folded into one scale/shift FMA.  The conv bias is omitted entirely:
    # the batch-mean subtraction cancels it exactly.
    mask = mask_ref[...]
    inv_n = 1.0 / float(B * Ho * Wo)
    mean = jnp.sum(y * mask, axis=0, keepdims=True) * inv_n
    d = y - mean
    var = jnp.sum(d * d * mask, axis=0, keepdims=True) * inv_n
    scale = g_ref[...] * jax.lax.rsqrt(var + BN_EPS)
    shift = beta_ref[...] - mean * scale
    o_ref[...] = jnp.maximum(y * scale + shift, 0.0).astype(o_ref.dtype)


def _tail_kernel(x4_ref, w4_ref, g4_ref, beta4_ref, w1_ref, b1_ref, w2_ref,
                 b2_ref, o_ref, p4_ref, a4_ref, h_ref, *, B):
    """Fused conv4(2x2, stride 2) + BN + ReLU -> flatten -> mlp1 -> mlp2.

    x4_ref : (2, 2, 2*2*B, 64) bf16 phase-split conv4 input (no padding).
    w4_ref : (256, 64) bf16, rows ordered (kh, kw, cin).
    w1_ref : (256, 128) bf16, rows ordered (s = h*2 + w, cin); output columns
             zero-padded 100 -> 128.
    w2_ref : (128, 128) bf16 ((100, 10) zero-padded).
    o_ref  : (B, 128) f32 lane-dense output; valid logits are [:, :10].
    """
    C4 = 64
    # conv4 im2col (4 taps) into VMEM scratch.
    for kh in range(2):
        for kw in range(2):
            t = kh * 2 + kw
            p4_ref[:, t * C4:(t + 1) * C4] = x4_ref[kh, kw, :, :]
    y4 = jnp.dot(p4_ref[...], w4_ref[...], preferred_element_type=jnp.float32)

    # Train-mode BN (no garbage rows here: Wq == Wo == 2) + ReLU.
    mean = jnp.mean(y4, axis=0, keepdims=True)
    d = y4 - mean
    var = jnp.mean(d * d, axis=0, keepdims=True)
    scale = g4_ref[...] * jax.lax.rsqrt(var + BN_EPS)
    shift = beta4_ref[...] - mean * scale
    a4_ref[...] = jnp.maximum(y4 * scale + shift, 0.0).astype(a4_ref.dtype)

    # Flatten to torch's (c, h, w) order: rows of a4 are (s = h*2 + w, b), so
    # lane block s of h_ref holds the 64 channels of spatial position s.
    for s in range(4):
        h_ref[:, s * C4:(s + 1) * C4] = a4_ref[s * B:(s + 1) * B, :]

    h1 = jnp.dot(h_ref[...], w1_ref[...], preferred_element_type=jnp.float32)
    h1 = h1 + b1_ref[...]                      # mlp1 (no activation, as in torch)
    out = jnp.dot(h1.astype(jnp.bfloat16), w2_ref[...],
                  preferred_element_type=jnp.float32) + b2_ref[...]
    o_ref[...] = out


# ---------------------------------------------------------------------------
# Wrapper glue (cheap XLA reshapes / pads only; no im2col blow-up, no
# activation relayouts)
# ---------------------------------------------------------------------------
def _phase_split(act, k, pad):
    """(H, W, B, C) -> ((2, 2, Hq*Wq*B, C) bf16, Ho, Wo, Wq).

    Zero-pads the spatial dims and splits them into (block, phase) pairs so
    that every tap of a stride-2 kxk window becomes a contiguous row-span of
    the flattened (qh, qw, b) index inside the kernel.
    """
    H, W, B, C = act.shape
    Ho = (H + 2 * pad - k) // 2 + 1
    Wo = (W + 2 * pad - k) // 2 + 1
    half = (k - 1) // 2                        # max phase-block offset of a tap
    Hq = Ho + half + (1 if half > 0 else 0)    # headroom so every span fits
    Wq = Wo + half
    xp = jnp.pad(act, ((pad, 2 * Hq - H - pad), (pad, 2 * Wq - W - pad),
                       (0, 0), (0, 0)))
    ps = xp.reshape(Hq, 2, Wq, 2, B, C).transpose(1, 3, 0, 2, 4, 5)
    return ps.reshape(2, 2, Hq * Wq * B, C).astype(jnp.bfloat16), Ho, Wo, Wq


def _conv_block(act, params, *, k, pad):
    # TODO(synk): for large batches add an M-grid ("parallel" semantics) with
    # two-pass / accumulated BN stats instead of whole-array VMEM residency.
    w, _unused_bias, gamma, beta = params      # bias cancelled by train-mode BN
    Cout, Cin = w.shape[0], w.shape[1]
    B = act.shape[2]
    xps, Ho, Wo, Wq = _phase_split(act, k, pad)
    M = Ho * Wq * B
    K = k * k * Cin
    w_mat = w.transpose(2, 3, 1, 0).reshape(K, Cout).astype(jnp.bfloat16)
    mask = (((jnp.arange(M) // B) % Wq) < Wo).astype(jnp.float32).reshape(M, 1)
    kernel = functools.partial(_conv_bn_relu_kernel, k=k, Ho=Ho, Wo=Wo, Wq=Wq,
                               B=B, Cin=Cin)
    out = pl.pallas_call(
        kernel,
        out_shape=jax.ShapeDtypeStruct((M, Cout), jnp.bfloat16),
        in_specs=[_vmem_spec()] * 5,
        out_specs=_vmem_spec(),
        scratch_shapes=[pltpu.VMEM((M, K), jnp.bfloat16)],
    )(xps, w_mat, gamma.reshape(1, Cout), beta.reshape(1, Cout), mask)
    # Rows are (i, j, b) with j in [0, Wq); drop the Wq-Wo stride-garbage
    # columns and hand the next layer a (Ho, Wo, B, Cout) channels-last block.
    return out.reshape(Ho, Wq, B, Cout)[:, :Wo]


def _tail_block(act, conv4_params, mlp1_params, mlp2_params):
    w4, _unused_bias, g4, be4 = conv4_params
    w1, b1 = mlp1_params
    w2, b2 = mlp2_params
    B = act.shape[2]
    x4ps, _, _, _ = _phase_split(act, 2, 0)    # conv4: k=2, stride=2, pad=0
    w4_mat = w4.transpose(2, 3, 1, 0).reshape(4 * 64, 64).astype(jnp.bfloat16)
    # mlp1: torch flattens conv4's NCHW output as (c, h, w); our flattened rows
    # are ordered (s = h*2 + w, c), so permute W1's input features to match and
    # zero-pad its 100 outputs to 128 lanes.
    w1_mat = w1.reshape(100, 64, 4).transpose(2, 1, 0).reshape(256, 100)
    w1_mat = jnp.pad(w1_mat, ((0, 0), (0, 28))).astype(jnp.bfloat16)
    b1_pad = jnp.pad(b1, (0, 28)).reshape(1, 128)
    w2_mat = jnp.pad(w2.T, ((0, 28), (0, 118))).astype(jnp.bfloat16)
    b2_pad = jnp.pad(b2, (0, 118)).reshape(1, 128)
    out = pl.pallas_call(
        functools.partial(_tail_kernel, B=B),
        out_shape=jax.ShapeDtypeStruct((B, 128), jnp.float32),
        in_specs=[_vmem_spec()] * 8,
        out_specs=_vmem_spec(),
        scratch_shapes=[
            pltpu.VMEM((4 * B, 256), jnp.bfloat16),  # conv4 patch matrix
            pltpu.VMEM((4 * B, 64), jnp.bfloat16),   # conv4 activation
            pltpu.VMEM((B, 256), jnp.bfloat16),      # flattened mlp1 input
        ],
    )(x4ps, w4_mat, g4.reshape(1, 64), be4.reshape(1, 64),
      w1_mat, b1_pad, w2_mat, b2_pad)
    return out[:, :10]


# ---------------------------------------------------------------------------
# Parameter construction (deterministic, synthetic)
# ---------------------------------------------------------------------------
def init_params(key):
    keys = jax.random.split(key, 12)

    def conv_block(k_w, k_b, cout, cin, k):
        w = 0.1 * jax.random.normal(k_w, (cout, cin, k, k), jnp.float32)
        # Conv bias is kept for parameter parity with the torch module but is
        # never read by the kernels: under train-mode BatchNorm the per-channel
        # bias is cancelled exactly by the batch-mean subtraction.
        b = 0.1 * jax.random.normal(k_b, (cout,), jnp.float32)
        gamma = jnp.ones((cout,), jnp.float32)
        beta = jnp.zeros((cout,), jnp.float32)
        return (w, b, gamma, beta)

    def linear_block(k_w, k_b, n_out, n_in):
        w = 0.1 * jax.random.normal(k_w, (n_out, n_in), jnp.float32)
        b = 0.1 * jax.random.normal(k_b, (n_out,), jnp.float32)
        return (w, b)

    return {
        "conv1": conv_block(keys[0], keys[1], 16, 1, 3),
        "conv2": conv_block(keys[2], keys[3], 32, 16, 3),
        "conv3": conv_block(keys[4], keys[5], 64, 32, 3),
        "conv4": conv_block(keys[6], keys[7], 64, 64, 2),
        "mlp1": linear_block(keys[8], keys[9], 100, 2 * 2 * 64),
        "mlp2": linear_block(keys[10], keys[11], 10, 100),
    }


# ---------------------------------------------------------------------------
# Forward pass
# ---------------------------------------------------------------------------
@jax.jit
def cnnnet_forward(params, x):
    # x: (B, 1, 28, 28) NCHW.  Internally everything is channels-last "HWBC"
    # (H, W, B, C) so no activation relayout is needed between layers.
    act = x.transpose(2, 3, 0, 1)                           # (28, 28, B, 1)
    act = _conv_block(act, params["conv1"], k=3, pad=1)      # (14, 14, B, 16)
    act = _conv_block(act, params["conv2"], k=3, pad=1)      # ( 7,  7, B, 32)
    act = _conv_block(act, params["conv3"], k=3, pad=1)      # ( 4,  4, B, 64)
    # conv4 + flatten + mlp1 + mlp2 fused into a single kernel.
    return _tail_block(act, params["conv4"], params["mlp1"], params["mlp2"])


if __name__ == "__main__":
    key = jax.random.PRNGKey(0)
    k_x, k_p = jax.random.split(key)
    # forward implies 28x28 single-channel input (flatten size 2*2*64)
    x = jax.random.normal(k_x, (2, 1, 28, 28), jnp.float32)
    params = init_params(k_p)

    out = cnnnet_forward(params, x)
    out = jax.block_until_ready(out)
    assert out.shape == (2, 10) and out.dtype == jnp.float32
    print("KERNEL_OK")
</pallas_src>

<mosaic_0001>
module attributes {stable_mosaic.version = 11 : i64} {
  func.func @_conv_bn_relu_kernel(%arg0: memref<2x2x480x1xbf16, #tpu.memory_space<vmem>>, %arg1: memref<9x16xbf16, #tpu.memory_space<vmem>>, %arg2: memref<1x16xf32, #tpu.memory_space<vmem>>, %arg3: memref<1x16xf32, #tpu.memory_space<vmem>>, %arg4: memref<420x1xf32, #tpu.memory_space<vmem>>, %arg5: memref<420x16xbf16, #tpu.memory_space<vmem>>, %arg6: memref<420x9xbf16, #tpu.memory_space<vmem>>) attributes {dimension_semantics = [], scalar_prefetch = 0 : i64, scratch_operands = 1 : i64, tpu.core_type = #tpu.core_type<tc>} {
    %c0 = arith.constant 0 : index
    %c0_0 = arith.constant 0 : index
    %c0_1 = arith.constant 0 : index
    %c0_2 = arith.constant 0 : index
    %0 = vector.load %arg0[%c0, %c0_0, %c0_1, %c0_2] : memref<2x2x480x1xbf16, #tpu.memory_space<vmem>>, vector<1x1x420x1xbf16>
    %1 = vector.shape_cast %0 : vector<1x1x420x1xbf16> to vector<420x1xbf16>
    %c0_3 = arith.constant 0 : index
    %c0_4 = arith.constant 0 : index
    %2 = vector.load %arg6[%c0_3, %c0_4] : memref<420x9xbf16, #tpu.memory_space<vmem>>, vector<420x1xbf16>
    tpu.vector_store %arg6[%c0_3, %c0_4], %1 {strides = array<i32>} : memref<420x9xbf16, #tpu.memory_space<vmem>>, vector<420x1xbf16>,
    %c0_5 = arith.constant 0 : index
    %c1 = arith.constant 1 : index
    %c0_6 = arith.constant 0 : index
    %c0_7 = arith.constant 0 : index
    %3 = vector.load %arg0[%c0_5, %c1, %c0_6, %c0_7] : memref<2x2x480x1xbf16, #tpu.memory_space<vmem>>, vector<1x1x420x1xbf16>
    %4 = vector.shape_cast %3 : vector<1x1x420x1xbf16> to vector<420x1xbf16>
    %c0_8 = arith.constant 0 : index
    %c1_9 = arith.constant 1 : index
    %5 = vector.load %arg6[%c0_8, %c1_9] : memref<420x9xbf16, #tpu.memory_space<vmem>>, vector<420x1xbf16>
    tpu.vector_store %arg6[%c0_8, %c1_9], %4 {strides = array<i32>} : memref<420x9xbf16, #tpu.memory_space<vmem>>, vector<420x1xbf16>,
    %c0_10 = arith.constant 0 : index
    %c0_11 = arith.constant 0 : index
    %c2 = arith.constant 2 : index
    %c0_12 = arith.constant 0 : index
    %6 = vector.load %arg0[%c0_10, %c0_11, %c2, %c0_12] : memref<2x2x480x1xbf16, #tpu.memory_space<vmem>>, vector<1x1x420x1xbf16>
    %7 = vector.shape_cast %6 : vector<1x1x420x1xbf16> to vector<420x1xbf16>
    %c0_13 = arith.constant 0 : index
    %c2_14 = arith.constant 2 : index
    %8 = vector.load %arg6[%c0_13, %c2_14] : memref<420x9xbf16, #tpu.memory_space<vmem>>, vector<420x1xbf16>
    tpu.vector_store %arg6[%c0_13, %c2_14], %7 {strides = array<i32>} : memref<420x9xbf16, #tpu.memory_space<vmem>>, vector<420x1xbf16>,
    %c1_15 = arith.constant 1 : index
    %c0_16 = arith.constant 0 : index
    %c0_17 = arith.constant 0 : index
    %c0_18 = arith.constant 0 : index
    %9 = vector.load %arg0[%c1_15, %c0_16, %c0_17, %c0_18] : memref<2x2x480x1xbf16, #tpu.memory_space<vmem>>, vector<1x1x420x1xbf16>
    %10 = vector.shape_cast %9 : vector<1x1x420x1xbf16> to vector<420x1xbf16>
    %c0_19 = arith.constant 0 : index
    %c3 = arith.constant 3 : index
    %11 = vector.load %arg6[%c0_19, %c3] : memref<420x9xbf16, #tpu.memory_space<vmem>>, vector<420x1xbf16>
    tpu.vector_store %arg6[%c0_19, %c3], %10 {strides = array<i32>} : memref<420x9xbf16, #tpu.memory_space<vmem>>, vector<420x1xbf16>,
    %c1_20 = arith.constant 1 : index
    %c1_21 = arith.constant 1 : index
    %c0_22 = arith.constant 0 : index
    %c0_23 = arith.constant 0 : index
    %12 = vector.load %arg0[%c1_20, %c1_21, %c0_22, %c0_23] : memref<2x2x480x1xbf16, #tpu.memory_space<vmem>>, vector<1x1x420x1xbf16>
    %13 = vector.shape_cast %12 : vector<1x1x420x1xbf16> to vector<420x1xbf16>
    %c0_24 = arith.constant 0 : index
    %c4 = arith.constant 4 : index
    %14 = vector.load %arg6[%c0_24, %c4] : memref<420x9xbf16, #tpu.memory_space<vmem>>, vector<420x1xbf16>
    tpu.vector_store %arg6[%c0_24, %c4], %13 {strides = array<i32>} : memref<420x9xbf16, #tpu.memory_space<vmem>>, vector<420x1xbf16>,
    %c1_25 = arith.constant 1 : index
    %c0_26 = arith.constant 0 : index
    %c2_27 = arith.constant 2 : index
    %c0_28 = arith.constant 0 : index
    %15 = vector.load %arg0[%c1_25, %c0_26, %c2_27, %c0_28] : memref<2x2x480x1xbf16, #tpu.memory_space<vmem>>, vector<1x1x420x1xbf16>
    %16 = vector.shape_cast %15 : vector<1x1x420x1xbf16> to vector<420x1xbf16>
    %c0_29 = arith.constant 0 : index
    %c5 = arith.constant 5 : index
    %17 = vector.load %arg6[%c0_29, %c5] : memref<420x9xbf16, #tpu.memory_space<vmem>>, vector<420x1xbf16>
    tpu.vector_store %arg6[%c0_29, %c5], %16 {strides = array<i32>} : memref<420x9xbf16, #tpu.memory_space<vmem>>, vector<420x1xbf16>,
    %c0_30 = arith.constant 0 : index
    %c0_31 = arith.constant 0 : index
    %c30 = arith.constant 30 : index
    %c0_32 = arith.constant 0 : index
    %18 = vector.load %arg0[%c0_30, %c0_31, %c30, %c0_32] : memref<2x2x480x1xbf16, #tpu.memory_space<vmem>>, vector<1x1x420x1xbf16>
    %19 = vector.shape_cast %18 : vector<1x1x420x1xbf16> to vector<420x1xbf16>
    %c0_33 = arith.constant 0 : index
    %c6 = arith.constant 6 : index
    %20 = vector.load %arg6[%c0_33, %c6] : memref<420x9xbf16, #tpu.memory_space<vmem>>, vector<420x1xbf16>
    tpu.vector_store %arg6[%c0_33, %c6], %19 {strides = array<i32>} : memref<420x9xbf16, #tpu.memory_space<vmem>>, vector<420x1xbf16>,
    %c0_34 = arith.constant 0 : index
    %c1_35 = arith.constant 1 : index
    %c30_36 = arith.constant 30 : index
    %c0_37 = arith.constant 0 : index
    %21 = vector.load %arg0[%c0_34, %c1_35, %c30_36, %c0_37] : memref<2x2x480x1xbf16, #tpu.memory_space<vmem>>, vector<1x1x420x1xbf16>
    %22 = vector.shape_cast %21 : vector<1x1x420x1xbf16> to vector<420x1xbf16>
    %c0_38 = arith.constant 0 : index
    %c7 = arith.constant 7 : index
    %23 = vector.load %arg6[%c0_38, %c7] : memref<420x9xbf16, #tpu.memory_space<vmem>>, vector<420x1xbf16>
    tpu.vector_store %arg6[%c0_38, %c7], %22 {strides = array<i32>} : memref<420x9xbf16, #tpu.memory_space<vmem>>, vector<420x1xbf16>,
    %c0_39 = arith.constant 0 : index
    %c0_40 = arith.constant 0 : index
    %c32 = arith.constant 32 : index
    %c0_41 = arith.constant 0 : index
    %24 = vector.load %arg0[%c0_39, %c0_40, %c32, %c0_41] : memref<2x2x480x1xbf16, #tpu.memory_space<vmem>>, vector<1x1x420x1xbf16>
    %25 = vector.shape_cast %24 : vector<1x1x420x1xbf16> to vector<420x1xbf16>
    %c0_42 = arith.constant 0 : index
    %c8 = arith.constant 8 : index
    %26 = vector.load %arg6[%c0_42, %c8] : memref<420x9xbf16, #tpu.memory_space<vmem>>, vector<420x1xbf16>
    tpu.vector_store %arg6[%c0_42, %c8], %25 {strides = array<i32>} : memref<420x9xbf16, #tpu.memory_space<vmem>>, vector<420x1xbf16>,
    %c0_43 = arith.constant 0 : index
    %c0_44 = arith.constant 0 : index
    %27 = vector.load %arg6[%c0_43, %c0_44] : memref<420x9xbf16, #tpu.memory_space<vmem>>, vector<420x9xbf16>
    %c0_45 = arith.constant 0 : index
    %c0_46 = arith.constant 0 : index
    %28 = vector.load %arg1[%c0_45, %c0_46] : memref<9x16xbf16, #tpu.memory_space<vmem>>, vector<9x16xbf16>
    %cst = arith.constant dense<0.000000e+00> : vector<420x16xf32>
    %29 = tpu.matmul %27, %28, %cst {dimension_numbers = #tpu.dot_dimension_numbers<[1], [0], [0], [1], [0, 0, 1, 1], [], []>} : vector<420x9xbf16>, vector<9x16xbf16>, vector<420x16xf32> -> vector<420x16xf32>
    %c0_47 = arith.constant 0 : index
    %c0_48 = arith.constant 0 : index
    %30 = vector.load %arg4[%c0_47, %c0_48] : memref<420x1xf32, #tpu.memory_space<vmem>>, vector<420x1xf32>
    %31 = vector.broadcast %30 : vector<420x1xf32> to vector<420x16xf32>
    %32 = arith.mulf %29, %31 : vector<420x16xf32>
    %cst_49 = arith.constant dense<0.000000e+00> : vector<16xf32>
    %33 = vector.multi_reduction <add>, %32, %cst_49 [0] : vector<420x16xf32> to vector<16xf32>
    %34 = vector.shape_cast %33 : vector<16xf32> to vector<1x16xf32>
    %cst_50 = arith.constant 0.00255102036 : f32
    %35 = vector.broadcast %cst_50 : f32 to vector<1x16xf32>
    %36 = arith.mulf %34, %35 : vector<1x16xf32>
    %37 = vector.broadcast %36 : vector<1x16xf32> to vector<420x16xf32>
    %38 = arith.subf %29, %37 : vector<420x16xf32>
    %39 = arith.mulf %38, %38 : vector<420x16xf32>
    %40 = vector.broadcast %30 : vector<420x1xf32> to vector<420x16xf32>
    %41 = arith.mulf %39, %40 : vector<420x16xf32>
    %cst_51 = arith.constant dense<0.000000e+00> : vector<16xf32>
    %42 = vector.multi_reduction <add>, %41, %cst_51 [0] : vector<420x16xf32> to vector<16xf32>
    %43 = vector.shape_cast %42 : vector<16xf32> to vector<1x16xf32>
    %cst_52 = arith.constant 0.00255102036 : f32
    %44 = vector.broadcast %cst_52 : f32 to vector<1x16xf32>
    %45 = arith.mulf %43, %44 : vector<1x16xf32>
    %c0_53 = arith.constant 0 : index
    %c0_54 = arith.constant 0 : index
    %46 = vector.load %arg2[%c0_53, %c0_54] : memref<1x16xf32, #tpu.memory_space<vmem>>, vector<1x16xf32>
    %cst_55 = arith.constant 9.99999974E-6 : f32
    %47 = vector.broadcast %cst_55 : f32 to vector<1x16xf32>
    %48 = arith.addf %45, %47 : vector<1x16xf32>
    %49 = math.rsqrt %48 : vector<1x16xf32>
    %50 = arith.mulf %46, %49 : vector<1x16xf32>
    %c0_56 = arith.constant 0 : index
    %c0_57 = arith.constant 0 : index
    %51 = vector.load %arg3[%c0_56, %c0_57] : memref<1x16xf32, #tpu.memory_space<vmem>>, vector<1x16xf32>
    %52 = arith.mulf %36, %50 : vector<1x16xf32>
    %53 = arith.subf %51, %52 : vector<1x16xf32>
    %54 = vector.broadcast %50 : vector<1x16xf32> to vector<420x16xf32>
    %55 = arith.mulf %29, %54 : vector<420x16xf32>
    %56 = vector.broadcast %53 : vector<1x16xf32> to vector<420x16xf32>
    %57 = arith.addf %55, %56 : vector<420x16xf32>
    %cst_58 = arith.constant 0.000000e+00 : f32
    %58 = vector.broadcast %cst_58 : f32 to vector<420x16xf32>
    %59 = arith.maximumf %57, %58 : vector<420x16xf32>
    %60 = arith.truncf %59 : vector<420x16xf32> to vector<420x16xbf16>
    %c0_59 = arith.constant 0 : index
    %c0_60 = arith.constant 0 : index
    %61 = vector.load %arg5[%c0_59, %c0_60] : memref<420x16xbf16, #tpu.memory_space<vmem>>, vector<420x16xbf16>
    tpu.vector_store %arg5[%c0_59, %c0_60], %60 {strides = array<i32>} : memref<420x16xbf16, #tpu.memory_space<vmem>>, vector<420x16xbf16>,
    return
  }
}

module attributes {stable_mosaic.version = 11 : i64} {
  func.func @_conv_bn_relu_kernel(%arg0: memref<2x2x144x16xbf16, #tpu.memory_space<vmem>>, %arg1: memref<144x32xbf16, #tpu.memory_space<vmem>>, %arg2: memref<1x32xf32, #tpu.memory_space<vmem>>, %arg3: memref<1x32xf32, #tpu.memory_space<vmem>>, %arg4: memref<112x1xf32, #tpu.memory_space<vmem>>, %arg5: memref<112x32xbf16, #tpu.memory_space<vmem>>, %arg6: memref<112x144xbf16, #tpu.memory_space<vmem>>) attributes {dimension_semantics = [], scalar_prefetch = 0 : i64, scratch_operands = 1 : i64, tpu.core_type = #tpu.core_type<tc>} {
    %c0 = arith.constant 0 : index
    %c0_0 = arith.constant 0 : index
    %c0_1 = arith.constant 0 : index
    %c0_2 = arith.constant 0 : index
    %0 = vector.load %arg0[%c0, %c0_0, %c0_1, %c0_2] : memref<2x2x144x16xbf16, #tpu.memory_space<vmem>>, vector<1x1x112x16xbf16>
    %1 = vector.shape_cast %0 : vector<1x1x112x16xbf16> to vector<112x16xbf16>
    %c0_3 = arith.constant 0 : index
    %c0_4 = arith.constant 0 : index
    %2 = vector.load %arg6[%c0_3, %c0_4] : memref<112x144xbf16, #tpu.memory_space<vmem>>, vector<112x16xbf16>
    tpu.vector_store %arg6[%c0_3, %c0_4], %1 {strides = array<i32>} : memref<112x144xbf16, #tpu.memory_space<vmem>>, vector<112x16xbf16>,
    %c0_5 = arith.constant 0 : index
    %c1 = arith.constant 1 : index
    %c0_6 = arith.constant 0 : index
    %c0_7 = arith.constant 0 : index
    %3 = vector.load %arg0[%c0_5, %c1, %c0_6, %c0_7] : memref<2x2x144x16xbf16, #tpu.memory_space<vmem>>, vector<1x1x112x16xbf16>
    %4 = vector.shape_cast %3 : vector<1x1x112x16xbf16> to vector<112x16xbf16>
    %c0_8 = arith.constant 0 : index
    %c16 = arith.constant 16 : index
    %5 = vector.load %arg6[%c0_8, %c16] : memref<112x144xbf16, #tpu.memory_space<vmem>>, vector<112x16xbf16>
    tpu.vector_store %arg6[%c0_8, %c16], %4 {strides = array<i32>} : memref<112x144xbf16, #tpu.memory_space<vmem>>, vector<112x16xbf16>,
    %c0_9 = arith.constant 0 : index
    %c0_10 = arith.constant 0 : index
    %c2 = arith.constant 2 : index
    %c0_11 = arith.constant 0 : index
    %6 = vector.load %arg0[%c0_9, %c0_10, %c2, %c0_11] : memref<2x2x144x16xbf16, #tpu.memory_space<vmem>>, vector<1x1x112x16xbf16>
    %7 = vector.shape_cast %6 : vector<1x1x112x16xbf16> to vector<112x16xbf16>
    %c0_12 = arith.constant 0 : index
    %c32 = arith.constant 32 : index
    %8 = vector.load %arg6[%c0_12, %c32] : memref<112x144xbf16, #tpu.memory_space<vmem>>, vector<112x16xbf16>
    tpu.vector_store %arg6[%c0_12, %c32], %7 {strides = array<i32>} : memref<112x144xbf16, #tpu.memory_space<vmem>>, vector<112x16xbf16>,
    %c1_13 = arith.constant 1 : index
    %c0_14 = arith.constant 0 : index
    %c0_15 = arith.constant 0 : index
    %c0_16 = arith.constant 0 : index
    %9 = vector.load %arg0[%c1_13, %c0_14, %c0_15, %c0_16] : memref<2x2x144x16xbf16, #tpu.memory_space<vmem>>, vector<1x1x112x16xbf16>
    %10 = vector.shape_cast %9 : vector<1x1x112x16xbf16> to vector<112x16xbf16>
    %c0_17 = arith.constant 0 : index
    %c48 = arith.constant 48 : index
    %11 = vector.load %arg6[%c0_17, %c48] : memref<112x144xbf16, #tpu.memory_space<vmem>>, vector<112x16xbf16>
    tpu.vector_store %arg6[%c0_17, %c48], %10 {strides = array<i32>} : memref<112x144xbf16, #tpu.memory_space<vmem>>, vector<112x16xbf16>,
    %c1_18 = arith.constant 1 : index
    %c1_19 = arith.constant 1 : index
    %c0_20 = arith.constant 0 : index
    %c0_21 = arith.constant 0 : index
    %12 = vector.load %arg0[%c1_18, %c1_19, %c0_20, %c0_21] : memref<2x2x144x16xbf16, #tpu.memory_space<vmem>>, vector<1x1x112x16xbf16>
    %13 = vector.shape_cast %12 : vector<1x1x112x16xbf16> to vector<112x16xbf16>
    %c0_22 = arith.constant 0 : index
    %c64 = arith.constant 64 : index
    %14 = vector.load %arg6[%c0_22, %c64] : memref<112x144xbf16, #tpu.memory_space<vmem>>, vector<112x16xbf16>
    tpu.vector_store %arg6[%c0_22, %c64], %13 {strides = array<i32>} : memref<112x144xbf16, #tpu.memory_space<vmem>>, vector<112x16xbf16>,
    %c1_23 = arith.constant 1 : index
    %c0_24 = arith.constant 0 : index
    %c2_25 = arith.constant 2 : index
    %c0_26 = arith.constant 0 : index
    %15 = vector.load %arg0[%c1_23, %c0_24, %c2_25, %c0_26] : memref<2x2x144x16xbf16, #tpu.memory_space<vmem>>, vector<1x1x112x16xbf16>
    %16 = vector.shape_cast %15 : vector<1x1x112x16xbf16> to vector<112x16xbf16>
    %c0_27 = arith.constant 0 : index
    %c80 = arith.constant 80 : index
    %17 = vector.load %arg6[%c0_27, %c80] : memref<112x144xbf16, #tpu.memory_space<vmem>>, vector<112x16xbf16>
    tpu.vector_store %arg6[%c0_27, %c80], %16 {strides = array<i32>} : memref<112x144xbf16, #tpu.memory_space<vmem>>, vector<112x16xbf16>,
    %c0_28 = arith.constant 0 : index
    %c0_29 = arith.constant 0 : index
    %c16_30 = arith.constant 16 : index
    %c0_31 = arith.constant 0 : index
    %18 = vector.load %arg0[%c0_28, %c0_29, %c16_30, %c0_31] : memref<2x2x144x16xbf16, #tpu.memory_space<vmem>>, vector<1x1x112x16xbf16>
    %19 = vector.shape_cast %18 : vector<1x1x112x16xbf16> to vector<112x16xbf16>
    %c0_32 = arith.constant 0 : index
    %c96 = arith.constant 96 : index
    %20 = vector.load %arg6[%c0_32, %c96] : memref<112x144xbf16, #tpu.memory_space<vmem>>, vector<112x16xbf16>
    tpu.vector_store %arg6[%c0_32, %c96], %19 {strides = array<i32>} : memref<112x144xbf16, #tpu.memory_space<vmem>>, vector<112x16xbf16>,
    %c0_33 = arith.constant 0 : index
    %c1_34 = arith.constant 1 : index
    %c16_35 = arith.constant 16 : index
    %c0_36 = arith.constant 0 : index
    %21 = vector.load %arg0[%c0_33, %c1_34, %c16_35, %c0_36] : memref<2x2x144x16xbf16, #tpu.memory_space<vmem>>, vector<1x1x112x16xbf16>
    %22 = vector.shape_cast %21 : vector<1x1x112x16xbf16> to vector<112x16xbf16>
    %c0_37 = arith.constant 0 : index
    %c112 = arith.constant 112 : index
    %23 = vector.load %arg6[%c0_37, %c112] : memref<112x144xbf16, #tpu.memory_space<vmem>>, vector<112x16xbf16>
    tpu.vector_store %arg6[%c0_37, %c112], %22 {strides = array<i32>} : memref<112x144xbf16, #tpu.memory_space<vmem>>, vector<112x16xbf16>,
    %c0_38 = arith.constant 0 : index
    %c0_39 = arith.constant 0 : index
    %c18 = arith.constant 18 : index
    %c0_40 = arith.constant 0 : index
    %24 = vector.load %arg0[%c0_38, %c0_39, %c18, %c0_40] : memref<2x2x144x16xbf16, #tpu.memory_space<vmem>>, vector<1x1x112x16xbf16>
    %25 = vector.shape_cast %24 : vector<1x1x112x16xbf16> to vector<112x16xbf16>
    %c0_41 = arith.constant 0 : index
    %c128 = arith.constant 128 : index
    %26 = vector.load %arg6[%c0_41, %c128] : memref<112x144xbf16, #tpu.memory_space<vmem>>, vector<112x16xbf16>
    tpu.vector_store %arg6[%c0_41, %c128], %25 {strides = array<i32>} : memref<112x144xbf16, #tpu.memory_space<vmem>>, vector<112x16xbf16>,
    %c0_42 = arith.constant 0 : index
    %c0_43 = arith.constant 0 : index
    %27 = vector.load %arg6[%c0_42, %c0_43] : memref<112x144xbf16, #tpu.memory_space<vmem>>, vector<112x144xbf16>
    %c0_44 = arith.constant 0 : index
    %c0_45 = arith.constant 0 : index
    %28 = vector.load %arg1[%c0_44, %c0_45] : memref<144x32xbf16, #tpu.memory_space<vmem>>, vector<144x32xbf16>
    %cst = arith.constant dense<0.000000e+00> : vector<112x32xf32>
    %29 = tpu.matmul %27, %28, %cst {dimension_numbers = #tpu.dot_dimension_numbers<[1], [0], [0], [1], [0, 0, 1, 1], [], []>} : vector<112x144xbf16>, vector<144x32xbf16>, vector<112x32xf32> -> vector<112x32xf32>
    %c0_46 = arith.constant 0 : index
    %c0_47 = arith.constant 0 : index
    %30 = vector.load %arg4[%c0_46, %c0_47] : memref<112x1xf32, #tpu.memory_space<vmem>>, vector<112x1xf32>
    %31 = vector.broadcast %30 : vector<112x1xf32> to vector<112x32xf32>
    %32 = arith.mulf %29, %31 : vector<112x32xf32>
    %cst_48 = arith.constant dense<0.000000e+00> : vector<32xf32>
    %33 = vector.multi_reduction <add>, %32, %cst_48 [0] : vector<112x32xf32> to vector<32xf32>
    %34 = vector.shape_cast %33 : vector<32xf32> to vector<1x32xf32>
    %cst_49 = arith.constant 0.0102040814 : f32
    %35 = vector.broadcast %cst_49 : f32 to vector<1x32xf32>
    %36 = arith.mulf %34, %35 : vector<1x32xf32>
    %37 = vector.broadcast %36 : vector<1x32xf32> to vector<112x32xf32>
    %38 = arith.subf %29, %37 : vector<112x32xf32>
    %39 = arith.mulf %38, %38 : vector<112x32xf32>
    %40 = vector.broadcast %30 : vector<112x1xf32> to vector<112x32xf32>
    %41 = arith.mulf %39, %40 : vector<112x32xf32>
    %cst_50 = arith.constant dense<0.000000e+00> : vector<32xf32>
    %42 = vector.multi_reduction <add>, %41, %cst_50 [0] : vector<112x32xf32> to vector<32xf32>
    %43 = vector.shape_cast %42 : vector<32xf32> to vector<1x32xf32>
    %cst_51 = arith.constant 0.0102040814 : f32
    %44 = vector.broadcast %cst_51 : f32 to vector<1x32xf32>
    %45 = arith.mulf %43, %44 : vector<1x32xf32>
    %c0_52 = arith.constant 0 : index
    %c0_53 = arith.constant 0 : index
    %46 = vector.load %arg2[%c0_52, %c0_53] : memref<1x32xf32, #tpu.memory_space<vmem>>, vector<1x32xf32>
    %cst_54 = arith.constant 9.99999974E-6 : f32
    %47 = vector.broadcast %cst_54 : f32 to vector<1x32xf32>
    %48 = arith.addf %45, %47 : vector<1x32xf32>
    %49 = math.rsqrt %48 : vector<1x32xf32>
    %50 = arith.mulf %46, %49 : vector<1x32xf32>
    %c0_55 = arith.constant 0 : index
    %c0_56 = arith.constant 0 : index
    %51 = vector.load %arg3[%c0_55, %c0_56] : memref<1x32xf32, #tpu.memory_space<vmem>>, vector<1x32xf32>
    %52 = arith.mulf %36, %50 : vector<1x32xf32>
    %53 = arith.subf %51, %52 : vector<1x32xf32>
    %54 = vector.broadcast %50 : vector<1x32xf32> to vector<112x32xf32>
    %55 = arith.mulf %29, %54 : vector<112x32xf32>
    %56 = vector.broadcast %53 : vector<1x32xf32> to vector<112x32xf32>
    %57 = arith.addf %55, %56 : vector<112x32xf32>
    %cst_57 = arith.constant 0.000000e+00 : f32
    %58 = vector.broadcast %cst_57 : f32 to vector<112x32xf32>
    %59 = arith.maximumf %57, %58 : vector<112x32xf32>
    %60 = arith.truncf %59 : vector<112x32xf32> to vector<112x32xbf16>
    %c0_58 = arith.constant 0 : index
    %c0_59 = arith.constant 0 : index
    %61 = vector.load %arg5[%c0_58, %c0_59] : memref<112x32xbf16, #tpu.memory_space<vmem>>, vector<112x32xbf16>
    tpu.vector_store %arg5[%c0_58, %c0_59], %60 {strides = array<i32>} : memref<112x32xbf16, #tpu.memory_space<vmem>>, vector<112x32xbf16>,
    return
  }
}

module attributes {stable_mosaic.version = 11 : i64} {
  func.func @_conv_bn_relu_kernel(%arg0: memref<2x2x60x32xbf16, #tpu.memory_space<vmem>>, %arg1: memref<288x64xbf16, #tpu.memory_space<vmem>>, %arg2: memref<1x64xf32, #tpu.memory_space<vmem>>, %arg3: memref<1x64xf32, #tpu.memory_space<vmem>>, %arg4: memref<40x1xf32, #tpu.memory_space<vmem>>, %arg5: memref<40x64xbf16, #tpu.memory_space<vmem>>, %arg6: memref<40x288xbf16, #tpu.memory_space<vmem>>) attributes {dimension_semantics = [], scalar_prefetch = 0 : i64, scratch_operands = 1 : i64, tpu.core_type = #tpu.core_type<tc>} {
    %c0 = arith.constant 0 : index
    %c0_0 = arith.constant 0 : index
    %c0_1 = arith.constant 0 : index
    %c0_2 = arith.constant 0 : index
    %0 = vector.load %arg0[%c0, %c0_0, %c0_1, %c0_2] : memref<2x2x60x32xbf16, #tpu.memory_space<vmem>>, vector<1x1x40x32xbf16>
    %1 = vector.shape_cast %0 : vector<1x1x40x32xbf16> to vector<40x32xbf16>
    %c0_3 = arith.constant 0 : index
    %c0_4 = arith.constant 0 : index
    %2 = vector.load %arg6[%c0_3, %c0_4] : memref<40x288xbf16, #tpu.memory_space<vmem>>, vector<40x32xbf16>
    tpu.vector_store %arg6[%c0_3, %c0_4], %1 {strides = array<i32>} : memref<40x288xbf16, #tpu.memory_space<vmem>>, vector<40x32xbf16>,
    %c0_5 = arith.constant 0 : index
    %c1 = arith.constant 1 : index
    %c0_6 = arith.constant 0 : index
    %c0_7 = arith.constant 0 : index
    %3 = vector.load %arg0[%c0_5, %c1, %c0_6, %c0_7] : memref<2x2x60x32xbf16, #tpu.memory_space<vmem>>, vector<1x1x40x32xbf16>
    %4 = vector.shape_cast %3 : vector<1x1x40x32xbf16> to vector<40x32xbf16>
    %c0_8 = arith.constant 0 : index
    %c32 = arith.constant 32 : index
    %5 = vector.load %arg6[%c0_8, %c32] : memref<40x288xbf16, #tpu.memory_space<vmem>>, vector<40x32xbf16>
    tpu.vector_store %arg6[%c0_8, %c32], %4 {strides = array<i32>} : memref<40x288xbf16, #tpu.memory_space<vmem>>, vector<40x32xbf16>,
    %c0_9 = arith.constant 0 : index
    %c0_10 = arith.constant 0 : index
    %c2 = arith.constant 2 : index
    %c0_11 = arith.constant 0 : index
    %6 = vector.load %arg0[%c0_9, %c0_10, %c2, %c0_11] : memref<2x2x60x32xbf16, #tpu.memory_space<vmem>>, vector<1x1x40x32xbf16>
    %7 = vector.shape_cast %6 : vector<1x1x40x32xbf16> to vector<40x32xbf16>
    %c0_12 = arith.constant 0 : index
    %c64 = arith.constant 64 : index
    %8 = vector.load %arg6[%c0_12, %c64] : memref<40x288xbf16, #tpu.memory_space<vmem>>, vector<40x32xbf16>
    tpu.vector_store %arg6[%c0_12, %c64], %7 {strides = array<i32>} : memref<40x288xbf16, #tpu.memory_space<vmem>>, vector<40x32xbf16>,
    %c1_13 = arith.constant 1 : index
    %c0_14 = arith.constant 0 : index
    %c0_15 = arith.constant 0 : index
    %c0_16 = arith.constant 0 : index
    %9 = vector.load %arg0[%c1_13, %c0_14, %c0_15, %c0_16] : memref<2x2x60x32xbf16, #tpu.memory_space<vmem>>, vector<1x1x40x32xbf16>
    %10 = vector.shape_cast %9 : vector<1x1x40x32xbf16> to vector<40x32xbf16>
    %c0_17 = arith.constant 0 : index
    %c96 = arith.constant 96 : index
    %11 = vector.load %arg6[%c0_17, %c96] : memref<40x288xbf16, #tpu.memory_space<vmem>>, vector<40x32xbf16>
    tpu.vector_store %arg6[%c0_17, %c96], %10 {strides = array<i32>} : memref<40x288xbf16, #tpu.memory_space<vmem>>, vector<40x32xbf16>,
    %c1_18 = arith.constant 1 : index
    %c1_19 = arith.constant 1 : index
    %c0_20 = arith.constant 0 : index
    %c0_21 = arith.constant 0 : index
    %12 = vector.load %arg0[%c1_18, %c1_19, %c0_20, %c0_21] : memref<2x2x60x32xbf16, #tpu.memory_space<vmem>>, vector<1x1x40x32xbf16>
    %13 = vector.shape_cast %12 : vector<1x1x40x32xbf16> to vector<40x32xbf16>
    %c0_22 = arith.constant 0 : index
    %c128 = arith.constant 128 : index
    %14 = vector.load %arg6[%c0_22, %c128] : memref<40x288xbf16, #tpu.memory_space<vmem>>, vector<40x32xbf16>
    tpu.vector_store %arg6[%c0_22, %c128], %13 {strides = array<i32>} : memref<40x288xbf16, #tpu.memory_space<vmem>>, vector<40x32xbf16>,
    %c1_23 = arith.constant 1 : index
    %c0_24 = arith.constant 0 : index
    %c2_25 = arith.constant 2 : index
    %c0_26 = arith.constant 0 : index
    %15 = vector.load %arg0[%c1_23, %c0_24, %c2_25, %c0_26] : memref<2x2x60x32xbf16, #tpu.memory_space<vmem>>, vector<1x1x40x32xbf16>
    %16 = vector.shape_cast %15 : vector<1x1x40x32xbf16> to vector<40x32xbf16>
    %c0_27 = arith.constant 0 : index
    %c160 = arith.constant 160 : index
    %17 = vector.load %arg6[%c0_27, %c160] : memref<40x288xbf16, #tpu.memory_space<vmem>>, vector<40x32xbf16>
    tpu.vector_store %arg6[%c0_27, %c160], %16 {strides = array<i32>} : memref<40x288xbf16, #tpu.memory_space<vmem>>, vector<40x32xbf16>,
    %c0_28 = arith.constant 0 : index
    %c0_29 = arith.constant 0 : index
    %c10 = arith.constant 10 : index
    %c0_30 = arith.constant 0 : index
    %18 = vector.load %arg0[%c0_28, %c0_29, %c10, %c0_30] : memref<2x2x60x32xbf16, #tpu.memory_space<vmem>>, vector<1x1x40x32xbf16>
    %19 = vector.shape_cast %18 : vector<1x1x40x32xbf16> to vector<40x32xbf16>
    %c0_31 = arith.constant 0 : index
    %c192 = arith.constant 192 : index
    %20 = vector.load %arg6[%c0_31, %c192] : memref<40x288xbf16, #tpu.memory_space<vmem>>, vector<40x32xbf16>
    tpu.vector_store %arg6[%c0_31, %c192], %19 {strides = array<i32>} : memref<40x288xbf16, #tpu.memory_space<vmem>>, vector<40x32xbf16>,
    %c0_32 = arith.constant 0 : index
    %c1_33 = arith.constant 1 : index
    %c10_34 = arith.constant 10 : index
    %c0_35 = arith.constant 0 : index
    %21 = vector.load %arg0[%c0_32, %c1_33, %c10_34, %c0_35] : memref<2x2x60x32xbf16, #tpu.memory_space<vmem>>, vector<1x1x40x32xbf16>
    %22 = vector.shape_cast %21 : vector<1x1x40x32xbf16> to vector<40x32xbf16>
    %c0_36 = arith.constant 0 : index
    %c224 = arith.constant 224 : index
    %23 = vector.load %arg6[%c0_36, %c224] : memref<40x288xbf16, #tpu.memory_space<vmem>>, vector<40x32xbf16>
    tpu.vector_store %arg6[%c0_36, %c224], %22 {strides = array<i32>} : memref<40x288xbf16, #tpu.memory_space<vmem>>, vector<40x32xbf16>,
    %c0_37 = arith.constant 0 : index
    %c0_38 = arith.constant 0 : index
    %c12 = arith.constant 12 : index
    %c0_39 = arith.constant 0 : index
    %24 = vector.load %arg0[%c0_37, %c0_38, %c12, %c0_39] : memref<2x2x60x32xbf16, #tpu.memory_space<vmem>>, vector<1x1x40x32xbf16>
    %25 = vector.shape_cast %24 : vector<1x1x40x32xbf16> to vector<40x32xbf16>
    %c0_40 = arith.constant 0 : index
    %c256 = arith.constant 256 : index
    %26 = vector.load %arg6[%c0_40, %c256] : memref<40x288xbf16, #tpu.memory_space<vmem>>, vector<40x32xbf16>
    tpu.vector_store %arg6[%c0_40, %c256], %25 {strides = array<i32>} : memref<40x288xbf16, #tpu.memory_space<vmem>>, vector<40x32xbf16>,
    %c0_41 = arith.constant 0 : index
    %c0_42 = arith.constant 0 : index
    %27 = vector.load %arg6[%c0_41, %c0_42] : memref<40x288xbf16, #tpu.memory_space<vmem>>, vector<40x288xbf16>
    %c0_43 = arith.constant 0 : index
    %c0_44 = arith.constant 0 : index
    %28 = vector.load %arg1[%c0_43, %c0_44] : memref<288x64xbf16, #tpu.memory_space<vmem>>, vector<288x64xbf16>
    %cst = arith.constant dense<0.000000e+00> : vector<40x64xf32>
    %29 = tpu.matmul %27, %28, %cst {dimension_numbers = #tpu.dot_dimension_numbers<[1], [0], [0], [1], [0, 0, 1, 1], [], []>} : vector<40x288xbf16>, vector<288x64xbf16>, vector<40x64xf32> -> vector<40x64xf32>
    %c0_45 = arith.constant 0 : index
    %c0_46 = arith.constant 0 : index
    %30 = vector.load %arg4[%c0_45, %c0_46] : memref<40x1xf32, #tpu.memory_space<vmem>>, vector<40x1xf32>
    %31 = vector.broadcast %30 : vector<40x1xf32> to vector<40x64xf32>
    %32 = arith.mulf %29, %31 : vector<40x64xf32>
    %cst_47 = arith.constant dense<0.000000e+00> : vector<64xf32>
    %33 = vector.multi_reduction <add>, %32, %cst_47 [0] : vector<40x64xf32> to vector<64xf32>
    %34 = vector.shape_cast %33 : vector<64xf32> to vector<1x64xf32>
    %cst_48 = arith.constant 3.125000e-02 : f32
    %35 = vector.broadcast %cst_48 : f32 to vector<1x64xf32>
    %36 = arith.mulf %34, %35 : vector<1x64xf32>
    %37 = vector.broadcast %36 : vector<1x64xf32> to vector<40x64xf32>
    %38 = arith.subf %29, %37 : vector<40x64xf32>
    %39 = arith.mulf %38, %38 : vector<40x64xf32>
    %40 = vector.broadcast %30 : vector<40x1xf32> to vector<40x64xf32>
    %41 = arith.mulf %39, %40 : vector<40x64xf32>
    %cst_49 = arith.constant dense<0.000000e+00> : vector<64xf32>
    %42 = vector.multi_reduction <add>, %41, %cst_49 [0] : vector<40x64xf32> to vector<64xf32>
    %43 = vector.shape_cast %42 : vector<64xf32> to vector<1x64xf32>
    %cst_50 = arith.constant 3.125000e-02 : f32
    %44 = vector.broadcast %cst_50 : f32 to vector<1x64xf32>
    %45 = arith.mulf %43, %44 : vector<1x64xf32>
    %c0_51 = arith.constant 0 : index
    %c0_52 = arith.constant 0 : index
    %46 = vector.load %arg2[%c0_51, %c0_52] : memref<1x64xf32, #tpu.memory_space<vmem>>, vector<1x64xf32>
    %cst_53 = arith.constant 9.99999974E-6 : f32
    %47 = vector.broadcast %cst_53 : f32 to vector<1x64xf32>
    %48 = arith.addf %45, %47 : vector<1x64xf32>
    %49 = math.rsqrt %48 : vector<1x64xf32>
    %50 = arith.mulf %46, %49 : vector<1x64xf32>
    %c0_54 = arith.constant 0 : index
    %c0_55 = arith.constant 0 : index
    %51 = vector.load %arg3[%c0_54, %c0_55] : memref<1x64xf32, #tpu.memory_space<vmem>>, vector<1x64xf32>
    %52 = arith.mulf %36, %50 : vector<1x64xf32>
    %53 = arith.subf %51, %52 : vector<1x64xf32>
    %54 = vector.broadcast %50 : vector<1x64xf32> to vector<40x64xf32>
    %55 = arith.mulf %29, %54 : vector<40x64xf32>
    %56 = vector.broadcast %53 : vector<1x64xf32> to vector<40x64xf32>
    %57 = arith.addf %55, %56 : vector<40x64xf32>
    %cst_56 = arith.constant 0.000000e+00 : f32
    %58 = vector.broadcast %cst_56 : f32 to vector<40x64xf32>
    %59 = arith.maximumf %57, %58 : vector<40x64xf32>
    %60 = arith.truncf %59 : vector<40x64xf32> to vector<40x64xbf16>
    %c0_57 = arith.constant 0 : index
    %c0_58 = arith.constant 0 : index
    %61 = vector.load %arg5[%c0_57, %c0_58] : memref<40x64xbf16, #tpu.memory_space<vmem>>, vector<40x64xbf16>
    tpu.vector_store %arg5[%c0_57, %c0_58], %60 {strides = array<i32>} : memref<40x64xbf16, #tpu.memory_space<vmem>>, vector<40x64xbf16>,
    return
  }
}

module attributes {stable_mosaic.version = 11 : i64} {
  func.func @_tail_kernel(%arg0: memref<2x2x8x64xbf16, #tpu.memory_space<vmem>>, %arg1: memref<256x64xbf16, #tpu.memory_space<vmem>>, %arg2: memref<1x64xf32, #tpu.memory_space<vmem>>, %arg3: memref<1x64xf32, #tpu.memory_space<vmem>>, %arg4: memref<256x128xbf16, #tpu.memory_space<vmem>>, %arg5: memref<1x128xf32, #tpu.memory_space<vmem>>, %arg6: memref<128x128xbf16, #tpu.memory_space<vmem>>, %arg7: memref<1x128xf32, #tpu.memory_space<vmem>>, %arg8: memref<2x128xf32, #tpu.memory_space<vmem>>, %arg9: memref<8x256xbf16, #tpu.memory_space<vmem>>, %arg10: memref<8x64xbf16, #tpu.memory_space<vmem>>, %arg11: memref<2x256xbf16, #tpu.memory_space<vmem>>) attributes {dimension_semantics = [], scalar_prefetch = 0 : i64, scratch_operands = 3 : i64, tpu.core_type = #tpu.core_type<tc>} {
    %c0 = arith.constant 0 : index
    %c0_0 = arith.constant 0 : index
    %c0_1 = arith.constant 0 : index
    %c0_2 = arith.constant 0 : index
    %0 = vector.load %arg0[%c0, %c0_0, %c0_1, %c0_2] : memref<2x2x8x64xbf16, #tpu.memory_space<vmem>>, vector<1x1x8x64xbf16>
    %1 = vector.shape_cast %0 : vector<1x1x8x64xbf16> to vector<8x64xbf16>
    %c0_3 = arith.constant 0 : index
    %c0_4 = arith.constant 0 : index
    %2 = vector.load %arg9[%c0_3, %c0_4] : memref<8x256xbf16, #tpu.memory_space<vmem>>, vector<8x64xbf16>
    tpu.vector_store %arg9[%c0_3, %c0_4], %1 {strides = array<i32>} : memref<8x256xbf16, #tpu.memory_space<vmem>>, vector<8x64xbf16>,
    %c0_5 = arith.constant 0 : index
    %c1 = arith.constant 1 : index
    %c0_6 = arith.constant 0 : index
    %c0_7 = arith.constant 0 : index
    %3 = vector.load %arg0[%c0_5, %c1, %c0_6, %c0_7] : memref<2x2x8x64xbf16, #tpu.memory_space<vmem>>, vector<1x1x8x64xbf16>
    %4 = vector.shape_cast %3 : vector<1x1x8x64xbf16> to vector<8x64xbf16>
    %c0_8 = arith.constant 0 : index
    %c64 = arith.constant 64 : index
    %5 = vector.load %arg9[%c0_8, %c64] : memref<8x256xbf16, #tpu.memory_space<vmem>>, vector<8x64xbf16>
    tpu.vector_store %arg9[%c0_8, %c64], %4 {strides = array<i32>} : memref<8x256xbf16, #tpu.memory_space<vmem>>, vector<8x64xbf16>,
    %c1_9 = arith.constant 1 : index
    %c0_10 = arith.constant 0 : index
    %c0_11 = arith.constant 0 : index
    %c0_12 = arith.constant 0 : index
    %6 = vector.load %arg0[%c1_9, %c0_10, %c0_11, %c0_12] : memref<2x2x8x64xbf16, #tpu.memory_space<vmem>>, vector<1x1x8x64xbf16>
    %7 = vector.shape_cast %6 : vector<1x1x8x64xbf16> to vector<8x64xbf16>
    %c0_13 = arith.constant 0 : index
    %c128 = arith.constant 128 : index
    %8 = vector.load %arg9[%c0_13, %c128] : memref<8x256xbf16, #tpu.memory_space<vmem>>, vector<8x64xbf16>
    tpu.vector_store %arg9[%c0_13, %c128], %7 {strides = array<i32>} : memref<8x256xbf16, #tpu.memory_space<vmem>>, vector<8x64xbf16>,
    %c1_14 = arith.constant 1 : index
    %c1_15 = arith.constant 1 : index
    %c0_16 = arith.constant 0 : index
    %c0_17 = arith.constant 0 : index
    %9 = vector.load %arg0[%c1_14, %c1_15, %c0_16, %c0_17] : memref<2x2x8x64xbf16, #tpu.memory_space<vmem>>, vector<1x1x8x64xbf16>
    %10 = vector.shape_cast %9 : vector<1x1x8x64xbf16> to vector<8x64xbf16>
    %c0_18 = arith.constant 0 : index
    %c192 = arith.constant 192 : index
    %11 = vector.load %arg9[%c0_18, %c192] : memref<8x256xbf16, #tpu.memory_space<vmem>>, vector<8x64xbf16>
    tpu.vector_store %arg9[%c0_18, %c192], %10 {strides = array<i32>} : memref<8x256xbf16, #tpu.memory_space<vmem>>, vector<8x64xbf16>,
    %c0_19 = arith.constant 0 : index
    %c0_20 = arith.constant 0 : index
    %12 = vector.load %arg9[%c0_19, %c0_20] : memref<8x256xbf16, #tpu.memory_space<vmem>>, vector<8x256xbf16>
    %c0_21 = arith.constant 0 : index
    %c0_22 = arith.constant 0 : index
    %13 = vector.load %arg1[%c0_21, %c0_22] : memref<256x64xbf16, #tpu.memory_space<vmem>>, vector<256x64xbf16>
    %cst = arith.constant dense<0.000000e+00> : vector<8x64xf32>
    %14 = tpu.matmul %12, %13, %cst {dimension_numbers = #tpu.dot_dimension_numbers<[1], [0], [0], [1], [0, 0, 1, 1], [], []>} : vector<8x256xbf16>, vector<256x64xbf16>, vector<8x64xf32> -> vector<8x64xf32>
    %cst_23 = arith.constant dense<0.000000e+00> : vector<64xf32>
    %15 = vector.multi_reduction <add>, %14, %cst_23 [0] : vector<8x64xf32> to vector<64xf32>
    %16 = vector.shape_cast %15 : vector<64xf32> to vector<1x64xf32>
    %cst_24 = arith.constant 8.000000e+00 : f32
    %17 = vector.broadcast %cst_24 : f32 to vector<1x64xf32>
    %18 = arith.divf %16, %17 : vector<1x64xf32>
    %19 = vector.broadcast %18 : vector<1x64xf32> to vector<8x64xf32>
    %20 = arith.subf %14, %19 : vector<8x64xf32>
    %21 = arith.mulf %20, %20 : vector<8x64xf32>
    %cst_25 = arith.constant dense<0.000000e+00> : vector<64xf32>
    %22 = vector.multi_reduction <add>, %21, %cst_25 [0] : vector<8x64xf32> to vector<64xf32>
    %23 = vector.shape_cast %22 : vector<64xf32> to vector<1x64xf32>
    %cst_26 = arith.constant 8.000000e+00 : f32
    %24 = vector.broadcast %cst_26 : f32 to vector<1x64xf32>
    %25 = arith.divf %23, %24 : vector<1x64xf32>
    %c0_27 = arith.constant 0 : index
    %c0_28 = arith.constant 0 : index
    %26 = vector.load %arg2[%c0_27, %c0_28] : memref<1x64xf32, #tpu.memory_space<vmem>>, vector<1x64xf32>
    %cst_29 = arith.constant 9.99999974E-6 : f32
    %27 = vector.broadcast %cst_29 : f32 to vector<1x64xf32>
    %28 = arith.addf %25, %27 : vector<1x64xf32>
    %29 = math.rsqrt %28 : vector<1x64xf32>
    %30 = arith.mulf %26, %29 : vector<1x64xf32>
    %c0_30 = arith.constant 0 : index
    %c0_31 = arith.constant 0 : index
    %31 = vector.load %arg3[%c0_30, %c0_31] : memref<1x64xf32, #tpu.memory_space<vmem>>, vector<1x64xf32>
    %32 = arith.mulf %18, %30 : vector<1x64xf32>
    %33 = arith.subf %31, %32 : vector<1x64xf32>
    %34 = vector.broadcast %30 : vector<1x64xf32> to vector<8x64xf32>
    %35 = arith.mulf %14, %34 : vector<8x64xf32>
    %36 = vector.broadcast %33 : vector<1x64xf32> to vector<8x64xf32>
    %37 = arith.addf %35, %36 : vector<8x64xf32>
    %cst_32 = arith.constant 0.000000e+00 : f32
    %38 = vector.broadcast %cst_32 : f32 to vector<8x64xf32>
    %39 = arith.maximumf %37, %38 : vector<8x64xf32>
    %40 = arith.truncf %39 : vector<8x64xf32> to vector<8x64xbf16>
    %c0_33 = arith.constant 0 : index
    %c0_34 = arith.constant 0 : index
    %41 = vector.load %arg10[%c0_33, %c0_34] : memref<8x64xbf16, #tpu.memory_space<vmem>>, vector<8x64xbf16>
    tpu.vector_store %arg10[%c0_33, %c0_34], %40 {strides = array<i32>} : memref<8x64xbf16, #tpu.memory_space<vmem>>, vector<8x64xbf16>,
    %c0_35 = arith.constant 0 : index
    %c0_36 = arith.constant 0 : index
    %42 = vector.load %arg10[%c0_35, %c0_36] : memref<8x64xbf16, #tpu.memory_space<vmem>>, vector<2x64xbf16>
    %c0_37 = arith.constant 0 : index
    %c0_38 = arith.constant 0 : index
    %43 = vector.load %arg11[%c0_37, %c0_38] : memref<2x256xbf16, #tpu.memory_space<vmem>>, vector<2x64xbf16>
    tpu.vector_store %arg11[%c0_37, %c0_38], %42 {strides = array<i32>} : memref<2x256xbf16, #tpu.memory_space<vmem>>, vector<2x64xbf16>,
    %c2 = arith.constant 2 : index
    %c0_39 = arith.constant 0 : index
    %44 = vector.load %arg10[%c2, %c0_39] : memref<8x64xbf16, #tpu.memory_space<vmem>>, vector<2x64xbf16>
    %c0_40 = arith.constant 0 : index
    %c64_41 = arith.constant 64 : index
    %45 = vector.load %arg11[%c0_40, %c64_41] : memref<2x256xbf16, #tpu.memory_space<vmem>>, vector<2x64xbf16>
    tpu.vector_store %arg11[%c0_40, %c64_41], %44 {strides = array<i32>} : memref<2x256xbf16, #tpu.memory_space<vmem>>, vector<2x64xbf16>,
    %c4 = arith.constant 4 : index
    %c0_42 = arith.constant 0 : index
    %46 = vector.load %arg10[%c4, %c0_42] : memref<8x64xbf16, #tpu.memory_space<vmem>>, vector<2x64xbf16>
    %c0_43 = arith.constant 0 : index
    %c128_44 = arith.constant 128 : index
    %47 = vector.load %arg11[%c0_43, %c128_44] : memref<2x256xbf16, #tpu.memory_space<vmem>>, vector<2x64xbf16>
    tpu.vector_store %arg11[%c0_43, %c128_44], %46 {strides = array<i32>} : memref<2x256xbf16, #tpu.memory_space<vmem>>, vector<2x64xbf16>,
    %c6 = arith.constant 6 : index
    %c0_45 = arith.constant 0 : index
    %48 = vector.load %arg10[%c6, %c0_45] : memref<8x64xbf16, #tpu.memory_space<vmem>>, vector<2x64xbf16>
    %c0_46 = arith.constant 0 : index
    %c192_47 = arith.constant 192 : index
    %49 = vector.load %arg11[%c0_46, %c192_47] : memref<2x256xbf16, #tpu.memory_space<vmem>>, vector<2x64xbf16>
    tpu.vector_store %arg11[%c0_46, %c192_47], %48 {strides = array<i32>} : memref<2x256xbf16, #tpu.memory_space<vmem>>, vector<2x64xbf16>,
    %c0_48 = arith.constant 0 : index
    %c0_49 = arith.constant 0 : index
    %50 = vector.load %arg11[%c0_48, %c0_49] : memref<2x256xbf16, #tpu.memory_space<vmem>>, vector<2x256xbf16>
    %c0_50 = arith.constant 0 : index
    %c0_51 = arith.constant 0 : index
    %51 = vector.load %arg4[%c0_50, %c0_51] : memref<256x128xbf16, #tpu.memory_space<vmem>>, vector<256x128xbf16>
    %cst_52 = arith.constant dense<0.000000e+00> : vector<2x128xf32>
    %52 = tpu.matmul %50, %51, %cst_52 {dimension_numbers = #tpu.dot_dimension_numbers<[1], [0], [0], [1], [0, 0, 1, 1], [], []>} : vector<2x256xbf16>, vector<256x128xbf16>, vector<2x128xf32> -> vector<2x128xf32>
    %c0_53 = arith.constant 0 : index
    %c0_54 = arith.constant 0 : index
    %53 = vector.load %arg5[%c0_53, %c0_54] : memref<1x128xf32, #tpu.memory_space<vmem>>, vector<1x128xf32>
    %54 = vector.broadcast %53 : vector<1x128xf32> to vector<2x128xf32>
    %55 = arith.addf %52, %54 : vector<2x128xf32>
    %56 = arith.truncf %55 : vector<2x128xf32> to vector<2x128xbf16>
    %c0_55 = arith.constant 0 : index
    %c0_56 = arith.constant 0 : index
    %57 = vector.load %arg6[%c0_55, %c0_56] : memref<128x128xbf16, #tpu.memory_space<vmem>>, vector<128x128xbf16>
    %cst_57 = arith.constant dense<0.000000e+00> : vector<2x128xf32>
    %58 = tpu.matmul %56, %57, %cst_57 {dimension_numbers = #tpu.dot_dimension_numbers<[1], [0], [0], [1], [0, 0, 1, 1], [], []>} : vector<2x128xbf16>, vector<128x128xbf16>, vector<2x128xf32> -> vector<2x128xf32>
    %c0_58 = arith.constant 0 : index
    %c0_59 = arith.constant 0 : index
    %59 = vector.load %arg7[%c0_58, %c0_59] : memref<1x128xf32, #tpu.memory_space<vmem>>, vector<1x128xf32>
    %60 = vector.broadcast %59 : vector<1x128xf32> to vector<2x128xf32>
    %61 = arith.addf %58, %60 : vector<2x128xf32>
    %c0_60 = arith.constant 0 : index
    %c0_61 = arith.constant 0 : index
    %62 = vector.load %arg8[%c0_60, %c0_61] : memref<2x128xf32, #tpu.memory_space<vmem>>, vector<2x128xf32>
    tpu.vector_store %arg8[%c0_60, %c0_61], %61 {strides = array<i32>} : memref<2x128xf32, #tpu.memory_space<vmem>>, vector<2x128xf32>,
    return
  }
}

</mosaic_0001>

<llo_original>
// kernel: cnnnet_forward.5
$region0: #{cnnnet_forward.5}
  #allocation0 [shape = 'u32[]', space=smem, size = 0x4, offset = 0x4, fixed_abs, tag = 'smem constant byte address 0x4 - core index']
  #allocation1 [shape = 'u32[144,128]{1,0:T(1,128)}', space=vmem, size = 0x12000, scoped, tag = 'internal scratch']
  #allocation2 [shape = 'bf16[112,144]{1,0:T(16,128)(2,1)}', space=vmem, size = 0xe000, scoped, tag = 'scratch operand']
  %s0 = inlined_call_operand.vmem [shape: bf16[2,2,144,16], index: 0, kind: input, shape index: {}]
  %s1 = inlined_call_operand.vmem [shape: bf16[144,32], index: 1, kind: input, shape index: {}]
  %s2 = inlined_call_operand.vmem [shape: f32[1,32], index: 2, kind: input, shape index: {}]
  %s3 = inlined_call_operand.vmem [shape: f32[1,32], index: 3, kind: input, shape index: {}]
  %s4 = inlined_call_operand.vmem [shape: f32[112,1], index: 4, kind: input, shape index: {}]
  %s5 = inlined_call_operand.vmem [shape: bf16[112,32], index: 5, kind: output, shape index: {}]
  %s6 = sld [smem:[#allocation0]]
  $region30: #{cnnnet_forward.5} parent=0
    _
  %s8 = ssub.s32 1, %s6
  %s9 = scalar_select 0, %s8, %s6
  // Predicated region
  $region2: #{cnnnet_forward.5} parent=0 // pred_check
    _
  $region3: #{cnnnet_forward.5} parent=0 // pred_check_branch
    %11 = sbr.rel (0) target = $region5
  $region4: #{cnnnet_forward.5} parent=0 // pred_region
    _
  $region5: #{cnnnet_forward.5} parent=0 // pred_fallthru
    _
  // Predicated region
  $region6: #{cnnnet_forward.5} parent=0 // pred_check
    _
  $region7: #{cnnnet_forward.5} parent=0 // pred_check_branch
    %13 = sbr.rel (0) target = $region9
  $region8: #{cnnnet_forward.5} parent=0 // pred_region
    _
  $region9: #{cnnnet_forward.5} parent=0 // pred_fallthru
    _
  // Predicated region
  $region10: #{cnnnet_forward.5} parent=0 // pred_check
    _
  $region11: #{cnnnet_forward.5} parent=0 // pred_check_branch
    %15 = sbr.rel (0) target = $region13
  $region12: #{cnnnet_forward.5} parent=0 // pred_region
    _
  $region13: #{cnnnet_forward.5} parent=0 // pred_fallthru
    _
  // Predicated region
  $region14: #{cnnnet_forward.5} parent=0 // pred_check
    _
  $region15: #{cnnnet_forward.5} parent=0 // pred_check_branch
    %17 = sbr.rel (0) target = $region17
  $region16: #{cnnnet_forward.5} parent=0 // pred_region
    _
  $region17: #{cnnnet_forward.5} parent=0 // pred_fallthru
    _
  // Predicated region
  $region18: #{cnnnet_forward.5} parent=0 // pred_check
    _
  $region19: #{cnnnet_forward.5} parent=0 // pred_check_branch
    %19 = sbr.rel (0) target = $region21
  $region20: #{cnnnet_forward.5} parent=0 // pred_region
    _
  $region21: #{cnnnet_forward.5} parent=0 // pred_fallthru
    _
  %v21 = vld [vmem:[%s0] sm:$0xf]
  %v22 = vld [vmem:[%s0 + $0x4] sm:$0xf]
  %v23 = vld [vmem:[%s0 + $0x8] sm:$0xf]
  %v24 = vld [vmem:[%s0 + $0xc] sm:$0xf]
  %v25 = vld [vmem:[%s0 + $0x10] sm:$0xf]
  %v26 = vld [vmem:[%s0 + $0x14] sm:$0xf]
  %v27 = vld [vmem:[%s0 + $0x18] sm:$0xf]
  %v28 = vld [vmem:[%s0 + $0x1c] sm:$0xf]
  %v29 = vld [vmem:[%s0 + $0x20] sm:$0xf]
  %v30 = vld [vmem:[%s0 + $0x24] sm:$0xf]
  %v31 = vld [vmem:[%s0 + $0x28] sm:$0xf]
  %v32 = vld [vmem:[%s0 + $0x2c] sm:$0xf]
  %v33 = vld [vmem:[%s0 + $0x30] sm:$0xf]
  %v34 = vld [vmem:[%s0 + $0x34] sm:$0xf]
  %v49 = vunpack.c.l.b16 %v21
  %v50 = vunpack.c.l.b16 %v22
  %v51 = vunpack.c.l.b16 %v23
  %v52 = vunpack.c.l.b16 %v24
  %v53 = vunpack.c.l.b16 %v25
  %v54 = vunpack.c.l.b16 %v26
  %v55 = vunpack.c.l.b16 %v27
  %v56 = vunpack.c.l.b16 %v28
  %v57 = vunpack.c.l.b16 %v29
  %v58 = vunpack.c.l.b16 %v30
  %v59 = vunpack.c.l.b16 %v31
  %v60 = vunpack.c.l.b16 %v32
  %v61 = vunpack.c.l.b16 %v33
  %v62 = vunpack.c.l.b16 %v34
  %v63 = vpack.c.b16 %v50, %v49
  %v64 = vpack.c.b16 %v52, %v51
  %v65 = vpack.c.b16 %v54, %v53
  %v66 = vpack.c.b16 %v56, %v55
  %v67 = vpack.c.b16 %v58, %v57
  %v68 = vpack.c.b16 %v60, %v59
  %v69 = vpack.c.b16 %v62, %v61
  %vm77 = vcmask 130048
  %78 = vst.msk [vmem:[#allocation2] sm:$0xff] %vm77, %v63
  %79 = vst.msk [vmem:[#allocation2 + $0x10] sm:$0xff] %vm77, %v64
  %80 = vst.msk [vmem:[#allocation2 + $0x20] sm:$0xff] %vm77, %v65
  %81 = vst.msk [vmem:[#allocation2 + $0x30] sm:$0xff] %vm77, %v66
  %82 = vst.msk [vmem:[#allocation2 + $0x40] sm:$0xff] %vm77, %v67
  %83 = vst.msk [vmem:[#allocation2 + $0x50] sm:$0xff] %vm77, %v68
  %84 = vst.msk [vmem:[#allocation2 + $0x60] sm:$0xff] %vm77, %v69
  %s85 = scalar_lea.vmem %s0, 72
  %v86 = vld [vmem:[%s85] sm:$0xf]
  %v87 = vld [vmem:[%s85 + $0x4] sm:$0xf]
  %v88 = vld [vmem:[%s85 + $0x8] sm:$0xf]
  %v89 = vld [vmem:[%s85 + $0xc] sm:$0xf]
  %v90 = vld [vmem:[%s85 + $0x10] sm:$0xf]
  %v91 = vld [vmem:[%s85 + $0x14] sm:$0xf]
  %v92 = vld [vmem:[%s85 + $0x18] sm:$0xf]
  %v93 = vld [vmem:[%s85 + $0x1c] sm:$0xf]
  %v94 = vld [vmem:[%s85 + $0x20] sm:$0xf]
  %v95 = vld [vmem:[%s85 + $0x24] sm:$0xf]
  %v96 = vld [vmem:[%s85 + $0x28] sm:$0xf]
  %v97 = vld [vmem:[%s85 + $0x2c] sm:$0xf]
  %v98 = vld [vmem:[%s85 + $0x30] sm:$0xf]
  %v99 = vld [vmem:[%s85 + $0x34] sm:$0xf]
  %v114 = vunpack.c.l.b16 %v86
  %v115 = vunpack.c.l.b16 %v87
  %v116 = vunpack.c.l.b16 %v88
  %v117 = vunpack.c.l.b16 %v89
  %v118 = vunpack.c.l.b16 %v90
  %v119 = vunpack.c.l.b16 %v91
  %v120 = vunpack.c.l.b16 %v92
  %v121 = vunpack.c.l.b16 %v93
  %v122 = vunpack.c.l.b16 %v94
  %v123 = vunpack.c.l.b16 %v95
  %v124 = vunpack.c.l.b16 %v96
  %v125 = vunpack.c.l.b16 %v97
  %v126 = vunpack.c.l.b16 %v98
  %v127 = vunpack.c.l.b16 %v99
  %v128 = vpack.c.b16 %v115, %v114
  %v129 = vpack.c.b16 %v117, %v116
  %v130 = vpack.c.b16 %v119, %v118
  %v131 = vpack.c.b16 %v121, %v120
  %v132 = vpack.c.b16 %v123, %v122
  %v133 = vpack.c.b16 %v125, %v124
  %v134 = vpack.c.b16 %v127, %v126
  %135 = vrot.lane.b32.xlu0 %v128, 16
  %v136 = vpop.permute.xlu0 %135
  %137 = vrot.lane.b32.xlu0 %v129, 16
  %v138 = vpop.permute.xlu0 %137
  %139 = vrot.lane.b32.xlu0 %v130, 16
  %v140 = vpop.permute.xlu0 %139
  %141 = vrot.lane.b32.xlu0 %v131, 16
  %v142 = vpop.permute.xlu0 %141
  %143 = vrot.lane.b32.xlu0 %v132, 16
  %v144 = vpop.permute.xlu0 %143
  %145 = vrot.lane.b32.xlu0 %v133, 16
  %v146 = vpop.permute.xlu0 %145
  %147 = vrot.lane.b32.xlu0 %v134, 16
  %v148 = vpop.permute.xlu0 %147
  %vm156 = vcmask 261248
  %157 = vst.msk [vmem:[#allocation2] sm:$0xff] %vm156, %v136
  %158 = vst.msk [vmem:[#allocation2 + $0x10] sm:$0xff] %vm156, %v138
  %159 = vst.msk [vmem:[#allocation2 + $0x20] sm:$0xff] %vm156, %v140
  %160 = vst.msk [vmem:[#allocation2 + $0x30] sm:$0xff] %vm156, %v142
  %161 = vst.msk [vmem:[#allocation2 + $0x40] sm:$0xff] %vm156, %v144
  %162 = vst.msk [vmem:[#allocation2 + $0x50] sm:$0xff] %vm156, %v146
  %163 = vst.msk [vmem:[#allocation2 + $0x60] sm:$0xff] %vm156, %v148
  %v164 = vld [vmem:[%s0] sm:$0xe]
  %v165 = vld [vmem:[%s0 + $0x4] sm:$0xf]
  %v166 = vld [vmem:[%s0 + $0x8] sm:$0xf]
  %v167 = vld [vmem:[%s0 + $0xc] sm:$0xf]
  %v168 = vld [vmem:[%s0 + $0x10] sm:$0xf]
  %v169 = vld [vmem:[%s0 + $0x14] sm:$0xf]
  %v170 = vld [vmem:[%s0 + $0x18] sm:$0xf]
  %v171 = vld [vmem:[%s0 + $0x1c] sm:$0xf]
  %v172 = vld [vmem:[%s0 + $0x20] sm:$0xf]
  %v173 = vld [vmem:[%s0 + $0x24] sm:$0xf]
  %v174 = vld [vmem:[%s0 + $0x28] sm:$0xf]
  %v175 = vld [vmem:[%s0 + $0x2c] sm:$0xf]
  %v176 = vld [vmem:[%s0 + $0x30] sm:$0xf]
  %v177 = vld [vmem:[%s0 + $0x34] sm:$0xf]
  %v178 = vld [vmem:[%s0 + $0x38] sm:$0x1]
  %v194 = vunpack.c.l.b16 %v164
  %v195 = vunpack.c.l.b16 %v165
  %v196 = vunpack.c.l.b16 %v166
  %v197 = vunpack.c.l.b16 %v167
  %v198 = vunpack.c.l.b16 %v168
  %v199 = vunpack.c.l.b16 %v169
  %v200 = vunpack.c.l.b16 %v170
  %v201 = vunpack.c.l.b16 %v171
  %v202 = vunpack.c.l.b16 %v172
  %v203 = vunpack.c.l.b16 %v173
  %v204 = vunpack.c.l.b16 %v174
  %v205 = vunpack.c.l.b16 %v175
  %v206 = vunpack.c.l.b16 %v176
  %v207 = vunpack.c.l.b16 %v177
  %v208 = vunpack.c.l.b16 %v178
  %v209 = vpack.c.b16 %v195, %v194
  %v210 = vpack.c.b16 %v197, %v196
  %v211 = vpack.c.b16 %v199, %v198
  %v212 = vpack.c.b16 %v201, %v200
  %v213 = vpack.c.b16 %v203, %v202
  %v214 = vpack.c.b16 %v205, %v204
  %v215 = vpack.c.b16 %v207, %v206
  %v216 = vpack.c.b16 %v208, %v208
  %vm217 = vcmask 1046528
  %v218 = vrot.slane %v209, 1
  %v219 = vrot.slane %v210, 1
  %v220 = vsel %vm217, %v218, %v219
  %v221 = vrot.slane %v211, 1
  %v222 = vsel %vm217, %v219, %v221
  %v223 = vrot.slane %v212, 1
  %v224 = vsel %vm217, %v221, %v223
  %v225 = vrot.slane %v213, 1
  %v226 = vsel %vm217, %v223, %v225
  %v227 = vrot.slane %v214, 1
  %v228 = vsel %vm217, %v225, %v227
  %v229 = vrot.slane %v215, 1
  %v230 = vsel %vm217, %v227, %v229
  %v231 = vrot.slane %v216, 1
  %v232 = vsel %vm217, %v229, %v231
  %233 = vrot.lane.b32.xlu0 %v220, 32
  %v234 = vpop.permute.xlu0 %233
  %235 = vrot.lane.b32.xlu0 %v222, 32
  %v236 = vpop.permute.xlu0 %235
  %237 = vrot.lane.b32.xlu0 %v224, 32
  %v238 = vpop.permute.xlu0 %237
  %239 = vrot.lane.b32.xlu0 %v226, 32
  %v240 = vpop.permute.xlu0 %239
  %241 = vrot.lane.b32.xlu0 %v228, 32
  %v242 = vpop.permute.xlu0 %241
  %243 = vrot.lane.b32.xlu0 %v230, 32
  %v244 = vpop.permute.xlu0 %243
  %245 = vrot.lane.b32.xlu0 %v232, 32
  %v246 = vpop.permute.xlu0 %245
  %vm254 = vcmask 392448
  %255 = vst.msk [vmem:[#allocation2] sm:$0xff] %vm254, %v234
  %256 = vst.msk [vmem:[#allocation2 + $0x10] sm:$0xff] %vm254, %v236
  %257 = vst.msk [vmem:[#allocation2 + $0x20] sm:$0xff] %vm254, %v238
  %258 = vst.msk [vmem:[#allocation2 + $0x30] sm:$0xff] %vm254, %v240
  %259 = vst.msk [vmem:[#allocation2 + $0x40] sm:$0xff] %vm254, %v242
  %260 = vst.msk [vmem:[#allocation2 + $0x50] sm:$0xff] %vm254, %v244
  %261 = vst.msk [vmem:[#allocation2 + $0x60] sm:$0xff] %vm254, %v246
  %s262 = scalar_lea.vmem %s0, 144
  %v263 = vld [vmem:[%s262] sm:$0xf]
  %v264 = vld [vmem:[%s262 + $0x4] sm:$0xf]
  %v265 = vld [vmem:[%s262 + $0x8] sm:$0xf]
  %v266 = vld [vmem:[%s262 + $0xc] sm:$0xf]
  %v267 = vld [vmem:[%s262 + $0x10] sm:$0xf]
  %v268 = vld [vmem:[%s262 + $0x14] sm:$0xf]
  %v269 = vld [vmem:[%s262 + $0x18] sm:$0xf]
  %v270 = vld [vmem:[%s262 + $0x1c] sm:$0xf]
  %v271 = vld [vmem:[%s262 + $0x20] sm:$0xf]
  %v272 = vld [vmem:[%s262 + $0x24] sm:$0xf]
  %v273 = vld [vmem:[%s262 + $0x28] sm:$0xf]
  %v274 = vld [vmem:[%s262 + $0x2c] sm:$0xf]
  %v275 = vld [vmem:[%s262 + $0x30] sm:$0xf]
  %v276 = vld [vmem:[%s262 + $0x34] sm:$0xf]
  %v291 = vunpack.c.l.b16 %v263
  %v292 = vunpack.c.l.b16 %v264
  %v293 = vunpack.c.l.b16 %v265
  %v294 = vunpack.c.l.b16 %v266
  %v295 = vunpack.c.l.b16 %v267
  %v296 = vunpack.c.l.b16 %v268
  %v297 = vunpack.c.l.b16 %v269
  %v298 = vunpack.c.l.b16 %v270
  %v299 = vunpack.c.l.b16 %v271
  %v300 = vunpack.c.l.b16 %v272
  %v301 = vunpack.c.l.b16 %v273
  %v302 = vunpack.c.l.b16 %v274
  %v303 = vunpack.c.l.b16 %v275
  %v304 = vunpack.c.l.b16 %v276
  %v305 = vpack.c.b16 %v292, %v291
  %v306 = vpack.c.b16 %v294, %v293
  %v307 = vpack.c.b16 %v296, %v295
  %v308 = vpack.c.b16 %v298, %v297
  %v309 = vpack.c.b16 %v300, %v299
  %v310 = vpack.c.b16 %v302, %v301
  %v311 = vpack.c.b16 %v304, %v303
  %312 = vrot.lane.b32.xlu0 %v305, 48
  %v313 = vpop.permute.xlu0 %312
  %314 = vrot.lane.b32.xlu0 %v306, 48
  %v315 = vpop.permute.xlu0 %314
  %316 = vrot.lane.b32.xlu0 %v307, 48
  %v317 = vpop.permute.xlu0 %316
  %318 = vrot.lane.b32.xlu0 %v308, 48
  %v319 = vpop.permute.xlu0 %318
  %320 = vrot.lane.b32.xlu0 %v309, 48
  %v321 = vpop.permute.xlu0 %320
  %322 = vrot.lane.b32.xlu0 %v310, 48
  %v323 = vpop.permute.xlu0 %322
  %324 = vrot.lane.b32.xlu0 %v311, 48
  %v325 = vpop.permute.xlu0 %324
  %vm333 = vcmask 523648
  %334 = vst.msk [vmem:[#allocation2] sm:$0xff] %vm333, %v313
  %335 = vst.msk [vmem:[#allocation2 + $0x10] sm:$0xff] %vm333, %v315
  %336 = vst.msk [vmem:[#allocation2 + $0x20] sm:$0xff] %vm333, %v317
  %337 = vst.msk [vmem:[#allocation2 + $0x30] sm:$0xff] %vm333, %v319
  %338 = vst.msk [vmem:[#allocation2 + $0x40] sm:$0xff] %vm333, %v321
  %339 = vst.msk [vmem:[#allocation2 + $0x50] sm:$0xff] %vm333, %v323
  %340 = vst.msk [vmem:[#allocation2 + $0x60] sm:$0xff] %vm333, %v325
  %s341 = scalar_lea.vmem %s0, 216
  %v342 = vld [vmem:[%s341] sm:$0xf]
  %v343 = vld [vmem:[%s341 + $0x4] sm:$0xf]
  %v344 = vld [vmem:[%s341 + $0x8] sm:$0xf]
  %v345 = vld [vmem:[%s341 + $0xc] sm:$0xf]
  %v346 = vld [vmem:[%s341 + $0x10] sm:$0xf]
  %v347 = vld [vmem:[%s341 + $0x14] sm:$0xf]
  %v348 = vld [vmem:[%s341 + $0x18] sm:$0xf]
  %v349 = vld [vmem:[%s341 + $0x1c] sm:$0xf]
  %v350 = vld [vmem:[%s341 + $0x20] sm:$0xf]
  %v351 = vld [vmem:[%s341 + $0x24] sm:$0xf]
  %v352 = vld [vmem:[%s341 + $0x28] sm:$0xf]
  %v353 = vld [vmem:[%s341 + $0x2c] sm:$0xf]
  %v354 = vld [vmem:[%s341 + $0x30] sm:$0xf]
  %v355 = vld [vmem:[%s341 + $0x34] sm:$0xf]
  %v370 = vunpack.c.l.b16 %v342
  %v371 = vunpack.c.l.b16 %v343
  %v372 = vunpack.c.l.b16 %v344
  %v373 = vunpack.c.l.b16 %v345
  %v374 = vunpack.c.l.b16 %v346
  %v375 = vunpack.c.l.b16 %v347
  %v376 = vunpack.c.l.b16 %v348
  %v377 = vunpack.c.l.b16 %v349
  %v378 = vunpack.c.l.b16 %v350
  %v379 = vunpack.c.l.b16 %v351
  %v380 = vunpack.c.l.b16 %v352
  %v381 = vunpack.c.l.b16 %v353
  %v382 = vunpack.c.l.b16 %v354
  %v383 = vunpack.c.l.b16 %v355
  %v384 = vpack.c.b16 %v371, %v370
  %v385 = vpack.c.b16 %v373, %v372
  %v386 = vpack.c.b16 %v375, %v374
  %v387 = vpack.c.b16 %v377, %v376
  %v388 = vpack.c.b16 %v379, %v378
  %v389 = vpack.c.b16 %v381, %v380
  %v390 = vpack.c.b16 %v383, %v382
  %391 = vrot.lane.b32.xlu0 %v384, 64
  %v392 = vpop.permute.xlu0 %391
  %393 = vrot.lane.b32.xlu0 %v385, 64
  %v394 = vpop.permute.xlu0 %393
  %395 = vrot.lane.b32.xlu0 %v386, 64
  %v396 = vpop.permute.xlu0 %395
  %397 = vrot.lane.b32.xlu0 %v387, 64
  %v398 = vpop.permute.xlu0 %397
  %399 = vrot.lane.b32.xlu0 %v388, 64
  %v400 = vpop.permute.xlu0 %399
  %401 = vrot.lane.b32.xlu0 %v389, 64
  %v402 = vpop.permute.xlu0 %401
  %403 = vrot.lane.b32.xlu0 %v390, 64
  %v404 = vpop.permute.xlu0 %403
  %vm412 = vcmask 654848
  %413 = vst.msk [vmem:[#allocation2] sm:$0xff] %vm412, %v392
  %414 = vst.msk [vmem:[#allocation2 + $0x10] sm:$0xff] %vm412, %v394
  %415 = vst.msk [vmem:[#allocation2 + $0x20] sm:$0xff] %vm412, %v396
  %416 = vst.msk [vmem:[#allocation2 + $0x30] sm:$0xff] %vm412, %v398
  %417 = vst.msk [vmem:[#allocation2 + $0x40] sm:$0xff] %vm412, %v400
  %418 = vst.msk [vmem:[#allocation2 + $0x50] sm:$0xff] %vm412, %v402
  %419 = vst.msk [vmem:[#allocation2 + $0x60] sm:$0xff] %vm412, %v404
  %v420 = vld [vmem:[%s262] sm:$0xe]
  %v421 = vld [vmem:[%s262 + $0x4] sm:$0xf]
  %v422 = vld [vmem:[%s262 + $0x8] sm:$0xf]
  %v423 = vld [vmem:[%s262 + $0xc] sm:$0xf]
  %v424 = vld [vmem:[%s262 + $0x10] sm:$0xf]
  %v425 = vld [vmem:[%s262 + $0x14] sm:$0xf]
  %v426 = vld [vmem:[%s262 + $0x18] sm:$0xf]
  %v427 = vld [vmem:[%s262 + $0x1c] sm:$0xf]
  %v428 = vld [vmem:[%s262 + $0x20] sm:$0xf]
  %v429 = vld [vmem:[%s262 + $0x24] sm:$0xf]
  %v430 = vld [vmem:[%s262 + $0x28] sm:$0xf]
  %v431 = vld [vmem:[%s262 + $0x2c] sm:$0xf]
  %v432 = vld [vmem:[%s262 + $0x30] sm:$0xf]
  %v433 = vld [vmem:[%s262 + $0x34] sm:$0xf]
  %v434 = vld [vmem:[%s262 + $0x38] sm:$0x1]
  %v450 = vunpack.c.l.b16 %v420
  %v451 = vunpack.c.l.b16 %v421
  %v452 = vunpack.c.l.b16 %v422
  %v453 = vunpack.c.l.b16 %v423
  %v454 = vunpack.c.l.b16 %v424
  %v455 = vunpack.c.l.b16 %v425
  %v456 = vunpack.c.l.b16 %v426
  %v457 = vunpack.c.l.b16 %v427
  %v458 = vunpack.c.l.b16 %v428
  %v459 = vunpack.c.l.b16 %v429
  %v460 = vunpack.c.l.b16 %v430
  %v461 = vunpack.c.l.b16 %v431
  %v462 = vunpack.c.l.b16 %v432
  %v463 = vunpack.c.l.b16 %v433
  %v464 = vunpack.c.l.b16 %v434
  %v465 = vpack.c.b16 %v451, %v450
  %v466 = vpack.c.b16 %v453, %v452
  %v467 = vpack.c.b16 %v455, %v454
  %v468 = vpack.c.b16 %v457, %v456
  %v469 = vpack.c.b16 %v459, %v458
  %v470 = vpack.c.b16 %v461, %v460
  %v471 = vpack.c.b16 %v463, %v462
  %v472 = vpack.c.b16 %v464, %v464
  %v473 = vrot.slane %v465, 1
  %v474 = vrot.slane %v466, 1
  %v475 = vsel %vm217, %v473, %v474
  %v476 = vrot.slane %v467, 1
  %v477 = vsel %vm217, %v474, %v476
  %v478 = vrot.slane %v468, 1
  %v479 = vsel %vm217, %v476, %v478
  %v480 = vrot.slane %v469, 1
  %v481 = vsel %vm217, %v478, %v480
  %v482 = vrot.slane %v470, 1
  %v483 = vsel %vm217, %v480, %v482
  %v484 = vrot.slane %v471, 1
  %v485 = vsel %vm217, %v482, %v484
  %v486 = vrot.slane %v472, 1
  %v487 = vsel %vm217, %v484, %v486
  %488 = vrot.lane.b32.xlu0 %v475, 80
  %v489 = vpop.permute.xlu0 %488
  %490 = vrot.lane.b32.xlu0 %v477, 80
  %v491 = vpop.permute.xlu0 %490
  %492 = vrot.lane.b32.xlu0 %v479, 80
  %v493 = vpop.permute.xlu0 %492
  %494 = vrot.lane.b32.xlu0 %v481, 80
  %v495 = vpop.permute.xlu0 %494
  %496 = vrot.lane.b32.xlu0 %v483, 80
  %v497 = vpop.permute.xlu0 %496
  %498 = vrot.lane.b32.xlu0 %v485, 80
  %v499 = vpop.permute.xlu0 %498
  %500 = vrot.lane.b32.xlu0 %v487, 80
  %v501 = vpop.permute.xlu0 %500
  %vm509 = vcmask 786048
  %510 = vst.msk [vmem:[#allocation2] sm:$0xff] %vm509, %v489
  %511 = vst.msk [vmem:[#allocation2 + $0x10] sm:$0xff] %vm509, %v491
  %512 = vst.msk [vmem:[#allocation2 + $0x20] sm:$0xff] %vm509, %v493
  %513 = vst.msk [vmem:[#allocation2 + $0x30] sm:$0xff] %vm509, %v495
  %514 = vst.msk [vmem:[#allocation2 + $0x40] sm:$0xff] %vm509, %v497
  %515 = vst.msk [vmem:[#allocation2 + $0x50] sm:$0xff] %vm509, %v499
  %516 = vst.msk [vmem:[#allocation2 + $0x60] sm:$0xff] %vm509, %v501
  %v517 = vld [vmem:[%s0 + $0x8] sm:$0xf]
  %v518 = vld [vmem:[%s0 + $0xc] sm:$0xf]
  %v519 = vld [vmem:[%s0 + $0x10] sm:$0xf]
  %v520 = vld [vmem:[%s0 + $0x14] sm:$0xf]
  %v521 = vld [vmem:[%s0 + $0x18] sm:$0xf]
  %v522 = vld [vmem:[%s0 + $0x1c] sm:$0xf]
  %v523 = vld [vmem:[%s0 + $0x20] sm:$0xf]
  %v524 = vld [vmem:[%s0 + $0x24] sm:$0xf]
  %v525 = vld [vmem:[%s0 + $0x28] sm:$0xf]
  %v526 = vld [vmem:[%s0 + $0x2c] sm:$0xf]
  %v527 = vld [vmem:[%s0 + $0x30] sm:$0xf]
  %v528 = vld [vmem:[%s0 + $0x34] sm:$0xf]
  %v529 = vld [vmem:[%s0 + $0x38] sm:$0xf]
  %v530 = vld [vmem:[%s0 + $0x3c] sm:$0xf]
  %v545 = vunpack.c.l.b16 %v517
  %v546 = vunpack.c.l.b16 %v518
  %v547 = vunpack.c.l.b16 %v519
  %v548 = vunpack.c.l.b16 %v520
  %v549 = vunpack.c.l.b16 %v521
  %v550 = vunpack.c.l.b16 %v522
  %v551 = vunpack.c.l.b16 %v523
  %v552 = vunpack.c.l.b16 %v524
  %v553 = vunpack.c.l.b16 %v525
  %v554 = vunpack.c.l.b16 %v526
  %v555 = vunpack.c.l.b16 %v527
  %v556 = vunpack.c.l.b16 %v528
  %v557 = vunpack.c.l.b16 %v529
  %v558 = vunpack.c.l.b16 %v530
  %v559 = vpack.c.b16 %v546, %v545
  %v560 = vpack.c.b16 %v548, %v547
  %v561 = vpack.c.b16 %v550, %v549
  %v562 = vpack.c.b16 %v552, %v551
  %v563 = vpack.c.b16 %v554, %v553
  %v564 = vpack.c.b16 %v556, %v555
  %v565 = vpack.c.b16 %v558, %v557
  %566 = vrot.lane.b32.xlu0 %v559, 96
  %v567 = vpop.permute.xlu0 %566
  %568 = vrot.lane.b32.xlu0 %v560, 96
  %v569 = vpop.permute.xlu0 %568
  %570 = vrot.lane.b32.xlu0 %v561, 96
  %v571 = vpop.permute.xlu0 %570
  %572 = vrot.lane.b32.xlu0 %v562, 96
  %v573 = vpop.permute.xlu0 %572
  %574 = vrot.lane.b32.xlu0 %v563, 96
  %v575 = vpop.permute.xlu0 %574
  %576 = vrot.lane.b32.xlu0 %v564, 96
  %v577 = vpop.permute.xlu0 %576
  %578 = vrot.lane.b32.xlu0 %v565, 96
  %v579 = vpop.permute.xlu0 %578
  %vm587 = vcmask 917248
  %588 = vst.msk [vmem:[#allocation2] sm:$0xff] %vm587, %v567
  %589 = vst.msk [vmem:[#allocation2 + $0x10] sm:$0xff] %vm587, %v569
  %590 = vst.msk [vmem:[#allocation2 + $0x20] sm:$0xff] %vm587, %v571
  %591 = vst.msk [vmem:[#allocation2 + $0x30] sm:$0xff] %vm587, %v573
  %592 = vst.msk [vmem:[#allocation2 + $0x40] sm:$0xff] %vm587, %v575
  %593 = vst.msk [vmem:[#allocation2 + $0x50] sm:$0xff] %vm587, %v577
  %594 = vst.msk [vmem:[#allocation2 + $0x60] sm:$0xff] %vm587, %v579
  %v595 = vld [vmem:[%s85 + $0x8] sm:$0xf]
  %v596 = vld [vmem:[%s85 + $0xc] sm:$0xf]
  %v597 = vld [vmem:[%s85 + $0x10] sm:$0xf]
  %v598 = vld [vmem:[%s85 + $0x14] sm:$0xf]
  %v599 = vld [vmem:[%s85 + $0x18] sm:$0xf]
  %v600 = vld [vmem:[%s85 + $0x1c] sm:$0xf]
  %v601 = vld [vmem:[%s85 + $0x20] sm:$0xf]
  %v602 = vld [vmem:[%s85 + $0x24] sm:$0xf]
  %v603 = vld [vmem:[%s85 + $0x28] sm:$0xf]
  %v604 = vld [vmem:[%s85 + $0x2c] sm:$0xf]
  %v605 = vld [vmem:[%s85 + $0x30] sm:$0xf]
  %v606 = vld [vmem:[%s85 + $0x34] sm:$0xf]
  %v607 = vld [vmem:[%s85 + $0x38] sm:$0xf]
  %v608 = vld [vmem:[%s85 + $0x3c] sm:$0xf]
  %v623 = vunpack.c.l.b16 %v595
  %v624 = vunpack.c.l.b16 %v596
  %v625 = vunpack.c.l.b16 %v597
  %v626 = vunpack.c.l.b16 %v598
  %v627 = vunpack.c.l.b16 %v599
  %v628 = vunpack.c.l.b16 %v600
  %v629 = vunpack.c.l.b16 %v601
  %v630 = vunpack.c.l.b16 %v602
  %v631 = vunpack.c.l.b16 %v603
  %v632 = vunpack.c.l.b16 %v604
  %v633 = vunpack.c.l.b16 %v605
  %v634 = vunpack.c.l.b16 %v606
  %v635 = vunpack.c.l.b16 %v607
  %v636 = vunpack.c.l.b16 %v608
  %v637 = vpack.c.b16 %v624, %v623
  %v638 = vpack.c.b16 %v626, %v625
  %v639 = vpack.c.b16 %v628, %v627
  %v640 = vpack.c.b16 %v630, %v629
  %v641 = vpack.c.b16 %v632, %v631
  %v642 = vpack.c.b16 %v634, %v633
  %v643 = vpack.c.b16 %v636, %v635
  %644 = vrot.lane.b32.xlu0 %v637, 112
  %v645 = vpop.permute.xlu0 %644
  %646 = vrot.lane.b32.xlu0 %v638, 112
  %v647 = vpop.permute.xlu0 %646
  %648 = vrot.lane.b32.xlu0 %v639, 112
  %v649 = vpop.permute.xlu0 %648
  %650 = vrot.lane.b32.xlu0 %v640, 112
  %v651 = vpop.permute.xlu0 %650
  %652 = vrot.lane.b32.xlu0 %v641, 112
  %v653 = vpop.permute.xlu0 %652
  %654 = vrot.lane.b32.xlu0 %v642, 112
  %v655 = vpop.permute.xlu0 %654
  %656 = vrot.lane.b32.xlu0 %v643, 112
  %v657 = vpop.permute.xlu0 %656
  %vm665 = vcmask 1048448
  %666 = vst.msk [vmem:[#allocation2] sm:$0xff] %vm665, %v645
  %667 = vst.msk [vmem:[#allocation2 + $0x10] sm:$0xff] %vm665, %v647
  %668 = vst.msk [vmem:[#allocation2 + $0x20] sm:$0xff] %vm665, %v649
  %669 = vst.msk [vmem:[#allocation2 + $0x30] sm:$0xff] %vm665, %v651
  %670 = vst.msk [vmem:[#allocation2 + $0x40] sm:$0xff] %vm665, %v653
  %671 = vst.msk [vmem:[#allocation2 + $0x50] sm:$0xff] %vm665, %v655
  %672 = vst.msk [vmem:[#allocation2 + $0x60] sm:$0xff] %vm665, %v657
  %v673 = vld [vmem:[%s0 + $0x8] sm:$0xe]
  %v674 = vld [vmem:[%s0 + $0xc] sm:$0xf]
  %v675 = vld [vmem:[%s0 + $0x10] sm:$0xf]
  %v676 = vld [vmem:[%s0 + $0x14] sm:$0xf]
  %v677 = vld [vmem:[%s0 + $0x18] sm:$0xf]
  %v678 = vld [vmem:[%s0 + $0x1c] sm:$0xf]
  %v679 = vld [vmem:[%s0 + $0x20] sm:$0xf]
  %v680 = vld [vmem:[%s0 + $0x24] sm:$0xf]
  %v681 = vld [vmem:[%s0 + $0x28] sm:$0xf]
  %v682 = vld [vmem:[%s0 + $0x2c] sm:$0xf]
  %v683 = vld [vmem:[%s0 + $0x30] sm:$0xf]
  %v684 = vld [vmem:[%s0 + $0x34] sm:$0xf]
  %v685 = vld [vmem:[%s0 + $0x38] sm:$0xf]
  %v686 = vld [vmem:[%s0 + $0x3c] sm:$0xf]
  %v687 = vld [vmem:[%s0 + $0x40] sm:$0x1]
  %v703 = vunpack.c.l.b16 %v673
  %v704 = vunpack.c.l.b16 %v674
  %v705 = vunpack.c.l.b16 %v675
  %v706 = vunpack.c.l.b16 %v676
  %v707 = vunpack.c.l.b16 %v677
  %v708 = vunpack.c.l.b16 %v678
  %v709 = vunpack.c.l.b16 %v679
  %v710 = vunpack.c.l.b16 %v680
  %v711 = vunpack.c.l.b16 %v681
  %v712 = vunpack.c.l.b16 %v682
  %v713 = vunpack.c.l.b16 %v683
  %v714 = vunpack.c.l.b16 %v684
  %v715 = vunpack.c.l.b16 %v685
  %v716 = vunpack.c.l.b16 %v686
  %v717 = vunpack.c.l.b16 %v687
  %v718 = vpack.c.b16 %v704, %v703
  %v719 = vpack.c.b16 %v706, %v705
  %v720 = vpack.c.b16 %v708, %v707
  %v721 = vpack.c.b16 %v710, %v709
  %v722 = vpack.c.b16 %v712, %v711
  %v723 = vpack.c.b16 %v714, %v713
  %v724 = vpack.c.b16 %v716, %v715
  %v725 = vpack.c.b16 %v717, %v717
  %v726 = vrot.slane %v718, 1
  %v727 = vrot.slane %v719, 1
  %v728 = vsel %vm217, %v726, %v727
  %v729 = vrot.slane %v720, 1
  %v730 = vsel %vm217, %v727, %v729
  %v731 = vrot.slane %v721, 1
  %v732 = vsel %vm217, %v729, %v731
  %v733 = vrot.slane %v722, 1
  %v734 = vsel %vm217, %v731, %v733
  %v735 = vrot.slane %v723, 1
  %v736 = vsel %vm217, %v733, %v735
  %v737 = vrot.slane %v724, 1
  %v738 = vsel %vm217, %v735, %v737
  %v739 = vrot.slane %v725, 1
  %v740 = vsel %vm217, %v737, %v739
  %748 = vst.msk [vmem:[#allocation2 + $0x8] sm:$0xff] %vm77, %v728
  %749 = vst.msk [vmem:[#allocation2 + $0x18] sm:$0xff] %vm77, %v730
  %750 = vst.msk [vmem:[#allocation2 + $0x28] sm:$0xff] %vm77, %v732
  %751 = vst.msk [vmem:[#allocation2 + $0x38] sm:$0xff] %vm77, %v734
  %752 = vst.msk [vmem:[#allocation2 + $0x48] sm:$0xff] %vm77, %v736
  %753 = vst.msk [vmem:[#allocation2 + $0x58] sm:$0xff] %vm77, %v738
  %754 = vst.msk [vmem:[#allocation2 + $0x68] sm:$0xff] %vm77, %v740
  %v755 = vld [vmem:[#allocation2] sm:$0xff]
  %v756 = vld [vmem:[#allocation2 + $0x8] sm:$0xff]
  %v757 = vld [vmem:[#allocation2 + $0x10] sm:$0xff]
  %v758 = vld [vmem:[#allocation2 + $0x18] sm:$0xff]
  %v759 = vld [vmem:[#allocation2 + $0x20] sm:$0xff]
  %v760 = vld [vmem:[#allocation2 + $0x28] sm:$0xff]
  %v761 = vld [vmem:[#allocation2 + $0x30] sm:$0xff]
  %v762 = vld [vmem:[#allocation2 + $0x38] sm:$0xff]
  %v763 = vld [vmem:[#allocation2 + $0x40] sm:$0xff]
  %v764 = vld [vmem:[#allocation2 + $0x48] sm:$0xff]
  %v765 = vld [vmem:[#allocation2 + $0x50] sm:$0xff]
  %v766 = vld [vmem:[#allocation2 + $0x58] sm:$0xff]
  %v767 = vld [vmem:[#allocation2 + $0x60] sm:$0xff]
  %v768 = vld [vmem:[#allocation2 + $0x68] sm:$0xff]
  %v769 = vld [vmem:[%s1] sm:$0xf]
  %v770 = vld [vmem:[%s1 + $0x4] sm:$0xf]
  %v771 = vld [vmem:[%s1 + $0x8] sm:$0xf]
  %v772 = vld [vmem:[%s1 + $0xc] sm:$0xf]
  %v773 = vld [vmem:[%s1 + $0x10] sm:$0xf]
  %v774 = vld [vmem:[%s1 + $0x14] sm:$0xf]
  %v775 = vld [vmem:[%s1 + $0x18] sm:$0xf]
  %v776 = vld [vmem:[%s1 + $0x1c] sm:$0xf]
  %v777 = vld [vmem:[%s1 + $0x20] sm:$0xf]
  %v778 = vld [vmem:[%s1 + $0x24] sm:$0xf]
  %v779 = vld [vmem:[%s1 + $0x28] sm:$0xf]
  %v780 = vld [vmem:[%s1 + $0x2c] sm:$0xf]
  %v781 = vld [vmem:[%s1 + $0x30] sm:$0xf]
  %v782 = vld [vmem:[%s1 + $0x34] sm:$0xf]
  %v783 = vld [vmem:[%s1 + $0x38] sm:$0xf]
  %v784 = vld [vmem:[%s1 + $0x3c] sm:$0xf]
  %v785 = vld [vmem:[%s1 + $0x40] sm:$0xf]
  %v786 = vld [vmem:[%s1 + $0x44] sm:$0xf]
  %v805 = vunpack.c.l.b16 %v769
  %v806 = vunpack.c.l.b16 %v770
  %v807 = vunpack.c.l.b16 %v771
  %v808 = vunpack.c.l.b16 %v772
  %v809 = vunpack.c.l.b16 %v773
  %v810 = vunpack.c.l.b16 %v774
  %v811 = vunpack.c.l.b16 %v775
  %v812 = vunpack.c.l.b16 %v776
  %v813 = vunpack.c.l.b16 %v777
  %v814 = vunpack.c.l.b16 %v778
  %v815 = vunpack.c.l.b16 %v779
  %v816 = vunpack.c.l.b16 %v780
  %v817 = vunpack.c.l.b16 %v781
  %v818 = vunpack.c.l.b16 %v782
  %v819 = vunpack.c.l.b16 %v783
  %v820 = vunpack.c.l.b16 %v784
  %v821 = vunpack.c.l.b16 %v785
  %v822 = vunpack.c.l.b16 %v786
  %v823 = vpack.c.b16 %v806, %v805
  %v824 = vpack.c.b16 %v808, %v807
  %v825 = vpack.c.b16 %v810, %v809
  %v826 = vpack.c.b16 %v812, %v811
  %v827 = vpack.c.b16 %v814, %v813
  %v828 = vpack.c.b16 %v816, %v815
  %v829 = vpack.c.b16 %v818, %v817
  %v830 = vpack.c.b16 %v820, %v819
  %v831 = vpack.c.b16 %v822, %v821
  %v842 = vsel %vm77, %v756, 0
  %v845 = vsel %vm77, %v758, 0
  %v848 = vsel %vm77, %v760, 0
  %v851 = vsel %vm77, %v762, 0
  %v854 = vsel %vm77, %v764, 0
  %v857 = vsel %vm77, %v766, 0
  %v860 = vsel %vm77, %v768, 0
  %862 = vmatprep.subr.bf16.mxu0 0
  %863 = vmatpush1.bf16.msra.mxu0 %v823
  %864 = vmatprep.subr.bf16.mxu0 0
  %865 = vmatpush1.bf16.msra.mxu0 %v824
  %866 = vmatprep.subr.bf16.mxu0 0
  %867 = vmatpush1.bf16.msra.mxu0 %v825
  %868 = vmatprep.subr.bf16.mxu0 0
  %869 = vmatpush1.bf16.msra.mxu0 %v826
  %870 = vmatprep.subr.bf16.mxu0 0
  %871 = vmatpush1.bf16.msra.mxu0 %v827
  %872 = vmatprep.subr.bf16.mxu0 0
  %873 = vmatpush1.bf16.msra.mxu0 %v828
  %874 = vmatprep.subr.bf16.mxu0 0
  %875 = vmatpush1.bf16.msra.mxu0 %v829
  %876 = vmatprep.subr.bf16.mxu0 0
  %877 = vmatpush1.bf16.msra.mxu0 %v830
  %878 = vmatprep.subr.bf16.mxu0 0
  %879 = vmatpush1.bf16.msra.mxu0 %v831
  %880 = vmatprep.subr.bf16.mxu0 0
  %881 = vmatpush1.bf16.msra.mxu0 0
  %882 = vmatprep.subr.bf16.mxu0 0
  %883 = vmatpush1.bf16.msra.mxu0 0
  %884 = vmatprep.subr.bf16.mxu0 0
  %885 = vmatpush1.bf16.msra.mxu0 0
  %886 = vmatprep.subr.bf16.mxu0 0
  %887 = vmatpush1.bf16.msra.mxu0 0
  %888 = vmatprep.subr.bf16.mxu0 0
  %889 = vmatpush1.bf16.msra.mxu0 0
  %890 = vmatprep.subr.bf16.mxu0 0
  %891 = vmatpush1.bf16.msra.mxu0 0
  %892 = vmatprep.subr.bf16.mxu0 0
  %893 = vmatpush1.bf16.msra.mxu0 0
  %894 = vmatprep.mubr.bf16.mxu0 %v842
  %895 = vmatmul.mubr.bf16.gmra.mrb[0].mxu0 %v755
  %v896 = vpop.f32.mrb[0].mxu0
  %v897 = vadd.f32 0.0, %v896
  %v898 = vpop.f32.mrb[0].mxu0
  %v899 = vpop.f32.mrb[0].mxu0
  %v900 = vadd.f32 0.0, %v899
  %v901 = vpop.f32.mrb[0].mxu0
  %902 = vmatprep.mubr.bf16.mxu0 %v845
  %903 = vmatmul.mubr.bf16.gmra.mrb[0].mxu0 %v757
  %v904 = vpop.f32.mrb[0].mxu0
  %v905 = vadd.f32 0.0, %v904
  %v906 = vpop.f32.mrb[0].mxu0
  %v907 = vpop.f32.mrb[0].mxu0
  %v908 = vadd.f32 0.0, %v907
  %v909 = vpop.f32.mrb[0].mxu0
  %910 = vmatprep.mubr.bf16.mxu0 %v848
  %911 = vmatmul.mubr.bf16.gmra.mrb[0].mxu0 %v759
  %v912 = vpop.f32.mrb[0].mxu0
  %v913 = vadd.f32 0.0, %v912
  %v914 = vpop.f32.mrb[0].mxu0
  %v915 = vpop.f32.mrb[0].mxu0
  %v916 = vadd.f32 0.0, %v915
  %v917 = vpop.f32.mrb[0].mxu0
  %918 = vmatprep.mubr.bf16.mxu0 %v851
  %919 = vmatmul.mubr.bf16.gmra.mrb[0].mxu0 %v761
  %v920 = vpop.f32.mrb[0].mxu0
  %v921 = vadd.f32 0.0, %v920
  %v922 = vpop.f32.mrb[0].mxu0
  %v923 = vpop.f32.mrb[0].mxu0
  %v924 = vadd.f32 0.0, %v923
  %v925 = vpop.f32.mrb[0].mxu0
  %926 = vmatprep.mubr.bf16.mxu0 %v854
  %927 = vmatmul.mubr.bf16.gmra.mrb[0].mxu0 %v763
  %v928 = vpop.f32.mrb[0].mxu0
  %v929 = vadd.f32 0.0, %v928
  %v930 = vpop.f32.mrb[0].mxu0
  %v931 = vpop.f32.mrb[0].mxu0
  %v932 = vadd.f32 0.0, %v931
  %v933 = vpop.f32.mrb[0].mxu0
  %934 = vmatprep.mubr.bf16.mxu0 %v857
  %935 = vmatmul.mubr.bf16.gmra.mrb[0].mxu0 %v765
  %v936 = vpop.f32.mrb[0].mxu0
  %v937 = vadd.f32 0.0, %v936
  %v938 = vpop.f32.mrb[0].mxu0
  %v939 = vpop.f32.mrb[0].mxu0
  %v940 = vadd.f32 0.0, %v939
  %v941 = vpop.f32.mrb[0].mxu0
  %942 = vmatprep.mubr.bf16.mxu0 %v860
  %943 = vmatmul.mubr.bf16.gmra.mrb[0].mxu0 %v767
  %v944 = vpop.f32.mrb[0].mxu0
  %v945 = vadd.f32 0.0, %v944
  %v946 = vpop.f32.mrb[0].mxu0
  %v947 = vpop.f32.mrb[0].mxu0
  %v948 = vadd.f32 0.0, %v947
  %v949 = vpop.f32.mrb[0].mxu0
  %950 = vdwg.mxu0
  %v951 = vld [vmem:[%s4] sm:$0xff]
  %v952 = vld [vmem:[%s4 + $0x8] sm:$0xff]
  %v953 = vld [vmem:[%s4 + $0x10] sm:$0xff]
  %v954 = vld [vmem:[%s4 + $0x18] sm:$0xff]
  %v955 = vld [vmem:[%s4 + $0x20] sm:$0xff]
  %v956 = vld [vmem:[%s4 + $0x28] sm:$0xff]
  %v957 = vld [vmem:[%s4 + $0x30] sm:$0xff]
  %v958 = vld [vmem:[%s4 + $0x38] sm:$0xff]
  %v959 = vld [vmem:[%s4 + $0x40] sm:$0xff]
  %v960 = vld [vmem:[%s4 + $0x48] sm:$0xff]
  %v961 = vld [vmem:[%s4 + $0x50] sm:$0xff]
  %v962 = vld [vmem:[%s4 + $0x58] sm:$0xff]
  %v963 = vld [vmem:[%s4 + $0x60] sm:$0xff]
  %v964 = vld [vmem:[%s4 + $0x68] sm:$0xff]
  %966 = vset.pattern.permute.xlu0 0
  %967 = vperm.xlu0 %966, %v951
  %v968 = vpop.permute.xlu0 %967
  %971 = vset.pattern.permute.xlu0 0
  %972 = vperm.xlu0 %971, %v952
  %v973 = vpop.permute.xlu0 %972
  %976 = vset.pattern.permute.xlu0 0
  %977 = vperm.xlu0 %976, %v953
  %v978 = vpop.permute.xlu0 %977
  %981 = vset.pattern.permute.xlu0 0
  %982 = vperm.xlu0 %981, %v954
  %v983 = vpop.permute.xlu0 %982
  %986 = vset.pattern.permute.xlu0 0
  %987 = vperm.xlu0 %986, %v955
  %v988 = vpop.permute.xlu0 %987
  %991 = vset.pattern.permute.xlu0 0
  %992 = vperm.xlu0 %991, %v956
  %v993 = vpop.permute.xlu0 %992
  %996 = vset.pattern.permute.xlu0 0
  %997 = vperm.xlu0 %996, %v957
  %v998 = vpop.permute.xlu0 %997
  %1001 = vset.pattern.permute.xlu0 0
  %1002 = vperm.xlu0 %1001, %v958
  %v1003 = vpop.permute.xlu0 %1002
  %1006 = vset.pattern.permute.xlu0 0
  %1007 = vperm.xlu0 %1006, %v959
  %v1008 = vpop.permute.xlu0 %1007
  %1011 = vset.pattern.permute.xlu0 0
  %1012 = vperm.xlu0 %1011, %v960
  %v1013 = vpop.permute.xlu0 %1012
  %1016 = vset.pattern.permute.xlu0 0
  %1017 = vperm.xlu0 %1016, %v961
  %v1018 = vpop.permute.xlu0 %1017
  %1021 = vset.pattern.permute.xlu0 0
  %1022 = vperm.xlu0 %1021, %v962
  %v1023 = vpop.permute.xlu0 %1022
  %1026 = vset.pattern.permute.xlu0 0
  %1027 = vperm.xlu0 %1026, %v963
  %v1028 = vpop.permute.xlu0 %1027
  %1031 = vset.pattern.permute.xlu0 0
  %1032 = vperm.xlu0 %1031, %v964
  %v1033 = vpop.permute.xlu0 %1032
  %v1035 = vmul.f32 %v897, %v968
  %v1036 = vmul.f32 %v900, %v973
  %v1037 = vmul.f32 %v905, %v978
  %v1038 = vmul.f32 %v908, %v983
  %v1039 = vmul.f32 %v913, %v988
  %v1040 = vmul.f32 %v916, %v993
  %v1041 = vmul.f32 %v921, %v998
  %v1042 = vmul.f32 %v924, %v1003
  %v1043 = vmul.f32 %v929, %v1008
  %v1044 = vmul.f32 %v932, %v1013
  %v1045 = vmul.f32 %v937, %v1018
  %v1046 = vmul.f32 %v940, %v1023
  %v1047 = vmul.f32 %v945, %v1028
  %v1048 = vmul.f32 %v948, %v1033
  %vm1049 = vcmask 261120
  %v1050 = vsel %vm1049, %v1035, 0.0
  %v1051 = vsel %vm1049, %v1036, 0.0
  %v1052 = vadd.f32 %v1050, %v1051
  %v1053 = vsel %vm1049, %v1037, 0.0
  %v1054 = vadd.f32 %v1052, %v1053
  %v1055 = vsel %vm1049, %v1038, 0.0
  %v1056 = vadd.f32 %v1054, %v1055
  %v1057 = vsel %vm1049, %v1039, 0.0
  %v1058 = vadd.f32 %v1056, %v1057
  %v1059 = vsel %vm1049, %v1040, 0.0
  %v1060 = vadd.f32 %v1058, %v1059
  %v1061 = vsel %vm1049, %v1041, 0.0
  %v1062 = vadd.f32 %v1060, %v1061
  %v1063 = vsel %vm1049, %v1042, 0.0
  %v1064 = vadd.f32 %v1062, %v1063
  %v1065 = vsel %vm1049, %v1043, 0.0
  %v1066 = vadd.f32 %v1064, %v1065
  %v1067 = vsel %vm1049, %v1044, 0.0
  %v1068 = vadd.f32 %v1066, %v1067
  %v1069 = vsel %vm1049, %v1045, 0.0
  %v1070 = vadd.f32 %v1068, %v1069
  %v1071 = vsel %vm1049, %v1046, 0.0
  %v1072 = vadd.f32 %v1070, %v1071
  %v1073 = vsel %vm1049, %v1047, 0.0
  %v1074 = vadd.f32 %v1072, %v1073
  %v1075 = vsel %vm1049, %v1048, 0.0
  %v1076 = vadd.f32 %v1074, %v1075
  %v1077 = vrot.slane %v1076, 4
  %v1078 = vadd.f32 %v1076, %v1077
  %v1079 = vrot.slane %v1078, 2
  %v1080 = vadd.f32 %v1078, %v1079
  %v1081 = vrot.slane %v1080, 1
  %v1082 = vadd.f32 %v1080, %v1081
  %v1083 = vmul.f32 %v1082, 0.010204081
  %v1084 = vsub.f32 %v897, %v1083
  %v1085 = vsub.f32 %v900, %v1083
  %v1086 = vsub.f32 %v905, %v1083
  %v1087 = vsub.f32 %v908, %v1083
  %v1088 = vsub.f32 %v913, %v1083
  %v1089 = vsub.f32 %v916, %v1083
  %v1090 = vsub.f32 %v921, %v1083
  %v1091 = vsub.f32 %v924, %v1083
  %v1092 = vsub.f32 %v929, %v1083
  %v1093 = vsub.f32 %v932, %v1083
  %v1094 = vsub.f32 %v937, %v1083
  %v1095 = vsub.f32 %v940, %v1083
  %v1096 = vsub.f32 %v945, %v1083
  %v1097 = vsub.f32 %v948, %v1083
  %v1098 = vmul.f32 %v1084, %v1084
  %v1099 = vmul.f32 %v1085, %v1085
  %v1100 = vmul.f32 %v1086, %v1086
  %v1101 = vmul.f32 %v1087, %v1087
  %v1102 = vmul.f32 %v1088, %v1088
  %v1103 = vmul.f32 %v1089, %v1089
  %v1104 = vmul.f32 %v1090, %v1090
  %v1105 = vmul.f32 %v1091, %v1091
  %v1106 = vmul.f32 %v1092, %v1092
  %v1107 = vmul.f32 %v1093, %v1093
  %v1108 = vmul.f32 %v1094, %v1094
  %v1109 = vmul.f32 %v1095, %v1095
  %v1110 = vmul.f32 %v1096, %v1096
  %v1111 = vmul.f32 %v1097, %v1097
  %v1112 = vmul.f32 %v1098, %v968
  %v1113 = vmul.f32 %v1099, %v973
  %v1114 = vmul.f32 %v1100, %v978
  %v1115 = vmul.f32 %v1101, %v983
  %v1116 = vmul.f32 %v1102, %v988
  %v1117 = vmul.f32 %v1103, %v993
  %v1118 = vmul.f32 %v1104, %v998
  %v1119 = vmul.f32 %v1105, %v1003
  %v1120 = vmul.f32 %v1106, %v1008
  %v1121 = vmul.f32 %v1107, %v1013
  %v1122 = vmul.f32 %v1108, %v1018
  %v1123 = vmul.f32 %v1109, %v1023
  %v1124 = vmul.f32 %v1110, %v1028
  %v1125 = vmul.f32 %v1111, %v1033
  %v1126 = vsel %vm1049, %v1112, 0.0
  %v1127 = vsel %vm1049, %v1113, 0.0
  %v1128 = vadd.f32 %v1126, %v1127
  %v1129 = vsel %vm1049, %v1114, 0.0
  %v1130 = vadd.f32 %v1128, %v1129
  %v1131 = vsel %vm1049, %v1115, 0.0
  %v1132 = vadd.f32 %v1130, %v1131
  %v1133 = vsel %vm1049, %v1116, 0.0
  %v1134 = vadd.f32 %v1132, %v1133
  %v1135 = vsel %vm1049, %v1117, 0.0
  %v1136 = vadd.f32 %v1134, %v1135
  %v1137 = vsel %vm1049, %v1118, 0.0
  %v1138 = vadd.f32 %v1136, %v1137
  %v1139 = vsel %vm1049, %v1119, 0.0
  %v1140 = vadd.f32 %v1138, %v1139
  %v1141 = vsel %vm1049, %v1120, 0.0
  %v1142 = vadd.f32 %v1140, %v1141
  %v1143 = vsel %vm1049, %v1121, 0.0
  %v1144 = vadd.f32 %v1142, %v1143
  %v1145 = vsel %vm1049, %v1122, 0.0
  %v1146 = vadd.f32 %v1144, %v1145
  %v1147 = vsel %vm1049, %v1123, 0.0
  %v1148 = vadd.f32 %v1146, %v1147
  %v1149 = vsel %vm1049, %v1124, 0.0
  %v1150 = vadd.f32 %v1148, %v1149
  %v1151 = vsel %vm1049, %v1125, 0.0
  %v1152 = vadd.f32 %v1150, %v1151
  %v1153 = vrot.slane %v1152, 4
  %v1154 = vadd.f32 %v1152, %v1153
  %v1155 = vrot.slane %v1154, 2
  %v1156 = vadd.f32 %v1154, %v1155
  %v1157 = vrot.slane %v1156, 1
  %v1158 = vadd.f32 %v1156, %v1157
  %v1159 = vmul.f32 %v1158, 0.010204081
  %v1160 = vld [vmem:[%s2] sm:$0x1]
  %v1161 = vadd.f32 %v1159, 1e-05
  %v1162 = vrsqrt.pop %v1161
  %v1163 = vmul.f32 %v1160, %v1162
  %v1164 = vld [vmem:[%s3] sm:$0x1]
  %v1165 = vmul.f32 %v1083, %v1163
  %v1166 = vsub.f32 %v1164, %v1165
  %v1168 = vlaneseq
  %v1169 = vshrl.u32 %v1168, 7
  %v1170 = vsub.s32 0, %v1169
  %v1171 = vrot.slane %v1163, %v1170
  %v1173 = vmul.f32 %v897, %v1171
  %v1174 = vmul.f32 %v900, %v1171
  %v1175 = vmul.f32 %v905, %v1171
  %v1176 = vmul.f32 %v908, %v1171
  %v1177 = vmul.f32 %v913, %v1171
  %v1178 = vmul.f32 %v916, %v1171
  %v1179 = vmul.f32 %v921, %v1171
  %v1180 = vmul.f32 %v924, %v1171
  %v1181 = vmul.f32 %v929, %v1171
  %v1182 = vmul.f32 %v932, %v1171
  %v1183 = vmul.f32 %v937, %v1171
  %v1184 = vmul.f32 %v940, %v1171
  %v1185 = vmul.f32 %v945, %v1171
  %v1186 = vmul.f32 %v948, %v1171
  %v1188 = vlaneseq
  %v1189 = vshrl.u32 %v1188, 7
  %v1190 = vsub.s32 0, %v1189
  %v1191 = vrot.slane %v1166, %v1190
  %v1193 = vadd.f32 %v1173, %v1191
  %v1194 = vadd.f32 %v1174, %v1191
  %v1195 = vadd.f32 %v1175, %v1191
  %v1196 = vadd.f32 %v1176, %v1191
  %v1197 = vadd.f32 %v1177, %v1191
  %v1198 = vadd.f32 %v1178, %v1191
  %v1199 = vadd.f32 %v1179, %v1191
  %v1200 = vadd.f32 %v1180, %v1191
  %v1201 = vadd.f32 %v1181, %v1191
  %v1202 = vadd.f32 %v1182, %v1191
  %v1203 = vadd.f32 %v1183, %v1191
  %v1204 = vadd.f32 %v1184, %v1191
  %v1205 = vadd.f32 %v1185, %v1191
  %v1206 = vadd.f32 %v1186, %v1191
  %v1207 = vmax.f32 %v1193, 0.0
  %v1208 = vmax.f32 %v1194, 0.0
  %v1209 = vmax.f32 %v1195, 0.0
  %v1210 = vmax.f32 %v1196, 0.0
  %v1211 = vmax.f32 %v1197, 0.0
  %v1212 = vmax.f32 %v1198, 0.0
  %v1213 = vmax.f32 %v1199, 0.0
  %v1214 = vmax.f32 %v1200, 0.0
  %v1215 = vmax.f32 %v1201, 0.0
  %v1216 = vmax.f32 %v1202, 0.0
  %v1217 = vmax.f32 %v1203, 0.0
  %v1218 = vmax.f32 %v1204, 0.0
  %v1219 = vmax.f32 %v1205, 0.0
  %v1220 = vmax.f32 %v1206, 0.0
  %v1221 = vpack.c.bf16 %v1208, %v1207
  %v1222 = vpack.c.bf16 %v1210, %v1209
  %v1223 = vpack.c.bf16 %v1212, %v1211
  %v1224 = vpack.c.bf16 %v1214, %v1213
  %v1225 = vpack.c.bf16 %v1216, %v1215
  %v1226 = vpack.c.bf16 %v1218, %v1217
  %v1227 = vpack.c.bf16 %v1220, %v1219
  %v1235 = vunpack.c.l.b16 %v1221
  %v1236 = vunpack.c.h.b16 %v1221
  %v1237 = vunpack.c.l.b16 %v1222
  %v1238 = vunpack.c.h.b16 %v1222
  %v1239 = vunpack.c.l.b16 %v1223
  %v1240 = vunpack.c.h.b16 %v1223
  %v1241 = vunpack.c.l.b16 %v1224
  %v1242 = vunpack.c.h.b16 %v1224
  %v1243 = vunpack.c.l.b16 %v1225
  %v1244 = vunpack.c.h.b16 %v1225
  %v1245 = vunpack.c.l.b16 %v1226
  %v1246 = vunpack.c.h.b16 %v1226
  %v1247 = vunpack.c.l.b16 %v1227
  %v1248 = vunpack.c.h.b16 %v1227
  %v1249 = vpack.c.b16 %v1235, %v1235
  %v1250 = vpack.c.b16 %v1236, %v1236
  %v1251 = vpack.c.b16 %v1237, %v1237
  %v1252 = vpack.c.b16 %v1238, %v1238
  %v1253 = vpack.c.b16 %v1239, %v1239
  %v1254 = vpack.c.b16 %v1240, %v1240
  %v1255 = vpack.c.b16 %v1241, %v1241
  %v1256 = vpack.c.b16 %v1242, %v1242
  %v1257 = vpack.c.b16 %v1243, %v1243
  %v1258 = vpack.c.b16 %v1244, %v1244
  %v1259 = vpack.c.b16 %v1245, %v1245
  %v1260 = vpack.c.b16 %v1246, %v1246
  %v1261 = vpack.c.b16 %v1247, %v1247
  %v1262 = vpack.c.b16 %v1248, %v1248
  %vm1277 = vcmask 257024
  %1278 = vst.msk [vmem:[%s5] sm:$0xf] %vm1277, %v1249
  %1279 = vst.msk [vmem:[%s5 + $0x4] sm:$0xf] %vm1277, %v1250
  %1280 = vst.msk [vmem:[%s5 + $0x8] sm:$0xf] %vm1277, %v1251
  %1281 = vst.msk [vmem:[%s5 + $0xc] sm:$0xf] %vm1277, %v1252
  %1282 = vst.msk [vmem:[%s5 + $0x10] sm:$0xf] %vm1277, %v1253
  %1283 = vst.msk [vmem:[%s5 + $0x14] sm:$0xf] %vm1277, %v1254
  %1284 = vst.msk [vmem:[%s5 + $0x18] sm:$0xf] %vm1277, %v1255
  %1285 = vst.msk [vmem:[%s5 + $0x1c] sm:$0xf] %vm1277, %v1256
  %1286 = vst.msk [vmem:[%s5 + $0x20] sm:$0xf] %vm1277, %v1257
  %1287 = vst.msk [vmem:[%s5 + $0x24] sm:$0xf] %vm1277, %v1258
  %1288 = vst.msk [vmem:[%s5 + $0x28] sm:$0xf] %vm1277, %v1259
  %1289 = vst.msk [vmem:[%s5 + $0x2c] sm:$0xf] %vm1277, %v1260
  %1290 = vst.msk [vmem:[%s5 + $0x30] sm:$0xf] %vm1277, %v1261
  %1291 = vst.msk [vmem:[%s5 + $0x34] sm:$0xf] %vm1277, %v1262
  // Predicated region
  $region22: #{cnnnet_forward.5} parent=0 // pred_check
    _
  $region23: #{cnnnet_forward.5} parent=0 // pred_check_branch
    %1293 = sbr.rel (0) target = $region25
  $region24: #{cnnnet_forward.5} parent=0 // pred_region
    _
  $region25: #{cnnnet_forward.5} parent=0 // pred_fallthru
    _
  // Predicated region
  $region26: #{cnnnet_forward.5} parent=0 // pred_check
    _
  $region27: #{cnnnet_forward.5} parent=0 // pred_check_branch
    %1295 = sbr.rel (0) target = $region29
  $region28: #{cnnnet_forward.5} parent=0 // pred_region
    _
  $region29: #{cnnnet_forward.5} parent=0 // pred_fallthru
    _

// kernel: cnnnet_forward.6
$region0: #{cnnnet_forward.6}
  #allocation0 [shape = 'u32[]', space=smem, size = 0x4, offset = 0x4, fixed_abs, tag = 'smem constant byte address 0x4 - core index']
  #allocation1 [shape = 'u32[144,128]{1,0:T(1,128)}', space=vmem, size = 0x12000, scoped, tag = 'internal scratch']
  #allocation2 [shape = 'bf16[40,288]{1,0:T(8,128)(2,1)}', space=vmem, size = 0x7800, scoped, tag = 'scratch operand']
  %s0 = inlined_call_operand.vmem [shape: bf16[2,2,60,32], index: 0, kind: input, shape index: {}]
  %s1 = inlined_call_operand.vmem [shape: bf16[288,64], index: 1, kind: input, shape index: {}]
  %s2 = inlined_call_operand.vmem [shape: f32[1,64], index: 2, kind: input, shape index: {}]
  %s3 = inlined_call_operand.vmem [shape: f32[1,64], index: 3, kind: input, shape index: {}]
  %s4 = inlined_call_operand.vmem [shape: f32[40,1], index: 4, kind: input, shape index: {}]
  %s5 = inlined_call_operand.vmem [shape: bf16[40,64], index: 5, kind: output, shape index: {}]
  %s6 = sld [smem:[#allocation0]]
  $region30: #{cnnnet_forward.6} parent=0
    _
  %s8 = ssub.s32 1, %s6
  %s9 = scalar_select 0, %s8, %s6
  // Predicated region
  $region2: #{cnnnet_forward.6} parent=0 // pred_check
    _
  $region3: #{cnnnet_forward.6} parent=0 // pred_check_branch
    %11 = sbr.rel (0) target = $region5
  $region4: #{cnnnet_forward.6} parent=0 // pred_region
    _
  $region5: #{cnnnet_forward.6} parent=0 // pred_fallthru
    _
  // Predicated region
  $region6: #{cnnnet_forward.6} parent=0 // pred_check
    _
  $region7: #{cnnnet_forward.6} parent=0 // pred_check_branch
    %13 = sbr.rel (0) target = $region9
  $region8: #{cnnnet_forward.6} parent=0 // pred_region
    _
  $region9: #{cnnnet_forward.6} parent=0 // pred_fallthru
    _
  // Predicated region
  $region10: #{cnnnet_forward.6} parent=0 // pred_check
    _
  $region11: #{cnnnet_forward.6} parent=0 // pred_check_branch
    %15 = sbr.rel (0) target = $region13
  $region12: #{cnnnet_forward.6} parent=0 // pred_region
    _
  $region13: #{cnnnet_forward.6} parent=0 // pred_fallthru
    _
  // Predicated region
  $region14: #{cnnnet_forward.6} parent=0 // pred_check
    _
  $region15: #{cnnnet_forward.6} parent=0 // pred_check_branch
    %17 = sbr.rel (0) target = $region17
  $region16: #{cnnnet_forward.6} parent=0 // pred_region
    _
  $region17: #{cnnnet_forward.6} parent=0 // pred_fallthru
    _
  // Predicated region
  $region18: #{cnnnet_forward.6} parent=0 // pred_check
    _
  $region19: #{cnnnet_forward.6} parent=0 // pred_check_branch
    %19 = sbr.rel (0) target = $region21
  $region20: #{cnnnet_forward.6} parent=0 // pred_region
    _
  $region21: #{cnnnet_forward.6} parent=0 // pred_fallthru
    _
  %v21 = vld [vmem:[%s0] sm:$0xf]
  %v22 = vld [vmem:[%s0 + $0x4] sm:$0xf]
  %v23 = vld [vmem:[%s0 + $0x8] sm:$0xf]
  %v24 = vld [vmem:[%s0 + $0xc] sm:$0xf]
  %v25 = vld [vmem:[%s0 + $0x10] sm:$0xf]
  %vm26 = vcmask 257024
  %27 = vst.msk [vmem:[#allocation2] sm:$0xf] %vm26, %v21
  %28 = vst.msk [vmem:[#allocation2 + $0xc] sm:$0xf] %vm26, %v22
  %29 = vst.msk [vmem:[#allocation2 + $0x18] sm:$0xf] %vm26, %v23
  %30 = vst.msk [vmem:[#allocation2 + $0x24] sm:$0xf] %vm26, %v24
  %31 = vst.msk [vmem:[#allocation2 + $0x30] sm:$0xf] %vm26, %v25
  %s32 = scalar_lea.vmem %s0, 32
  %v33 = vld [vmem:[%s32] sm:$0xf]
  %v34 = vld [vmem:[%s32 + $0x4] sm:$0xf]
  %v35 = vld [vmem:[%s32 + $0x8] sm:$0xf]
  %v36 = vld [vmem:[%s32 + $0xc] sm:$0xf]
  %v37 = vld [vmem:[%s32 + $0x10] sm:$0xf]
  %43 = vrot.lane.b32.xlu0 %v33, 32
  %v44 = vpop.permute.xlu0 %43
  %45 = vrot.lane.b32.xlu0 %v34, 32
  %v46 = vpop.permute.xlu0 %45
  %47 = vrot.lane.b32.xlu0 %v35, 32
  %v48 = vpop.permute.xlu0 %47
  %49 = vrot.lane.b32.xlu0 %v36, 32
  %v50 = vpop.permute.xlu0 %49
  %51 = vrot.lane.b32.xlu0 %v37, 32
  %v52 = vpop.permute.xlu0 %51
  %vm58 = vcmask 519424
  %59 = vst.msk [vmem:[#allocation2] sm:$0xf] %vm58, %v44
  %60 = vst.msk [vmem:[#allocation2 + $0xc] sm:$0xf] %vm58, %v46
  %61 = vst.msk [vmem:[#allocation2 + $0x18] sm:$0xf] %vm58, %v48
  %62 = vst.msk [vmem:[#allocation2 + $0x24] sm:$0xf] %vm58, %v50
  %63 = vst.msk [vmem:[#allocation2 + $0x30] sm:$0xf] %vm58, %v52
  %v64 = vld [vmem:[%s0] sm:$0xe]
  %v65 = vld [vmem:[%s0 + $0x4] sm:$0xf]
  %v66 = vld [vmem:[%s0 + $0x8] sm:$0xf]
  %v67 = vld [vmem:[%s0 + $0xc] sm:$0xf]
  %v68 = vld [vmem:[%s0 + $0x10] sm:$0xf]
  %v69 = vld [vmem:[%s0 + $0x14] sm:$0x1]
  %vm76 = vcmask 1042432
  %vm77 = vcmask 1046532
  %vm78 = vmor %vm76, %vm77
  %v79 = vrot.slane %v64, 5
  %v80 = vrot.slane %v79, 4
  %v81 = vrot.slane %v65, 5
  %v82 = vsel %vm78, %v80, %v81
  %v83 = vrot.slane %v81, 4
  %v84 = vrot.slane %v66, 5
  %v85 = vsel %vm78, %v83, %v84
  %v86 = vrot.slane %v84, 4
  %v87 = vrot.slane %v67, 5
  %v88 = vsel %vm78, %v86, %v87
  %v89 = vrot.slane %v87, 4
  %v90 = vrot.slane %v68, 5
  %v91 = vsel %vm78, %v89, %v90
  %v92 = vrot.slane %v90, 4
  %v93 = vrot.slane %v69, 5
  %v94 = vsel %vm78, %v92, %v93
  %95 = vrot.lane.b32.xlu0 %v82, 64
  %v96 = vpop.permute.xlu0 %95
  %97 = vrot.lane.b32.xlu0 %v85, 64
  %v98 = vpop.permute.xlu0 %97
  %99 = vrot.lane.b32.xlu0 %v88, 64
  %v100 = vpop.permute.xlu0 %99
  %101 = vrot.lane.b32.xlu0 %v91, 64
  %v102 = vpop.permute.xlu0 %101
  %103 = vrot.lane.b32.xlu0 %v94, 64
  %v104 = vpop.permute.xlu0 %103
  %vm110 = vcmask 781824
  %111 = vst.msk [vmem:[#allocation2] sm:$0xf] %vm110, %v96
  %112 = vst.msk [vmem:[#allocation2 + $0xc] sm:$0xf] %vm110, %v98
  %113 = vst.msk [vmem:[#allocation2 + $0x18] sm:$0xf] %vm110, %v100
  %114 = vst.msk [vmem:[#allocation2 + $0x24] sm:$0xf] %vm110, %v102
  %115 = vst.msk [vmem:[#allocation2 + $0x30] sm:$0xf] %vm110, %v104
  %s116 = scalar_lea.vmem %s0, 64
  %v117 = vld [vmem:[%s116] sm:$0xf]
  %v118 = vld [vmem:[%s116 + $0x4] sm:$0xf]
  %v119 = vld [vmem:[%s116 + $0x8] sm:$0xf]
  %v120 = vld [vmem:[%s116 + $0xc] sm:$0xf]
  %v121 = vld [vmem:[%s116 + $0x10] sm:$0xf]
  %127 = vrot.lane.b32.xlu0 %v117, 96
  %v128 = vpop.permute.xlu0 %127
  %129 = vrot.lane.b32.xlu0 %v118, 96
  %v130 = vpop.permute.xlu0 %129
  %131 = vrot.lane.b32.xlu0 %v119, 96
  %v132 = vpop.permute.xlu0 %131
  %133 = vrot.lane.b32.xlu0 %v120, 96
  %v134 = vpop.permute.xlu0 %133
  %135 = vrot.lane.b32.xlu0 %v121, 96
  %v136 = vpop.permute.xlu0 %135
  %vm142 = vcmask 1044224
  %143 = vst.msk [vmem:[#allocation2] sm:$0xf] %vm142, %v128
  %144 = vst.msk [vmem:[#allocation2 + $0xc] sm:$0xf] %vm142, %v130
  %145 = vst.msk [vmem:[#allocation2 + $0x18] sm:$0xf] %vm142, %v132
  %146 = vst.msk [vmem:[#allocation2 + $0x24] sm:$0xf] %vm142, %v134
  %147 = vst.msk [vmem:[#allocation2 + $0x30] sm:$0xf] %vm142, %v136
  %s148 = scalar_lea.vmem %s0, 96
  %v149 = vld [vmem:[%s148] sm:$0xf]
  %v150 = vld [vmem:[%s148 + $0x4] sm:$0xf]
  %v151 = vld [vmem:[%s148 + $0x8] sm:$0xf]
  %v152 = vld [vmem:[%s148 + $0xc] sm:$0xf]
  %v153 = vld [vmem:[%s148 + $0x10] sm:$0xf]
  %154 = vst.msk [vmem:[#allocation2 + $0x4] sm:$0xf] %vm26, %v149
  %155 = vst.msk [vmem:[#allocation2 + $0x10] sm:$0xf] %vm26, %v150
  %156 = vst.msk [vmem:[#allocation2 + $0x1c] sm:$0xf] %vm26, %v151
  %157 = vst.msk [vmem:[#allocation2 + $0x28] sm:$0xf] %vm26, %v152
  %158 = vst.msk [vmem:[#allocation2 + $0x34] sm:$0xf] %vm26, %v153
  %v159 = vld [vmem:[%s116] sm:$0xe]
  %v160 = vld [vmem:[%s116 + $0x4] sm:$0xf]
  %v161 = vld [vmem:[%s116 + $0x8] sm:$0xf]
  %v162 = vld [vmem:[%s116 + $0xc] sm:$0xf]
  %v163 = vld [vmem:[%s116 + $0x10] sm:$0xf]
  %v164 = vld [vmem:[%s116 + $0x14] sm:$0x1]
  %v171 = vrot.slane %v159, 5
  %v172 = vrot.slane %v171, 4
  %v173 = vrot.slane %v160, 5
  %v174 = vsel %vm78, %v172, %v173
  %v175 = vrot.slane %v173, 4
  %v176 = vrot.slane %v161, 5
  %v177 = vsel %vm78, %v175, %v176
  %v178 = vrot.slane %v176, 4
  %v179 = vrot.slane %v162, 5
  %v180 = vsel %vm78, %v178, %v179
  %v181 = vrot.slane %v179, 4
  %v182 = vrot.slane %v163, 5
  %v183 = vsel %vm78, %v181, %v182
  %v184 = vrot.slane %v182, 4
  %v185 = vrot.slane %v164, 5
  %v186 = vsel %vm78, %v184, %v185
  %187 = vrot.lane.b32.xlu0 %v174, 32
  %v188 = vpop.permute.xlu0 %187
  %189 = vrot.lane.b32.xlu0 %v177, 32
  %v190 = vpop.permute.xlu0 %189
  %191 = vrot.lane.b32.xlu0 %v180, 32
  %v192 = vpop.permute.xlu0 %191
  %193 = vrot.lane.b32.xlu0 %v183, 32
  %v194 = vpop.permute.xlu0 %193
  %195 = vrot.lane.b32.xlu0 %v186, 32
  %v196 = vpop.permute.xlu0 %195
  %202 = vst.msk [vmem:[#allocation2 + $0x4] sm:$0xf] %vm58, %v188
  %203 = vst.msk [vmem:[#allocation2 + $0x10] sm:$0xf] %vm58, %v190
  %204 = vst.msk [vmem:[#allocation2 + $0x1c] sm:$0xf] %vm58, %v192
  %205 = vst.msk [vmem:[#allocation2 + $0x28] sm:$0xf] %vm58, %v194
  %206 = vst.msk [vmem:[#allocation2 + $0x34] sm:$0xf] %vm58, %v196
  %v207 = vld [vmem:[%s0 + $0x4] sm:$0xe]
  %v208 = vld [vmem:[%s0 + $0x8] sm:$0xf]
  %v209 = vld [vmem:[%s0 + $0xc] sm:$0xf]
  %v210 = vld [vmem:[%s0 + $0x10] sm:$0xf]
  %v211 = vld [vmem:[%s0 + $0x14] sm:$0xf]
  %v212 = vld [vmem:[%s0 + $0x18] sm:$0x1]
  %v219 = vrot.slane %v207, 5
  %v220 = vrot.slane %v219, 4
  %v221 = vrot.slane %v208, 5
  %v222 = vsel %vm78, %v220, %v221
  %v223 = vrot.slane %v221, 4
  %v224 = vrot.slane %v209, 5
  %v225 = vsel %vm78, %v223, %v224
  %v226 = vrot.slane %v224, 4
  %v227 = vrot.slane %v210, 5
  %v228 = vsel %vm78, %v226, %v227
  %v229 = vrot.slane %v227, 4
  %v230 = vrot.slane %v211, 5
  %v231 = vsel %vm78, %v229, %v230
  %v232 = vrot.slane %v230, 4
  %v233 = vrot.slane %v212, 5
  %v234 = vsel %vm78, %v232, %v233
  %235 = vrot.lane.b32.xlu0 %v222, 64
  %v236 = vpop.permute.xlu0 %235
  %237 = vrot.lane.b32.xlu0 %v225, 64
  %v238 = vpop.permute.xlu0 %237
  %239 = vrot.lane.b32.xlu0 %v228, 64
  %v240 = vpop.permute.xlu0 %239
  %241 = vrot.lane.b32.xlu0 %v231, 64
  %v242 = vpop.permute.xlu0 %241
  %243 = vrot.lane.b32.xlu0 %v234, 64
  %v244 = vpop.permute.xlu0 %243
  %250 = vst.msk [vmem:[#allocation2 + $0x4] sm:$0xf] %vm110, %v236
  %251 = vst.msk [vmem:[#allocation2 + $0x10] sm:$0xf] %vm110, %v238
  %252 = vst.msk [vmem:[#allocation2 + $0x1c] sm:$0xf] %vm110, %v240
  %253 = vst.msk [vmem:[#allocation2 + $0x28] sm:$0xf] %vm110, %v242
  %254 = vst.msk [vmem:[#allocation2 + $0x34] sm:$0xf] %vm110, %v244
  %v255 = vld [vmem:[%s32 + $0x4] sm:$0xe]
  %v256 = vld [vmem:[%s32 + $0x8] sm:$0xf]
  %v257 = vld [vmem:[%s32 + $0xc] sm:$0xf]
  %v258 = vld [vmem:[%s32 + $0x10] sm:$0xf]
  %v259 = vld [vmem:[%s32 + $0x14] sm:$0xf]
  %v260 = vld [vmem:[%s32 + $0x18] sm:$0x1]
  %v267 = vrot.slane %v255, 5
  %v268 = vrot.slane %v267, 4
  %v269 = vrot.slane %v256, 5
  %v270 = vsel %vm78, %v268, %v269
  %v271 = vrot.slane %v269, 4
  %v272 = vrot.slane %v257, 5
  %v273 = vsel %vm78, %v271, %v272
  %v274 = vrot.slane %v272, 4
  %v275 = vrot.slane %v258, 5
  %v276 = vsel %vm78, %v274, %v275
  %v277 = vrot.slane %v275, 4
  %v278 = vrot.slane %v259, 5
  %v279 = vsel %vm78, %v277, %v278
  %v280 = vrot.slane %v278, 4
  %v281 = vrot.slane %v260, 5
  %v282 = vsel %vm78, %v280, %v281
  %283 = vrot.lane.b32.xlu0 %v270, 96
  %v284 = vpop.permute.xlu0 %283
  %285 = vrot.lane.b32.xlu0 %v273, 96
  %v286 = vpop.permute.xlu0 %285
  %287 = vrot.lane.b32.xlu0 %v276, 96
  %v288 = vpop.permute.xlu0 %287
  %289 = vrot.lane.b32.xlu0 %v279, 96
  %v290 = vpop.permute.xlu0 %289
  %291 = vrot.lane.b32.xlu0 %v282, 96
  %v292 = vpop.permute.xlu0 %291
  %298 = vst.msk [vmem:[#allocation2 + $0x4] sm:$0xf] %vm142, %v284
  %299 = vst.msk [vmem:[#allocation2 + $0x10] sm:$0xf] %vm142, %v286
  %300 = vst.msk [vmem:[#allocation2 + $0x1c] sm:$0xf] %vm142, %v288
  %301 = vst.msk [vmem:[#allocation2 + $0x28] sm:$0xf] %vm142, %v290
  %302 = vst.msk [vmem:[#allocation2 + $0x34] sm:$0xf] %vm142, %v292
  %v303 = vld [vmem:[%s0 + $0x4] sm:$0xc]
  %v304 = vld [vmem:[%s0 + $0x8] sm:$0xf]
  %v305 = vld [vmem:[%s0 + $0xc] sm:$0xf]
  %v306 = vld [vmem:[%s0 + $0x10] sm:$0xf]
  %v307 = vld [vmem:[%s0 + $0x14] sm:$0xf]
  %v308 = vld [vmem:[%s0 + $0x18] sm:$0x3]
  %vm315 = vcmask 1041408
  %vm316 = vcmask 1045508
  %vm317 = vmor %vm315, %vm316
  %v318 = vrot.slane %v303, 6
  %v319 = vrot.slane %v318, 4
  %v320 = vrot.slane %v304, 6
  %v321 = vsel %vm317, %v319, %v320
  %v322 = vrot.slane %v320, 4
  %v323 = vrot.slane %v305, 6
  %v324 = vsel %vm317, %v322, %v323
  %v325 = vrot.slane %v323, 4
  %v326 = vrot.slane %v306, 6
  %v327 = vsel %vm317, %v325, %v326
  %v328 = vrot.slane %v326, 4
  %v329 = vrot.slane %v307, 6
  %v330 = vsel %vm317, %v328, %v329
  %v331 = vrot.slane %v329, 4
  %v332 = vrot.slane %v308, 6
  %v333 = vsel %vm317, %v331, %v332
  %339 = vst.msk [vmem:[#allocation2 + $0x8] sm:$0xf] %vm26, %v321
  %340 = vst.msk [vmem:[#allocation2 + $0x14] sm:$0xf] %vm26, %v324
  %341 = vst.msk [vmem:[#allocation2 + $0x20] sm:$0xf] %vm26, %v327
  %342 = vst.msk [vmem:[#allocation2 + $0x2c] sm:$0xf] %vm26, %v330
  %343 = vst.msk [vmem:[#allocation2 + $0x38] sm:$0xf] %vm26, %v333
  %v344 = vld [vmem:[#allocation2] sm:$0xff]
  %v345 = vld [vmem:[#allocation2 + $0x8] sm:$0xf]
  %v346 = vld [vmem:[#allocation2 + $0xc] sm:$0xff]
  %v347 = vld [vmem:[#allocation2 + $0x14] sm:$0xf]
  %v348 = vld [vmem:[#allocation2 + $0x18] sm:$0xff]
  %v349 = vld [vmem:[#allocation2 + $0x20] sm:$0xf]
  %v350 = vld [vmem:[#allocation2 + $0x24] sm:$0xff]
  %v351 = vld [vmem:[#allocation2 + $0x2c] sm:$0xf]
  %v352 = vld [vmem:[#allocation2 + $0x30] sm:$0xff]
  %v353 = vld [vmem:[#allocation2 + $0x38] sm:$0xf]
  %v354 = vld [vmem:[%s1] sm:$0xf]
  %v355 = vld [vmem:[%s1 + $0x4] sm:$0xf]
  %v356 = vld [vmem:[%s1 + $0x8] sm:$0xf]
  %v357 = vld [vmem:[%s1 + $0xc] sm:$0xf]
  %v358 = vld [vmem:[%s1 + $0x10] sm:$0xf]
  %v359 = vld [vmem:[%s1 + $0x14] sm:$0xf]
  %v360 = vld [vmem:[%s1 + $0x18] sm:$0xf]
  %v361 = vld [vmem:[%s1 + $0x1c] sm:$0xf]
  %v362 = vld [vmem:[%s1 + $0x20] sm:$0xf]
  %v363 = vld [vmem:[%s1 + $0x24] sm:$0xf]
  %v364 = vld [vmem:[%s1 + $0x28] sm:$0xf]
  %v365 = vld [vmem:[%s1 + $0x2c] sm:$0xf]
  %v366 = vld [vmem:[%s1 + $0x30] sm:$0xf]
  %v367 = vld [vmem:[%s1 + $0x34] sm:$0xf]
  %v368 = vld [vmem:[%s1 + $0x38] sm:$0xf]
  %v369 = vld [vmem:[%s1 + $0x3c] sm:$0xf]
  %v370 = vld [vmem:[%s1 + $0x40] sm:$0xf]
  %v371 = vld [vmem:[%s1 + $0x44] sm:$0xf]
  %v372 = vld [vmem:[%s1 + $0x48] sm:$0xf]
  %v373 = vld [vmem:[%s1 + $0x4c] sm:$0xf]
  %v374 = vld [vmem:[%s1 + $0x50] sm:$0xf]
  %v375 = vld [vmem:[%s1 + $0x54] sm:$0xf]
  %v376 = vld [vmem:[%s1 + $0x58] sm:$0xf]
  %v377 = vld [vmem:[%s1 + $0x5c] sm:$0xf]
  %v378 = vld [vmem:[%s1 + $0x60] sm:$0xf]
  %v379 = vld [vmem:[%s1 + $0x64] sm:$0xf]
  %v380 = vld [vmem:[%s1 + $0x68] sm:$0xf]
  %v381 = vld [vmem:[%s1 + $0x6c] sm:$0xf]
  %v382 = vld [vmem:[%s1 + $0x70] sm:$0xf]
  %v383 = vld [vmem:[%s1 + $0x74] sm:$0xf]
  %v384 = vld [vmem:[%s1 + $0x78] sm:$0xf]
  %v385 = vld [vmem:[%s1 + $0x7c] sm:$0xf]
  %v386 = vld [vmem:[%s1 + $0x80] sm:$0xf]
  %v387 = vld [vmem:[%s1 + $0x84] sm:$0xf]
  %v388 = vld [vmem:[%s1 + $0x88] sm:$0xf]
  %v389 = vld [vmem:[%s1 + $0x8c] sm:$0xf]
  %v400 = vunpack.c.l.b16 %v344
  %v401 = vunpack.c.h.b16 %v344
  %v402 = vunpack.c.l.b16 %v345
  %v403 = vunpack.c.l.b16 %v346
  %v404 = vunpack.c.h.b16 %v346
  %v405 = vunpack.c.l.b16 %v347
  %v406 = vunpack.c.l.b16 %v348
  %v407 = vunpack.c.h.b16 %v348
  %v408 = vunpack.c.l.b16 %v349
  %v409 = vunpack.c.l.b16 %v350
  %v410 = vunpack.c.h.b16 %v350
  %v411 = vunpack.c.l.b16 %v351
  %v412 = vunpack.c.l.b16 %v352
  %v413 = vunpack.c.h.b16 %v352
  %v414 = vunpack.c.l.b16 %v353
  %v415 = vpack.c.b16 %v403, %v400
  %v416 = vpack.c.b16 %v404, %v401
  %v417 = vpack.c.b16 %v405, %v402
  %v418 = vpack.c.b16 %v409, %v406
  %v419 = vpack.c.b16 %v410, %v407
  %v420 = vpack.c.b16 %v411, %v408
  %v421 = vpack.c.b16 %v412, %v412
  %v422 = vpack.c.b16 %v413, %v413
  %v423 = vpack.c.b16 %v414, %v414
  %v466 = vunpack.c.l.b16 %v354
  %v467 = vunpack.c.l.b16 %v355
  %v468 = vunpack.c.l.b16 %v356
  %v469 = vunpack.c.l.b16 %v357
  %v470 = vunpack.c.l.b16 %v358
  %v471 = vunpack.c.l.b16 %v359
  %v472 = vunpack.c.l.b16 %v360
  %v473 = vunpack.c.l.b16 %v361
  %v474 = vunpack.c.l.b16 %v362
  %v475 = vunpack.c.l.b16 %v363
  %v476 = vunpack.c.l.b16 %v364
  %v477 = vunpack.c.l.b16 %v365
  %v478 = vunpack.c.l.b16 %v366
  %v479 = vunpack.c.l.b16 %v367
  %v480 = vunpack.c.l.b16 %v368
  %v481 = vunpack.c.l.b16 %v369
  %v482 = vunpack.c.l.b16 %v370
  %v483 = vunpack.c.l.b16 %v371
  %v484 = vunpack.c.l.b16 %v372
  %v485 = vunpack.c.l.b16 %v373
  %v486 = vunpack.c.l.b16 %v374
  %v487 = vunpack.c.l.b16 %v375
  %v488 = vunpack.c.l.b16 %v376
  %v489 = vunpack.c.l.b16 %v377
  %v490 = vunpack.c.l.b16 %v378
  %v491 = vunpack.c.l.b16 %v379
  %v492 = vunpack.c.l.b16 %v380
  %v493 = vunpack.c.l.b16 %v381
  %v494 = vunpack.c.l.b16 %v382
  %v495 = vunpack.c.l.b16 %v383
  %v496 = vunpack.c.l.b16 %v384
  %v497 = vunpack.c.l.b16 %v385
  %v498 = vunpack.c.l.b16 %v386
  %v499 = vunpack.c.l.b16 %v387
  %v500 = vunpack.c.l.b16 %v388
  %v501 = vunpack.c.l.b16 %v389
  %v502 = vpack.c.b16 %v467, %v466
  %v503 = vpack.c.b16 %v469, %v468
  %v504 = vpack.c.b16 %v471, %v470
  %v505 = vpack.c.b16 %v473, %v472
  %v506 = vpack.c.b16 %v475, %v474
  %v507 = vpack.c.b16 %v477, %v476
  %v508 = vpack.c.b16 %v479, %v478
  %v509 = vpack.c.b16 %v481, %v480
  %v510 = vpack.c.b16 %v483, %v482
  %v511 = vpack.c.b16 %v485, %v484
  %v512 = vpack.c.b16 %v487, %v486
  %v513 = vpack.c.b16 %v489, %v488
  %v514 = vpack.c.b16 %v491, %v490
  %v515 = vpack.c.b16 %v493, %v492
  %v516 = vpack.c.b16 %v495, %v494
  %v517 = vpack.c.b16 %v497, %v496
  %v518 = vpack.c.b16 %v499, %v498
  %v519 = vpack.c.b16 %v501, %v500
  %vm538 = vcmask 261120
  %v540 = vsel %vm538, %v417, 0
  %v543 = vsel %vm538, %v420, 0
  %v546 = vsel %vm538, %v423, 0
  %548 = vmatprep.subr.bf16.mxu0 0
  %549 = vmatpush1.bf16.msra.mxu0 %v502
  %550 = vmatprep.subr.bf16.mxu0 0
  %551 = vmatpush1.bf16.msra.mxu0 %v503
  %552 = vmatprep.subr.bf16.mxu0 0
  %553 = vmatpush1.bf16.msra.mxu0 %v504
  %554 = vmatprep.subr.bf16.mxu0 0
  %555 = vmatpush1.bf16.msra.mxu0 %v505
  %556 = vmatprep.subr.bf16.mxu0 0
  %557 = vmatpush1.bf16.msra.mxu0 %v506
  %558 = vmatprep.subr.bf16.mxu0 0
  %559 = vmatpush1.bf16.msra.mxu0 %v507
  %560 = vmatprep.subr.bf16.mxu0 0
  %561 = vmatpush1.bf16.msra.mxu0 %v508
  %562 = vmatprep.subr.bf16.mxu0 0
  %563 = vmatpush1.bf16.msra.mxu0 %v509
  %564 = vmatprep.subr.bf16.mxu0 0
  %565 = vmatpush1.bf16.msra.mxu0 %v510
  %566 = vmatprep.subr.bf16.mxu0 0
  %567 = vmatpush1.bf16.msra.mxu0 %v511
  %568 = vmatprep.subr.bf16.mxu0 0
  %569 = vmatpush1.bf16.msra.mxu0 %v512
  %570 = vmatprep.subr.bf16.mxu0 0
  %571 = vmatpush1.bf16.msra.mxu0 %v513
  %572 = vmatprep.subr.bf16.mxu0 0
  %573 = vmatpush1.bf16.msra.mxu0 %v514
  %574 = vmatprep.subr.bf16.mxu0 0
  %575 = vmatpush1.bf16.msra.mxu0 %v515
  %576 = vmatprep.subr.bf16.mxu0 0
  %577 = vmatpush1.bf16.msra.mxu0 %v516
  %578 = vmatprep.subr.bf16.mxu0 0
  %579 = vmatpush1.bf16.msra.mxu0 %v517
  %580 = vmatprep.mubr.bf16.mxu0 %v416
  %581 = vmatmul.mubr.bf16.gmra.mrb[0].mxu0 %v415
  %v582 = vpop.f32.mrb[0].mxu0
  %v583 = vadd.f32 0.0, %v582
  %v584 = vpop.f32.mrb[0].mxu0
  %v585 = vpop.f32.mrb[0].mxu0
  %v586 = vadd.f32 0.0, %v585
  %v587 = vpop.f32.mrb[0].mxu0
  %588 = vmatprep.mubr.bf16.mxu0 %v419
  %589 = vmatmul.mubr.bf16.gmra.mrb[0].mxu0 %v418
  %v590 = vpop.f32.mrb[0].mxu0
  %v591 = vadd.f32 0.0, %v590
  %v592 = vpop.f32.mrb[0].mxu0
  %v593 = vpop.f32.mrb[0].mxu0
  %v594 = vadd.f32 0.0, %v593
  %v595 = vpop.f32.mrb[0].mxu0
  %596 = vmatprep.mubr.bf16.mxu0 %v422
  %597 = vmatmul.mubr.bf16.gmra.mrb[0].mxu0 %v421
  %v598 = vpop.f32.mrb[0].mxu0
  %v599 = vadd.f32 0.0, %v598
  %v600 = vpop.f32.mrb[0].mxu0
  %v601 = vpop.f32.mrb[0].mxu0
  %v602 = vpop.f32.mrb[0].mxu0
  %603 = vdwg.mxu0
  %604 = vmatprep.subr.bf16.mxu0 0
  %605 = vmatpush1.bf16.msra.mxu0 %v518
  %606 = vmatprep.subr.bf16.mxu0 0
  %607 = vmatpush1.bf16.msra.mxu0 %v519
  %608 = vmatprep.subr.bf16.mxu0 0
  %609 = vmatpush1.bf16.msra.mxu0 0
  %610 = vmatprep.subr.bf16.mxu0 0
  %611 = vmatpush1.bf16.msra.mxu0 0
  %612 = vmatprep.subr.bf16.mxu0 0
  %613 = vmatpush1.bf16.msra.mxu0 0
  %614 = vmatprep.subr.bf16.mxu0 0
  %615 = vmatpush1.bf16.msra.mxu0 0
  %616 = vmatprep.subr.bf16.mxu0 0
  %617 = vmatpush1.bf16.msra.mxu0 0
  %618 = vmatprep.subr.bf16.mxu0 0
  %619 = vmatpush1.bf16.msra.mxu0 0
  %620 = vmatprep.subr.bf16.mxu0 0
  %621 = vmatpush1.bf16.msra.mxu0 0
  %622 = vmatprep.subr.bf16.mxu0 0
  %623 = vmatpush1.bf16.msra.mxu0 0
  %624 = vmatprep.subr.bf16.mxu0 0
  %625 = vmatpush1.bf16.msra.mxu0 0
  %626 = vmatprep.subr.bf16.mxu0 0
  %627 = vmatpush1.bf16.msra.mxu0 0
  %628 = vmatprep.subr.bf16.mxu0 0
  %629 = vmatpush1.bf16.msra.mxu0 0
  %630 = vmatprep.subr.bf16.mxu0 0
  %631 = vmatpush1.bf16.msra.mxu0 0
  %632 = vmatprep.subr.bf16.mxu0 0
  %633 = vmatpush1.bf16.msra.mxu0 0
  %634 = vmatprep.subr.bf16.mxu0 0
  %635 = vmatpush1.bf16.msra.mxu0 0
  %636 = vmatprep.mubr.bf16.mxu0 0
  %637 = vmatmul.mubr.bf16.gmra.mrb[0].mxu0 %v540
  %v638 = vpop.f32.mrb[0].mxu0
  %v639 = vadd.f32 %v583, %v638
  %v640 = vpop.f32.mrb[0].mxu0
  %v641 = vpop.f32.mrb[0].mxu0
  %v642 = vadd.f32 %v586, %v641
  %v643 = vpop.f32.mrb[0].mxu0
  %644 = vmatprep.mubr.bf16.mxu0 0
  %645 = vmatmul.mubr.bf16.gmra.mrb[0].mxu0 %v543
  %v646 = vpop.f32.mrb[0].mxu0
  %v647 = vadd.f32 %v591, %v646
  %v648 = vpop.f32.mrb[0].mxu0
  %v649 = vpop.f32.mrb[0].mxu0
  %v650 = vadd.f32 %v594, %v649
  %v651 = vpop.f32.mrb[0].mxu0
  %652 = vmatprep.mubr.bf16.mxu0 0
  %653 = vmatmul.mubr.bf16.gmra.mrb[0].mxu0 %v546
  %v654 = vpop.f32.mrb[0].mxu0
  %v655 = vadd.f32 %v599, %v654
  %v656 = vpop.f32.mrb[0].mxu0
  %v657 = vpop.f32.mrb[0].mxu0
  %v658 = vpop.f32.mrb[0].mxu0
  %659 = vdwg.mxu0
  %v660 = vld [vmem:[%s4] sm:$0xff]
  %v661 = vld [vmem:[%s4 + $0x8] sm:$0xff]
  %v662 = vld [vmem:[%s4 + $0x10] sm:$0xff]
  %v663 = vld [vmem:[%s4 + $0x18] sm:$0xff]
  %v664 = vld [vmem:[%s4 + $0x20] sm:$0xff]
  %666 = vset.pattern.permute.xlu0 0
  %667 = vperm.xlu0 %666, %v660
  %v668 = vpop.permute.xlu0 %667
  %671 = vset.pattern.permute.xlu0 0
  %672 = vperm.xlu0 %671, %v661
  %v673 = vpop.permute.xlu0 %672
  %676 = vset.pattern.permute.xlu0 0
  %677 = vperm.xlu0 %676, %v662
  %v678 = vpop.permute.xlu0 %677
  %681 = vset.pattern.permute.xlu0 0
  %682 = vperm.xlu0 %681, %v663
  %v683 = vpop.permute.xlu0 %682
  %686 = vset.pattern.permute.xlu0 0
  %687 = vperm.xlu0 %686, %v664
  %v688 = vpop.permute.xlu0 %687
  %v690 = vmul.f32 %v639, %v668
  %v691 = vmul.f32 %v642, %v673
  %v692 = vmul.f32 %v647, %v678
  %v693 = vmul.f32 %v650, %v683
  %v694 = vmul.f32 %v655, %v688
  %vm695 = vcmask 523264
  %v696 = vsel %vm695, %v690, 0.0
  %v697 = vsel %vm695, %v691, 0.0
  %v698 = vadd.f32 %v696, %v697
  %v699 = vsel %vm695, %v692, 0.0
  %v700 = vadd.f32 %v698, %v699
  %v701 = vsel %vm695, %v693, 0.0
  %v702 = vadd.f32 %v700, %v701
  %v703 = vsel %vm695, %v694, 0.0
  %v704 = vadd.f32 %v702, %v703
  %v705 = vrot.slane %v704, 4
  %v706 = vadd.f32 %v704, %v705
  %v707 = vrot.slane %v706, 2
  %v708 = vadd.f32 %v706, %v707
  %v709 = vrot.slane %v708, 1
  %v710 = vadd.f32 %v708, %v709
  %v711 = vmul.f32 %v710, 0.03125
  %v712 = vsub.f32 %v639, %v711
  %v713 = vsub.f32 %v642, %v711
  %v714 = vsub.f32 %v647, %v711
  %v715 = vsub.f32 %v650, %v711
  %v716 = vsub.f32 %v655, %v711
  %v717 = vmul.f32 %v712, %v712
  %v718 = vmul.f32 %v713, %v713
  %v719 = vmul.f32 %v714, %v714
  %v720 = vmul.f32 %v715, %v715
  %v721 = vmul.f32 %v716, %v716
  %v722 = vmul.f32 %v717, %v668
  %v723 = vmul.f32 %v718, %v673
  %v724 = vmul.f32 %v719, %v678
  %v725 = vmul.f32 %v720, %v683
  %v726 = vmul.f32 %v721, %v688
  %v727 = vsel %vm695, %v722, 0.0
  %v728 = vsel %vm695, %v723, 0.0
  %v729 = vadd.f32 %v727, %v728
  %v730 = vsel %vm695, %v724, 0.0
  %v731 = vadd.f32 %v729, %v730
  %v732 = vsel %vm695, %v725, 0.0
  %v733 = vadd.f32 %v731, %v732
  %v734 = vsel %vm695, %v726, 0.0
  %v735 = vadd.f32 %v733, %v734
  %v736 = vrot.slane %v735, 4
  %v737 = vadd.f32 %v735, %v736
  %v738 = vrot.slane %v737, 2
  %v739 = vadd.f32 %v737, %v738
  %v740 = vrot.slane %v739, 1
  %v741 = vadd.f32 %v739, %v740
  %v742 = vmul.f32 %v741, 0.03125
  %v743 = vld [vmem:[%s2] sm:$0x1]
  %v744 = vadd.f32 %v742, 1e-05
  %v745 = vrsqrt.pop %v744
  %v746 = vmul.f32 %v743, %v745
  %v747 = vld [vmem:[%s3] sm:$0x1]
  %v748 = vmul.f32 %v711, %v746
  %v749 = vsub.f32 %v747, %v748
  %v751 = vlaneseq
  %v752 = vshrl.u32 %v751, 7
  %v753 = vsub.s32 0, %v752
  %v754 = vrot.slane %v746, %v753
  %v756 = vmul.f32 %v639, %v754
  %v757 = vmul.f32 %v642, %v754
  %v758 = vmul.f32 %v647, %v754
  %v759 = vmul.f32 %v650, %v754
  %v760 = vmul.f32 %v655, %v754
  %v762 = vlaneseq
  %v763 = vshrl.u32 %v762, 7
  %v764 = vsub.s32 0, %v763
  %v765 = vrot.slane %v749, %v764
  %v767 = vadd.f32 %v756, %v765
  %v768 = vadd.f32 %v757, %v765
  %v769 = vadd.f32 %v758, %v765
  %v770 = vadd.f32 %v759, %v765
  %v771 = vadd.f32 %v760, %v765
  %v772 = vmax.f32 %v767, 0.0
  %v773 = vmax.f32 %v768, 0.0
  %v774 = vmax.f32 %v769, 0.0
  %v775 = vmax.f32 %v770, 0.0
  %v776 = vmax.f32 %v771, 0.0
  %v777 = vpack.c.bf16 %v773, %v772
  %v778 = vpack.c.bf16 %v775, %v774
  %v779 = vpack.c.bf16 %v776, %v776
  %v783 = vunpack.c.l.b16 %v777
  %v784 = vunpack.c.h.b16 %v777
  %v785 = vunpack.c.l.b16 %v778
  %v786 = vunpack.c.h.b16 %v778
  %v787 = vunpack.c.l.b16 %v779
  %v788 = vpack.c.b16 %v783, %v783
  %v789 = vpack.c.b16 %v784, %v784
  %v790 = vpack.c.b16 %v785, %v785
  %v791 = vpack.c.b16 %v786, %v786
  %v792 = vpack.c.b16 %v787, %v787
  %vm798 = vcmask 519168
  %799 = vst.msk [vmem:[%s5] sm:$0xf] %vm798, %v788
  %800 = vst.msk [vmem:[%s5 + $0x4] sm:$0xf] %vm798, %v789
  %801 = vst.msk [vmem:[%s5 + $0x8] sm:$0xf] %vm798, %v790
  %802 = vst.msk [vmem:[%s5 + $0xc] sm:$0xf] %vm798, %v791
  %803 = vst.msk [vmem:[%s5 + $0x10] sm:$0xf] %vm798, %v792
  // Predicated region
  $region22: #{cnnnet_forward.6} parent=0 // pred_check
    _
  $region23: #{cnnnet_forward.6} parent=0 // pred_check_branch
    %805 = sbr.rel (0) target = $region25
  $region24: #{cnnnet_forward.6} parent=0 // pred_region
    _
  $region25: #{cnnnet_forward.6} parent=0 // pred_fallthru
    _
  // Predicated region
  $region26: #{cnnnet_forward.6} parent=0 // pred_check
    _
  $region27: #{cnnnet_forward.6} parent=0 // pred_check_branch
    %807 = sbr.rel (0) target = $region29
  $region28: #{cnnnet_forward.6} parent=0 // pred_region
    _
  $region29: #{cnnnet_forward.6} parent=0 // pred_fallthru
    _

// kernel: cnnnet_forward.4
$region0: #{cnnnet_forward.4}
  #allocation0 [shape = 'u32[]', space=smem, size = 0x4, offset = 0x4, fixed_abs, tag = 'smem constant byte address 0x4 - core index']
  #allocation1 [shape = 'u32[144,128]{1,0:T(1,128)}', space=vmem, size = 0x12000, scoped, tag = 'internal scratch']
  #allocation2 [shape = 'bf16[420,9]{1,0:T(8,128)(2,1)}', space=vmem, size = 0x1a800, scoped, tag = 'scratch operand']
  %s0 = inlined_call_operand.vmem [shape: bf16[2,2,480,1], index: 0, kind: input, shape index: {}]
  %s1 = inlined_call_operand.vmem [shape: bf16[9,16], index: 1, kind: input, shape index: {}]
  %s2 = inlined_call_operand.vmem [shape: f32[1,16], index: 2, kind: input, shape index: {}]
  %s3 = inlined_call_operand.vmem [shape: f32[1,16], index: 3, kind: input, shape index: {}]
  %s4 = inlined_call_operand.vmem [shape: f32[420,1], index: 4, kind: input, shape index: {}]
  %s5 = inlined_call_operand.vmem [shape: bf16[420,16], index: 5, kind: output, shape index: {}]
  %s6 = sld [smem:[#allocation0]]
  $region30: #{cnnnet_forward.4} parent=0
    _
  %s8 = ssub.s32 1, %s6
  %s9 = scalar_select 0, %s8, %s6
  // Predicated region
  $region2: #{cnnnet_forward.4} parent=0 // pred_check
    _
  $region3: #{cnnnet_forward.4} parent=0 // pred_check_branch
    %11 = sbr.rel (0) target = $region5
  $region4: #{cnnnet_forward.4} parent=0 // pred_region
    _
  $region5: #{cnnnet_forward.4} parent=0 // pred_fallthru
    _
  // Predicated region
  $region6: #{cnnnet_forward.4} parent=0 // pred_check
    _
  $region7: #{cnnnet_forward.4} parent=0 // pred_check_branch
    %13 = sbr.rel (0) target = $region9
  $region8: #{cnnnet_forward.4} parent=0 // pred_region
    _
  $region9: #{cnnnet_forward.4} parent=0 // pred_fallthru
    _
  // Predicated region
  $region10: #{cnnnet_forward.4} parent=0 // pred_check
    _
  $region11: #{cnnnet_forward.4} parent=0 // pred_check_branch
    %15 = sbr.rel (0) target = $region13
  $region12: #{cnnnet_forward.4} parent=0 // pred_region
    _
  $region13: #{cnnnet_forward.4} parent=0 // pred_fallthru
    _
  // Predicated region
  $region14: #{cnnnet_forward.4} parent=0 // pred_check
    _
  $region15: #{cnnnet_forward.4} parent=0 // pred_check_branch
    %17 = sbr.rel (0) target = $region17
  $region16: #{cnnnet_forward.4} parent=0 // pred_region
    _
  $region17: #{cnnnet_forward.4} parent=0 // pred_fallthru
    _
  // Predicated region
  $region18: #{cnnnet_forward.4} parent=0 // pred_check
    _
  $region19: #{cnnnet_forward.4} parent=0 // pred_check_branch
    %19 = sbr.rel (0) target = $region21
  $region20: #{cnnnet_forward.4} parent=0 // pred_region
    _
  $region21: #{cnnnet_forward.4} parent=0 // pred_fallthru
    _
  %v21 = vld [vmem:[%s0] sm:$0xf]
  %v22 = vld [vmem:[%s0 + $0x4] sm:$0xf]
  %v23 = vld [vmem:[%s0 + $0x8] sm:$0xf]
  %v24 = vld [vmem:[%s0 + $0xc] sm:$0xf]
  %v25 = vld [vmem:[%s0 + $0x10] sm:$0xf]
  %v26 = vld [vmem:[%s0 + $0x14] sm:$0xf]
  %v27 = vld [vmem:[%s0 + $0x18] sm:$0xf]
  %v28 = vld [vmem:[%s0 + $0x1c] sm:$0xf]
  %v29 = vld [vmem:[%s0 + $0x20] sm:$0xf]
  %v30 = vld [vmem:[%s0 + $0x24] sm:$0xf]
  %v31 = vld [vmem:[%s0 + $0x28] sm:$0xf]
  %v32 = vld [vmem:[%s0 + $0x2c] sm:$0xf]
  %v33 = vld [vmem:[%s0 + $0x30] sm:$0xf]
  %v34 = vld [vmem:[%s0 + $0x34] sm:$0xf]
  %v35 = vld [vmem:[%s0 + $0x38] sm:$0xf]
  %v36 = vld [vmem:[%s0 + $0x3c] sm:$0xf]
  %v37 = vld [vmem:[%s0 + $0x40] sm:$0xf]
  %v38 = vld [vmem:[%s0 + $0x44] sm:$0xf]
  %v39 = vld [vmem:[%s0 + $0x48] sm:$0xf]
  %v40 = vld [vmem:[%s0 + $0x4c] sm:$0xf]
  %v41 = vld [vmem:[%s0 + $0x50] sm:$0xf]
  %v42 = vld [vmem:[%s0 + $0x54] sm:$0xf]
  %v43 = vld [vmem:[%s0 + $0x58] sm:$0xf]
  %v44 = vld [vmem:[%s0 + $0x5c] sm:$0xf]
  %v45 = vld [vmem:[%s0 + $0x60] sm:$0xf]
  %v46 = vld [vmem:[%s0 + $0x64] sm:$0xf]
  %v47 = vld [vmem:[%s0 + $0x68] sm:$0xf]
  %v48 = vld [vmem:[%s0 + $0x6c] sm:$0xf]
  %v49 = vld [vmem:[%s0 + $0x70] sm:$0xf]
  %v50 = vld [vmem:[%s0 + $0x74] sm:$0xf]
  %v51 = vld [vmem:[%s0 + $0x78] sm:$0xf]
  %v52 = vld [vmem:[%s0 + $0x7c] sm:$0xf]
  %v53 = vld [vmem:[%s0 + $0x80] sm:$0xf]
  %v54 = vld [vmem:[%s0 + $0x84] sm:$0xf]
  %v55 = vld [vmem:[%s0 + $0x88] sm:$0xf]
  %v56 = vld [vmem:[%s0 + $0x8c] sm:$0xf]
  %v57 = vld [vmem:[%s0 + $0x90] sm:$0xf]
  %v58 = vld [vmem:[%s0 + $0x94] sm:$0xf]
  %v59 = vld [vmem:[%s0 + $0x98] sm:$0xf]
  %v60 = vld [vmem:[%s0 + $0x9c] sm:$0xf]
  %v61 = vld [vmem:[%s0 + $0xa0] sm:$0xf]
  %v62 = vld [vmem:[%s0 + $0xa4] sm:$0xf]
  %v63 = vld [vmem:[%s0 + $0xa8] sm:$0xf]
  %v64 = vld [vmem:[%s0 + $0xac] sm:$0xf]
  %v65 = vld [vmem:[%s0 + $0xb0] sm:$0xf]
  %v66 = vld [vmem:[%s0 + $0xb4] sm:$0xf]
  %v67 = vld [vmem:[%s0 + $0xb8] sm:$0xf]
  %v68 = vld [vmem:[%s0 + $0xbc] sm:$0xf]
  %v69 = vld [vmem:[%s0 + $0xc0] sm:$0xf]
  %v70 = vld [vmem:[%s0 + $0xc4] sm:$0xf]
  %v71 = vld [vmem:[%s0 + $0xc8] sm:$0xf]
  %v72 = vld [vmem:[%s0 + $0xcc] sm:$0xf]
  %v73 = vld [vmem:[%s0 + $0xd0] sm:$0x3]
  %vm74 = vcmask 3072
  %75 = vst.msk [vmem:[#allocation2] sm:$0xf] %vm74, %v21
  %76 = vst.msk [vmem:[#allocation2 + $0x4] sm:$0xf] %vm74, %v22
  %77 = vst.msk [vmem:[#allocation2 + $0x8] sm:$0xf] %vm74, %v23
  %78 = vst.msk [vmem:[#allocation2 + $0xc] sm:$0xf] %vm74, %v24
  %79 = vst.msk [vmem:[#allocation2 + $0x10] sm:$0xf] %vm74, %v25
  %80 = vst.msk [vmem:[#allocation2 + $0x14] sm:$0xf] %vm74, %v26
  %81 = vst.msk [vmem:[#allocation2 + $0x18] sm:$0xf] %vm74, %v27
  %82 = vst.msk [vmem:[#allocation2 + $0x1c] sm:$0xf] %vm74, %v28
  %83 = vst.msk [vmem:[#allocation2 + $0x20] sm:$0xf] %vm74, %v29
  %84 = vst.msk [vmem:[#allocation2 + $0x24] sm:$0xf] %vm74, %v30
  %85 = vst.msk [vmem:[#allocation2 + $0x28] sm:$0xf] %vm74, %v31
  %86 = vst.msk [vmem:[#allocation2 + $0x2c] sm:$0xf] %vm74, %v32
  %87 = vst.msk [vmem:[#allocation2 + $0x30] sm:$0xf] %vm74, %v33
  %88 = vst.msk [vmem:[#allocation2 + $0x34] sm:$0xf] %vm74, %v34
  %89 = vst.msk [vmem:[#allocation2 + $0x38] sm:$0xf] %vm74, %v35
  %90 = vst.msk [vmem:[#allocation2 + $0x3c] sm:$0xf] %vm74, %v36
  %91 = vst.msk [vmem:[#allocation2 + $0x40] sm:$0xf] %vm74, %v37
  %92 = vst.msk [vmem:[#allocation2 + $0x44] sm:$0xf] %vm74, %v38
  %93 = vst.msk [vmem:[#allocation2 + $0x48] sm:$0xf] %vm74, %v39
  %94 = vst.msk [vmem:[#allocation2 + $0x4c] sm:$0xf] %vm74, %v40
  %95 = vst.msk [vmem:[#allocation2 + $0x50] sm:$0xf] %vm74, %v41
  %96 = vst.msk [vmem:[#allocation2 + $0x54] sm:$0xf] %vm74, %v42
  %97 = vst.msk [vmem:[#allocation2 + $0x58] sm:$0xf] %vm74, %v43
  %98 = vst.msk [vmem:[#allocation2 + $0x5c] sm:$0xf] %vm74, %v44
  %99 = vst.msk [vmem:[#allocation2 + $0x60] sm:$0xf] %vm74, %v45
  %100 = vst.msk [vmem:[#allocation2 + $0x64] sm:$0xf] %vm74, %v46
  %101 = vst.msk [vmem:[#allocation2 + $0x68] sm:$0xf] %vm74, %v47
  %102 = vst.msk [vmem:[#allocation2 + $0x6c] sm:$0xf] %vm74, %v48
  %103 = vst.msk [vmem:[#allocation2 + $0x70] sm:$0xf] %vm74, %v49
  %104 = vst.msk [vmem:[#allocation2 + $0x74] sm:$0xf] %vm74, %v50
  %105 = vst.msk [vmem:[#allocation2 + $0x78] sm:$0xf] %vm74, %v51
  %106 = vst.msk [vmem:[#allocation2 + $0x7c] sm:$0xf] %vm74, %v52
  %107 = vst.msk [vmem:[#allocation2 + $0x80] sm:$0xf] %vm74, %v53
  %108 = vst.msk [vmem:[#allocation2 + $0x84] sm:$0xf] %vm74, %v54
  %109 = vst.msk [vmem:[#allocation2 + $0x88] sm:$0xf] %vm74, %v55
  %110 = vst.msk [vmem:[#allocation2 + $0x8c] sm:$0xf] %vm74, %v56
  %111 = vst.msk [vmem:[#allocation2 + $0x90] sm:$0xf] %vm74, %v57
  %112 = vst.msk [vmem:[#allocation2 + $0x94] sm:$0xf] %vm74, %v58
  %113 = vst.msk [vmem:[#allocation2 + $0x98] sm:$0xf] %vm74, %v59
  %114 = vst.msk [vmem:[#allocation2 + $0x9c] sm:$0xf] %vm74, %v60
  %115 = vst.msk [vmem:[#allocation2 + $0xa0] sm:$0xf] %vm74, %v61
  %116 = vst.msk [vmem:[#allocation2 + $0xa4] sm:$0xf] %vm74, %v62
  %117 = vst.msk [vmem:[#allocation2 + $0xa8] sm:$0xf] %vm74, %v63
  %118 = vst.msk [vmem:[#allocation2 + $0xac] sm:$0xf] %vm74, %v64
  %119 = vst.msk [vmem:[#allocation2 + $0xb0] sm:$0xf] %vm74, %v65
  %120 = vst.msk [vmem:[#allocation2 + $0xb4] sm:$0xf] %vm74, %v66
  %121 = vst.msk [vmem:[#allocation2 + $0xb8] sm:$0xf] %vm74, %v67
  %122 = vst.msk [vmem:[#allocation2 + $0xbc] sm:$0xf] %vm74, %v68
  %123 = vst.msk [vmem:[#allocation2 + $0xc0] sm:$0xf] %vm74, %v69
  %124 = vst.msk [vmem:[#allocation2 + $0xc4] sm:$0xf] %vm74, %v70
  %125 = vst.msk [vmem:[#allocation2 + $0xc8] sm:$0xf] %vm74, %v71
  %126 = vst.msk [vmem:[#allocation2 + $0xcc] sm:$0xf] %vm74, %v72
  %vm127 = vcmask 1024
  %128 = vst.msk [vmem:[#allocation2 + $0xd0] sm:$0x3] %vm127, %v73
  %s129 = scalar_lea.vmem %s0, 240
  %v130 = vld [vmem:[%s129] sm:$0xf]
  %v131 = vld [vmem:[%s129 + $0x4] sm:$0xf]
  %v132 = vld [vmem:[%s129 + $0x8] sm:$0xf]
  %v133 = vld [vmem:[%s129 + $0xc] sm:$0xf]
  %v134 = vld [vmem:[%s129 + $0x10] sm:$0xf]
  %v135 = vld [vmem:[%s129 + $0x14] sm:$0xf]
  %v136 = vld [vmem:[%s129 + $0x18] sm:$0xf]
  %v137 = vld [vmem:[%s129 + $0x1c] sm:$0xf]
  %v138 = vld [vmem:[%s129 + $0x20] sm:$0xf]
  %v139 = vld [vmem:[%s129 + $0x24] sm:$0xf]
  %v140 = vld [vmem:[%s129 + $0x28] sm:$0xf]
  %v141 = vld [vmem:[%s129 + $0x2c] sm:$0xf]
  %v142 = vld [vmem:[%s129 + $0x30] sm:$0xf]
  %v143 = vld [vmem:[%s129 + $0x34] sm:$0xf]
  %v144 = vld [vmem:[%s129 + $0x38] sm:$0xf]
  %v145 = vld [vmem:[%s129 + $0x3c] sm:$0xf]
  %v146 = vld [vmem:[%s129 + $0x40] sm:$0xf]
  %v147 = vld [vmem:[%s129 + $0x44] sm:$0xf]
  %v148 = vld [vmem:[%s129 + $0x48] sm:$0xf]
  %v149 = vld [vmem:[%s129 + $0x4c] sm:$0xf]
  %v150 = vld [vmem:[%s129 + $0x50] sm:$0xf]
  %v151 = vld [vmem:[%s129 + $0x54] sm:$0xf]
  %v152 = vld [vmem:[%s129 + $0x58] sm:$0xf]
  %v153 = vld [vmem:[%s129 + $0x5c] sm:$0xf]
  %v154 = vld [vmem:[%s129 + $0x60] sm:$0xf]
  %v155 = vld [vmem:[%s129 + $0x64] sm:$0xf]
  %v156 = vld [vmem:[%s129 + $0x68] sm:$0xf]
  %v157 = vld [vmem:[%s129 + $0x6c] sm:$0xf]
  %v158 = vld [vmem:[%s129 + $0x70] sm:$0xf]
  %v159 = vld [vmem:[%s129 + $0x74] sm:$0xf]
  %v160 = vld [vmem:[%s129 + $0x78] sm:$0xf]
  %v161 = vld [vmem:[%s129 + $0x7c] sm:$0xf]
  %v162 = vld [vmem:[%s129 + $0x80] sm:$0xf]
  %v163 = vld [vmem:[%s129 + $0x84] sm:$0xf]
  %v164 = vld [vmem:[%s129 + $0x88] sm:$0xf]
  %v165 = vld [vmem:[%s129 + $0x8c] sm:$0xf]
  %v166 = vld [vmem:[%s129 + $0x90] sm:$0xf]
  %v167 = vld [vmem:[%s129 + $0x94] sm:$0xf]
  %v168 = vld [vmem:[%s129 + $0x98] sm:$0xf]
  %v169 = vld [vmem:[%s129 + $0x9c] sm:$0xf]
  %v170 = vld [vmem:[%s129 + $0xa0] sm:$0xf]
  %v171 = vld [vmem:[%s129 + $0xa4] sm:$0xf]
  %v172 = vld [vmem:[%s129 + $0xa8] sm:$0xf]
  %v173 = vld [vmem:[%s129 + $0xac] sm:$0xf]
  %v174 = vld [vmem:[%s129 + $0xb0] sm:$0xf]
  %v175 = vld [vmem:[%s129 + $0xb4] sm:$0xf]
  %v176 = vld [vmem:[%s129 + $0xb8] sm:$0xf]
  %v177 = vld [vmem:[%s129 + $0xbc] sm:$0xf]
  %v178 = vld [vmem:[%s129 + $0xc0] sm:$0xf]
  %v179 = vld [vmem:[%s129 + $0xc4] sm:$0xf]
  %v180 = vld [vmem:[%s129 + $0xc8] sm:$0xf]
  %v181 = vld [vmem:[%s129 + $0xcc] sm:$0xf]
  %v182 = vld [vmem:[%s129 + $0xd0] sm:$0x3]
  %236 = vrot.lane.b32.xlu0 %v130, 1
  %v237 = vpop.permute.xlu0 %236
  %238 = vrot.lane.b32.xlu0 %v131, 1
  %v239 = vpop.permute.xlu0 %238
  %240 = vrot.lane.b32.xlu0 %v132, 1
  %v241 = vpop.permute.xlu0 %240
  %242 = vrot.lane.b32.xlu0 %v133, 1
  %v243 = vpop.permute.xlu0 %242
  %244 = vrot.lane.b32.xlu0 %v134, 1
  %v245 = vpop.permute.xlu0 %244
  %246 = vrot.lane.b32.xlu0 %v135, 1
  %v247 = vpop.permute.xlu0 %246
  %248 = vrot.lane.b32.xlu0 %v136, 1
  %v249 = vpop.permute.xlu0 %248
  %250 = vrot.lane.b32.xlu0 %v137, 1
  %v251 = vpop.permute.xlu0 %250
  %252 = vrot.lane.b32.xlu0 %v138, 1
  %v253 = vpop.permute.xlu0 %252
  %254 = vrot.lane.b32.xlu0 %v139, 1
  %v255 = vpop.permute.xlu0 %254
  %256 = vrot.lane.b32.xlu0 %v140, 1
  %v257 = vpop.permute.xlu0 %256
  %258 = vrot.lane.b32.xlu0 %v141, 1
  %v259 = vpop.permute.xlu0 %258
  %260 = vrot.lane.b32.xlu0 %v142, 1
  %v261 = vpop.permute.xlu0 %260
  %262 = vrot.lane.b32.xlu0 %v143, 1
  %v263 = vpop.permute.xlu0 %262
  %264 = vrot.lane.b32.xlu0 %v144, 1
  %v265 = vpop.permute.xlu0 %264
  %266 = vrot.lane.b32.xlu0 %v145, 1
  %v267 = vpop.permute.xlu0 %266
  %268 = vrot.lane.b32.xlu0 %v146, 1
  %v269 = vpop.permute.xlu0 %268
  %270 = vrot.lane.b32.xlu0 %v147, 1
  %v271 = vpop.permute.xlu0 %270
  %272 = vrot.lane.b32.xlu0 %v148, 1
  %v273 = vpop.permute.xlu0 %272
  %274 = vrot.lane.b32.xlu0 %v149, 1
  %v275 = vpop.permute.xlu0 %274
  %276 = vrot.lane.b32.xlu0 %v150, 1
  %v277 = vpop.permute.xlu0 %276
  %278 = vrot.lane.b32.xlu0 %v151, 1
  %v279 = vpop.permute.xlu0 %278
  %280 = vrot.lane.b32.xlu0 %v152, 1
  %v281 = vpop.permute.xlu0 %280
  %282 = vrot.lane.b32.xlu0 %v153, 1
  %v283 = vpop.permute.xlu0 %282
  %284 = vrot.lane.b32.xlu0 %v154, 1
  %v285 = vpop.permute.xlu0 %284
  %286 = vrot.lane.b32.xlu0 %v155, 1
  %v287 = vpop.permute.xlu0 %286
  %288 = vrot.lane.b32.xlu0 %v156, 1
  %v289 = vpop.permute.xlu0 %288
  %290 = vrot.lane.b32.xlu0 %v157, 1
  %v291 = vpop.permute.xlu0 %290
  %292 = vrot.lane.b32.xlu0 %v158, 1
  %v293 = vpop.permute.xlu0 %292
  %294 = vrot.lane.b32.xlu0 %v159, 1
  %v295 = vpop.permute.xlu0 %294
  %296 = vrot.lane.b32.xlu0 %v160, 1
  %v297 = vpop.permute.xlu0 %296
  %298 = vrot.lane.b32.xlu0 %v161, 1
  %v299 = vpop.permute.xlu0 %298
  %300 = vrot.lane.b32.xlu0 %v162, 1
  %v301 = vpop.permute.xlu0 %300
  %302 = vrot.lane.b32.xlu0 %v163, 1
  %v303 = vpop.permute.xlu0 %302
  %304 = vrot.lane.b32.xlu0 %v164, 1
  %v305 = vpop.permute.xlu0 %304
  %306 = vrot.lane.b32.xlu0 %v165, 1
  %v307 = vpop.permute.xlu0 %306
  %308 = vrot.lane.b32.xlu0 %v166, 1
  %v309 = vpop.permute.xlu0 %308
  %310 = vrot.lane.b32.xlu0 %v167, 1
  %v311 = vpop.permute.xlu0 %310
  %312 = vrot.lane.b32.xlu0 %v168, 1
  %v313 = vpop.permute.xlu0 %312
  %314 = vrot.lane.b32.xlu0 %v169, 1
  %v315 = vpop.permute.xlu0 %314
  %316 = vrot.lane.b32.xlu0 %v170, 1
  %v317 = vpop.permute.xlu0 %316
  %318 = vrot.lane.b32.xlu0 %v171, 1
  %v319 = vpop.permute.xlu0 %318
  %320 = vrot.lane.b32.xlu0 %v172, 1
  %v321 = vpop.permute.xlu0 %320
  %322 = vrot.lane.b32.xlu0 %v173, 1
  %v323 = vpop.permute.xlu0 %322
  %324 = vrot.lane.b32.xlu0 %v174, 1
  %v325 = vpop.permute.xlu0 %324
  %326 = vrot.lane.b32.xlu0 %v175, 1
  %v327 = vpop.permute.xlu0 %326
  %328 = vrot.lane.b32.xlu0 %v176, 1
  %v329 = vpop.permute.xlu0 %328
  %330 = vrot.lane.b32.xlu0 %v177, 1
  %v331 = vpop.permute.xlu0 %330
  %332 = vrot.lane.b32.xlu0 %v178, 1
  %v333 = vpop.permute.xlu0 %332
  %334 = vrot.lane.b32.xlu0 %v179, 1
  %v335 = vpop.permute.xlu0 %334
  %336 = vrot.lane.b32.xlu0 %v180, 1
  %v337 = vpop.permute.xlu0 %336
  %338 = vrot.lane.b32.xlu0 %v181, 1
  %v339 = vpop.permute.xlu0 %338
  %340 = vrot.lane.b32.xlu0 %v182, 1
  %v341 = vpop.permute.xlu0 %340
  %vm395 = vcmask 11272
  %396 = vst.msk [vmem:[#allocation2] sm:$0xf] %vm395, %v237
  %397 = vst.msk [vmem:[#allocation2 + $0x4] sm:$0xf] %vm395, %v239
  %398 = vst.msk [vmem:[#allocation2 + $0x8] sm:$0xf] %vm395, %v241
  %399 = vst.msk [vmem:[#allocation2 + $0xc] sm:$0xf] %vm395, %v243
  %400 = vst.msk [vmem:[#allocation2 + $0x10] sm:$0xf] %vm395, %v245
  %401 = vst.msk [vmem:[#allocation2 + $0x14] sm:$0xf] %vm395, %v247
  %402 = vst.msk [vmem:[#allocation2 + $0x18] sm:$0xf] %vm395, %v249
  %403 = vst.msk [vmem:[#allocation2 + $0x1c] sm:$0xf] %vm395, %v251
  %404 = vst.msk [vmem:[#allocation2 + $0x20] sm:$0xf] %vm395, %v253
  %405 = vst.msk [vmem:[#allocation2 + $0x24] sm:$0xf] %vm395, %v255
  %406 = vst.msk [vmem:[#allocation2 + $0x28] sm:$0xf] %vm395, %v257
  %407 = vst.msk [vmem:[#allocation2 + $0x2c] sm:$0xf] %vm395, %v259
  %408 = vst.msk [vmem:[#allocation2 + $0x30] sm:$0xf] %vm395, %v261
  %409 = vst.msk [vmem:[#allocation2 + $0x34] sm:$0xf] %vm395, %v263
  %410 = vst.msk [vmem:[#allocation2 + $0x38] sm:$0xf] %vm395, %v265
  %411 = vst.msk [vmem:[#allocation2 + $0x3c] sm:$0xf] %vm395, %v267
  %412 = vst.msk [vmem:[#allocation2 + $0x40] sm:$0xf] %vm395, %v269
  %413 = vst.msk [vmem:[#allocation2 + $0x44] sm:$0xf] %vm395, %v271
  %414 = vst.msk [vmem:[#allocation2 + $0x48] sm:$0xf] %vm395, %v273
  %415 = vst.msk [vmem:[#allocation2 + $0x4c] sm:$0xf] %vm395, %v275
  %416 = vst.msk [vmem:[#allocation2 + $0x50] sm:$0xf] %vm395, %v277
  %417 = vst.msk [vmem:[#allocation2 + $0x54] sm:$0xf] %vm395, %v279
  %418 = vst.msk [vmem:[#allocation2 + $0x58] sm:$0xf] %vm395, %v281
  %419 = vst.msk [vmem:[#allocation2 + $0x5c] sm:$0xf] %vm395, %v283
  %420 = vst.msk [vmem:[#allocation2 + $0x60] sm:$0xf] %vm395, %v285
  %421 = vst.msk [vmem:[#allocation2 + $0x64] sm:$0xf] %vm395, %v287
  %422 = vst.msk [vmem:[#allocation2 + $0x68] sm:$0xf] %vm395, %v289
  %423 = vst.msk [vmem:[#allocation2 + $0x6c] sm:$0xf] %vm395, %v291
  %424 = vst.msk [vmem:[#allocation2 + $0x70] sm:$0xf] %vm395, %v293
  %425 = vst.msk [vmem:[#allocation2 + $0x74] sm:$0xf] %vm395, %v295
  %426 = vst.msk [vmem:[#allocation2 + $0x78] sm:$0xf] %vm395, %v297
  %427 = vst.msk [vmem:[#allocation2 + $0x7c] sm:$0xf] %vm395, %v299
  %428 = vst.msk [vmem:[#allocation2 + $0x80] sm:$0xf] %vm395, %v301
  %429 = vst.msk [vmem:[#allocation2 + $0x84] sm:$0xf] %vm395, %v303
  %430 = vst.msk [vmem:[#allocation2 + $0x88] sm:$0xf] %vm395, %v305
  %431 = vst.msk [vmem:[#allocation2 + $0x8c] sm:$0xf] %vm395, %v307
  %432 = vst.msk [vmem:[#allocation2 + $0x90] sm:$0xf] %vm395, %v309
  %433 = vst.msk [vmem:[#allocation2 + $0x94] sm:$0xf] %vm395, %v311
  %434 = vst.msk [vmem:[#allocation2 + $0x98] sm:$0xf] %vm395, %v313
  %435 = vst.msk [vmem:[#allocation2 + $0x9c] sm:$0xf] %vm395, %v315
  %436 = vst.msk [vmem:[#allocation2 + $0xa0] sm:$0xf] %vm395, %v317
  %437 = vst.msk [vmem:[#allocation2 + $0xa4] sm:$0xf] %vm395, %v319
  %438 = vst.msk [vmem:[#allocation2 + $0xa8] sm:$0xf] %vm395, %v321
  %439 = vst.msk [vmem:[#allocation2 + $0xac] sm:$0xf] %vm395, %v323
  %440 = vst.msk [vmem:[#allocation2 + $0xb0] sm:$0xf] %vm395, %v325
  %441 = vst.msk [vmem:[#allocation2 + $0xb4] sm:$0xf] %vm395, %v327
  %442 = vst.msk [vmem:[#allocation2 + $0xb8] sm:$0xf] %vm395, %v329
  %443 = vst.msk [vmem:[#allocation2 + $0xbc] sm:$0xf] %vm395, %v331
  %444 = vst.msk [vmem:[#allocation2 + $0xc0] sm:$0xf] %vm395, %v333
  %445 = vst.msk [vmem:[#allocation2 + $0xc4] sm:$0xf] %vm395, %v335
  %446 = vst.msk [vmem:[#allocation2 + $0xc8] sm:$0xf] %vm395, %v337
  %447 = vst.msk [vmem:[#allocation2 + $0xcc] sm:$0xf] %vm395, %v339
  %vm448 = vcmask 9224
  %449 = vst.msk [vmem:[#allocation2 + $0xd0] sm:$0x3] %vm448, %v341
  %v450 = vld [vmem:[%s0] sm:$0xe]
  %v451 = vld [vmem:[%s0 + $0x4] sm:$0xf]
  %v452 = vld [vmem:[%s0 + $0x8] sm:$0xf]
  %v453 = vld [vmem:[%s0 + $0xc] sm:$0xf]
  %v454 = vld [vmem:[%s0 + $0x10] sm:$0xf]
  %v455 = vld [vmem:[%s0 + $0x14] sm:$0xf]
  %v456 = vld [vmem:[%s0 + $0x18] sm:$0xf]
  %v457 = vld [vmem:[%s0 + $0x1c] sm:$0xf]
  %v458 = vld [vmem:[%s0 + $0x20] sm:$0xf]
  %v459 = vld [vmem:[%s0 + $0x24] sm:$0xf]
  %v460 = vld [vmem:[%s0 + $0x28] sm:$0xf]
  %v461 = vld [vmem:[%s0 + $0x2c] sm:$0xf]
  %v462 = vld [vmem:[%s0 + $0x30] sm:$0xf]
  %v463 = vld [vmem:[%s0 + $0x34] sm:$0xf]
  %v464 = vld [vmem:[%s0 + $0x38] sm:$0xf]
  %v465 = vld [vmem:[%s0 + $0x3c] sm:$0xf]
  %v466 = vld [vmem:[%s0 + $0x40] sm:$0xf]
  %v467 = vld [vmem:[%s0 + $0x44] sm:$0xf]
  %v468 = vld [vmem:[%s0 + $0x48] sm:$0xf]
  %v469 = vld [vmem:[%s0 + $0x4c] sm:$0xf]
  %v470 = vld [vmem:[%s0 + $0x50] sm:$0xf]
  %v471 = vld [vmem:[%s0 + $0x54] sm:$0xf]
  %v472 = vld [vmem:[%s0 + $0x58] sm:$0xf]
  %v473 = vld [vmem:[%s0 + $0x5c] sm:$0xf]
  %v474 = vld [vmem:[%s0 + $0x60] sm:$0xf]
  %v475 = vld [vmem:[%s0 + $0x64] sm:$0xf]
  %v476 = vld [vmem:[%s0 + $0x68] sm:$0xf]
  %v477 = vld [vmem:[%s0 + $0x6c] sm:$0xf]
  %v478 = vld [vmem:[%s0 + $0x70] sm:$0xf]
  %v479 = vld [vmem:[%s0 + $0x74] sm:$0xf]
  %v480 = vld [vmem:[%s0 + $0x78] sm:$0xf]
  %v481 = vld [vmem:[%s0 + $0x7c] sm:$0xf]
  %v482 = vld [vmem:[%s0 + $0x80] sm:$0xf]
  %v483 = vld [vmem:[%s0 + $0x84] sm:$0xf]
  %v484 = vld [vmem:[%s0 + $0x88] sm:$0xf]
  %v485 = vld [vmem:[%s0 + $0x8c] sm:$0xf]
  %v486 = vld [vmem:[%s0 + $0x90] sm:$0xf]
  %v487 = vld [vmem:[%s0 + $0x94] sm:$0xf]
  %v488 = vld [vmem:[%s0 + $0x98] sm:$0xf]
  %v489 = vld [vmem:[%s0 + $0x9c] sm:$0xf]
  %v490 = vld [vmem:[%s0 + $0xa0] sm:$0xf]
  %v491 = vld [vmem:[%s0 + $0xa4] sm:$0xf]
  %v492 = vld [vmem:[%s0 + $0xa8] sm:$0xf]
  %v493 = vld [vmem:[%s0 + $0xac] sm:$0xf]
  %v494 = vld [vmem:[%s0 + $0xb0] sm:$0xf]
  %v495 = vld [vmem:[%s0 + $0xb4] sm:$0xf]
  %v496 = vld [vmem:[%s0 + $0xb8] sm:$0xf]
  %v497 = vld [vmem:[%s0 + $0xbc] sm:$0xf]
  %v498 = vld [vmem:[%s0 + $0xc0] sm:$0xf]
  %v499 = vld [vmem:[%s0 + $0xc4] sm:$0xf]
  %v500 = vld [vmem:[%s0 + $0xc8] sm:$0xf]
  %v501 = vld [vmem:[%s0 + $0xcc] sm:$0xf]
  %v502 = vld [vmem:[%s0 + $0xd0] sm:$0x7]
  %vm556 = vcmask 1042432
  %vm557 = vcmask 1046532
  %vm558 = vmor %vm556, %vm557
  %v559 = vrot.slane %v450, 5
  %v560 = vrot.slane %v559, 4
  %v561 = vrot.slane %v451, 5
  %v562 = vsel %vm558, %v560, %v561
  %v563 = vrot.slane %v561, 4
  %v564 = vrot.slane %v452, 5
  %v565 = vsel %vm558, %v563, %v564
  %v566 = vrot.slane %v564, 4
  %v567 = vrot.slane %v453, 5
  %v568 = vsel %vm558, %v566, %v567
  %v569 = vrot.slane %v567, 4
  %v570 = vrot.slane %v454, 5
  %v571 = vsel %vm558, %v569, %v570
  %v572 = vrot.slane %v570, 4
  %v573 = vrot.slane %v455, 5
  %v574 = vsel %vm558, %v572, %v573
  %v575 = vrot.slane %v573, 4
  %v576 = vrot.slane %v456, 5
  %v577 = vsel %vm558, %v575, %v576
  %v578 = vrot.slane %v576, 4
  %v579 = vrot.slane %v457, 5
  %v580 = vsel %vm558, %v578, %v579
  %v581 = vrot.slane %v579, 4
  %v582 = vrot.slane %v458, 5
  %v583 = vsel %vm558, %v581, %v582
  %v584 = vrot.slane %v582, 4
  %v585 = vrot.slane %v459, 5
  %v586 = vsel %vm558, %v584, %v585
  %v587 = vrot.slane %v585, 4
  %v588 = vrot.slane %v460, 5
  %v589 = vsel %vm558, %v587, %v588
  %v590 = vrot.slane %v588, 4
  %v591 = vrot.slane %v461, 5
  %v592 = vsel %vm558, %v590, %v591
  %v593 = vrot.slane %v591, 4
  %v594 = vrot.slane %v462, 5
  %v595 = vsel %vm558, %v593, %v594
  %v596 = vrot.slane %v594, 4
  %v597 = vrot.slane %v463, 5
  %v598 = vsel %vm558, %v596, %v597
  %v599 = vrot.slane %v597, 4
  %v600 = vrot.slane %v464, 5
  %v601 = vsel %vm558, %v599, %v600
  %v602 = vrot.slane %v600, 4
  %v603 = vrot.slane %v465, 5
  %v604 = vsel %vm558, %v602, %v603
  %v605 = vrot.slane %v603, 4
  %v606 = vrot.slane %v466, 5
  %v607 = vsel %vm558, %v605, %v606
  %v608 = vrot.slane %v606, 4
  %v609 = vrot.slane %v467, 5
  %v610 = vsel %vm558, %v608, %v609
  %v611 = vrot.slane %v609, 4
  %v612 = vrot.slane %v468, 5
  %v613 = vsel %vm558, %v611, %v612
  %v614 = vrot.slane %v612, 4
  %v615 = vrot.slane %v469, 5
  %v616 = vsel %vm558, %v614, %v615
  %v617 = vrot.slane %v615, 4
  %v618 = vrot.slane %v470, 5
  %v619 = vsel %vm558, %v617, %v618
  %v620 = vrot.slane %v618, 4
  %v621 = vrot.slane %v471, 5
  %v622 = vsel %vm558, %v620, %v621
  %v623 = vrot.slane %v621, 4
  %v624 = vrot.slane %v472, 5
  %v625 = vsel %vm558, %v623, %v624
  %v626 = vrot.slane %v624, 4
  %v627 = vrot.slane %v473, 5
  %v628 = vsel %vm558, %v626, %v627
  %v629 = vrot.slane %v627, 4
  %v630 = vrot.slane %v474, 5
  %v631 = vsel %vm558, %v629, %v630
  %v632 = vrot.slane %v630, 4
  %v633 = vrot.slane %v475, 5
  %v634 = vsel %vm558, %v632, %v633
  %v635 = vrot.slane %v633, 4
  %v636 = vrot.slane %v476, 5
  %v637 = vsel %vm558, %v635, %v636
  %v638 = vrot.slane %v636, 4
  %v639 = vrot.slane %v477, 5
  %v640 = vsel %vm558, %v638, %v639
  %v641 = vrot.slane %v639, 4
  %v642 = vrot.slane %v478, 5
  %v643 = vsel %vm558, %v641, %v642
  %v644 = vrot.slane %v642, 4
  %v645 = vrot.slane %v479, 5
  %v646 = vsel %vm558, %v644, %v645
  %v647 = vrot.slane %v645, 4
  %v648 = vrot.slane %v480, 5
  %v649 = vsel %vm558, %v647, %v648
  %v650 = vrot.slane %v648, 4
  %v651 = vrot.slane %v481, 5
  %v652 = vsel %vm558, %v650, %v651
  %v653 = vrot.slane %v651, 4
  %v654 = vrot.slane %v482, 5
  %v655 = vsel %vm558, %v653, %v654
  %v656 = vrot.slane %v654, 4
  %v657 = vrot.slane %v483, 5
  %v658 = vsel %vm558, %v656, %v657
  %v659 = vrot.slane %v657, 4
  %v660 = vrot.slane %v484, 5
  %v661 = vsel %vm558, %v659, %v660
  %v662 = vrot.slane %v660, 4
  %v663 = vrot.slane %v485, 5
  %v664 = vsel %vm558, %v662, %v663
  %v665 = vrot.slane %v663, 4
  %v666 = vrot.slane %v486, 5
  %v667 = vsel %vm558, %v665, %v666
  %v668 = vrot.slane %v666, 4
  %v669 = vrot.slane %v487, 5
  %v670 = vsel %vm558, %v668, %v669
  %v671 = vrot.slane %v669, 4
  %v672 = vrot.slane %v488, 5
  %v673 = vsel %vm558, %v671, %v672
  %v674 = vrot.slane %v672, 4
  %v675 = vrot.slane %v489, 5
  %v676 = vsel %vm558, %v674, %v675
  %v677 = vrot.slane %v675, 4
  %v678 = vrot.slane %v490, 5
  %v679 = vsel %vm558, %v677, %v678
  %v680 = vrot.slane %v678, 4
  %v681 = vrot.slane %v491, 5
  %v682 = vsel %vm558, %v680, %v681
  %v683 = vrot.slane %v681, 4
  %v684 = vrot.slane %v492, 5
  %v685 = vsel %vm558, %v683, %v684
  %v686 = vrot.slane %v684, 4
  %v687 = vrot.slane %v493, 5
  %v688 = vsel %vm558, %v686, %v687
  %v689 = vrot.slane %v687, 4
  %v690 = vrot.slane %v494, 5
  %v691 = vsel %vm558, %v689, %v690
  %v692 = vrot.slane %v690, 4
  %v693 = vrot.slane %v495, 5
  %v694 = vsel %vm558, %v692, %v693
  %v695 = vrot.slane %v693, 4
  %v696 = vrot.slane %v496, 5
  %v697 = vsel %vm558, %v695, %v696
  %v698 = vrot.slane %v696, 4
  %v699 = vrot.slane %v497, 5
  %v700 = vsel %vm558, %v698, %v699
  %v701 = vrot.slane %v699, 4
  %v702 = vrot.slane %v498, 5
  %v703 = vsel %vm558, %v701, %v702
  %v704 = vrot.slane %v702, 4
  %v705 = vrot.slane %v499, 5
  %v706 = vsel %vm558, %v704, %v705
  %v707 = vrot.slane %v705, 4
  %v708 = vrot.slane %v500, 5
  %v709 = vsel %vm558, %v707, %v708
  %v710 = vrot.slane %v708, 4
  %v711 = vrot.slane %v501, 5
  %v712 = vsel %vm558, %v710, %v711
  %v713 = vrot.slane %v711, 4
  %v714 = vrot.slane %v502, 5
  %v715 = vsel %vm558, %v713, %v714
  %v716 = vrot.slane %v714, 4
  %717 = vrot.lane.b32.xlu0 %v562, 2
  %v718 = vpop.permute.xlu0 %717
  %719 = vrot.lane.b32.xlu0 %v565, 2
  %v720 = vpop.permute.xlu0 %719
  %721 = vrot.lane.b32.xlu0 %v568, 2
  %v722 = vpop.permute.xlu0 %721
  %723 = vrot.lane.b32.xlu0 %v571, 2
  %v724 = vpop.permute.xlu0 %723
  %725 = vrot.lane.b32.xlu0 %v574, 2
  %v726 = vpop.permute.xlu0 %725
  %727 = vrot.lane.b32.xlu0 %v577, 2
  %v728 = vpop.permute.xlu0 %727
  %729 = vrot.lane.b32.xlu0 %v580, 2
  %v730 = vpop.permute.xlu0 %729
  %731 = vrot.lane.b32.xlu0 %v583, 2
  %v732 = vpop.permute.xlu0 %731
  %733 = vrot.lane.b32.xlu0 %v586, 2
  %v734 = vpop.permute.xlu0 %733
  %735 = vrot.lane.b32.xlu0 %v589, 2
  %v736 = vpop.permute.xlu0 %735
  %737 = vrot.lane.b32.xlu0 %v592, 2
  %v738 = vpop.permute.xlu0 %737
  %739 = vrot.lane.b32.xlu0 %v595, 2
  %v740 = vpop.permute.xlu0 %739
  %741 = vrot.lane.b32.xlu0 %v598, 2
  %v742 = vpop.permute.xlu0 %741
  %743 = vrot.lane.b32.xlu0 %v601, 2
  %v744 = vpop.permute.xlu0 %743
  %745 = vrot.lane.b32.xlu0 %v604, 2
  %v746 = vpop.permute.xlu0 %745
  %747 = vrot.lane.b32.xlu0 %v607, 2
  %v748 = vpop.permute.xlu0 %747
  %749 = vrot.lane.b32.xlu0 %v610, 2
  %v750 = vpop.permute.xlu0 %749
  %751 = vrot.lane.b32.xlu0 %v613, 2
  %v752 = vpop.permute.xlu0 %751
  %753 = vrot.lane.b32.xlu0 %v616, 2
  %v754 = vpop.permute.xlu0 %753
  %755 = vrot.lane.b32.xlu0 %v619, 2
  %v756 = vpop.permute.xlu0 %755
  %757 = vrot.lane.b32.xlu0 %v622, 2
  %v758 = vpop.permute.xlu0 %757
  %759 = vrot.lane.b32.xlu0 %v625, 2
  %v760 = vpop.permute.xlu0 %759
  %761 = vrot.lane.b32.xlu0 %v628, 2
  %v762 = vpop.permute.xlu0 %761
  %763 = vrot.lane.b32.xlu0 %v631, 2
  %v764 = vpop.permute.xlu0 %763
  %765 = vrot.lane.b32.xlu0 %v634, 2
  %v766 = vpop.permute.xlu0 %765
  %767 = vrot.lane.b32.xlu0 %v637, 2
  %v768 = vpop.permute.xlu0 %767
  %769 = vrot.lane.b32.xlu0 %v640, 2
  %v770 = vpop.permute.xlu0 %769
  %771 = vrot.lane.b32.xlu0 %v643, 2
  %v772 = vpop.permute.xlu0 %771
  %773 = vrot.lane.b32.xlu0 %v646, 2
  %v774 = vpop.permute.xlu0 %773
  %775 = vrot.lane.b32.xlu0 %v649, 2
  %v776 = vpop.permute.xlu0 %775
  %777 = vrot.lane.b32.xlu0 %v652, 2
  %v778 = vpop.permute.xlu0 %777
  %779 = vrot.lane.b32.xlu0 %v655, 2
  %v780 = vpop.permute.xlu0 %779
  %781 = vrot.lane.b32.xlu0 %v658, 2
  %v782 = vpop.permute.xlu0 %781
  %783 = vrot.lane.b32.xlu0 %v661, 2
  %v784 = vpop.permute.xlu0 %783
  %785 = vrot.lane.b32.xlu0 %v664, 2
  %v786 = vpop.permute.xlu0 %785
  %787 = vrot.lane.b32.xlu0 %v667, 2
  %v788 = vpop.permute.xlu0 %787
  %789 = vrot.lane.b32.xlu0 %v670, 2
  %v790 = vpop.permute.xlu0 %789
  %791 = vrot.lane.b32.xlu0 %v673, 2
  %v792 = vpop.permute.xlu0 %791
  %793 = vrot.lane.b32.xlu0 %v676, 2
  %v794 = vpop.permute.xlu0 %793
  %795 = vrot.lane.b32.xlu0 %v679, 2
  %v796 = vpop.permute.xlu0 %795
  %797 = vrot.lane.b32.xlu0 %v682, 2
  %v798 = vpop.permute.xlu0 %797
  %799 = vrot.lane.b32.xlu0 %v685, 2
  %v800 = vpop.permute.xlu0 %799
  %801 = vrot.lane.b32.xlu0 %v688, 2
  %v802 = vpop.permute.xlu0 %801
  %803 = vrot.lane.b32.xlu0 %v691, 2
  %v804 = vpop.permute.xlu0 %803
  %805 = vrot.lane.b32.xlu0 %v694, 2
  %v806 = vpop.permute.xlu0 %805
  %807 = vrot.lane.b32.xlu0 %v697, 2
  %v808 = vpop.permute.xlu0 %807
  %809 = vrot.lane.b32.xlu0 %v700, 2
  %v810 = vpop.permute.xlu0 %809
  %811 = vrot.lane.b32.xlu0 %v703, 2
  %v812 = vpop.permute.xlu0 %811
  %813 = vrot.lane.b32.xlu0 %v706, 2
  %v814 = vpop.permute.xlu0 %813
  %815 = vrot.lane.b32.xlu0 %v709, 2
  %v816 = vpop.permute.xlu0 %815
  %817 = vrot.lane.b32.xlu0 %v712, 2
  %v818 = vpop.permute.xlu0 %817
  %819 = vrot.lane.b32.xlu0 %v715, 2
  %v820 = vpop.permute.xlu0 %819
  %821 = vrot.lane.b32.xlu0 %v716, 2
  %v822 = vpop.permute.xlu0 %821
  %vm876 = vcmask 19472
  %877 = vst.msk [vmem:[#allocation2] sm:$0xf] %vm876, %v718
  %878 = vst.msk [vmem:[#allocation2 + $0x4] sm:$0xf] %vm876, %v720
  %879 = vst.msk [vmem:[#allocation2 + $0x8] sm:$0xf] %vm876, %v722
  %880 = vst.msk [vmem:[#allocation2 + $0xc] sm:$0xf] %vm876, %v724
  %881 = vst.msk [vmem:[#allocation2 + $0x10] sm:$0xf] %vm876, %v726
  %882 = vst.msk [vmem:[#allocation2 + $0x14] sm:$0xf] %vm876, %v728
  %883 = vst.msk [vmem:[#allocation2 + $0x18] sm:$0xf] %vm876, %v730
  %884 = vst.msk [vmem:[#allocation2 + $0x1c] sm:$0xf] %vm876, %v732
  %885 = vst.msk [vmem:[#allocation2 + $0x20] sm:$0xf] %vm876, %v734
  %886 = vst.msk [vmem:[#allocation2 + $0x24] sm:$0xf] %vm876, %v736
  %887 = vst.msk [vmem:[#allocation2 + $0x28] sm:$0xf] %vm876, %v738
  %888 = vst.msk [vmem:[#allocation2 + $0x2c] sm:$0xf] %vm876, %v740
  %889 = vst.msk [vmem:[#allocation2 + $0x30] sm:$0xf] %vm876, %v742
  %890 = vst.msk [vmem:[#allocation2 + $0x34] sm:$0xf] %vm876, %v744
  %891 = vst.msk [vmem:[#allocation2 + $0x38] sm:$0xf] %vm876, %v746
  %892 = vst.msk [vmem:[#allocation2 + $0x3c] sm:$0xf] %vm876, %v748
  %893 = vst.msk [vmem:[#allocation2 + $0x40] sm:$0xf] %vm876, %v750
  %894 = vst.msk [vmem:[#allocation2 + $0x44] sm:$0xf] %vm876, %v752
  %895 = vst.msk [vmem:[#allocation2 + $0x48] sm:$0xf] %vm876, %v754
  %896 = vst.msk [vmem:[#allocation2 + $0x4c] sm:$0xf] %vm876, %v756
  %897 = vst.msk [vmem:[#allocation2 + $0x50] sm:$0xf] %vm876, %v758
  %898 = vst.msk [vmem:[#allocation2 + $0x54] sm:$0xf] %vm876, %v760
  %899 = vst.msk [vmem:[#allocation2 + $0x58] sm:$0xf] %vm876, %v762
  %900 = vst.msk [vmem:[#allocation2 + $0x5c] sm:$0xf] %vm876, %v764
  %901 = vst.msk [vmem:[#allocation2 + $0x60] sm:$0xf] %vm876, %v766
  %902 = vst.msk [vmem:[#allocation2 + $0x64] sm:$0xf] %vm876, %v768
  %903 = vst.msk [vmem:[#allocation2 + $0x68] sm:$0xf] %vm876, %v770
  %904 = vst.msk [vmem:[#allocation2 + $0x6c] sm:$0xf] %vm876, %v772
  %905 = vst.msk [vmem:[#allocation2 + $0x70] sm:$0xf] %vm876, %v774
  %906 = vst.msk [vmem:[#allocation2 + $0x74] sm:$0xf] %vm876, %v776
  %907 = vst.msk [vmem:[#allocation2 + $0x78] sm:$0xf] %vm876, %v778
  %908 = vst.msk [vmem:[#allocation2 + $0x7c] sm:$0xf] %vm876, %v780
  %909 = vst.msk [vmem:[#allocation2 + $0x80] sm:$0xf] %vm876, %v782
  %910 = vst.msk [vmem:[#allocation2 + $0x84] sm:$0xf] %vm876, %v784
  %911 = vst.msk [vmem:[#allocation2 + $0x88] sm:$0xf] %vm876, %v786
  %912 = vst.msk [vmem:[#allocation2 + $0x8c] sm:$0xf] %vm876, %v788
  %913 = vst.msk [vmem:[#allocation2 + $0x90] sm:$0xf] %vm876, %v790
  %914 = vst.msk [vmem:[#allocation2 + $0x94] sm:$0xf] %vm876, %v792
  %915 = vst.msk [vmem:[#allocation2 + $0x98] sm:$0xf] %vm876, %v794
  %916 = vst.msk [vmem:[#allocation2 + $0x9c] sm:$0xf] %vm876, %v796
  %917 = vst.msk [vmem:[#allocation2 + $0xa0] sm:$0xf] %vm876, %v798
  %918 = vst.msk [vmem:[#allocation2 + $0xa4] sm:$0xf] %vm876, %v800
  %919 = vst.msk [vmem:[#allocation2 + $0xa8] sm:$0xf] %vm876, %v802
  %920 = vst.msk [vmem:[#allocation2 + $0xac] sm:$0xf] %vm876, %v804
  %921 = vst.msk [vmem:[#allocation2 + $0xb0] sm:$0xf] %vm876, %v806
  %922 = vst.msk [vmem:[#allocation2 + $0xb4] sm:$0xf] %vm876, %v808
  %923 = vst.msk [vmem:[#allocation2 + $0xb8] sm:$0xf] %vm876, %v810
  %924 = vst.msk [vmem:[#allocation2 + $0xbc] sm:$0xf] %vm876, %v812
  %925 = vst.msk [vmem:[#allocation2 + $0xc0] sm:$0xf] %vm876, %v814
  %926 = vst.msk [vmem:[#allocation2 + $0xc4] sm:$0xf] %vm876, %v816
  %927 = vst.msk [vmem:[#allocation2 + $0xc8] sm:$0xf] %vm876, %v818
  %928 = vst.msk [vmem:[#allocation2 + $0xcc] sm:$0xf] %vm876, %v820
  %vm929 = vcmask 17424
  %930 = vst.msk [vmem:[#allocation2 + $0xd0] sm:$0x3] %vm929, %v822
  %s931 = scalar_lea.vmem %s0, 480
  %v932 = vld [vmem:[%s931] sm:$0xf]
  %v933 = vld [vmem:[%s931 + $0x4] sm:$0xf]
  %v934 = vld [vmem:[%s931 + $0x8] sm:$0xf]
  %v935 = vld [vmem:[%s931 + $0xc] sm:$0xf]
  %v936 = vld [vmem:[%s931 + $0x10] sm:$0xf]
  %v937 = vld [vmem:[%s931 + $0x14] sm:$0xf]
  %v938 = vld [vmem:[%s931 + $0x18] sm:$0xf]
  %v939 = vld [vmem:[%s931 + $0x1c] sm:$0xf]
  %v940 = vld [vmem:[%s931 + $0x20] sm:$0xf]
  %v941 = vld [vmem:[%s931 + $0x24] sm:$0xf]
  %v942 = vld [vmem:[%s931 + $0x28] sm:$0xf]
  %v943 = vld [vmem:[%s931 + $0x2c] sm:$0xf]
  %v944 = vld [vmem:[%s931 + $0x30] sm:$0xf]
  %v945 = vld [vmem:[%s931 + $0x34] sm:$0xf]
  %v946 = vld [vmem:[%s931 + $0x38] sm:$0xf]
  %v947 = vld [vmem:[%s931 + $0x3c] sm:$0xf]
  %v948 = vld [vmem:[%s931 + $0x40] sm:$0xf]
  %v949 = vld [vmem:[%s931 + $0x44] sm:$0xf]
  %v950 = vld [vmem:[%s931 + $0x48] sm:$0xf]
  %v951 = vld [vmem:[%s931 + $0x4c] sm:$0xf]
  %v952 = vld [vmem:[%s931 + $0x50] sm:$0xf]
  %v953 = vld [vmem:[%s931 + $0x54] sm:$0xf]
  %v954 = vld [vmem:[%s931 + $0x58] sm:$0xf]
  %v955 = vld [vmem:[%s931 + $0x5c] sm:$0xf]
  %v956 = vld [vmem:[%s931 + $0x60] sm:$0xf]
  %v957 = vld [vmem:[%s931 + $0x64] sm:$0xf]
  %v958 = vld [vmem:[%s931 + $0x68] sm:$0xf]
  %v959 = vld [vmem:[%s931 + $0x6c] sm:$0xf]
  %v960 = vld [vmem:[%s931 + $0x70] sm:$0xf]
  %v961 = vld [vmem:[%s931 + $0x74] sm:$0xf]
  %v962 = vld [vmem:[%s931 + $0x78] sm:$0xf]
  %v963 = vld [vmem:[%s931 + $0x7c] sm:$0xf]
  %v964 = vld [vmem:[%s931 + $0x80] sm:$0xf]
  %v965 = vld [vmem:[%s931 + $0x84] sm:$0xf]
  %v966 = vld [vmem:[%s931 + $0x88] sm:$0xf]
  %v967 = vld [vmem:[%s931 + $0x8c] sm:$0xf]
  %v968 = vld [vmem:[%s931 + $0x90] sm:$0xf]
  %v969 = vld [vmem:[%s931 + $0x94] sm:$0xf]
  %v970 = vld [vmem:[%s931 + $0x98] sm:$0xf]
  %v971 = vld [vmem:[%s931 + $0x9c] sm:$0xf]
  %v972 = vld [vmem:[%s931 + $0xa0] sm:$0xf]
  %v973 = vld [vmem:[%s931 + $0xa4] sm:$0xf]
  %v974 = vld [vmem:[%s931 + $0xa8] sm:$0xf]
  %v975 = vld [vmem:[%s931 + $0xac] sm:$0xf]
  %v976 = vld [vmem:[%s931 + $0xb0] sm:$0xf]
  %v977 = vld [vmem:[%s931 + $0xb4] sm:$0xf]
  %v978 = vld [vmem:[%s931 + $0xb8] sm:$0xf]
  %v979 = vld [vmem:[%s931 + $0xbc] sm:$0xf]
  %v980 = vld [vmem:[%s931 + $0xc0] sm:$0xf]
  %v981 = vld [vmem:[%s931 + $0xc4] sm:$0xf]
  %v982 = vld [vmem:[%s931 + $0xc8] sm:$0xf]
  %v983 = vld [vmem:[%s931 + $0xcc] sm:$0xf]
  %v984 = vld [vmem:[%s931 + $0xd0] sm:$0x3]
  %1038 = vrot.lane.b32.xlu0 %v932, 3
  %v1039 = vpop.permute.xlu0 %1038
  %1040 = vrot.lane.b32.xlu0 %v933, 3
  %v1041 = vpop.permute.xlu0 %1040
  %1042 = vrot.lane.b32.xlu0 %v934, 3
  %v1043 = vpop.permute.xlu0 %1042
  %1044 = vrot.lane.b32.xlu0 %v935, 3
  %v1045 = vpop.permute.xlu0 %1044
  %1046 = vrot.lane.b32.xlu0 %v936, 3
  %v1047 = vpop.permute.xlu0 %1046
  %1048 = vrot.lane.b32.xlu0 %v937, 3
  %v1049 = vpop.permute.xlu0 %1048
  %1050 = vrot.lane.b32.xlu0 %v938, 3
  %v1051 = vpop.permute.xlu0 %1050
  %1052 = vrot.lane.b32.xlu0 %v939, 3
  %v1053 = vpop.permute.xlu0 %1052
  %1054 = vrot.lane.b32.xlu0 %v940, 3
  %v1055 = vpop.permute.xlu0 %1054
  %1056 = vrot.lane.b32.xlu0 %v941, 3
  %v1057 = vpop.permute.xlu0 %1056
  %1058 = vrot.lane.b32.xlu0 %v942, 3
  %v1059 = vpop.permute.xlu0 %1058
  %1060 = vrot.lane.b32.xlu0 %v943, 3
  %v1061 = vpop.permute.xlu0 %1060
  %1062 = vrot.lane.b32.xlu0 %v944, 3
  %v1063 = vpop.permute.xlu0 %1062
  %1064 = vrot.lane.b32.xlu0 %v945, 3
  %v1065 = vpop.permute.xlu0 %1064
  %1066 = vrot.lane.b32.xlu0 %v946, 3
  %v1067 = vpop.permute.xlu0 %1066
  %1068 = vrot.lane.b32.xlu0 %v947, 3
  %v1069 = vpop.permute.xlu0 %1068
  %1070 = vrot.lane.b32.xlu0 %v948, 3
  %v1071 = vpop.permute.xlu0 %1070
  %1072 = vrot.lane.b32.xlu0 %v949, 3
  %v1073 = vpop.permute.xlu0 %1072
  %1074 = vrot.lane.b32.xlu0 %v950, 3
  %v1075 = vpop.permute.xlu0 %1074
  %1076 = vrot.lane.b32.xlu0 %v951, 3
  %v1077 = vpop.permute.xlu0 %1076
  %1078 = vrot.lane.b32.xlu0 %v952, 3
  %v1079 = vpop.permute.xlu0 %1078
  %1080 = vrot.lane.b32.xlu0 %v953, 3
  %v1081 = vpop.permute.xlu0 %1080
  %1082 = vrot.lane.b32.xlu0 %v954, 3
  %v1083 = vpop.permute.xlu0 %1082
  %1084 = vrot.lane.b32.xlu0 %v955, 3
  %v1085 = vpop.permute.xlu0 %1084
  %1086 = vrot.lane.b32.xlu0 %v956, 3
  %v1087 = vpop.permute.xlu0 %1086
  %1088 = vrot.lane.b32.xlu0 %v957, 3
  %v1089 = vpop.permute.xlu0 %1088
  %1090 = vrot.lane.b32.xlu0 %v958, 3
  %v1091 = vpop.permute.xlu0 %1090
  %1092 = vrot.lane.b32.xlu0 %v959, 3
  %v1093 = vpop.permute.xlu0 %1092
  %1094 = vrot.lane.b32.xlu0 %v960, 3
  %v1095 = vpop.permute.xlu0 %1094
  %1096 = vrot.lane.b32.xlu0 %v961, 3
  %v1097 = vpop.permute.xlu0 %1096
  %1098 = vrot.lane.b32.xlu0 %v962, 3
  %v1099 = vpop.permute.xlu0 %1098
  %1100 = vrot.lane.b32.xlu0 %v963, 3
  %v1101 = vpop.permute.xlu0 %1100
  %1102 = vrot.lane.b32.xlu0 %v964, 3
  %v1103 = vpop.permute.xlu0 %1102
  %1104 = vrot.lane.b32.xlu0 %v965, 3
  %v1105 = vpop.permute.xlu0 %1104
  %1106 = vrot.lane.b32.xlu0 %v966, 3
  %v1107 = vpop.permute.xlu0 %1106
  %1108 = vrot.lane.b32.xlu0 %v967, 3
  %v1109 = vpop.permute.xlu0 %1108
  %1110 = vrot.lane.b32.xlu0 %v968, 3
  %v1111 = vpop.permute.xlu0 %1110
  %1112 = vrot.lane.b32.xlu0 %v969, 3
  %v1113 = vpop.permute.xlu0 %1112
  %1114 = vrot.lane.b32.xlu0 %v970, 3
  %v1115 = vpop.permute.xlu0 %1114
  %1116 = vrot.lane.b32.xlu0 %v971, 3
  %v1117 = vpop.permute.xlu0 %1116
  %1118 = vrot.lane.b32.xlu0 %v972, 3
  %v1119 = vpop.permute.xlu0 %1118
  %1120 = vrot.lane.b32.xlu0 %v973, 3
  %v1121 = vpop.permute.xlu0 %1120
  %1122 = vrot.lane.b32.xlu0 %v974, 3
  %v1123 = vpop.permute.xlu0 %1122
  %1124 = vrot.lane.b32.xlu0 %v975, 3
  %v1125 = vpop.permute.xlu0 %1124
  %1126 = vrot.lane.b32.xlu0 %v976, 3
  %v1127 = vpop.permute.xlu0 %1126
  %1128 = vrot.lane.b32.xlu0 %v977, 3
  %v1129 = vpop.permute.xlu0 %1128
  %1130 = vrot.lane.b32.xlu0 %v978, 3
  %v1131 = vpop.permute.xlu0 %1130
  %1132 = vrot.lane.b32.xlu0 %v979, 3
  %v1133 = vpop.permute.xlu0 %1132
  %1134 = vrot.lane.b32.xlu0 %v980, 3
  %v1135 = vpop.permute.xlu0 %1134
  %1136 = vrot.lane.b32.xlu0 %v981, 3
  %v1137 = vpop.permute.xlu0 %1136
  %1138 = vrot.lane.b32.xlu0 %v982, 3
  %v1139 = vpop.permute.xlu0 %1138
  %1140 = vrot.lane.b32.xlu0 %v983, 3
  %v1141 = vpop.permute.xlu0 %1140
  %1142 = vrot.lane.b32.xlu0 %v984, 3
  %v1143 = vpop.permute.xlu0 %1142
  %vm1197 = vcmask 27672
  %1198 = vst.msk [vmem:[#allocation2] sm:$0xf] %vm1197, %v1039
  %1199 = vst.msk [vmem:[#allocation2 + $0x4] sm:$0xf] %vm1197, %v1041
  %1200 = vst.msk [vmem:[#allocation2 + $0x8] sm:$0xf] %vm1197, %v1043
  %1201 = vst.msk [vmem:[#allocation2 + $0xc] sm:$0xf] %vm1197, %v1045
  %1202 = vst.msk [vmem:[#allocation2 + $0x10] sm:$0xf] %vm1197, %v1047
  %1203 = vst.msk [vmem:[#allocation2 + $0x14] sm:$0xf] %vm1197, %v1049
  %1204 = vst.msk [vmem:[#allocation2 + $0x18] sm:$0xf] %vm1197, %v1051
  %1205 = vst.msk [vmem:[#allocation2 + $0x1c] sm:$0xf] %vm1197, %v1053
  %1206 = vst.msk [vmem:[#allocation2 + $0x20] sm:$0xf] %vm1197, %v1055
  %1207 = vst.msk [vmem:[#allocation2 + $0x24] sm:$0xf] %vm1197, %v1057
  %1208 = vst.msk [vmem:[#allocation2 + $0x28] sm:$0xf] %vm1197, %v1059
  %1209 = vst.msk [vmem:[#allocation2 + $0x2c] sm:$0xf] %vm1197, %v1061
  %1210 = vst.msk [vmem:[#allocation2 + $0x30] sm:$0xf] %vm1197, %v1063
  %1211 = vst.msk [vmem:[#allocation2 + $0x34] sm:$0xf] %vm1197, %v1065
  %1212 = vst.msk [vmem:[#allocation2 + $0x38] sm:$0xf] %vm1197, %v1067
  %1213 = vst.msk [vmem:[#allocation2 + $0x3c] sm:$0xf] %vm1197, %v1069
  %1214 = vst.msk [vmem:[#allocation2 + $0x40] sm:$0xf] %vm1197, %v1071
  %1215 = vst.msk [vmem:[#allocation2 + $0x44] sm:$0xf] %vm1197, %v1073
  %1216 = vst.msk [vmem:[#allocation2 + $0x48] sm:$0xf] %vm1197, %v1075
  %1217 = vst.msk [vmem:[#allocation2 + $0x4c] sm:$0xf] %vm1197, %v1077
  %1218 = vst.msk [vmem:[#allocation2 + $0x50] sm:$0xf] %vm1197, %v1079
  %1219 = vst.msk [vmem:[#allocation2 + $0x54] sm:$0xf] %vm1197, %v1081
  %1220 = vst.msk [vmem:[#allocation2 + $0x58] sm:$0xf] %vm1197, %v1083
  %1221 = vst.msk [vmem:[#allocation2 + $0x5c] sm:$0xf] %vm1197, %v1085
  %1222 = vst.msk [vmem:[#allocation2 + $0x60] sm:$0xf] %vm1197, %v1087
  %1223 = vst.msk [vmem:[#allocation2 + $0x64] sm:$0xf] %vm1197, %v1089
  %1224 = vst.msk [vmem:[#allocation2 + $0x68] sm:$0xf] %vm1197, %v1091
  %1225 = vst.msk [vmem:[#allocation2 + $0x6c] sm:$0xf] %vm1197, %v1093
  %1226 = vst.msk [vmem:[#allocation2 + $0x70] sm:$0xf] %vm1197, %v1095
  %1227 = vst.msk [vmem:[#allocation2 + $0x74] sm:$0xf] %vm1197, %v1097
  %1228 = vst.msk [vmem:[#allocation2 + $0x78] sm:$0xf] %vm1197, %v1099
  %1229 = vst.msk [vmem:[#allocation2 + $0x7c] sm:$0xf] %vm1197, %v1101
  %1230 = vst.msk [vmem:[#allocation2 + $0x80] sm:$0xf] %vm1197, %v1103
  %1231 = vst.msk [vmem:[#allocation2 + $0x84] sm:$0xf] %vm1197, %v1105
  %1232 = vst.msk [vmem:[#allocation2 + $0x88] sm:$0xf] %vm1197, %v1107
  %1233 = vst.msk [vmem:[#allocation2 + $0x8c] sm:$0xf] %vm1197, %v1109
  %1234 = vst.msk [vmem:[#allocation2 + $0x90] sm:$0xf] %vm1197, %v1111
  %1235 = vst.msk [vmem:[#allocation2 + $0x94] sm:$0xf] %vm1197, %v1113
  %1236 = vst.msk [vmem:[#allocation2 + $0x98] sm:$0xf] %vm1197, %v1115
  %1237 = vst.msk [vmem:[#allocation2 + $0x9c] sm:$0xf] %vm1197, %v1117
  %1238 = vst.msk [vmem:[#allocation2 + $0xa0] sm:$0xf] %vm1197, %v1119
  %1239 = vst.msk [vmem:[#allocation2 + $0xa4] sm:$0xf] %vm1197, %v1121
  %1240 = vst.msk [vmem:[#allocation2 + $0xa8] sm:$0xf] %vm1197, %v1123
  %1241 = vst.msk [vmem:[#allocation2 + $0xac] sm:$0xf] %vm1197, %v1125
  %1242 = vst.msk [vmem:[#allocation2 + $0xb0] sm:$0xf] %vm1197, %v1127
  %1243 = vst.msk [vmem:[#allocation2 + $0xb4] sm:$0xf] %vm1197, %v1129
  %1244 = vst.msk [vmem:[#allocation2 + $0xb8] sm:$0xf] %vm1197, %v1131
  %1245 = vst.msk [vmem:[#allocation2 + $0xbc] sm:$0xf] %vm1197, %v1133
  %1246 = vst.msk [vmem:[#allocation2 + $0xc0] sm:$0xf] %vm1197, %v1135
  %1247 = vst.msk [vmem:[#allocation2 + $0xc4] sm:$0xf] %vm1197, %v1137
  %1248 = vst.msk [vmem:[#allocation2 + $0xc8] sm:$0xf] %vm1197, %v1139
  %1249 = vst.msk [vmem:[#allocation2 + $0xcc] sm:$0xf] %vm1197, %v1141
  %vm1250 = vcmask 25624
  %1251 = vst.msk [vmem:[#allocation2 + $0xd0] sm:$0x3] %vm1250, %v1143
  %s1252 = scalar_lea.vmem %s0, 720
  %v1253 = vld [vmem:[%s1252] sm:$0xf]
  %v1254 = vld [vmem:[%s1252 + $0x4] sm:$0xf]
  %v1255 = vld [vmem:[%s1252 + $0x8] sm:$0xf]
  %v1256 = vld [vmem:[%s1252 + $0xc] sm:$0xf]
  %v1257 = vld [vmem:[%s1252 + $0x10] sm:$0xf]
  %v1258 = vld [vmem:[%s1252 + $0x14] sm:$0xf]
  %v1259 = vld [vmem:[%s1252 + $0x18] sm:$0xf]
  %v1260 = vld [vmem:[%s1252 + $0x1c] sm:$0xf]
  %v1261 = vld [vmem:[%s1252 + $0x20] sm:$0xf]
  %v1262 = vld [vmem:[%s1252 + $0x24] sm:$0xf]
  %v1263 = vld [vmem:[%s1252 + $0x28] sm:$0xf]
  %v1264 = vld [vmem:[%s1252 + $0x2c] sm:$0xf]
  %v1265 = vld [vmem:[%s1252 + $0x30] sm:$0xf]
  %v1266 = vld [vmem:[%s1252 + $0x34] sm:$0xf]
  %v1267 = vld [vmem:[%s1252 + $0x38] sm:$0xf]
  %v1268 = vld [vmem:[%s1252 + $0x3c] sm:$0xf]
  %v1269 = vld [vmem:[%s1252 + $0x40] sm:$0xf]
  %v1270 = vld [vmem:[%s1252 + $0x44] sm:$0xf]
  %v1271 = vld [vmem:[%s1252 + $0x48] sm:$0xf]
  %v1272 = vld [vmem:[%s1252 + $0x4c] sm:$0xf]
  %v1273 = vld [vmem:[%s1252 + $0x50] sm:$0xf]
  %v1274 = vld [vmem:[%s1252 + $0x54] sm:$0xf]
  %v1275 = vld [vmem:[%s1252 + $0x58] sm:$0xf]
  %v1276 = vld [vmem:[%s1252 + $0x5c] sm:$0xf]
  %v1277 = vld [vmem:[%s1252 + $0x60] sm:$0xf]
  %v1278 = vld [vmem:[%s1252 + $0x64] sm:$0xf]
  %v1279 = vld [vmem:[%s1252 + $0x68] sm:$0xf]
  %v1280 = vld [vmem:[%s1252 + $0x6c] sm:$0xf]
  %v1281 = vld [vmem:[%s1252 + $0x70] sm:$0xf]
  %v1282 = vld [vmem:[%s1252 + $0x74] sm:$0xf]
  %v1283 = vld [vmem:[%s1252 + $0x78] sm:$0xf]
  %v1284 = vld [vmem:[%s1252 + $0x7c] sm:$0xf]
  %v1285 = vld [vmem:[%s1252 + $0x80] sm:$0xf]
  %v1286 = vld [vmem:[%s1252 + $0x84] sm:$0xf]
  %v1287 = vld [vmem:[%s1252 + $0x88] sm:$0xf]
  %v1288 = vld [vmem:[%s1252 + $0x8c] sm:$0xf]
  %v1289 = vld [vmem:[%s1252 + $0x90] sm:$0xf]
  %v1290 = vld [vmem:[%s1252 + $0x94] sm:$0xf]
  %v1291 = vld [vmem:[%s1252 + $0x98] sm:$0xf]
  %v1292 = vld [vmem:[%s1252 + $0x9c] sm:$0xf]
  %v1293 = vld [vmem:[%s1252 + $0xa0] sm:$0xf]
  %v1294 = vld [vmem:[%s1252 + $0xa4] sm:$0xf]
  %v1295 = vld [vmem:[%s1252 + $0xa8] sm:$0xf]
  %v1296 = vld [vmem:[%s1252 + $0xac] sm:$0xf]
  %v1297 = vld [vmem:[%s1252 + $0xb0] sm:$0xf]
  %v1298 = vld [vmem:[%s1252 + $0xb4] sm:$0xf]
  %v1299 = vld [vmem:[%s1252 + $0xb8] sm:$0xf]
  %v1300 = vld [vmem:[%s1252 + $0xbc] sm:$0xf]
  %v1301 = vld [vmem:[%s1252 + $0xc0] sm:$0xf]
  %v1302 = vld [vmem:[%s1252 + $0xc4] sm:$0xf]
  %v1303 = vld [vmem:[%s1252 + $0xc8] sm:$0xf]
  %v1304 = vld [vmem:[%s1252 + $0xcc] sm:$0xf]
  %v1305 = vld [vmem:[%s1252 + $0xd0] sm:$0x3]
  %1359 = vrot.lane.b32.xlu0 %v1253, 4
  %v1360 = vpop.permute.xlu0 %1359
  %1361 = vrot.lane.b32.xlu0 %v1254, 4
  %v1362 = vpop.permute.xlu0 %1361
  %1363 = vrot.lane.b32.xlu0 %v1255, 4
  %v1364 = vpop.permute.xlu0 %1363
  %1365 = vrot.lane.b32.xlu0 %v1256, 4
  %v1366 = vpop.permute.xlu0 %1365
  %1367 = vrot.lane.b32.xlu0 %v1257, 4
  %v1368 = vpop.permute.xlu0 %1367
  %1369 = vrot.lane.b32.xlu0 %v1258, 4
  %v1370 = vpop.permute.xlu0 %1369
  %1371 = vrot.lane.b32.xlu0 %v1259, 4
  %v1372 = vpop.permute.xlu0 %1371
  %1373 = vrot.lane.b32.xlu0 %v1260, 4
  %v1374 = vpop.permute.xlu0 %1373
  %1375 = vrot.lane.b32.xlu0 %v1261, 4
  %v1376 = vpop.permute.xlu0 %1375
  %1377 = vrot.lane.b32.xlu0 %v1262, 4
  %v1378 = vpop.permute.xlu0 %1377
  %1379 = vrot.lane.b32.xlu0 %v1263, 4
  %v1380 = vpop.permute.xlu0 %1379
  %1381 = vrot.lane.b32.xlu0 %v1264, 4
  %v1382 = vpop.permute.xlu0 %1381
  %1383 = vrot.lane.b32.xlu0 %v1265, 4
  %v1384 = vpop.permute.xlu0 %1383
  %1385 = vrot.lane.b32.xlu0 %v1266, 4
  %v1386 = vpop.permute.xlu0 %1385
  %1387 = vrot.lane.b32.xlu0 %v1267, 4
  %v1388 = vpop.permute.xlu0 %1387
  %1389 = vrot.lane.b32.xlu0 %v1268, 4
  %v1390 = vpop.permute.xlu0 %1389
  %1391 = vrot.lane.b32.xlu0 %v1269, 4
  %v1392 = vpop.permute.xlu0 %1391
  %1393 = vrot.lane.b32.xlu0 %v1270, 4
  %v1394 = vpop.permute.xlu0 %1393
  %1395 = vrot.lane.b32.xlu0 %v1271, 4
  %v1396 = vpop.permute.xlu0 %1395
  %1397 = vrot.lane.b32.xlu0 %v1272, 4
  %v1398 = vpop.permute.xlu0 %1397
  %1399 = vrot.lane.b32.xlu0 %v1273, 4
  %v1400 = vpop.permute.xlu0 %1399
  %1401 = vrot.lane.b32.xlu0 %v1274, 4
  %v1402 = vpop.permute.xlu0 %1401
  %1403 = vrot.lane.b32.xlu0 %v1275, 4
  %v1404 = vpop.permute.xlu0 %1403
  %1405 = vrot.lane.b32.xlu0 %v1276, 4
  %v1406 = vpop.permute.xlu0 %1405
  %1407 = vrot.lane.b32.xlu0 %v1277, 4
  %v1408 = vpop.permute.xlu0 %1407
  %1409 = vrot.lane.b32.xlu0 %v1278, 4
  %v1410 = vpop.permute.xlu0 %1409
  %1411 = vrot.lane.b32.xlu0 %v1279, 4
  %v1412 = vpop.permute.xlu0 %1411
  %1413 = vrot.lane.b32.xlu0 %v1280, 4
  %v1414 = vpop.permute.xlu0 %1413
  %1415 = vrot.lane.b32.xlu0 %v1281, 4
  %v1416 = vpop.permute.xlu0 %1415
  %1417 = vrot.lane.b32.xlu0 %v1282, 4
  %v1418 = vpop.permute.xlu0 %1417
  %1419 = vrot.lane.b32.xlu0 %v1283, 4
  %v1420 = vpop.permute.xlu0 %1419
  %1421 = vrot.lane.b32.xlu0 %v1284, 4
  %v1422 = vpop.permute.xlu0 %1421
  %1423 = vrot.lane.b32.xlu0 %v1285, 4
  %v1424 = vpop.permute.xlu0 %1423
  %1425 = vrot.lane.b32.xlu0 %v1286, 4
  %v1426 = vpop.permute.xlu0 %1425
  %1427 = vrot.lane.b32.xlu0 %v1287, 4
  %v1428 = vpop.permute.xlu0 %1427
  %1429 = vrot.lane.b32.xlu0 %v1288, 4
  %v1430 = vpop.permute.xlu0 %1429
  %1431 = vrot.lane.b32.xlu0 %v1289, 4
  %v1432 = vpop.permute.xlu0 %1431
  %1433 = vrot.lane.b32.xlu0 %v1290, 4
  %v1434 = vpop.permute.xlu0 %1433
  %1435 = vrot.lane.b32.xlu0 %v1291, 4
  %v1436 = vpop.permute.xlu0 %1435
  %1437 = vrot.lane.b32.xlu0 %v1292, 4
  %v1438 = vpop.permute.xlu0 %1437
  %1439 = vrot.lane.b32.xlu0 %v1293, 4
  %v1440 = vpop.permute.xlu0 %1439
  %1441 = vrot.lane.b32.xlu0 %v1294, 4
  %v1442 = vpop.permute.xlu0 %1441
  %1443 = vrot.lane.b32.xlu0 %v1295, 4
  %v1444 = vpop.permute.xlu0 %1443
  %1445 = vrot.lane.b32.xlu0 %v1296, 4
  %v1446 = vpop.permute.xlu0 %1445
  %1447 = vrot.lane.b32.xlu0 %v1297, 4
  %v1448 = vpop.permute.xlu0 %1447
  %1449 = vrot.lane.b32.xlu0 %v1298, 4
  %v1450 = vpop.permute.xlu0 %1449
  %1451 = vrot.lane.b32.xlu0 %v1299, 4
  %v1452 = vpop.permute.xlu0 %1451
  %1453 = vrot.lane.b32.xlu0 %v1300, 4
  %v1454 = vpop.permute.xlu0 %1453
  %1455 = vrot.lane.b32.xlu0 %v1301, 4
  %v1456 = vpop.permute.xlu0 %1455
  %1457 = vrot.lane.b32.xlu0 %v1302, 4
  %v1458 = vpop.permute.xlu0 %1457
  %1459 = vrot.lane.b32.xlu0 %v1303, 4
  %v1460 = vpop.permute.xlu0 %1459
  %1461 = vrot.lane.b32.xlu0 %v1304, 4
  %v1462 = vpop.permute.xlu0 %1461
  %1463 = vrot.lane.b32.xlu0 %v1305, 4
  %v1464 = vpop.permute.xlu0 %1463
  %vm1518 = vcmask 35872
  %1519 = vst.msk [vmem:[#allocation2] sm:$0xf] %vm1518, %v1360
  %1520 = vst.msk [vmem:[#allocation2 + $0x4] sm:$0xf] %vm1518, %v1362
  %1521 = vst.msk [vmem:[#allocation2 + $0x8] sm:$0xf] %vm1518, %v1364
  %1522 = vst.msk [vmem:[#allocation2 + $0xc] sm:$0xf] %vm1518, %v1366
  %1523 = vst.msk [vmem:[#allocation2 + $0x10] sm:$0xf] %vm1518, %v1368
  %1524 = vst.msk [vmem:[#allocation2 + $0x14] sm:$0xf] %vm1518, %v1370
  %1525 = vst.msk [vmem:[#allocation2 + $0x18] sm:$0xf] %vm1518, %v1372
  %1526 = vst.msk [vmem:[#allocation2 + $0x1c] sm:$0xf] %vm1518, %v1374
  %1527 = vst.msk [vmem:[#allocation2 + $0x20] sm:$0xf] %vm1518, %v1376
  %1528 = vst.msk [vmem:[#allocation2 + $0x24] sm:$0xf] %vm1518, %v1378
  %1529 = vst.msk [vmem:[#allocation2 + $0x28] sm:$0xf] %vm1518, %v1380
  %1530 = vst.msk [vmem:[#allocation2 + $0x2c] sm:$0xf] %vm1518, %v1382
  %1531 = vst.msk [vmem:[#allocation2 + $0x30] sm:$0xf] %vm1518, %v1384
  %1532 = vst.msk [vmem:[#allocation2 + $0x34] sm:$0xf] %vm1518, %v1386
  %1533 = vst.msk [vmem:[#allocation2 + $0x38] sm:$0xf] %vm1518, %v1388
  %1534 = vst.msk [vmem:[#allocation2 + $0x3c] sm:$0xf] %vm1518, %v1390
  %1535 = vst.msk [vmem:[#allocation2 + $0x40] sm:$0xf] %vm1518, %v1392
  %1536 = vst.msk [vmem:[#allocation2 + $0x44] sm:$0xf] %vm1518, %v1394
  %1537 = vst.msk [vmem:[#allocation2 + $0x48] sm:$0xf] %vm1518, %v1396
  %1538 = vst.msk [vmem:[#allocation2 + $0x4c] sm:$0xf] %vm1518, %v1398
  %1539 = vst.msk [vmem:[#allocation2 + $0x50] sm:$0xf] %vm1518, %v1400
  %1540 = vst.msk [vmem:[#allocation2 + $0x54] sm:$0xf] %vm1518, %v1402
  %1541 = vst.msk [vmem:[#allocation2 + $0x58] sm:$0xf] %vm1518, %v1404
  %1542 = vst.msk [vmem:[#allocation2 + $0x5c] sm:$0xf] %vm1518, %v1406
  %1543 = vst.msk [vmem:[#allocation2 + $0x60] sm:$0xf] %vm1518, %v1408
  %1544 = vst.msk [vmem:[#allocation2 + $0x64] sm:$0xf] %vm1518, %v1410
  %1545 = vst.msk [vmem:[#allocation2 + $0x68] sm:$0xf] %vm1518, %v1412
  %1546 = vst.msk [vmem:[#allocation2 + $0x6c] sm:$0xf] %vm1518, %v1414
  %1547 = vst.msk [vmem:[#allocation2 + $0x70] sm:$0xf] %vm1518, %v1416
  %1548 = vst.msk [vmem:[#allocation2 + $0x74] sm:$0xf] %vm1518, %v1418
  %1549 = vst.msk [vmem:[#allocation2 + $0x78] sm:$0xf] %vm1518, %v1420
  %1550 = vst.msk [vmem:[#allocation2 + $0x7c] sm:$0xf] %vm1518, %v1422
  %1551 = vst.msk [vmem:[#allocation2 + $0x80] sm:$0xf] %vm1518, %v1424
  %1552 = vst.msk [vmem:[#allocation2 + $0x84] sm:$0xf] %vm1518, %v1426
  %1553 = vst.msk [vmem:[#allocation2 + $0x88] sm:$0xf] %vm1518, %v1428
  %1554 = vst.msk [vmem:[#allocation2 + $0x8c] sm:$0xf] %vm1518, %v1430
  %1555 = vst.msk [vmem:[#allocation2 + $0x90] sm:$0xf] %vm1518, %v1432
  %1556 = vst.msk [vmem:[#allocation2 + $0x94] sm:$0xf] %vm1518, %v1434
  %1557 = vst.msk [vmem:[#allocation2 + $0x98] sm:$0xf] %vm1518, %v1436
  %1558 = vst.msk [vmem:[#allocation2 + $0x9c] sm:$0xf] %vm1518, %v1438
  %1559 = vst.msk [vmem:[#allocation2 + $0xa0] sm:$0xf] %vm1518, %v1440
  %1560 = vst.msk [vmem:[#allocation2 + $0xa4] sm:$0xf] %vm1518, %v1442
  %1561 = vst.msk [vmem:[#allocation2 + $0xa8] sm:$0xf] %vm1518, %v1444
  %1562 = vst.msk [vmem:[#allocation2 + $0xac] sm:$0xf] %vm1518, %v1446
  %1563 = vst.msk [vmem:[#allocation2 + $0xb0] sm:$0xf] %vm1518, %v1448
  %1564 = vst.msk [vmem:[#allocation2 + $0xb4] sm:$0xf] %vm1518, %v1450
  %1565 = vst.msk [vmem:[#allocation2 + $0xb8] sm:$0xf] %vm1518, %v1452
  %1566 = vst.msk [vmem:[#allocation2 + $0xbc] sm:$0xf] %vm1518, %v1454
  %1567 = vst.msk [vmem:[#allocation2 + $0xc0] sm:$0xf] %vm1518, %v1456
  %1568 = vst.msk [vmem:[#allocation2 + $0xc4] sm:$0xf] %vm1518, %v1458
  %1569 = vst.msk [vmem:[#allocation2 + $0xc8] sm:$0xf] %vm1518, %v1460
  %1570 = vst.msk [vmem:[#allocation2 + $0xcc] sm:$0xf] %vm1518, %v1462
  %vm1571 = vcmask 33824
  %1572 = vst.msk [vmem:[#allocation2 + $0xd0] sm:$0x3] %vm1571, %v1464
  %v1573 = vld [vmem:[%s931] sm:$0xe]
  %v1574 = vld [vmem:[%s931 + $0x4] sm:$0xf]
  %v1575 = vld [vmem:[%s931 + $0x8] sm:$0xf]
  %v1576 = vld [vmem:[%s931 + $0xc] sm:$0xf]
  %v1577 = vld [vmem:[%s931 + $0x10] sm:$0xf]
  %v1578 = vld [vmem:[%s931 + $0x14] sm:$0xf]
  %v1579 = vld [vmem:[%s931 + $0x18] sm:$0xf]
  %v1580 = vld [vmem:[%s931 + $0x1c] sm:$0xf]
  %v1581 = vld [vmem:[%s931 + $0x20] sm:$0xf]
  %v1582 = vld [vmem:[%s931 + $0x24] sm:$0xf]
  %v1583 = vld [vmem:[%s931 + $0x28] sm:$0xf]
  %v1584 = vld [vmem:[%s931 + $0x2c] sm:$0xf]
  %v1585 = vld [vmem:[%s931 + $0x30] sm:$0xf]
  %v1586 = vld [vmem:[%s931 + $0x34] sm:$0xf]
  %v1587 = vld [vmem:[%s931 + $0x38] sm:$0xf]
  %v1588 = vld [vmem:[%s931 + $0x3c] sm:$0xf]
  %v1589 = vld [vmem:[%s931 + $0x40] sm:$0xf]
  %v1590 = vld [vmem:[%s931 + $0x44] sm:$0xf]
  %v1591 = vld [vmem:[%s931 + $0x48] sm:$0xf]
  %v1592 = vld [vmem:[%s931 + $0x4c] sm:$0xf]
  %v1593 = vld [vmem:[%s931 + $0x50] sm:$0xf]
  %v1594 = vld [vmem:[%s931 + $0x54] sm:$0xf]
  %v1595 = vld [vmem:[%s931 + $0x58] sm:$0xf]
  %v1596 = vld [vmem:[%s931 + $0x5c] sm:$0xf]
  %v1597 = vld [vmem:[%s931 + $0x60] sm:$0xf]
  %v1598 = vld [vmem:[%s931 + $0x64] sm:$0xf]
  %v1599 = vld [vmem:[%s931 + $0x68] sm:$0xf]
  %v1600 = vld [vmem:[%s931 + $0x6c] sm:$0xf]
  %v1601 = vld [vmem:[%s931 + $0x70] sm:$0xf]
  %v1602 = vld [vmem:[%s931 + $0x74] sm:$0xf]
  %v1603 = vld [vmem:[%s931 + $0x78] sm:$0xf]
  %v1604 = vld [vmem:[%s931 + $0x7c] sm:$0xf]
  %v1605 = vld [vmem:[%s931 + $0x80] sm:$0xf]
  %v1606 = vld [vmem:[%s931 + $0x84] sm:$0xf]
  %v1607 = vld [vmem:[%s931 + $0x88] sm:$0xf]
  %v1608 = vld [vmem:[%s931 + $0x8c] sm:$0xf]
  %v1609 = vld [vmem:[%s931 + $0x90] sm:$0xf]
  %v1610 = vld [vmem:[%s931 + $0x94] sm:$0xf]
  %v1611 = vld [vmem:[%s931 + $0x98] sm:$0xf]
  %v1612 = vld [vmem:[%s931 + $0x9c] sm:$0xf]
  %v1613 = vld [vmem:[%s931 + $0xa0] sm:$0xf]
  %v1614 = vld [vmem:[%s931 + $0xa4] sm:$0xf]
  %v1615 = vld [vmem:[%s931 + $0xa8] sm:$0xf]
  %v1616 = vld [vmem:[%s931 + $0xac] sm:$0xf]
  %v1617 = vld [vmem:[%s931 + $0xb0] sm:$0xf]
  %v1618 = vld [vmem:[%s931 + $0xb4] sm:$0xf]
  %v1619 = vld [vmem:[%s931 + $0xb8] sm:$0xf]
  %v1620 = vld [vmem:[%s931 + $0xbc] sm:$0xf]
  %v1621 = vld [vmem:[%s931 + $0xc0] sm:$0xf]
  %v1622 = vld [vmem:[%s931 + $0xc4] sm:$0xf]
  %v1623 = vld [vmem:[%s931 + $0xc8] sm:$0xf]
  %v1624 = vld [vmem:[%s931 + $0xcc] sm:$0xf]
  %v1625 = vld [vmem:[%s931 + $0xd0] sm:$0x7]
  %v1679 = vrot.slane %v1573, 5
  %v1680 = vrot.slane %v1679, 4
  %v1681 = vrot.slane %v1574, 5
  %v1682 = vsel %vm558, %v1680, %v1681
  %v1683 = vrot.slane %v1681, 4
  %v1684 = vrot.slane %v1575, 5
  %v1685 = vsel %vm558, %v1683, %v1684
  %v1686 = vrot.slane %v1684, 4
  %v1687 = vrot.slane %v1576, 5
  %v1688 = vsel %vm558, %v1686, %v1687
  %v1689 = vrot.slane %v1687, 4
  %v1690 = vrot.slane %v1577, 5
  %v1691 = vsel %vm558, %v1689, %v1690
  %v1692 = vrot.slane %v1690, 4
  %v1693 = vrot.slane %v1578, 5
  %v1694 = vsel %vm558, %v1692, %v1693
  %v1695 = vrot.slane %v1693, 4
  %v1696 = vrot.slane %v1579, 5
  %v1697 = vsel %vm558, %v1695, %v1696
  %v1698 = vrot.slane %v1696, 4
  %v1699 = vrot.slane %v1580, 5
  %v1700 = vsel %vm558, %v1698, %v1699
  %v1701 = vrot.slane %v1699, 4
  %v1702 = vrot.slane %v1581, 5
  %v1703 = vsel %vm558, %v1701, %v1702
  %v1704 = vrot.slane %v1702, 4
  %v1705 = vrot.slane %v1582, 5
  %v1706 = vsel %vm558, %v1704, %v1705
  %v1707 = vrot.slane %v1705, 4
  %v1708 = vrot.slane %v1583, 5
  %v1709 = vsel %vm558, %v1707, %v1708
  %v1710 = vrot.slane %v1708, 4
  %v1711 = vrot.slane %v1584, 5
  %v1712 = vsel %vm558, %v1710, %v1711
  %v1713 = vrot.slane %v1711, 4
  %v1714 = vrot.slane %v1585, 5
  %v1715 = vsel %vm558, %v1713, %v1714
  %v1716 = vrot.slane %v1714, 4
  %v1717 = vrot.slane %v1586, 5
  %v1718 = vsel %vm558, %v1716, %v1717
  %v1719 = vrot.slane %v1717, 4
  %v1720 = vrot.slane %v1587, 5
  %v1721 = vsel %vm558, %v1719, %v1720
  %v1722 = vrot.slane %v1720, 4
  %v1723 = vrot.slane %v1588, 5
  %v1724 = vsel %vm558, %v1722, %v1723
  %v1725 = vrot.slane %v1723, 4
  %v1726 = vrot.slane %v1589, 5
  %v1727 = vsel %vm558, %v1725, %v1726
  %v1728 = vrot.slane %v1726, 4
  %v1729 = vrot.slane %v1590, 5
  %v1730 = vsel %vm558, %v1728, %v1729
  %v1731 = vrot.slane %v1729, 4
  %v1732 = vrot.slane %v1591, 5
  %v1733 = vsel %vm558, %v1731, %v1732
  %v1734 = vrot.slane %v1732, 4
  %v1735 = vrot.slane %v1592, 5
  %v1736 = vsel %vm558, %v1734, %v1735
  %v1737 = vrot.slane %v1735, 4
  %v1738 = vrot.slane %v1593, 5
  %v1739 = vsel %vm558, %v1737, %v1738
  %v1740 = vrot.slane %v1738, 4
  %v1741 = vrot.slane %v1594, 5
  %v1742 = vsel %vm558, %v1740, %v1741
  %v1743 = vrot.slane %v1741, 4
  %v1744 = vrot.slane %v1595, 5
  %v1745 = vsel %vm558, %v1743, %v1744
  %v1746 = vrot.slane %v1744, 4
  %v1747 = vrot.slane %v1596, 5
  %v1748 = vsel %vm558, %v1746, %v1747
  %v1749 = vrot.slane %v1747, 4
  %v1750 = vrot.slane %v1597, 5
  %v1751 = vsel %vm558, %v1749, %v1750
  %v1752 = vrot.slane %v1750, 4
  %v1753 = vrot.slane %v1598, 5
  %v1754 = vsel %vm558, %v1752, %v1753
  %v1755 = vrot.slane %v1753, 4
  %v1756 = vrot.slane %v1599, 5
  %v1757 = vsel %vm558, %v1755, %v1756
  %v1758 = vrot.slane %v1756, 4
  %v1759 = vrot.slane %v1600, 5
  %v1760 = vsel %vm558, %v1758, %v1759
  %v1761 = vrot.slane %v1759, 4
  %v1762 = vrot.slane %v1601, 5
  %v1763 = vsel %vm558, %v1761, %v1762
  %v1764 = vrot.slane %v1762, 4
  %v1765 = vrot.slane %v1602, 5
  %v1766 = vsel %vm558, %v1764, %v1765
  %v1767 = vrot.slane %v1765, 4
  %v1768 = vrot.slane %v1603, 5
  %v1769 = vsel %vm558, %v1767, %v1768
  %v1770 = vrot.slane %v1768, 4
  %v1771 = vrot.slane %v1604, 5
  %v1772 = vsel %vm558, %v1770, %v1771
  %v1773 = vrot.slane %v1771, 4
  %v1774 = vrot.slane %v1605, 5
  %v1775 = vsel %vm558, %v1773, %v1774
  %v1776 = vrot.slane %v1774, 4
  %v1777 = vrot.slane %v1606, 5
  %v1778 = vsel %vm558, %v1776, %v1777
  %v1779 = vrot.slane %v1777, 4
  %v1780 = vrot.slane %v1607, 5
  %v1781 = vsel %vm558, %v1779, %v1780
  %v1782 = vrot.slane %v1780, 4
  %v1783 = vrot.slane %v1608, 5
  %v1784 = vsel %vm558, %v1782, %v1783
  %v1785 = vrot.slane %v1783, 4
  %v1786 = vrot.slane %v1609, 5
  %v1787 = vsel %vm558, %v1785, %v1786
  %v1788 = vrot.slane %v1786, 4
  %v1789 = vrot.slane %v1610, 5
  %v1790 = vsel %vm558, %v1788, %v1789
  %v1791 = vrot.slane %v1789, 4
  %v1792 = vrot.slane %v1611, 5
  %v1793 = vsel %vm558, %v1791, %v1792
  %v1794 = vrot.slane %v1792, 4
  %v1795 = vrot.slane %v1612, 5
  %v1796 = vsel %vm558, %v1794, %v1795
  %v1797 = vrot.slane %v1795, 4
  %v1798 = vrot.slane %v1613, 5
  %v1799 = vsel %vm558, %v1797, %v1798
  %v1800 = vrot.slane %v1798, 4
  %v1801 = vrot.slane %v1614, 5
  %v1802 = vsel %vm558, %v1800, %v1801
  %v1803 = vrot.slane %v1801, 4
  %v1804 = vrot.slane %v1615, 5
  %v1805 = vsel %vm558, %v1803, %v1804
  %v1806 = vrot.slane %v1804, 4
  %v1807 = vrot.slane %v1616, 5
  %v1808 = vsel %vm558, %v1806, %v1807
  %v1809 = vrot.slane %v1807, 4
  %v1810 = vrot.slane %v1617, 5
  %v1811 = vsel %vm558, %v1809, %v1810
  %v1812 = vrot.slane %v1810, 4
  %v1813 = vrot.slane %v1618, 5
  %v1814 = vsel %vm558, %v1812, %v1813
  %v1815 = vrot.slane %v1813, 4
  %v1816 = vrot.slane %v1619, 5
  %v1817 = vsel %vm558, %v1815, %v1816
  %v1818 = vrot.slane %v1816, 4
  %v1819 = vrot.slane %v1620, 5
  %v1820 = vsel %vm558, %v1818, %v1819
  %v1821 = vrot.slane %v1819, 4
  %v1822 = vrot.slane %v1621, 5
  %v1823 = vsel %vm558, %v1821, %v1822
  %v1824 = vrot.slane %v1822, 4
  %v1825 = vrot.slane %v1622, 5
  %v1826 = vsel %vm558, %v1824, %v1825
  %v1827 = vrot.slane %v1825, 4
  %v1828 = vrot.slane %v1623, 5
  %v1829 = vsel %vm558, %v1827, %v1828
  %v1830 = vrot.slane %v1828, 4
  %v1831 = vrot.slane %v1624, 5
  %v1832 = vsel %vm558, %v1830, %v1831
  %v1833 = vrot.slane %v1831, 4
  %v1834 = vrot.slane %v1625, 5
  %v1835 = vsel %vm558, %v1833, %v1834
  %v1836 = vrot.slane %v1834, 4
  %1837 = vrot.lane.b32.xlu0 %v1682, 5
  %v1838 = vpop.permute.xlu0 %1837
  %1839 = vrot.lane.b32.xlu0 %v1685, 5
  %v1840 = vpop.permute.xlu0 %1839
  %1841 = vrot.lane.b32.xlu0 %v1688, 5
  %v1842 = vpop.permute.xlu0 %1841
  %1843 = vrot.lane.b32.xlu0 %v1691, 5
  %v1844 = vpop.permute.xlu0 %1843
  %1845 = vrot.lane.b32.xlu0 %v1694, 5
  %v1846 = vpop.permute.xlu0 %1845
  %1847 = vrot.lane.b32.xlu0 %v1697, 5
  %v1848 = vpop.permute.xlu0 %1847
  %1849 = vrot.lane.b32.xlu0 %v1700, 5
  %v1850 = vpop.permute.xlu0 %1849
  %1851 = vrot.lane.b32.xlu0 %v1703, 5
  %v1852 = vpop.permute.xlu0 %1851
  %1853 = vrot.lane.b32.xlu0 %v1706, 5
  %v1854 = vpop.permute.xlu0 %1853
  %1855 = vrot.lane.b32.xlu0 %v1709, 5
  %v1856 = vpop.permute.xlu0 %1855
  %1857 = vrot.lane.b32.xlu0 %v1712, 5
  %v1858 = vpop.permute.xlu0 %1857
  %1859 = vrot.lane.b32.xlu0 %v1715, 5
  %v1860 = vpop.permute.xlu0 %1859
  %1861 = vrot.lane.b32.xlu0 %v1718, 5
  %v1862 = vpop.permute.xlu0 %1861
  %1863 = vrot.lane.b32.xlu0 %v1721, 5
  %v1864 = vpop.permute.xlu0 %1863
  %1865 = vrot.lane.b32.xlu0 %v1724, 5
  %v1866 = vpop.permute.xlu0 %1865
  %1867 = vrot.lane.b32.xlu0 %v1727, 5
  %v1868 = vpop.permute.xlu0 %1867
  %1869 = vrot.lane.b32.xlu0 %v1730, 5
  %v1870 = vpop.permute.xlu0 %1869
  %1871 = vrot.lane.b32.xlu0 %v1733, 5
  %v1872 = vpop.permute.xlu0 %1871
  %1873 = vrot.lane.b32.xlu0 %v1736, 5
  %v1874 = vpop.permute.xlu0 %1873
  %1875 = vrot.lane.b32.xlu0 %v1739, 5
  %v1876 = vpop.permute.xlu0 %1875
  %1877 = vrot.lane.b32.xlu0 %v1742, 5
  %v1878 = vpop.permute.xlu0 %1877
  %1879 = vrot.lane.b32.xlu0 %v1745, 5
  %v1880 = vpop.permute.xlu0 %1879
  %1881 = vrot.lane.b32.xlu0 %v1748, 5
  %v1882 = vpop.permute.xlu0 %1881
  %1883 = vrot.lane.b32.xlu0 %v1751, 5
  %v1884 = vpop.permute.xlu0 %1883
  %1885 = vrot.lane.b32.xlu0 %v1754, 5
  %v1886 = vpop.permute.xlu0 %1885
  %1887 = vrot.lane.b32.xlu0 %v1757, 5
  %v1888 = vpop.permute.xlu0 %1887
  %1889 = vrot.lane.b32.xlu0 %v1760, 5
  %v1890 = vpop.permute.xlu0 %1889
  %1891 = vrot.lane.b32.xlu0 %v1763, 5
  %v1892 = vpop.permute.xlu0 %1891
  %1893 = vrot.lane.b32.xlu0 %v1766, 5
  %v1894 = vpop.permute.xlu0 %1893
  %1895 = vrot.lane.b32.xlu0 %v1769, 5
  %v1896 = vpop.permute.xlu0 %1895
  %1897 = vrot.lane.b32.xlu0 %v1772, 5
  %v1898 = vpop.permute.xlu0 %1897
  %1899 = vrot.lane.b32.xlu0 %v1775, 5
  %v1900 = vpop.permute.xlu0 %1899
  %1901 = vrot.lane.b32.xlu0 %v1778, 5
  %v1902 = vpop.permute.xlu0 %1901
  %1903 = vrot.lane.b32.xlu0 %v1781, 5
  %v1904 = vpop.permute.xlu0 %1903
  %1905 = vrot.lane.b32.xlu0 %v1784, 5
  %v1906 = vpop.permute.xlu0 %1905
  %1907 = vrot.lane.b32.xlu0 %v1787, 5
  %v1908 = vpop.permute.xlu0 %1907
  %1909 = vrot.lane.b32.xlu0 %v1790, 5
  %v1910 = vpop.permute.xlu0 %1909
  %1911 = vrot.lane.b32.xlu0 %v1793, 5
  %v1912 = vpop.permute.xlu0 %1911
  %1913 = vrot.lane.b32.xlu0 %v1796, 5
  %v1914 = vpop.permute.xlu0 %1913
  %1915 = vrot.lane.b32.xlu0 %v1799, 5
  %v1916 = vpop.permute.xlu0 %1915
  %1917 = vrot.lane.b32.xlu0 %v1802, 5
  %v1918 = vpop.permute.xlu0 %1917
  %1919 = vrot.lane.b32.xlu0 %v1805, 5
  %v1920 = vpop.permute.xlu0 %1919
  %1921 = vrot.lane.b32.xlu0 %v1808, 5
  %v1922 = vpop.permute.xlu0 %1921
  %1923 = vrot.lane.b32.xlu0 %v1811, 5
  %v1924 = vpop.permute.xlu0 %1923
  %1925 = vrot.lane.b32.xlu0 %v1814, 5
  %v1926 = vpop.permute.xlu0 %1925
  %1927 = vrot.lane.b32.xlu0 %v1817, 5
  %v1928 = vpop.permute.xlu0 %1927
  %1929 = vrot.lane.b32.xlu0 %v1820, 5
  %v1930 = vpop.permute.xlu0 %1929
  %1931 = vrot.lane.b32.xlu0 %v1823, 5
  %v1932 = vpop.permute.xlu0 %1931
  %1933 = vrot.lane.b32.xlu0 %v1826, 5
  %v1934 = vpop.permute.xlu0 %1933
  %1935 = vrot.lane.b32.xlu0 %v1829, 5
  %v1936 = vpop.permute.xlu0 %1935
  %1937 = vrot.lane.b32.xlu0 %v1832, 5
  %v1938 = vpop.permute.xlu0 %1937
  %1939 = vrot.lane.b32.xlu0 %v1835, 5
  %v1940 = vpop.permute.xlu0 %1939
  %1941 = vrot.lane.b32.xlu0 %v1836, 5
  %v1942 = vpop.permute.xlu0 %1941
  %vm1996 = vcmask 44072
  %1997 = vst.msk [vmem:[#allocation2] sm:$0xf] %vm1996, %v1838
  %1998 = vst.msk [vmem:[#allocation2 + $0x4] sm:$0xf] %vm1996, %v1840
  %1999 = vst.msk [vmem:[#allocation2 + $0x8] sm:$0xf] %vm1996, %v1842
  %2000 = vst.msk [vmem:[#allocation2 + $0xc] sm:$0xf] %vm1996, %v1844
  %2001 = vst.msk [vmem:[#allocation2 + $0x10] sm:$0xf] %vm1996, %v1846
  %2002 = vst.msk [vmem:[#allocation2 + $0x14] sm:$0xf] %vm1996, %v1848
  %2003 = vst.msk [vmem:[#allocation2 + $0x18] sm:$0xf] %vm1996, %v1850
  %2004 = vst.msk [vmem:[#allocation2 + $0x1c] sm:$0xf] %vm1996, %v1852
  %2005 = vst.msk [vmem:[#allocation2 + $0x20] sm:$0xf] %vm1996, %v1854
  %2006 = vst.msk [vmem:[#allocation2 + $0x24] sm:$0xf] %vm1996, %v1856
  %2007 = vst.msk [vmem:[#allocation2 + $0x28] sm:$0xf] %vm1996, %v1858
  %2008 = vst.msk [vmem:[#allocation2 + $0x2c] sm:$0xf] %vm1996, %v1860
  %2009 = vst.msk [vmem:[#allocation2 + $0x30] sm:$0xf] %vm1996, %v1862
  %2010 = vst.msk [vmem:[#allocation2 + $0x34] sm:$0xf] %vm1996, %v1864
  %2011 = vst.msk [vmem:[#allocation2 + $0x38] sm:$0xf] %vm1996, %v1866
  %2012 = vst.msk [vmem:[#allocation2 + $0x3c] sm:$0xf] %vm1996, %v1868
  %2013 = vst.msk [vmem:[#allocation2 + $0x40] sm:$0xf] %vm1996, %v1870
  %2014 = vst.msk [vmem:[#allocation2 + $0x44] sm:$0xf] %vm1996, %v1872
  %2015 = vst.msk [vmem:[#allocation2 + $0x48] sm:$0xf] %vm1996, %v1874
  %2016 = vst.msk [vmem:[#allocation2 + $0x4c] sm:$0xf] %vm1996, %v1876
  %2017 = vst.msk [vmem:[#allocation2 + $0x50] sm:$0xf] %vm1996, %v1878
  %2018 = vst.msk [vmem:[#allocation2 + $0x54] sm:$0xf] %vm1996, %v1880
  %2019 = vst.msk [vmem:[#allocation2 + $0x58] sm:$0xf] %vm1996, %v1882
  %2020 = vst.msk [vmem:[#allocation2 + $0x5c] sm:$0xf] %vm1996, %v1884
  %2021 = vst.msk [vmem:[#allocation2 + $0x60] sm:$0xf] %vm1996, %v1886
  %2022 = vst.msk [vmem:[#allocation2 + $0x64] sm:$0xf] %vm1996, %v1888
  %2023 = vst.msk [vmem:[#allocation2 + $0x68] sm:$0xf] %vm1996, %v1890
  %2024 = vst.msk [vmem:[#allocation2 + $0x6c] sm:$0xf] %vm1996, %v1892
  %2025 = vst.msk [vmem:[#allocation2 + $0x70] sm:$0xf] %vm1996, %v1894
  %2026 = vst.msk [vmem:[#allocation2 + $0x74] sm:$0xf] %vm1996, %v1896
  %2027 = vst.msk [vmem:[#allocation2 + $0x78] sm:$0xf] %vm1996, %v1898
  %2028 = vst.msk [vmem:[#allocation2 + $0x7c] sm:$0xf] %vm1996, %v1900
  %2029 = vst.msk [vmem:[#allocation2 + $0x80] sm:$0xf] %vm1996, %v1902
  %2030 = vst.msk [vmem:[#allocation2 + $0x84] sm:$0xf] %vm1996, %v1904
  %2031 = vst.msk [vmem:[#allocation2 + $0x88] sm:$0xf] %vm1996, %v1906
  %2032 = vst.msk [vmem:[#allocation2 + $0x8c] sm:$0xf] %vm1996, %v1908
  %2033 = vst.msk [vmem:[#allocation2 + $0x90] sm:$0xf] %vm1996, %v1910
  %2034 = vst.msk [vmem:[#allocation2 + $0x94] sm:$0xf] %vm1996, %v1912
  %2035 = vst.msk [vmem:[#allocation2 + $0x98] sm:$0xf] %vm1996, %v1914
  %2036 = vst.msk [vmem:[#allocation2 + $0x9c] sm:$0xf] %vm1996, %v1916
  %2037 = vst.msk [vmem:[#allocation2 + $0xa0] sm:$0xf] %vm1996, %v1918
  %2038 = vst.msk [vmem:[#allocation2 + $0xa4] sm:$0xf] %vm1996, %v1920
  %2039 = vst.msk [vmem:[#allocation2 + $0xa8] sm:$0xf] %vm1996, %v1922
  %2040 = vst.msk [vmem:[#allocation2 + $0xac] sm:$0xf] %vm1996, %v1924
  %2041 = vst.msk [vmem:[#allocation2 + $0xb0] sm:$0xf] %vm1996, %v1926
  %2042 = vst.msk [vmem:[#allocation2 + $0xb4] sm:$0xf] %vm1996, %v1928
  %2043 = vst.msk [vmem:[#allocation2 + $0xb8] sm:$0xf] %vm1996, %v1930
  %2044 = vst.msk [vmem:[#allocation2 + $0xbc] sm:$0xf] %vm1996, %v1932
  %2045 = vst.msk [vmem:[#allocation2 + $0xc0] sm:$0xf] %vm1996, %v1934
  %2046 = vst.msk [vmem:[#allocation2 + $0xc4] sm:$0xf] %vm1996, %v1936
  %2047 = vst.msk [vmem:[#allocation2 + $0xc8] sm:$0xf] %vm1996, %v1938
  %2048 = vst.msk [vmem:[#allocation2 + $0xcc] sm:$0xf] %vm1996, %v1940
  %vm2049 = vcmask 42024
  %2050 = vst.msk [vmem:[#allocation2 + $0xd0] sm:$0x3] %vm2049, %v1942
  %v2051 = vld [vmem:[%s0 + $0xc] sm:$0x8]
  %v2052 = vld [vmem:[%s0 + $0x10] sm:$0xf]
  %v2053 = vld [vmem:[%s0 + $0x14] sm:$0xf]
  %v2054 = vld [vmem:[%s0 + $0x18] sm:$0xf]
  %v2055 = vld [vmem:[%s0 + $0x1c] sm:$0xf]
  %v2056 = vld [vmem:[%s0 + $0x20] sm:$0xf]
  %v2057 = vld [vmem:[%s0 + $0x24] sm:$0xf]
  %v2058 = vld [vmem:[%s0 + $0x28] sm:$0xf]
  %v2059 = vld [vmem:[%s0 + $0x2c] sm:$0xf]
  %v2060 = vld [vmem:[%s0 + $0x30] sm:$0xf]
  %v2061 = vld [vmem:[%s0 + $0x34] sm:$0xf]
  %v2062 = vld [vmem:[%s0 + $0x38] sm:$0xf]
  %v2063 = vld [vmem:[%s0 + $0x3c] sm:$0xf]
  %v2064 = vld [vmem:[%s0 + $0x40] sm:$0xf]
  %v2065 = vld [vmem:[%s0 + $0x44] sm:$0xf]
  %v2066 = vld [vmem:[%s0 + $0x48] sm:$0xf]
  %v2067 = vld [vmem:[%s0 + $0x4c] sm:$0xf]
  %v2068 = vld [vmem:[%s0 + $0x50] sm:$0xf]
  %v2069 = vld [vmem:[%s0 + $0x54] sm:$0xf]
  %v2070 = vld [vmem:[%s0 + $0x58] sm:$0xf]
  %v2071 = vld [vmem:[%s0 + $0x5c] sm:$0xf]
  %v2072 = vld [vmem:[%s0 + $0x60] sm:$0xf]
  %v2073 = vld [vmem:[%s0 + $0x64] sm:$0xf]
  %v2074 = vld [vmem:[%s0 + $0x68] sm:$0xf]
  %v2075 = vld [vmem:[%s0 + $0x6c] sm:$0xf]
  %v2076 = vld [vmem:[%s0 + $0x70] sm:$0xf]
  %v2077 = vld [vmem:[%s0 + $0x74] sm:$0xf]
  %v2078 = vld [vmem:[%s0 + $0x78] sm:$0xf]
  %v2079 = vld [vmem:[%s0 + $0x7c] sm:$0xf]
  %v2080 = vld [vmem:[%s0 + $0x80] sm:$0xf]
  %v2081 = vld [vmem:[%s0 + $0x84] sm:$0xf]
  %v2082 = vld [vmem:[%s0 + $0x88] sm:$0xf]
  %v2083 = vld [vmem:[%s0 + $0x8c] sm:$0xf]
  %v2084 = vld [vmem:[%s0 + $0x90] sm:$0xf]
  %v2085 = vld [vmem:[%s0 + $0x94] sm:$0xf]
  %v2086 = vld [vmem:[%s0 + $0x98] sm:$0xf]
  %v2087 = vld [vmem:[%s0 + $0x9c] sm:$0xf]
  %v2088 = vld [vmem:[%s0 + $0xa0] sm:$0xf]
  %v2089 = vld [vmem:[%s0 + $0xa4] sm:$0xf]
  %v2090 = vld [vmem:[%s0 + $0xa8] sm:$0xf]
  %v2091 = vld [vmem:[%s0 + $0xac] sm:$0xf]
  %v2092 = vld [vmem:[%s0 + $0xb0] sm:$0xf]
  %v2093 = vld [vmem:[%s0 + $0xb4] sm:$0xf]
  %v2094 = vld [vmem:[%s0 + $0xb8] sm:$0xf]
  %v2095 = vld [vmem:[%s0 + $0xbc] sm:$0xf]
  %v2096 = vld [vmem:[%s0 + $0xc0] sm:$0xf]
  %v2097 = vld [vmem:[%s0 + $0xc4] sm:$0xf]
  %v2098 = vld [vmem:[%s0 + $0xc8] sm:$0xf]
  %v2099 = vld [vmem:[%s0 + $0xcc] sm:$0xf]
  %v2100 = vld [vmem:[%s0 + $0xd0] sm:$0xf]
  %v2101 = vld [vmem:[%s0 + $0xd4] sm:$0xf]
  %v2102 = vld [vmem:[%s0 + $0xd8] sm:$0xf]
  %v2103 = vld [vmem:[%s0 + $0xdc] sm:$0xf]
  %v2104 = vld [vmem:[%s0 + $0xe0] sm:$0x1]
  %vm2159 = vcmask 1040384
  %vm2160 = vcmask 1044484
  %vm2161 = vmor %vm2159, %vm2160
  %v2162 = vrot.slane %v2051, 7
  %v2163 = vrot.slane %v2162, 4
  %v2164 = vrot.slane %v2052, 7
  %v2165 = vsel %vm2161, %v2163, %v2164
  %v2166 = vrot.slane %v2164, 4
  %v2167 = vrot.slane %v2053, 7
  %v2168 = vsel %vm2161, %v2166, %v2167
  %v2169 = vrot.slane %v2167, 4
  %v2170 = vrot.slane %v2054, 7
  %v2171 = vsel %vm2161, %v2169, %v2170
  %v2172 = vrot.slane %v2170, 4
  %v2173 = vrot.slane %v2055, 7
  %v2174 = vsel %vm2161, %v2172, %v2173
  %v2175 = vrot.slane %v2173, 4
  %v2176 = vrot.slane %v2056, 7
  %v2177 = vsel %vm2161, %v2175, %v2176
  %v2178 = vrot.slane %v2176, 4
  %v2179 = vrot.slane %v2057, 7
  %v2180 = vsel %vm2161, %v2178, %v2179
  %v2181 = vrot.slane %v2179, 4
  %v2182 = vrot.slane %v2058, 7
  %v2183 = vsel %vm2161, %v2181, %v2182
  %v2184 = vrot.slane %v2182, 4
  %v2185 = vrot.slane %v2059, 7
  %v2186 = vsel %vm2161, %v2184, %v2185
  %v2187 = vrot.slane %v2185, 4
  %v2188 = vrot.slane %v2060, 7
  %v2189 = vsel %vm2161, %v2187, %v2188
  %v2190 = vrot.slane %v2188, 4
  %v2191 = vrot.slane %v2061, 7
  %v2192 = vsel %vm2161, %v2190, %v2191
  %v2193 = vrot.slane %v2191, 4
  %v2194 = vrot.slane %v2062, 7
  %v2195 = vsel %vm2161, %v2193, %v2194
  %v2196 = vrot.slane %v2194, 4
  %v2197 = vrot.slane %v2063, 7
  %v2198 = vsel %vm2161, %v2196, %v2197
  %v2199 = vrot.slane %v2197, 4
  %v2200 = vrot.slane %v2064, 7
  %v2201 = vsel %vm2161, %v2199, %v2200
  %v2202 = vrot.slane %v2200, 4
  %v2203 = vrot.slane %v2065, 7
  %v2204 = vsel %vm2161, %v2202, %v2203
  %v2205 = vrot.slane %v2203, 4
  %v2206 = vrot.slane %v2066, 7
  %v2207 = vsel %vm2161, %v2205, %v2206
  %v2208 = vrot.slane %v2206, 4
  %v2209 = vrot.slane %v2067, 7
  %v2210 = vsel %vm2161, %v2208, %v2209
  %v2211 = vrot.slane %v2209, 4
  %v2212 = vrot.slane %v2068, 7
  %v2213 = vsel %vm2161, %v2211, %v2212
  %v2214 = vrot.slane %v2212, 4
  %v2215 = vrot.slane %v2069, 7
  %v2216 = vsel %vm2161, %v2214, %v2215
  %v2217 = vrot.slane %v2215, 4
  %v2218 = vrot.slane %v2070, 7
  %v2219 = vsel %vm2161, %v2217, %v2218
  %v2220 = vrot.slane %v2218, 4
  %v2221 = vrot.slane %v2071, 7
  %v2222 = vsel %vm2161, %v2220, %v2221
  %v2223 = vrot.slane %v2221, 4
  %v2224 = vrot.slane %v2072, 7
  %v2225 = vsel %vm2161, %v2223, %v2224
  %v2226 = vrot.slane %v2224, 4
  %v2227 = vrot.slane %v2073, 7
  %v2228 = vsel %vm2161, %v2226, %v2227
  %v2229 = vrot.slane %v2227, 4
  %v2230 = vrot.slane %v2074, 7
  %v2231 = vsel %vm2161, %v2229, %v2230
  %v2232 = vrot.slane %v2230, 4
  %v2233 = vrot.slane %v2075, 7
  %v2234 = vsel %vm2161, %v2232, %v2233
  %v2235 = vrot.slane %v2233, 4
  %v2236 = vrot.slane %v2076, 7
  %v2237 = vsel %vm2161, %v2235, %v2236
  %v2238 = vrot.slane %v2236, 4
  %v2239 = vrot.slane %v2077, 7
  %v2240 = vsel %vm2161, %v2238, %v2239
  %v2241 = vrot.slane %v2239, 4
  %v2242 = vrot.slane %v2078, 7
  %v2243 = vsel %vm2161, %v2241, %v2242
  %v2244 = vrot.slane %v2242, 4
  %v2245 = vrot.slane %v2079, 7
  %v2246 = vsel %vm2161, %v2244, %v2245
  %v2247 = vrot.slane %v2245, 4
  %v2248 = vrot.slane %v2080, 7
  %v2249 = vsel %vm2161, %v2247, %v2248
  %v2250 = vrot.slane %v2248, 4
  %v2251 = vrot.slane %v2081, 7
  %v2252 = vsel %vm2161, %v2250, %v2251
  %v2253 = vrot.slane %v2251, 4
  %v2254 = vrot.slane %v2082, 7
  %v2255 = vsel %vm2161, %v2253, %v2254
  %v2256 = vrot.slane %v2254, 4
  %v2257 = vrot.slane %v2083, 7
  %v2258 = vsel %vm2161, %v2256, %v2257
  %v2259 = vrot.slane %v2257, 4
  %v2260 = vrot.slane %v2084, 7
  %v2261 = vsel %vm2161, %v2259, %v2260
  %v2262 = vrot.slane %v2260, 4
  %v2263 = vrot.slane %v2085, 7
  %v2264 = vsel %vm2161, %v2262, %v2263
  %v2265 = vrot.slane %v2263, 4
  %v2266 = vrot.slane %v2086, 7
  %v2267 = vsel %vm2161, %v2265, %v2266
  %v2268 = vrot.slane %v2266, 4
  %v2269 = vrot.slane %v2087, 7
  %v2270 = vsel %vm2161, %v2268, %v2269
  %v2271 = vrot.slane %v2269, 4
  %v2272 = vrot.slane %v2088, 7
  %v2273 = vsel %vm2161, %v2271, %v2272
  %v2274 = vrot.slane %v2272, 4
  %v2275 = vrot.slane %v2089, 7
  %v2276 = vsel %vm2161, %v2274, %v2275
  %v2277 = vrot.slane %v2275, 4
  %v2278 = vrot.slane %v2090, 7
  %v2279 = vsel %vm2161, %v2277, %v2278
  %v2280 = vrot.slane %v2278, 4
  %v2281 = vrot.slane %v2091, 7
  %v2282 = vsel %vm2161, %v2280, %v2281
  %v2283 = vrot.slane %v2281, 4
  %v2284 = vrot.slane %v2092, 7
  %v2285 = vsel %vm2161, %v2283, %v2284
  %v2286 = vrot.slane %v2284, 4
  %v2287 = vrot.slane %v2093, 7
  %v2288 = vsel %vm2161, %v2286, %v2287
  %v2289 = vrot.slane %v2287, 4
  %v2290 = vrot.slane %v2094, 7
  %v2291 = vsel %vm2161, %v2289, %v2290
  %v2292 = vrot.slane %v2290, 4
  %v2293 = vrot.slane %v2095, 7
  %v2294 = vsel %vm2161, %v2292, %v2293
  %v2295 = vrot.slane %v2293, 4
  %v2296 = vrot.slane %v2096, 7
  %v2297 = vsel %vm2161, %v2295, %v2296
  %v2298 = vrot.slane %v2296, 4
  %v2299 = vrot.slane %v2097, 7
  %v2300 = vsel %vm2161, %v2298, %v2299
  %v2301 = vrot.slane %v2299, 4
  %v2302 = vrot.slane %v2098, 7
  %v2303 = vsel %vm2161, %v2301, %v2302
  %v2304 = vrot.slane %v2302, 4
  %v2305 = vrot.slane %v2099, 7
  %v2306 = vsel %vm2161, %v2304, %v2305
  %v2307 = vrot.slane %v2305, 4
  %v2308 = vrot.slane %v2100, 7
  %v2309 = vsel %vm2161, %v2307, %v2308
  %v2310 = vrot.slane %v2308, 4
  %v2311 = vrot.slane %v2101, 7
  %v2312 = vsel %vm2161, %v2310, %v2311
  %v2313 = vrot.slane %v2311, 4
  %v2314 = vrot.slane %v2102, 7
  %v2315 = vsel %vm2161, %v2313, %v2314
  %v2316 = vrot.slane %v2314, 4
  %v2317 = vrot.slane %v2103, 7
  %v2318 = vsel %vm2161, %v2316, %v2317
  %v2319 = vrot.slane %v2317, 4
  %v2320 = vrot.slane %v2104, 7
  %v2321 = vsel %vm2161, %v2319, %v2320
  %2322 = vrot.lane.b32.xlu0 %v2165, 6
  %v2323 = vpop.permute.xlu0 %2322
  %2324 = vrot.lane.b32.xlu0 %v2168, 6
  %v2325 = vpop.permute.xlu0 %2324
  %2326 = vrot.lane.b32.xlu0 %v2171, 6
  %v2327 = vpop.permute.xlu0 %2326
  %2328 = vrot.lane.b32.xlu0 %v2174, 6
  %v2329 = vpop.permute.xlu0 %2328
  %2330 = vrot.lane.b32.xlu0 %v2177, 6
  %v2331 = vpop.permute.xlu0 %2330
  %2332 = vrot.lane.b32.xlu0 %v2180, 6
  %v2333 = vpop.permute.xlu0 %2332
  %2334 = vrot.lane.b32.xlu0 %v2183, 6
  %v2335 = vpop.permute.xlu0 %2334
  %2336 = vrot.lane.b32.xlu0 %v2186, 6
  %v2337 = vpop.permute.xlu0 %2336
  %2338 = vrot.lane.b32.xlu0 %v2189, 6
  %v2339 = vpop.permute.xlu0 %2338
  %2340 = vrot.lane.b32.xlu0 %v2192, 6
  %v2341 = vpop.permute.xlu0 %2340
  %2342 = vrot.lane.b32.xlu0 %v2195, 6
  %v2343 = vpop.permute.xlu0 %2342
  %2344 = vrot.lane.b32.xlu0 %v2198, 6
  %v2345 = vpop.permute.xlu0 %2344
  %2346 = vrot.lane.b32.xlu0 %v2201, 6
  %v2347 = vpop.permute.xlu0 %2346
  %2348 = vrot.lane.b32.xlu0 %v2204, 6
  %v2349 = vpop.permute.xlu0 %2348
  %2350 = vrot.lane.b32.xlu0 %v2207, 6
  %v2351 = vpop.permute.xlu0 %2350
  %2352 = vrot.lane.b32.xlu0 %v2210, 6
  %v2353 = vpop.permute.xlu0 %2352
  %2354 = vrot.lane.b32.xlu0 %v2213, 6
  %v2355 = vpop.permute.xlu0 %2354
  %2356 = vrot.lane.b32.xlu0 %v2216, 6
  %v2357 = vpop.permute.xlu0 %2356
  %2358 = vrot.lane.b32.xlu0 %v2219, 6
  %v2359 = vpop.permute.xlu0 %2358
  %2360 = vrot.lane.b32.xlu0 %v2222, 6
  %v2361 = vpop.permute.xlu0 %2360
  %2362 = vrot.lane.b32.xlu0 %v2225, 6
  %v2363 = vpop.permute.xlu0 %2362
  %2364 = vrot.lane.b32.xlu0 %v2228, 6
  %v2365 = vpop.permute.xlu0 %2364
  %2366 = vrot.lane.b32.xlu0 %v2231, 6
  %v2367 = vpop.permute.xlu0 %2366
  %2368 = vrot.lane.b32.xlu0 %v2234, 6
  %v2369 = vpop.permute.xlu0 %2368
  %2370 = vrot.lane.b32.xlu0 %v2237, 6
  %v2371 = vpop.permute.xlu0 %2370
  %2372 = vrot.lane.b32.xlu0 %v2240, 6
  %v2373 = vpop.permute.xlu0 %2372
  %2374 = vrot.lane.b32.xlu0 %v2243, 6
  %v2375 = vpop.permute.xlu0 %2374
  %2376 = vrot.lane.b32.xlu0 %v2246, 6
  %v2377 = vpop.permute.xlu0 %2376
  %2378 = vrot.lane.b32.xlu0 %v2249, 6
  %v2379 = vpop.permute.xlu0 %2378
  %2380 = vrot.lane.b32.xlu0 %v2252, 6
  %v2381 = vpop.permute.xlu0 %2380
  %2382 = vrot.lane.b32.xlu0 %v2255, 6
  %v2383 = vpop.permute.xlu0 %2382
  %2384 = vrot.lane.b32.xlu0 %v2258, 6
  %v2385 = vpop.permute.xlu0 %2384
  %2386 = vrot.lane.b32.xlu0 %v2261, 6
  %v2387 = vpop.permute.xlu0 %2386
  %2388 = vrot.lane.b32.xlu0 %v2264, 6
  %v2389 = vpop.permute.xlu0 %2388
  %2390 = vrot.lane.b32.xlu0 %v2267, 6
  %v2391 = vpop.permute.xlu0 %2390
  %2392 = vrot.lane.b32.xlu0 %v2270, 6
  %v2393 = vpop.permute.xlu0 %2392
  %2394 = vrot.lane.b32.xlu0 %v2273, 6
  %v2395 = vpop.permute.xlu0 %2394
  %2396 = vrot.lane.b32.xlu0 %v2276, 6
  %v2397 = vpop.permute.xlu0 %2396
  %2398 = vrot.lane.b32.xlu0 %v2279, 6
  %v2399 = vpop.permute.xlu0 %2398
  %2400 = vrot.lane.b32.xlu0 %v2282, 6
  %v2401 = vpop.permute.xlu0 %2400
  %2402 = vrot.lane.b32.xlu0 %v2285, 6
  %v2403 = vpop.permute.xlu0 %2402
  %2404 = vrot.lane.b32.xlu0 %v2288, 6
  %v2405 = vpop.permute.xlu0 %2404
  %2406 = vrot.lane.b32.xlu0 %v2291, 6
  %v2407 = vpop.permute.xlu0 %2406
  %2408 = vrot.lane.b32.xlu0 %v2294, 6
  %v2409 = vpop.permute.xlu0 %2408
  %2410 = vrot.lane.b32.xlu0 %v2297, 6
  %v2411 = vpop.permute.xlu0 %2410
  %2412 = vrot.lane.b32.xlu0 %v2300, 6
  %v2413 = vpop.permute.xlu0 %2412
  %2414 = vrot.lane.b32.xlu0 %v2303, 6
  %v2415 = vpop.permute.xlu0 %2414
  %2416 = vrot.lane.b32.xlu0 %v2306, 6
  %v2417 = vpop.permute.xlu0 %2416
  %2418 = vrot.lane.b32.xlu0 %v2309, 6
  %v2419 = vpop.permute.xlu0 %2418
  %2420 = vrot.lane.b32.xlu0 %v2312, 6
  %v2421 = vpop.permute.xlu0 %2420
  %2422 = vrot.lane.b32.xlu0 %v2315, 6
  %v2423 = vpop.permute.xlu0 %2422
  %2424 = vrot.lane.b32.xlu0 %v2318, 6
  %v2425 = vpop.permute.xlu0 %2424
  %2426 = vrot.lane.b32.xlu0 %v2321, 6
  %v2427 = vpop.permute.xlu0 %2426
  %vm2481 = vcmask 52272
  %2482 = vst.msk [vmem:[#allocation2] sm:$0xf] %vm2481, %v2323
  %2483 = vst.msk [vmem:[#allocation2 + $0x4] sm:$0xf] %vm2481, %v2325
  %2484 = vst.msk [vmem:[#allocation2 + $0x8] sm:$0xf] %vm2481, %v2327
  %2485 = vst.msk [vmem:[#allocation2 + $0xc] sm:$0xf] %vm2481, %v2329
  %2486 = vst.msk [vmem:[#allocation2 + $0x10] sm:$0xf] %vm2481, %v2331
  %2487 = vst.msk [vmem:[#allocation2 + $0x14] sm:$0xf] %vm2481, %v2333
  %2488 = vst.msk [vmem:[#allocation2 + $0x18] sm:$0xf] %vm2481, %v2335
  %2489 = vst.msk [vmem:[#allocation2 + $0x1c] sm:$0xf] %vm2481, %v2337
  %2490 = vst.msk [vmem:[#allocation2 + $0x20] sm:$0xf] %vm2481, %v2339
  %2491 = vst.msk [vmem:[#allocation2 + $0x24] sm:$0xf] %vm2481, %v2341
  %2492 = vst.msk [vmem:[#allocation2 + $0x28] sm:$0xf] %vm2481, %v2343
  %2493 = vst.msk [vmem:[#allocation2 + $0x2c] sm:$0xf] %vm2481, %v2345
  %2494 = vst.msk [vmem:[#allocation2 + $0x30] sm:$0xf] %vm2481, %v2347
  %2495 = vst.msk [vmem:[#allocation2 + $0x34] sm:$0xf] %vm2481, %v2349
  %2496 = vst.msk [vmem:[#allocation2 + $0x38] sm:$0xf] %vm2481, %v2351
  %2497 = vst.msk [vmem:[#allocation2 + $0x3c] sm:$0xf] %vm2481, %v2353
  %2498 = vst.msk [vmem:[#allocation2 + $0x40] sm:$0xf] %vm2481, %v2355
  %2499 = vst.msk [vmem:[#allocation2 + $0x44] sm:$0xf] %vm2481, %v2357
  %2500 = vst.msk [vmem:[#allocation2 + $0x48] sm:$0xf] %vm2481, %v2359
  %2501 = vst.msk [vmem:[#allocation2 + $0x4c] sm:$0xf] %vm2481, %v2361
  %2502 = vst.msk [vmem:[#allocation2 + $0x50] sm:$0xf] %vm2481, %v2363
  %2503 = vst.msk [vmem:[#allocation2 + $0x54] sm:$0xf] %vm2481, %v2365
  %2504 = vst.msk [vmem:[#allocation2 + $0x58] sm:$0xf] %vm2481, %v2367
  %2505 = vst.msk [vmem:[#allocation2 + $0x5c] sm:$0xf] %vm2481, %v2369
  %2506 = vst.msk [vmem:[#allocation2 + $0x60] sm:$0xf] %vm2481, %v2371
  %2507 = vst.msk [vmem:[#allocation2 + $0x64] sm:$0xf] %vm2481, %v2373
  %2508 = vst.msk [vmem:[#allocation2 + $0x68] sm:$0xf] %vm2481, %v2375
  %2509 = vst.msk [vmem:[#allocation2 + $0x6c] sm:$0xf] %vm2481, %v2377
  %2510 = vst.msk [vmem:[#allocation2 + $0x70] sm:$0xf] %vm2481, %v2379
  %2511 = vst.msk [vmem:[#allocation2 + $0x74] sm:$0xf] %vm2481, %v2381
  %2512 = vst.msk [vmem:[#allocation2 + $0x78] sm:$0xf] %vm2481, %v2383
  %2513 = vst.msk [vmem:[#allocation2 + $0x7c] sm:$0xf] %vm2481, %v2385
  %2514 = vst.msk [vmem:[#allocation2 + $0x80] sm:$0xf] %vm2481, %v2387
  %2515 = vst.msk [vmem:[#allocation2 + $0x84] sm:$0xf] %vm2481, %v2389
  %2516 = vst.msk [vmem:[#allocation2 + $0x88] sm:$0xf] %vm2481, %v2391
  %2517 = vst.msk [vmem:[#allocation2 + $0x8c] sm:$0xf] %vm2481, %v2393
  %2518 = vst.msk [vmem:[#allocation2 + $0x90] sm:$0xf] %vm2481, %v2395
  %2519 = vst.msk [vmem:[#allocation2 + $0x94] sm:$0xf] %vm2481, %v2397
  %2520 = vst.msk [vmem:[#allocation2 + $0x98] sm:$0xf] %vm2481, %v2399
  %2521 = vst.msk [vmem:[#allocation2 + $0x9c] sm:$0xf] %vm2481, %v2401
  %2522 = vst.msk [vmem:[#allocation2 + $0xa0] sm:$0xf] %vm2481, %v2403
  %2523 = vst.msk [vmem:[#allocation2 + $0xa4] sm:$0xf] %vm2481, %v2405
  %2524 = vst.msk [vmem:[#allocation2 + $0xa8] sm:$0xf] %vm2481, %v2407
  %2525 = vst.msk [vmem:[#allocation2 + $0xac] sm:$0xf] %vm2481, %v2409
  %2526 = vst.msk [vmem:[#allocation2 + $0xb0] sm:$0xf] %vm2481, %v2411
  %2527 = vst.msk [vmem:[#allocation2 + $0xb4] sm:$0xf] %vm2481, %v2413
  %2528 = vst.msk [vmem:[#allocation2 + $0xb8] sm:$0xf] %vm2481, %v2415
  %2529 = vst.msk [vmem:[#allocation2 + $0xbc] sm:$0xf] %vm2481, %v2417
  %2530 = vst.msk [vmem:[#allocation2 + $0xc0] sm:$0xf] %vm2481, %v2419
  %2531 = vst.msk [vmem:[#allocation2 + $0xc4] sm:$0xf] %vm2481, %v2421
  %2532 = vst.msk [vmem:[#allocation2 + $0xc8] sm:$0xf] %vm2481, %v2423
  %2533 = vst.msk [vmem:[#allocation2 + $0xcc] sm:$0xf] %vm2481, %v2425
  %vm2534 = vcmask 50224
  %2535 = vst.msk [vmem:[#allocation2 + $0xd0] sm:$0x3] %vm2534, %v2427
  %v2536 = vld [vmem:[%s129 + $0xc] sm:$0x8]
  %v2537 = vld [vmem:[%s129 + $0x10] sm:$0xf]
  %v2538 = vld [vmem:[%s129 + $0x14] sm:$0xf]
  %v2539 = vld [vmem:[%s129 + $0x18] sm:$0xf]
  %v2540 = vld [vmem:[%s129 + $0x1c] sm:$0xf]
  %v2541 = vld [vmem:[%s129 + $0x20] sm:$0xf]
  %v2542 = vld [vmem:[%s129 + $0x24] sm:$0xf]
  %v2543 = vld [vmem:[%s129 + $0x28] sm:$0xf]
  %v2544 = vld [vmem:[%s129 + $0x2c] sm:$0xf]
  %v2545 = vld [vmem:[%s129 + $0x30] sm:$0xf]
  %v2546 = vld [vmem:[%s129 + $0x34] sm:$0xf]
  %v2547 = vld [vmem:[%s129 + $0x38] sm:$0xf]
  %v2548 = vld [vmem:[%s129 + $0x3c] sm:$0xf]
  %v2549 = vld [vmem:[%s129 + $0x40] sm:$0xf]
  %v2550 = vld [vmem:[%s129 + $0x44] sm:$0xf]
  %v2551 = vld [vmem:[%s129 + $0x48] sm:$0xf]
  %v2552 = vld [vmem:[%s129 + $0x4c] sm:$0xf]
  %v2553 = vld [vmem:[%s129 + $0x50] sm:$0xf]
  %v2554 = vld [vmem:[%s129 + $0x54] sm:$0xf]
  %v2555 = vld [vmem:[%s129 + $0x58] sm:$0xf]
  %v2556 = vld [vmem:[%s129 + $0x5c] sm:$0xf]
  %v2557 = vld [vmem:[%s129 + $0x60] sm:$0xf]
  %v2558 = vld [vmem:[%s129 + $0x64] sm:$0xf]
  %v2559 = vld [vmem:[%s129 + $0x68] sm:$0xf]
  %v2560 = vld [vmem:[%s129 + $0x6c] sm:$0xf]
  %v2561 = vld [vmem:[%s129 + $0x70] sm:$0xf]
  %v2562 = vld [vmem:[%s129 + $0x74] sm:$0xf]
  %v2563 = vld [vmem:[%s129 + $0x78] sm:$0xf]
  %v2564 = vld [vmem:[%s129 + $0x7c] sm:$0xf]
  %v2565 = vld [vmem:[%s129 + $0x80] sm:$0xf]
  %v2566 = vld [vmem:[%s129 + $0x84] sm:$0xf]
  %v2567 = vld [vmem:[%s129 + $0x88] sm:$0xf]
  %v2568 = vld [vmem:[%s129 + $0x8c] sm:$0xf]
  %v2569 = vld [vmem:[%s129 + $0x90] sm:$0xf]
  %v2570 = vld [vmem:[%s129 + $0x94] sm:$0xf]
  %v2571 = vld [vmem:[%s129 + $0x98] sm:$0xf]
  %v2572 = vld [vmem:[%s129 + $0x9c] sm:$0xf]
  %v2573 = vld [vmem:[%s129 + $0xa0] sm:$0xf]
  %v2574 = vld [vmem:[%s129 + $0xa4] sm:$0xf]
  %v2575 = vld [vmem:[%s129 + $0xa8] sm:$0xf]
  %v2576 = vld [vmem:[%s129 + $0xac] sm:$0xf]
  %v2577 = vld [vmem:[%s129 + $0xb0] sm:$0xf]
  %v2578 = vld [vmem:[%s129 + $0xb4] sm:$0xf]
  %v2579 = vld [vmem:[%s129 + $0xb8] sm:$0xf]
  %v2580 = vld [vmem:[%s129 + $0xbc] sm:$0xf]
  %v2581 = vld [vmem:[%s129 + $0xc0] sm:$0xf]
  %v2582 = vld [vmem:[%s129 + $0xc4] sm:$0xf]
  %v2583 = vld [vmem:[%s129 + $0xc8] sm:$0xf]
  %v2584 = vld [vmem:[%s129 + $0xcc] sm:$0xf]
  %v2585 = vld [vmem:[%s129 + $0xd0] sm:$0xf]
  %v2586 = vld [vmem:[%s129 + $0xd4] sm:$0xf]
  %v2587 = vld [vmem:[%s129 + $0xd8] sm:$0xf]
  %v2588 = vld [vmem:[%s129 + $0xdc] sm:$0xf]
  %v2589 = vld [vmem:[%s129 + $0xe0] sm:$0x1]
  %v2644 = vrot.slane %v2536, 7
  %v2645 = vrot.slane %v2644, 4
  %v2646 = vrot.slane %v2537, 7
  %v2647 = vsel %vm2161, %v2645, %v2646
  %v2648 = vrot.slane %v2646, 4
  %v2649 = vrot.slane %v2538, 7
  %v2650 = vsel %vm2161, %v2648, %v2649
  %v2651 = vrot.slane %v2649, 4
  %v2652 = vrot.slane %v2539, 7
  %v2653 = vsel %vm2161, %v2651, %v2652
  %v2654 = vrot.slane %v2652, 4
  %v2655 = vrot.slane %v2540, 7
  %v2656 = vsel %vm2161, %v2654, %v2655
  %v2657 = vrot.slane %v2655, 4
  %v2658 = vrot.slane %v2541, 7
  %v2659 = vsel %vm2161, %v2657, %v2658
  %v2660 = vrot.slane %v2658, 4
  %v2661 = vrot.slane %v2542, 7
  %v2662 = vsel %vm2161, %v2660, %v2661
  %v2663 = vrot.slane %v2661, 4
  %v2664 = vrot.slane %v2543, 7
  %v2665 = vsel %vm2161, %v2663, %v2664
  %v2666 = vrot.slane %v2664, 4
  %v2667 = vrot.slane %v2544, 7
  %v2668 = vsel %vm2161, %v2666, %v2667
  %v2669 = vrot.slane %v2667, 4
  %v2670 = vrot.slane %v2545, 7
  %v2671 = vsel %vm2161, %v2669, %v2670
  %v2672 = vrot.slane %v2670, 4
  %v2673 = vrot.slane %v2546, 7
  %v2674 = vsel %vm2161, %v2672, %v2673
  %v2675 = vrot.slane %v2673, 4
  %v2676 = vrot.slane %v2547, 7
  %v2677 = vsel %vm2161, %v2675, %v2676
  %v2678 = vrot.slane %v2676, 4
  %v2679 = vrot.slane %v2548, 7
  %v2680 = vsel %vm2161, %v2678, %v2679
  %v2681 = vrot.slane %v2679, 4
  %v2682 = vrot.slane %v2549, 7
  %v2683 = vsel %vm2161, %v2681, %v2682
  %v2684 = vrot.slane %v2682, 4
  %v2685 = vrot.slane %v2550, 7
  %v2686 = vsel %vm2161, %v2684, %v2685
  %v2687 = vrot.slane %v2685, 4
  %v2688 = vrot.slane %v2551, 7
  %v2689 = vsel %vm2161, %v2687, %v2688
  %v2690 = vrot.slane %v2688, 4
  %v2691 = vrot.slane %v2552, 7
  %v2692 = vsel %vm2161, %v2690, %v2691
  %v2693 = vrot.slane %v2691, 4
  %v2694 = vrot.slane %v2553, 7
  %v2695 = vsel %vm2161, %v2693, %v2694
  %v2696 = vrot.slane %v2694, 4
  %v2697 = vrot.slane %v2554, 7
  %v2698 = vsel %vm2161, %v2696, %v2697
  %v2699 = vrot.slane %v2697, 4
  %v2700 = vrot.slane %v2555, 7
  %v2701 = vsel %vm2161, %v2699, %v2700
  %v2702 = vrot.slane %v2700, 4
  %v2703 = vrot.slane %v2556, 7
  %v2704 = vsel %vm2161, %v2702, %v2703
  %v2705 = vrot.slane %v2703, 4
  %v2706 = vrot.slane %v2557, 7
  %v2707 = vsel %vm2161, %v2705, %v2706
  %v2708 = vrot.slane %v2706, 4
  %v2709 = vrot.slane %v2558, 7
  %v2710 = vsel %vm2161, %v2708, %v2709
  %v2711 = vrot.slane %v2709, 4
  %v2712 = vrot.slane %v2559, 7
  %v2713 = vsel %vm2161, %v2711, %v2712
  %v2714 = vrot.slane %v2712, 4
  %v2715 = vrot.slane %v2560, 7
  %v2716 = vsel %vm2161, %v2714, %v2715
  %v2717 = vrot.slane %v2715, 4
  %v2718 = vrot.slane %v2561, 7
  %v2719 = vsel %vm2161, %v2717, %v2718
  %v2720 = vrot.slane %v2718, 4
  %v2721 = vrot.slane %v2562, 7
  %v2722 = vsel %vm2161, %v2720, %v2721
  %v2723 = vrot.slane %v2721, 4
  %v2724 = vrot.slane %v2563, 7
  %v2725 = vsel %vm2161, %v2723, %v2724
  %v2726 = vrot.slane %v2724, 4
  %v2727 = vrot.slane %v2564, 7
  %v2728 = vsel %vm2161, %v2726, %v2727
  %v2729 = vrot.slane %v2727, 4
  %v2730 = vrot.slane %v2565, 7
  %v2731 = vsel %vm2161, %v2729, %v2730
  %v2732 = vrot.slane %v2730, 4
  %v2733 = vrot.slane %v2566, 7
  %v2734 = vsel %vm2161, %v2732, %v2733
  %v2735 = vrot.slane %v2733, 4
  %v2736 = vrot.slane %v2567, 7
  %v2737 = vsel %vm2161, %v2735, %v2736
  %v2738 = vrot.slane %v2736, 4
  %v2739 = vrot.slane %v2568, 7
  %v2740 = vsel %vm2161, %v2738, %v2739
  %v2741 = vrot.slane %v2739, 4
  %v2742 = vrot.slane %v2569, 7
  %v2743 = vsel %vm2161, %v2741, %v2742
  %v2744 = vrot.slane %v2742, 4
  %v2745 = vrot.slane %v2570, 7
  %v2746 = vsel %vm2161, %v2744, %v2745
  %v2747 = vrot.slane %v2745, 4
  %v2748 = vrot.slane %v2571, 7
  %v2749 = vsel %vm2161, %v2747, %v2748
  %v2750 = vrot.slane %v2748, 4
  %v2751 = vrot.slane %v2572, 7
  %v2752 = vsel %vm2161, %v2750, %v2751
  %v2753 = vrot.slane %v2751, 4
  %v2754 = vrot.slane %v2573, 7
  %v2755 = vsel %vm2161, %v2753, %v2754
  %v2756 = vrot.slane %v2754, 4
  %v2757 = vrot.slane %v2574, 7
  %v2758 = vsel %vm2161, %v2756, %v2757
  %v2759 = vrot.slane %v2757, 4
  %v2760 = vrot.slane %v2575, 7
  %v2761 = vsel %vm2161, %v2759, %v2760
  %v2762 = vrot.slane %v2760, 4
  %v2763 = vrot.slane %v2576, 7
  %v2764 = vsel %vm2161, %v2762, %v2763
  %v2765 = vrot.slane %v2763, 4
  %v2766 = vrot.slane %v2577, 7
  %v2767 = vsel %vm2161, %v2765, %v2766
  %v2768 = vrot.slane %v2766, 4
  %v2769 = vrot.slane %v2578, 7
  %v2770 = vsel %vm2161, %v2768, %v2769
  %v2771 = vrot.slane %v2769, 4
  %v2772 = vrot.slane %v2579, 7
  %v2773 = vsel %vm2161, %v2771, %v2772
  %v2774 = vrot.slane %v2772, 4
  %v2775 = vrot.slane %v2580, 7
  %v2776 = vsel %vm2161, %v2774, %v2775
  %v2777 = vrot.slane %v2775, 4
  %v2778 = vrot.slane %v2581, 7
  %v2779 = vsel %vm2161, %v2777, %v2778
  %v2780 = vrot.slane %v2778, 4
  %v2781 = vrot.slane %v2582, 7
  %v2782 = vsel %vm2161, %v2780, %v2781
  %v2783 = vrot.slane %v2781, 4
  %v2784 = vrot.slane %v2583, 7
  %v2785 = vsel %vm2161, %v2783, %v2784
  %v2786 = vrot.slane %v2784, 4
  %v2787 = vrot.slane %v2584, 7
  %v2788 = vsel %vm2161, %v2786, %v2787
  %v2789 = vrot.slane %v2787, 4
  %v2790 = vrot.slane %v2585, 7
  %v2791 = vsel %vm2161, %v2789, %v2790
  %v2792 = vrot.slane %v2790, 4
  %v2793 = vrot.slane %v2586, 7
  %v2794 = vsel %vm2161, %v2792, %v2793
  %v2795 = vrot.slane %v2793, 4
  %v2796 = vrot.slane %v2587, 7
  %v2797 = vsel %vm2161, %v2795, %v2796
  %v2798 = vrot.slane %v2796, 4
  %v2799 = vrot.slane %v2588, 7
  %v2800 = vsel %vm2161, %v2798, %v2799
  %v2801 = vrot.slane %v2799, 4
  %v2802 = vrot.slane %v2589, 7
  %v2803 = vsel %vm2161, %v2801, %v2802
  %2804 = vrot.lane.b32.xlu0 %v2647, 7
  %v2805 = vpop.permute.xlu0 %2804
  %2806 = vrot.lane.b32.xlu0 %v2650, 7
  %v2807 = vpop.permute.xlu0 %2806
  %2808 = vrot.lane.b32.xlu0 %v2653, 7
  %v2809 = vpop.permute.xlu0 %2808
  %2810 = vrot.lane.b32.xlu0 %v2656, 7
  %v2811 = vpop.permute.xlu0 %2810
  %2812 = vrot.lane.b32.xlu0 %v2659, 7
  %v2813 = vpop.permute.xlu0 %2812
  %2814 = vrot.lane.b32.xlu0 %v2662, 7
  %v2815 = vpop.permute.xlu0 %2814
  %2816 = vrot.lane.b32.xlu0 %v2665, 7
  %v2817 = vpop.permute.xlu0 %2816
  %2818 = vrot.lane.b32.xlu0 %v2668, 7
  %v2819 = vpop.permute.xlu0 %2818
  %2820 = vrot.lane.b32.xlu0 %v2671, 7
  %v2821 = vpop.permute.xlu0 %2820
  %2822 = vrot.lane.b32.xlu0 %v2674, 7
  %v2823 = vpop.permute.xlu0 %2822
  %2824 = vrot.lane.b32.xlu0 %v2677, 7
  %v2825 = vpop.permute.xlu0 %2824
  %2826 = vrot.lane.b32.xlu0 %v2680, 7
  %v2827 = vpop.permute.xlu0 %2826
  %2828 = vrot.lane.b32.xlu0 %v2683, 7
  %v2829 = vpop.permute.xlu0 %2828
  %2830 = vrot.lane.b32.xlu0 %v2686, 7
  %v2831 = vpop.permute.xlu0 %2830
  %2832 = vrot.lane.b32.xlu0 %v2689, 7
  %v2833 = vpop.permute.xlu0 %2832
  %2834 = vrot.lane.b32.xlu0 %v2692, 7
  %v2835 = vpop.permute.xlu0 %2834
  %2836 = vrot.lane.b32.xlu0 %v2695, 7
  %v2837 = vpop.permute.xlu0 %2836
  %2838 = vrot.lane.b32.xlu0 %v2698, 7
  %v2839 = vpop.permute.xlu0 %2838
  %2840 = vrot.lane.b32.xlu0 %v2701, 7
  %v2841 = vpop.permute.xlu0 %2840
  %2842 = vrot.lane.b32.xlu0 %v2704, 7
  %v2843 = vpop.permute.xlu0 %2842
  %2844 = vrot.lane.b32.xlu0 %v2707, 7
  %v2845 = vpop.permute.xlu0 %2844
  %2846 = vrot.lane.b32.xlu0 %v2710, 7
  %v2847 = vpop.permute.xlu0 %2846
  %2848 = vrot.lane.b32.xlu0 %v2713, 7
  %v2849 = vpop.permute.xlu0 %2848
  %2850 = vrot.lane.b32.xlu0 %v2716, 7
  %v2851 = vpop.permute.xlu0 %2850
  %2852 = vrot.lane.b32.xlu0 %v2719, 7
  %v2853 = vpop.permute.xlu0 %2852
  %2854 = vrot.lane.b32.xlu0 %v2722, 7
  %v2855 = vpop.permute.xlu0 %2854
  %2856 = vrot.lane.b32.xlu0 %v2725, 7
  %v2857 = vpop.permute.xlu0 %2856
  %2858 = vrot.lane.b32.xlu0 %v2728, 7
  %v2859 = vpop.permute.xlu0 %2858
  %2860 = vrot.lane.b32.xlu0 %v2731, 7
  %v2861 = vpop.permute.xlu0 %2860
  %2862 = vrot.lane.b32.xlu0 %v2734, 7
  %v2863 = vpop.permute.xlu0 %2862
  %2864 = vrot.lane.b32.xlu0 %v2737, 7
  %v2865 = vpop.permute.xlu0 %2864
  %2866 = vrot.lane.b32.xlu0 %v2740, 7
  %v2867 = vpop.permute.xlu0 %2866
  %2868 = vrot.lane.b32.xlu0 %v2743, 7
  %v2869 = vpop.permute.xlu0 %2868
  %2870 = vrot.lane.b32.xlu0 %v2746, 7
  %v2871 = vpop.permute.xlu0 %2870
  %2872 = vrot.lane.b32.xlu0 %v2749, 7
  %v2873 = vpop.permute.xlu0 %2872
  %2874 = vrot.lane.b32.xlu0 %v2752, 7
  %v2875 = vpop.permute.xlu0 %2874
  %2876 = vrot.lane.b32.xlu0 %v2755, 7
  %v2877 = vpop.permute.xlu0 %2876
  %2878 = vrot.lane.b32.xlu0 %v2758, 7
  %v2879 = vpop.permute.xlu0 %2878
  %2880 = vrot.lane.b32.xlu0 %v2761, 7
  %v2881 = vpop.permute.xlu0 %2880
  %2882 = vrot.lane.b32.xlu0 %v2764, 7
  %v2883 = vpop.permute.xlu0 %2882
  %2884 = vrot.lane.b32.xlu0 %v2767, 7
  %v2885 = vpop.permute.xlu0 %2884
  %2886 = vrot.lane.b32.xlu0 %v2770, 7
  %v2887 = vpop.permute.xlu0 %2886
  %2888 = vrot.lane.b32.xlu0 %v2773, 7
  %v2889 = vpop.permute.xlu0 %2888
  %2890 = vrot.lane.b32.xlu0 %v2776, 7
  %v2891 = vpop.permute.xlu0 %2890
  %2892 = vrot.lane.b32.xlu0 %v2779, 7
  %v2893 = vpop.permute.xlu0 %2892
  %2894 = vrot.lane.b32.xlu0 %v2782, 7
  %v2895 = vpop.permute.xlu0 %2894
  %2896 = vrot.lane.b32.xlu0 %v2785, 7
  %v2897 = vpop.permute.xlu0 %2896
  %2898 = vrot.lane.b32.xlu0 %v2788, 7
  %v2899 = vpop.permute.xlu0 %2898
  %2900 = vrot.lane.b32.xlu0 %v2791, 7
  %v2901 = vpop.permute.xlu0 %2900
  %2902 = vrot.lane.b32.xlu0 %v2794, 7
  %v2903 = vpop.permute.xlu0 %2902
  %2904 = vrot.lane.b32.xlu0 %v2797, 7
  %v2905 = vpop.permute.xlu0 %2904
  %2906 = vrot.lane.b32.xlu0 %v2800, 7
  %v2907 = vpop.permute.xlu0 %2906
  %2908 = vrot.lane.b32.xlu0 %v2803, 7
  %v2909 = vpop.permute.xlu0 %2908
  %vm2963 = vcmask 60472
  %2964 = vst.msk [vmem:[#allocation2] sm:$0xf] %vm2963, %v2805
  %2965 = vst.msk [vmem:[#allocation2 + $0x4] sm:$0xf] %vm2963, %v2807
  %2966 = vst.msk [vmem:[#allocation2 + $0x8] sm:$0xf] %vm2963, %v2809
  %2967 = vst.msk [vmem:[#allocation2 + $0xc] sm:$0xf] %vm2963, %v2811
  %2968 = vst.msk [vmem:[#allocation2 + $0x10] sm:$0xf] %vm2963, %v2813
  %2969 = vst.msk [vmem:[#allocation2 + $0x14] sm:$0xf] %vm2963, %v2815
  %2970 = vst.msk [vmem:[#allocation2 + $0x18] sm:$0xf] %vm2963, %v2817
  %2971 = vst.msk [vmem:[#allocation2 + $0x1c] sm:$0xf] %vm2963, %v2819
  %2972 = vst.msk [vmem:[#allocation2 + $0x20] sm:$0xf] %vm2963, %v2821
  %2973 = vst.msk [vmem:[#allocation2 + $0x24] sm:$0xf] %vm2963, %v2823
  %2974 = vst.msk [vmem:[#allocation2 + $0x28] sm:$0xf] %vm2963, %v2825
  %2975 = vst.msk [vmem:[#allocation2 + $0x2c] sm:$0xf] %vm2963, %v2827
  %2976 = vst.msk [vmem:[#allocation2 + $0x30] sm:$0xf] %vm2963, %v2829
  %2977 = vst.msk [vmem:[#allocation2 + $0x34] sm:$0xf] %vm2963, %v2831
  %2978 = vst.msk [vmem:[#allocation2 + $0x38] sm:$0xf] %vm2963, %v2833
  %2979 = vst.msk [vmem:[#allocation2 + $0x3c] sm:$0xf] %vm2963, %v2835
  %2980 = vst.msk [vmem:[#allocation2 + $0x40] sm:$0xf] %vm2963, %v2837
  %2981 = vst.msk [vmem:[#allocation2 + $0x44] sm:$0xf] %vm2963, %v2839
  %2982 = vst.msk [vmem:[#allocation2 + $0x48] sm:$0xf] %vm2963, %v2841
  %2983 = vst.msk [vmem:[#allocation2 + $0x4c] sm:$0xf] %vm2963, %v2843
  %2984 = vst.msk [vmem:[#allocation2 + $0x50] sm:$0xf] %vm2963, %v2845
  %2985 = vst.msk [vmem:[#allocation2 + $0x54] sm:$0xf] %vm2963, %v2847
  %2986 = vst.msk [vmem:[#allocation2 + $0x58] sm:$0xf] %vm2963, %v2849
  %2987 = vst.msk [vmem:[#allocation2 + $0x5c] sm:$0xf] %vm2963, %v2851
  %2988 = vst.msk [vmem:[#allocation2 + $0x60] sm:$0xf] %vm2963, %v2853
  %2989 = vst.msk [vmem:[#allocation2 + $0x64] sm:$0xf] %vm2963, %v2855
  %2990 = vst.msk [vmem:[#allocation2 + $0x68] sm:$0xf] %vm2963, %v2857
  %2991 = vst.msk [vmem:[#allocation2 + $0x6c] sm:$0xf] %vm2963, %v2859
  %2992 = vst.msk [vmem:[#allocation2 + $0x70] sm:$0xf] %vm2963, %v2861
  %2993 = vst.msk [vmem:[#allocation2 + $0x74] sm:$0xf] %vm2963, %v2863
  %2994 = vst.msk [vmem:[#allocation2 + $0x78] sm:$0xf] %vm2963, %v2865
  %2995 = vst.msk [vmem:[#allocation2 + $0x7c] sm:$0xf] %vm2963, %v2867
  %2996 = vst.msk [vmem:[#allocation2 + $0x80] sm:$0xf] %vm2963, %v2869
  %2997 = vst.msk [vmem:[#allocation2 + $0x84] sm:$0xf] %vm2963, %v2871
  %2998 = vst.msk [vmem:[#allocation2 + $0x88] sm:$0xf] %vm2963, %v2873
  %2999 = vst.msk [vmem:[#allocation2 + $0x8c] sm:$0xf] %vm2963, %v2875
  %3000 = vst.msk [vmem:[#allocation2 + $0x90] sm:$0xf] %vm2963, %v2877
  %3001 = vst.msk [vmem:[#allocation2 + $0x94] sm:$0xf] %vm2963, %v2879
  %3002 = vst.msk [vmem:[#allocation2 + $0x98] sm:$0xf] %vm2963, %v2881
  %3003 = vst.msk [vmem:[#allocation2 + $0x9c] sm:$0xf] %vm2963, %v2883
  %3004 = vst.msk [vmem:[#allocation2 + $0xa0] sm:$0xf] %vm2963, %v2885
  %3005 = vst.msk [vmem:[#allocation2 + $0xa4] sm:$0xf] %vm2963, %v2887
  %3006 = vst.msk [vmem:[#allocation2 + $0xa8] sm:$0xf] %vm2963, %v2889
  %3007 = vst.msk [vmem:[#allocation2 + $0xac] sm:$0xf] %vm2963, %v2891
  %3008 = vst.msk [vmem:[#allocation2 + $0xb0] sm:$0xf] %vm2963, %v2893
  %3009 = vst.msk [vmem:[#allocation2 + $0xb4] sm:$0xf] %vm2963, %v2895
  %3010 = vst.msk [vmem:[#allocation2 + $0xb8] sm:$0xf] %vm2963, %v2897
  %3011 = vst.msk [vmem:[#allocation2 + $0xbc] sm:$0xf] %vm2963, %v2899
  %3012 = vst.msk [vmem:[#allocation2 + $0xc0] sm:$0xf] %vm2963, %v2901
  %3013 = vst.msk [vmem:[#allocation2 + $0xc4] sm:$0xf] %vm2963, %v2903
  %3014 = vst.msk [vmem:[#allocation2 + $0xc8] sm:$0xf] %vm2963, %v2905
  %3015 = vst.msk [vmem:[#allocation2 + $0xcc] sm:$0xf] %vm2963, %v2907
  %vm3016 = vcmask 58424
  %3017 = vst.msk [vmem:[#allocation2 + $0xd0] sm:$0x3] %vm3016, %v2909
  %v3018 = vld [vmem:[%s0 + $0x10] sm:$0xf]
  %v3019 = vld [vmem:[%s0 + $0x14] sm:$0xf]
  %v3020 = vld [vmem:[%s0 + $0x18] sm:$0xf]
  %v3021 = vld [vmem:[%s0 + $0x1c] sm:$0xf]
  %v3022 = vld [vmem:[%s0 + $0x20] sm:$0xf]
  %v3023 = vld [vmem:[%s0 + $0x24] sm:$0xf]
  %v3024 = vld [vmem:[%s0 + $0x28] sm:$0xf]
  %v3025 = vld [vmem:[%s0 + $0x2c] sm:$0xf]
  %v3026 = vld [vmem:[%s0 + $0x30] sm:$0xf]
  %v3027 = vld [vmem:[%s0 + $0x34] sm:$0xf]
  %v3028 = vld [vmem:[%s0 + $0x38] sm:$0xf]
  %v3029 = vld [vmem:[%s0 + $0x3c] sm:$0xf]
  %v3030 = vld [vmem:[%s0 + $0x40] sm:$0xf]
  %v3031 = vld [vmem:[%s0 + $0x44] sm:$0xf]
  %v3032 = vld [vmem:[%s0 + $0x48] sm:$0xf]
  %v3033 = vld [vmem:[%s0 + $0x4c] sm:$0xf]
  %v3034 = vld [vmem:[%s0 + $0x50] sm:$0xf]
  %v3035 = vld [vmem:[%s0 + $0x54] sm:$0xf]
  %v3036 = vld [vmem:[%s0 + $0x58] sm:$0xf]
  %v3037 = vld [vmem:[%s0 + $0x5c] sm:$0xf]
  %v3038 = vld [vmem:[%s0 + $0x60] sm:$0xf]
  %v3039 = vld [vmem:[%s0 + $0x64] sm:$0xf]
  %v3040 = vld [vmem:[%s0 + $0x68] sm:$0xf]
  %v3041 = vld [vmem:[%s0 + $0x6c] sm:$0xf]
  %v3042 = vld [vmem:[%s0 + $0x70] sm:$0xf]
  %v3043 = vld [vmem:[%s0 + $0x74] sm:$0xf]
  %v3044 = vld [vmem:[%s0 + $0x78] sm:$0xf]
  %v3045 = vld [vmem:[%s0 + $0x7c] sm:$0xf]
  %v3046 = vld [vmem:[%s0 + $0x80] sm:$0xf]
  %v3047 = vld [vmem:[%s0 + $0x84] sm:$0xf]
  %v3048 = vld [vmem:[%s0 + $0x88] sm:$0xf]
  %v3049 = vld [vmem:[%s0 + $0x8c] sm:$0xf]
  %v3050 = vld [vmem:[%s0 + $0x90] sm:$0xf]
  %v3051 = vld [vmem:[%s0 + $0x94] sm:$0xf]
  %v3052 = vld [vmem:[%s0 + $0x98] sm:$0xf]
  %v3053 = vld [vmem:[%s0 + $0x9c] sm:$0xf]
  %v3054 = vld [vmem:[%s0 + $0xa0] sm:$0xf]
  %v3055 = vld [vmem:[%s0 + $0xa4] sm:$0xf]
  %v3056 = vld [vmem:[%s0 + $0xa8] sm:$0xf]
  %v3057 = vld [vmem:[%s0 + $0xac] sm:$0xf]
  %v3058 = vld [vmem:[%s0 + $0xb0] sm:$0xf]
  %v3059 = vld [vmem:[%s0 + $0xb4] sm:$0xf]
  %v3060 = vld [vmem:[%s0 + $0xb8] sm:$0xf]
  %v3061 = vld [vmem:[%s0 + $0xbc] sm:$0xf]
  %v3062 = vld [vmem:[%s0 + $0xc0] sm:$0xf]
  %v3063 = vld [vmem:[%s0 + $0xc4] sm:$0xf]
  %v3064 = vld [vmem:[%s0 + $0xc8] sm:$0xf]
  %v3065 = vld [vmem:[%s0 + $0xcc] sm:$0xf]
  %v3066 = vld [vmem:[%s0 + $0xd0] sm:$0xf]
  %v3067 = vld [vmem:[%s0 + $0xd4] sm:$0xf]
  %v3068 = vld [vmem:[%s0 + $0xd8] sm:$0xf]
  %v3069 = vld [vmem:[%s0 + $0xdc] sm:$0xf]
  %v3070 = vld [vmem:[%s0 + $0xe0] sm:$0x3]
  %3124 = vrot.lane.b32.xlu0 %v3018, 8
  %v3125 = vpop.permute.xlu0 %3124
  %3126 = vrot.lane.b32.xlu0 %v3019, 8
  %v3127 = vpop.permute.xlu0 %3126
  %3128 = vrot.lane.b32.xlu0 %v3020, 8
  %v3129 = vpop.permute.xlu0 %3128
  %3130 = vrot.lane.b32.xlu0 %v3021, 8
  %v3131 = vpop.permute.xlu0 %3130
  %3132 = vrot.lane.b32.xlu0 %v3022, 8
  %v3133 = vpop.permute.xlu0 %3132
  %3134 = vrot.lane.b32.xlu0 %v3023, 8
  %v3135 = vpop.permute.xlu0 %3134
  %3136 = vrot.lane.b32.xlu0 %v3024, 8
  %v3137 = vpop.permute.xlu0 %3136
  %3138 = vrot.lane.b32.xlu0 %v3025, 8
  %v3139 = vpop.permute.xlu0 %3138
  %3140 = vrot.lane.b32.xlu0 %v3026, 8
  %v3141 = vpop.permute.xlu0 %3140
  %3142 = vrot.lane.b32.xlu0 %v3027, 8
  %v3143 = vpop.permute.xlu0 %3142
  %3144 = vrot.lane.b32.xlu0 %v3028, 8
  %v3145 = vpop.permute.xlu0 %3144
  %3146 = vrot.lane.b32.xlu0 %v3029, 8
  %v3147 = vpop.permute.xlu0 %3146
  %3148 = vrot.lane.b32.xlu0 %v3030, 8
  %v3149 = vpop.permute.xlu0 %3148
  %3150 = vrot.lane.b32.xlu0 %v3031, 8
  %v3151 = vpop.permute.xlu0 %3150
  %3152 = vrot.lane.b32.xlu0 %v3032, 8
  %v3153 = vpop.permute.xlu0 %3152
  %3154 = vrot.lane.b32.xlu0 %v3033, 8
  %v3155 = vpop.permute.xlu0 %3154
  %3156 = vrot.lane.b32.xlu0 %v3034, 8
  %v3157 = vpop.permute.xlu0 %3156
  %3158 = vrot.lane.b32.xlu0 %v3035, 8
  %v3159 = vpop.permute.xlu0 %3158
  %3160 = vrot.lane.b32.xlu0 %v3036, 8
  %v3161 = vpop.permute.xlu0 %3160
  %3162 = vrot.lane.b32.xlu0 %v3037, 8
  %v3163 = vpop.permute.xlu0 %3162
  %3164 = vrot.lane.b32.xlu0 %v3038, 8
  %v3165 = vpop.permute.xlu0 %3164
  %3166 = vrot.lane.b32.xlu0 %v3039, 8
  %v3167 = vpop.permute.xlu0 %3166
  %3168 = vrot.lane.b32.xlu0 %v3040, 8
  %v3169 = vpop.permute.xlu0 %3168
  %3170 = vrot.lane.b32.xlu0 %v3041, 8
  %v3171 = vpop.permute.xlu0 %3170
  %3172 = vrot.lane.b32.xlu0 %v3042, 8
  %v3173 = vpop.permute.xlu0 %3172
  %3174 = vrot.lane.b32.xlu0 %v3043, 8
  %v3175 = vpop.permute.xlu0 %3174
  %3176 = vrot.lane.b32.xlu0 %v3044, 8
  %v3177 = vpop.permute.xlu0 %3176
  %3178 = vrot.lane.b32.xlu0 %v3045, 8
  %v3179 = vpop.permute.xlu0 %3178
  %3180 = vrot.lane.b32.xlu0 %v3046, 8
  %v3181 = vpop.permute.xlu0 %3180
  %3182 = vrot.lane.b32.xlu0 %v3047, 8
  %v3183 = vpop.permute.xlu0 %3182
  %3184 = vrot.lane.b32.xlu0 %v3048, 8
  %v3185 = vpop.permute.xlu0 %3184
  %3186 = vrot.lane.b32.xlu0 %v3049, 8
  %v3187 = vpop.permute.xlu0 %3186
  %3188 = vrot.lane.b32.xlu0 %v3050, 8
  %v3189 = vpop.permute.xlu0 %3188
  %3190 = vrot.lane.b32.xlu0 %v3051, 8
  %v3191 = vpop.permute.xlu0 %3190
  %3192 = vrot.lane.b32.xlu0 %v3052, 8
  %v3193 = vpop.permute.xlu0 %3192
  %3194 = vrot.lane.b32.xlu0 %v3053, 8
  %v3195 = vpop.permute.xlu0 %3194
  %3196 = vrot.lane.b32.xlu0 %v3054, 8
  %v3197 = vpop.permute.xlu0 %3196
  %3198 = vrot.lane.b32.xlu0 %v3055, 8
  %v3199 = vpop.permute.xlu0 %3198
  %3200 = vrot.lane.b32.xlu0 %v3056, 8
  %v3201 = vpop.permute.xlu0 %3200
  %3202 = vrot.lane.b32.xlu0 %v3057, 8
  %v3203 = vpop.permute.xlu0 %3202
  %3204 = vrot.lane.b32.xlu0 %v3058, 8
  %v3205 = vpop.permute.xlu0 %3204
  %3206 = vrot.lane.b32.xlu0 %v3059, 8
  %v3207 = vpop.permute.xlu0 %3206
  %3208 = vrot.lane.b32.xlu0 %v3060, 8
  %v3209 = vpop.permute.xlu0 %3208
  %3210 = vrot.lane.b32.xlu0 %v3061, 8
  %v3211 = vpop.permute.xlu0 %3210
  %3212 = vrot.lane.b32.xlu0 %v3062, 8
  %v3213 = vpop.permute.xlu0 %3212
  %3214 = vrot.lane.b32.xlu0 %v3063, 8
  %v3215 = vpop.permute.xlu0 %3214
  %3216 = vrot.lane.b32.xlu0 %v3064, 8
  %v3217 = vpop.permute.xlu0 %3216
  %3218 = vrot.lane.b32.xlu0 %v3065, 8
  %v3219 = vpop.permute.xlu0 %3218
  %3220 = vrot.lane.b32.xlu0 %v3066, 8
  %v3221 = vpop.permute.xlu0 %3220
  %3222 = vrot.lane.b32.xlu0 %v3067, 8
  %v3223 = vpop.permute.xlu0 %3222
  %3224 = vrot.lane.b32.xlu0 %v3068, 8
  %v3225 = vpop.permute.xlu0 %3224
  %3226 = vrot.lane.b32.xlu0 %v3069, 8
  %v3227 = vpop.permute.xlu0 %3226
  %3228 = vrot.lane.b32.xlu0 %v3070, 8
  %v3229 = vpop.permute.xlu0 %3228
  %vm3283 = vcmask 68672
  %3284 = vst.msk [vmem:[#allocation2] sm:$0xf] %vm3283, %v3125
  %3285 = vst.msk [vmem:[#allocation2 + $0x4] sm:$0xf] %vm3283, %v3127
  %3286 = vst.msk [vmem:[#allocation2 + $0x8] sm:$0xf] %vm3283, %v3129
  %3287 = vst.msk [vmem:[#allocation2 + $0xc] sm:$0xf] %vm3283, %v3131
  %3288 = vst.msk [vmem:[#allocation2 + $0x10] sm:$0xf] %vm3283, %v3133
  %3289 = vst.msk [vmem:[#allocation2 + $0x14] sm:$0xf] %vm3283, %v3135
  %3290 = vst.msk [vmem:[#allocation2 + $0x18] sm:$0xf] %vm3283, %v3137
  %3291 = vst.msk [vmem:[#allocation2 + $0x1c] sm:$0xf] %vm3283, %v3139
  %3292 = vst.msk [vmem:[#allocation2 + $0x20] sm:$0xf] %vm3283, %v3141
  %3293 = vst.msk [vmem:[#allocation2 + $0x24] sm:$0xf] %vm3283, %v3143
  %3294 = vst.msk [vmem:[#allocation2 + $0x28] sm:$0xf] %vm3283, %v3145
  %3295 = vst.msk [vmem:[#allocation2 + $0x2c] sm:$0xf] %vm3283, %v3147
  %3296 = vst.msk [vmem:[#allocation2 + $0x30] sm:$0xf] %vm3283, %v3149
  %3297 = vst.msk [vmem:[#allocation2 + $0x34] sm:$0xf] %vm3283, %v3151
  %3298 = vst.msk [vmem:[#allocation2 + $0x38] sm:$0xf] %vm3283, %v3153
  %3299 = vst.msk [vmem:[#allocation2 + $0x3c] sm:$0xf] %vm3283, %v3155
  %3300 = vst.msk [vmem:[#allocation2 + $0x40] sm:$0xf] %vm3283, %v3157
  %3301 = vst.msk [vmem:[#allocation2 + $0x44] sm:$0xf] %vm3283, %v3159
  %3302 = vst.msk [vmem:[#allocation2 + $0x48] sm:$0xf] %vm3283, %v3161
  %3303 = vst.msk [vmem:[#allocation2 + $0x4c] sm:$0xf] %vm3283, %v3163
  %3304 = vst.msk [vmem:[#allocation2 + $0x50] sm:$0xf] %vm3283, %v3165
  %3305 = vst.msk [vmem:[#allocation2 + $0x54] sm:$0xf] %vm3283, %v3167
  %3306 = vst.msk [vmem:[#allocation2 + $0x58] sm:$0xf] %vm3283, %v3169
  %3307 = vst.msk [vmem:[#allocation2 + $0x5c] sm:$0xf] %vm3283, %v3171
  %3308 = vst.msk [vmem:[#allocation2 + $0x60] sm:$0xf] %vm3283, %v3173
  %3309 = vst.msk [vmem:[#allocation2 + $0x64] sm:$0xf] %vm3283, %v3175
  %3310 = vst.msk [vmem:[#allocation2 + $0x68] sm:$0xf] %vm3283, %v3177
  %3311 = vst.msk [vmem:[#allocation2 + $0x6c] sm:$0xf] %vm3283, %v3179
  %3312 = vst.msk [vmem:[#allocation2 + $0x70] sm:$0xf] %vm3283, %v3181
  %3313 = vst.msk [vmem:[#allocation2 + $0x74] sm:$0xf] %vm3283, %v3183
  %3314 = vst.msk [vmem:[#allocation2 + $0x78] sm:$0xf] %vm3283, %v3185
  %3315 = vst.msk [vmem:[#allocation2 + $0x7c] sm:$0xf] %vm3283, %v3187
  %3316 = vst.msk [vmem:[#allocation2 + $0x80] sm:$0xf] %vm3283, %v3189
  %3317 = vst.msk [vmem:[#allocation2 + $0x84] sm:$0xf] %vm3283, %v3191
  %3318 = vst.msk [vmem:[#allocation2 + $0x88] sm:$0xf] %vm3283, %v3193
  %3319 = vst.msk [vmem:[#allocation2 + $0x8c] sm:$0xf] %vm3283, %v3195
  %3320 = vst.msk [vmem:[#allocation2 + $0x90] sm:$0xf] %vm3283, %v3197
  %3321 = vst.msk [vmem:[#allocation2 + $0x94] sm:$0xf] %vm3283, %v3199
  %3322 = vst.msk [vmem:[#allocation2 + $0x98] sm:$0xf] %vm3283, %v3201
  %3323 = vst.msk [vmem:[#allocation2 + $0x9c] sm:$0xf] %vm3283, %v3203
  %3324 = vst.msk [vmem:[#allocation2 + $0xa0] sm:$0xf] %vm3283, %v3205
  %3325 = vst.msk [vmem:[#allocation2 + $0xa4] sm:$0xf] %vm3283, %v3207
  %3326 = vst.msk [vmem:[#allocation2 + $0xa8] sm:$0xf] %vm3283, %v3209
  %3327 = vst.msk [vmem:[#allocation2 + $0xac] sm:$0xf] %vm3283, %v3211
  %3328 = vst.msk [vmem:[#allocation2 + $0xb0] sm:$0xf] %vm3283, %v3213
  %3329 = vst.msk [vmem:[#allocation2 + $0xb4] sm:$0xf] %vm3283, %v3215
  %3330 = vst.msk [vmem:[#allocation2 + $0xb8] sm:$0xf] %vm3283, %v3217
  %3331 = vst.msk [vmem:[#allocation2 + $0xbc] sm:$0xf] %vm3283, %v3219
  %3332 = vst.msk [vmem:[#allocation2 + $0xc0] sm:$0xf] %vm3283, %v3221
  %3333 = vst.msk [vmem:[#allocation2 + $0xc4] sm:$0xf] %vm3283, %v3223
  %3334 = vst.msk [vmem:[#allocation2 + $0xc8] sm:$0xf] %vm3283, %v3225
  %3335 = vst.msk [vmem:[#allocation2 + $0xcc] sm:$0xf] %vm3283, %v3227
  %vm3336 = vcmask 66624
  %3337 = vst.msk [vmem:[#allocation2 + $0xd0] sm:$0x3] %vm3336, %v3229
  %v3338 = vld [vmem:[#allocation2] sm:$0xf]
  %v3339 = vld [vmem:[#allocation2 + $0x4] sm:$0xf]
  %v3340 = vld [vmem:[#allocation2 + $0x8] sm:$0xf]
  %v3341 = vld [vmem:[#allocation2 + $0xc] sm:$0xf]
  %v3342 = vld [vmem:[#allocation2 + $0x10] sm:$0xf]
  %v3343 = vld [vmem:[#allocation2 + $0x14] sm:$0xf]
  %v3344 = vld [vmem:[#allocation2 + $0x18] sm:$0xf]
  %v3345 = vld [vmem:[#allocation2 + $0x1c] sm:$0xf]
  %v3346 = vld [vmem:[#allocation2 + $0x20] sm:$0xf]
  %v3347 = vld [vmem:[#allocation2 + $0x24] sm:$0xf]
  %v3348 = vld [vmem:[#allocation2 + $0x28] sm:$0xf]
  %v3349 = vld [vmem:[#allocation2 + $0x2c] sm:$0xf]
  %v3350 = vld [vmem:[#allocation2 + $0x30] sm:$0xf]
  %v3351 = vld [vmem:[#allocation2 + $0x34] sm:$0xf]
  %v3352 = vld [vmem:[#allocation2 + $0x38] sm:$0xf]
  %v3353 = vld [vmem:[#allocation2 + $0x3c] sm:$0xf]
  %v3354 = vld [vmem:[#allocation2 + $0x40] sm:$0xf]
  %v3355 = vld [vmem:[#allocation2 + $0x44] sm:$0xf]
  %v3356 = vld [vmem:[#allocation2 + $0x48] sm:$0xf]
  %v3357 = vld [vmem:[#allocation2 + $0x4c] sm:$0xf]
  %v3358 = vld [vmem:[#allocation2 + $0x50] sm:$0xf]
  %v3359 = vld [vmem:[#allocation2 + $0x54] sm:$0xf]
  %v3360 = vld [vmem:[#allocation2 + $0x58] sm:$0xf]
  %v3361 = vld [vmem:[#allocation2 + $0x5c] sm:$0xf]
  %v3362 = vld [vmem:[#allocation2 + $0x60] sm:$0xf]
  %v3363 = vld [vmem:[#allocation2 + $0x64] sm:$0xf]
  %v3364 = vld [vmem:[#allocation2 + $0x68] sm:$0xf]
  %v3365 = vld [vmem:[#allocation2 + $0x6c] sm:$0xf]
  %v3366 = vld [vmem:[#allocation2 + $0x70] sm:$0xf]
  %v3367 = vld [vmem:[#allocation2 + $0x74] sm:$0xf]
  %v3368 = vld [vmem:[#allocation2 + $0x78] sm:$0xf]
  %v3369 = vld [vmem:[#allocation2 + $0x7c] sm:$0xf]
  %v3370 = vld [vmem:[#allocation2 + $0x80] sm:$0xf]
  %v3371 = vld [vmem:[#allocation2 + $0x84] sm:$0xf]
  %v3372 = vld [vmem:[#allocation2 + $0x88] sm:$0xf]
  %v3373 = vld [vmem:[#allocation2 + $0x8c] sm:$0xf]
  %v3374 = vld [vmem:[#allocation2 + $0x90] sm:$0xf]
  %v3375 = vld [vmem:[#allocation2 + $0x94] sm:$0xf]
  %v3376 = vld [vmem:[#allocation2 + $0x98] sm:$0xf]
  %v3377 = vld [vmem:[#allocation2 + $0x9c] sm:$0xf]
  %v3378 = vld [vmem:[#allocation2 + $0xa0] sm:$0xf]
  %v3379 = vld [vmem:[#allocation2 + $0xa4] sm:$0xf]
  %v3380 = vld [vmem:[#allocation2 + $0xa8] sm:$0xf]
  %v3381 = vld [vmem:[#allocation2 + $0xac] sm:$0xf]
  %v3382 = vld [vmem:[#allocation2 + $0xb0] sm:$0xf]
  %v3383 = vld [vmem:[#allocation2 + $0xb4] sm:$0xf]
  %v3384 = vld [vmem:[#allocation2 + $0xb8] sm:$0xf]
  %v3385 = vld [vmem:[#allocation2 + $0xbc] sm:$0xf]
  %v3386 = vld [vmem:[#allocation2 + $0xc0] sm:$0xf]
  %v3387 = vld [vmem:[#allocation2 + $0xc4] sm:$0xf]
  %v3388 = vld [vmem:[#allocation2 + $0xc8] sm:$0xf]
  %v3389 = vld [vmem:[#allocation2 + $0xcc] sm:$0xf]
  %v3390 = vld [vmem:[#allocation2 + $0xd0] sm:$0x3]
  %v3391 = vld [vmem:[%s1] sm:$0xf]
  %v3392 = vld [vmem:[%s1 + $0x4] sm:$0x1]
  %v3446 = vunpack.c.l.b16 %v3338
  %v3447 = vunpack.c.l.b16 %v3339
  %v3448 = vunpack.c.l.b16 %v3340
  %v3449 = vunpack.c.l.b16 %v3341
  %v3450 = vunpack.c.l.b16 %v3342
  %v3451 = vunpack.c.l.b16 %v3343
  %v3452 = vunpack.c.l.b16 %v3344
  %v3453 = vunpack.c.l.b16 %v3345
  %v3454 = vunpack.c.l.b16 %v3346
  %v3455 = vunpack.c.l.b16 %v3347
  %v3456 = vunpack.c.l.b16 %v3348
  %v3457 = vunpack.c.l.b16 %v3349
  %v3458 = vunpack.c.l.b16 %v3350
  %v3459 = vunpack.c.l.b16 %v3351
  %v3460 = vunpack.c.l.b16 %v3352
  %v3461 = vunpack.c.l.b16 %v3353
  %v3462 = vunpack.c.l.b16 %v3354
  %v3463 = vunpack.c.l.b16 %v3355
  %v3464 = vunpack.c.l.b16 %v3356
  %v3465 = vunpack.c.l.b16 %v3357
  %v3466 = vunpack.c.l.b16 %v3358
  %v3467 = vunpack.c.l.b16 %v3359
  %v3468 = vunpack.c.l.b16 %v3360
  %v3469 = vunpack.c.l.b16 %v3361
  %v3470 = vunpack.c.l.b16 %v3362
  %v3471 = vunpack.c.l.b16 %v3363
  %v3472 = vunpack.c.l.b16 %v3364
  %v3473 = vunpack.c.l.b16 %v3365
  %v3474 = vunpack.c.l.b16 %v3366
  %v3475 = vunpack.c.l.b16 %v3367
  %v3476 = vunpack.c.l.b16 %v3368
  %v3477 = vunpack.c.l.b16 %v3369
  %v3478 = vunpack.c.l.b16 %v3370
  %v3479 = vunpack.c.l.b16 %v3371
  %v3480 = vunpack.c.l.b16 %v3372
  %v3481 = vunpack.c.l.b16 %v3373
  %v3482 = vunpack.c.l.b16 %v3374
  %v3483 = vunpack.c.l.b16 %v3375
  %v3484 = vunpack.c.l.b16 %v3376
  %v3485 = vunpack.c.l.b16 %v3377
  %v3486 = vunpack.c.l.b16 %v3378
  %v3487 = vunpack.c.l.b16 %v3379
  %v3488 = vunpack.c.l.b16 %v3380
  %v3489 = vunpack.c.l.b16 %v3381
  %v3490 = vunpack.c.l.b16 %v3382
  %v3491 = vunpack.c.l.b16 %v3383
  %v3492 = vunpack.c.l.b16 %v3384
  %v3493 = vunpack.c.l.b16 %v3385
  %v3494 = vunpack.c.l.b16 %v3386
  %v3495 = vunpack.c.l.b16 %v3387
  %v3496 = vunpack.c.l.b16 %v3388
  %v3497 = vunpack.c.l.b16 %v3389
  %v3498 = vunpack.c.l.b16 %v3390
  %v3499 = vpack.c.b16 %v3447, %v3446
  %v3500 = vpack.c.b16 %v3449, %v3448
  %v3501 = vpack.c.b16 %v3451, %v3450
  %v3502 = vpack.c.b16 %v3453, %v3452
  %v3503 = vpack.c.b16 %v3455, %v3454
  %v3504 = vpack.c.b16 %v3457, %v3456
  %v3505 = vpack.c.b16 %v3459, %v3458
  %v3506 = vpack.c.b16 %v3461, %v3460
  %v3507 = vpack.c.b16 %v3463, %v3462
  %v3508 = vpack.c.b16 %v3465, %v3464
  %v3509 = vpack.c.b16 %v3467, %v3466
  %v3510 = vpack.c.b16 %v3469, %v3468
  %v3511 = vpack.c.b16 %v3471, %v3470
  %v3512 = vpack.c.b16 %v3473, %v3472
  %v3513 = vpack.c.b16 %v3475, %v3474
  %v3514 = vpack.c.b16 %v3477, %v3476
  %v3515 = vpack.c.b16 %v3479, %v3478
  %v3516 = vpack.c.b16 %v3481, %v3480
  %v3517 = vpack.c.b16 %v3483, %v3482
  %v3518 = vpack.c.b16 %v3485, %v3484
  %v3519 = vpack.c.b16 %v3487, %v3486
  %v3520 = vpack.c.b16 %v3489, %v3488
  %v3521 = vpack.c.b16 %v3491, %v3490
  %v3522 = vpack.c.b16 %v3493, %v3492
  %v3523 = vpack.c.b16 %v3495, %v3494
  %v3524 = vpack.c.b16 %v3497, %v3496
  %v3525 = vpack.c.b16 %v3498, %v3498
  %v3528 = vunpack.c.l.b16 %v3391
  %v3529 = vunpack.c.l.b16 %v3392
  %v3530 = vpack.c.b16 %v3529, %v3528
  %vm3531 = vcmask 72704
  %v3533 = vsel %vm3531, %v3499, 0
  %v3536 = vsel %vm3531, %v3500, 0
  %v3539 = vsel %vm3531, %v3501, 0
  %v3542 = vsel %vm3531, %v3502, 0
  %v3545 = vsel %vm3531, %v3503, 0
  %v3548 = vsel %vm3531, %v3504, 0
  %v3551 = vsel %vm3531, %v3505, 0
  %v3554 = vsel %vm3531, %v3506, 0
  %v3557 = vsel %vm3531, %v3507, 0
  %v3560 = vsel %vm3531, %v3508, 0
  %v3563 = vsel %vm3531, %v3509, 0
  %v3566 = vsel %vm3531, %v3510, 0
  %v3569 = vsel %vm3531, %v3511, 0
  %v3572 = vsel %vm3531, %v3512, 0
  %v3575 = vsel %vm3531, %v3513, 0
  %v3578 = vsel %vm3531, %v3514, 0
  %v3581 = vsel %vm3531, %v3515, 0
  %v3584 = vsel %vm3531, %v3516, 0
  %v3587 = vsel %vm3531, %v3517, 0
  %v3590 = vsel %vm3531, %v3518, 0
  %v3593 = vsel %vm3531, %v3519, 0
  %v3596 = vsel %vm3531, %v3520, 0
  %v3599 = vsel %vm3531, %v3521, 0
  %v3602 = vsel %vm3531, %v3522, 0
  %v3605 = vsel %vm3531, %v3523, 0
  %v3608 = vsel %vm3531, %v3524, 0
  %v3611 = vsel %vm3531, %v3525, 0
  %vm3613 = vcmask 1043456
  %vm3614 = vcmask 1044480
  %v3615 = vsel %vm3613, 4294967295, 65535
  %v3616 = vsel %vm3614, %v3615, 0
  %v3618 = vand.u32 %v3530, %v3616
  %3620 = vmatprep.subr.bf16.mxu0 0
  %3621 = vmatpush1.bf16.msra.mxu0 %v3618
  %3622 = vmatprep.subr.bf16.mxu0 0
  %3623 = vmatpush1.bf16.msra.mxu0 0
  %3624 = vmatprep.subr.bf16.mxu0 0
  %3625 = vmatpush1.bf16.msra.mxu0 0
  %3626 = vmatprep.subr.bf16.mxu0 0
  %3627 = vmatpush1.bf16.msra.mxu0 0
  %3628 = vmatprep.subr.bf16.mxu0 0
  %3629 = vmatpush1.bf16.msra.mxu0 0
  %3630 = vmatprep.subr.bf16.mxu0 0
  %3631 = vmatpush1.bf16.msra.mxu0 0
  %3632 = vmatprep.subr.bf16.mxu0 0
  %3633 = vmatpush1.bf16.msra.mxu0 0
  %3634 = vmatprep.subr.bf16.mxu0 0
  %3635 = vmatpush1.bf16.msra.mxu0 0
  %3636 = vmatprep.subr.bf16.mxu0 0
  %3637 = vmatpush1.bf16.msra.mxu0 0
  %3638 = vmatprep.subr.bf16.mxu0 0
  %3639 = vmatpush1.bf16.msra.mxu0 0
  %3640 = vmatprep.subr.bf16.mxu0 0
  %3641 = vmatpush1.bf16.msra.mxu0 0
  %3642 = vmatprep.subr.bf16.mxu0 0
  %3643 = vmatpush1.bf16.msra.mxu0 0
  %3644 = vmatprep.subr.bf16.mxu0 0
  %3645 = vmatpush1.bf16.msra.mxu0 0
  %3646 = vmatprep.subr.bf16.mxu0 0
  %3647 = vmatpush1.bf16.msra.mxu0 0
  %3648 = vmatprep.subr.bf16.mxu0 0
  %3649 = vmatpush1.bf16.msra.mxu0 0
  %3650 = vmatprep.subr.bf16.mxu0 0
  %3651 = vmatpush1.bf16.msra.mxu0 0
  %3652 = vmatprep.mubr.bf16.mxu0 0
  %3653 = vmatmul.mubr.bf16.gmra.mrb[0].mxu0 %v3533
  %v3654 = vpop.f32.mrb[0].mxu0
  %v3655 = vadd.f32 0.0, %v3654
  %v3656 = vpop.f32.mrb[0].mxu0
  %v3657 = vpop.f32.mrb[0].mxu0
  %v3658 = vadd.f32 0.0, %v3657
  %v3659 = vpop.f32.mrb[0].mxu0
  %3660 = vmatprep.mubr.bf16.mxu0 0
  %3661 = vmatmul.mubr.bf16.gmra.mrb[0].mxu0 %v3536
  %v3662 = vpop.f32.mrb[0].mxu0
  %v3663 = vadd.f32 0.0, %v3662
  %v3664 = vpop.f32.mrb[0].mxu0
  %v3665 = vpop.f32.mrb[0].mxu0
  %v3666 = vadd.f32 0.0, %v3665
  %v3667 = vpop.f32.mrb[0].mxu0
  %3668 = vmatprep.mubr.bf16.mxu0 0
  %3669 = vmatmul.mubr.bf16.gmra.mrb[0].mxu0 %v3539
  %v3670 = vpop.f32.mrb[0].mxu0
  %v3671 = vadd.f32 0.0, %v3670
  %v3672 = vpop.f32.mrb[0].mxu0
  %v3673 = vpop.f32.mrb[0].mxu0
  %v3674 = vadd.f32 0.0, %v3673
  %v3675 = vpop.f32.mrb[0].mxu0
  %3676 = vmatprep.mubr.bf16.mxu0 0
  %3677 = vmatmul.mubr.bf16.gmra.mrb[0].mxu0 %v3542
  %v3678 = vpop.f32.mrb[0].mxu0
  %v3679 = vadd.f32 0.0, %v3678
  %v3680 = vpop.f32.mrb[0].mxu0
  %v3681 = vpop.f32.mrb[0].mxu0
  %v3682 = vadd.f32 0.0, %v3681
  %v3683 = vpop.f32.mrb[0].mxu0
  %3684 = vmatprep.mubr.bf16.mxu0 0
  %3685 = vmatmul.mubr.bf16.gmra.mrb[0].mxu0 %v3545
  %v3686 = vpop.f32.mrb[0].mxu0
  %v3687 = vadd.f32 0.0, %v3686
  %v3688 = vpop.f32.mrb[0].mxu0
  %v3689 = vpop.f32.mrb[0].mxu0
  %v3690 = vadd.f32 0.0, %v3689
  %v3691 = vpop.f32.mrb[0].mxu0
  %3692 = vmatprep.mubr.bf16.mxu0 0
  %3693 = vmatmul.mubr.bf16.gmra.mrb[0].mxu0 %v3548
  %v3694 = vpop.f32.mrb[0].mxu0
  %v3695 = vadd.f32 0.0, %v3694
  %v3696 = vpop.f32.mrb[0].mxu0
  %v3697 = vpop.f32.mrb[0].mxu0
  %v3698 = vadd.f32 0.0, %v3697
  %v3699 = vpop.f32.mrb[0].mxu0
  %3700 = vmatprep.mubr.bf16.mxu0 0
  %3701 = vmatmul.mubr.bf16.gmra.mrb[0].mxu0 %v3551
  %v3702 = vpop.f32.mrb[0].mxu0
  %v3703 = vadd.f32 0.0, %v3702
  %v3704 = vpop.f32.mrb[0].mxu0
  %v3705 = vpop.f32.mrb[0].mxu0
  %v3706 = vadd.f32 0.0, %v3705
  %v3707 = vpop.f32.mrb[0].mxu0
  %3708 = vmatprep.mubr.bf16.mxu0 0
  %3709 = vmatmul.mubr.bf16.gmra.mrb[0].mxu0 %v3554
  %v3710 = vpop.f32.mrb[0].mxu0
  %v3711 = vadd.f32 0.0, %v3710
  %v3712 = vpop.f32.mrb[0].mxu0
  %v3713 = vpop.f32.mrb[0].mxu0
  %v3714 = vadd.f32 0.0, %v3713
  %v3715 = vpop.f32.mrb[0].mxu0
  %3716 = vmatprep.mubr.bf16.mxu0 0
  %3717 = vmatmul.mubr.bf16.gmra.mrb[0].mxu0 %v3557
  %v3718 = vpop.f32.mrb[0].mxu0
  %v3719 = vadd.f32 0.0, %v3718
  %v3720 = vpop.f32.mrb[0].mxu0
  %v3721 = vpop.f32.mrb[0].mxu0
  %v3722 = vadd.f32 0.0, %v3721
  %v3723 = vpop.f32.mrb[0].mxu0
  %3724 = vmatprep.mubr.bf16.mxu0 0
  %3725 = vmatmul.mubr.bf16.gmra.mrb[0].mxu0 %v3560
  %v3726 = vpop.f32.mrb[0].mxu0
  %v3727 = vadd.f32 0.0, %v3726
  %v3728 = vpop.f32.mrb[0].mxu0
  %v3729 = vpop.f32.mrb[0].mxu0
  %v3730 = vadd.f32 0.0, %v3729
  %v3731 = vpop.f32.mrb[0].mxu0
  %3732 = vmatprep.mubr.bf16.mxu0 0
  %3733 = vmatmul.mubr.bf16.gmra.mrb[0].mxu0 %v3563
  %v3734 = vpop.f32.mrb[0].mxu0
  %v3735 = vadd.f32 0.0, %v3734
  %v3736 = vpop.f32.mrb[0].mxu0
  %v3737 = vpop.f32.mrb[0].mxu0
  %v3738 = vadd.f32 0.0, %v3737
  %v3739 = vpop.f32.mrb[0].mxu0
  %3740 = vmatprep.mubr.bf16.mxu0 0
  %3741 = vmatmul.mubr.bf16.gmra.mrb[0].mxu0 %v3566
  %v3742 = vpop.f32.mrb[0].mxu0
  %v3743 = vadd.f32 0.0, %v3742
  %v3744 = vpop.f32.mrb[0].mxu0
  %v3745 = vpop.f32.mrb[0].mxu0
  %v3746 = vadd.f32 0.0, %v3745
  %v3747 = vpop.f32.mrb[0].mxu0
  %3748 = vmatprep.mubr.bf16.mxu0 0
  %3749 = vmatmul.mubr.bf16.gmra.mrb[0].mxu0 %v3569
  %v3750 = vpop.f32.mrb[0].mxu0
  %v3751 = vadd.f32 0.0, %v3750
  %v3752 = vpop.f32.mrb[0].mxu0
  %v3753 = vpop.f32.mrb[0].mxu0
  %v3754 = vadd.f32 0.0, %v3753
  %v3755 = vpop.f32.mrb[0].mxu0
  %3756 = vmatprep.mubr.bf16.mxu0 0
  %3757 = vmatmul.mubr.bf16.gmra.mrb[0].mxu0 %v3572
  %v3758 = vpop.f32.mrb[0].mxu0
  %v3759 = vadd.f32 0.0, %v3758
  %v3760 = vpop.f32.mrb[0].mxu0
  %v3761 = vpop.f32.mrb[0].mxu0
  %v3762 = vadd.f32 0.0, %v3761
  %v3763 = vpop.f32.mrb[0].mxu0
  %3764 = vmatprep.mubr.bf16.mxu0 0
  %3765 = vmatmul.mubr.bf16.gmra.mrb[0].mxu0 %v3575
  %v3766 = vpop.f32.mrb[0].mxu0
  %v3767 = vadd.f32 0.0, %v3766
  %v3768 = vpop.f32.mrb[0].mxu0
  %v3769 = vpop.f32.mrb[0].mxu0
  %v3770 = vadd.f32 0.0, %v3769
  %v3771 = vpop.f32.mrb[0].mxu0
  %3772 = vmatprep.mubr.bf16.mxu0 0
  %3773 = vmatmul.mubr.bf16.gmra.mrb[0].mxu0 %v3578
  %v3774 = vpop.f32.mrb[0].mxu0
  %v3775 = vadd.f32 0.0, %v3774
  %v3776 = vpop.f32.mrb[0].mxu0
  %v3777 = vpop.f32.mrb[0].mxu0
  %v3778 = vadd.f32 0.0, %v3777
  %v3779 = vpop.f32.mrb[0].mxu0
  %3780 = vmatprep.mubr.bf16.mxu0 0
  %3781 = vmatmul.mubr.bf16.gmra.mrb[0].mxu0 %v3581
  %v3782 = vpop.f32.mrb[0].mxu0
  %v3783 = vadd.f32 0.0, %v3782
  %v3784 = vpop.f32.mrb[0].mxu0
  %v3785 = vpop.f32.mrb[0].mxu0
  %v3786 = vadd.f32 0.0, %v3785
  %v3787 = vpop.f32.mrb[0].mxu0
  %3788 = vmatprep.mubr.bf16.mxu0 0
  %3789 = vmatmul.mubr.bf16.gmra.mrb[0].mxu0 %v3584
  %v3790 = vpop.f32.mrb[0].mxu0
  %v3791 = vadd.f32 0.0, %v3790
  %v3792 = vpop.f32.mrb[0].mxu0
  %v3793 = vpop.f32.mrb[0].mxu0
  %v3794 = vadd.f32 0.0, %v3793
  %v3795 = vpop.f32.mrb[0].mxu0
  %3796 = vmatprep.mubr.bf16.mxu0 0
  %3797 = vmatmul.mubr.bf16.gmra.mrb[0].mxu0 %v3587
  %v3798 = vpop.f32.mrb[0].mxu0
  %v3799 = vadd.f32 0.0, %v3798
  %v3800 = vpop.f32.mrb[0].mxu0
  %v3801 = vpop.f32.mrb[0].mxu0
  %v3802 = vadd.f32 0.0, %v3801
  %v3803 = vpop.f32.mrb[0].mxu0
  %3804 = vmatprep.mubr.bf16.mxu0 0
  %3805 = vmatmul.mubr.bf16.gmra.mrb[0].mxu0 %v3590
  %v3806 = vpop.f32.mrb[0].mxu0
  %v3807 = vadd.f32 0.0, %v3806
  %v3808 = vpop.f32.mrb[0].mxu0
  %v3809 = vpop.f32.mrb[0].mxu0
  %v3810 = vadd.f32 0.0, %v3809
  %v3811 = vpop.f32.mrb[0].mxu0
  %3812 = vmatprep.mubr.bf16.mxu0 0
  %3813 = vmatmul.mubr.bf16.gmra.mrb[0].mxu0 %v3593
  %v3814 = vpop.f32.mrb[0].mxu0
  %v3815 = vadd.f32 0.0, %v3814
  %v3816 = vpop.f32.mrb[0].mxu0
  %v3817 = vpop.f32.mrb[0].mxu0
  %v3818 = vadd.f32 0.0, %v3817
  %v3819 = vpop.f32.mrb[0].mxu0
  %3820 = vmatprep.mubr.bf16.mxu0 0
  %3821 = vmatmul.mubr.bf16.gmra.mrb[0].mxu0 %v3596
  %v3822 = vpop.f32.mrb[0].mxu0
  %v3823 = vadd.f32 0.0, %v3822
  %v3824 = vpop.f32.mrb[0].mxu0
  %v3825 = vpop.f32.mrb[0].mxu0
  %v3826 = vadd.f32 0.0, %v3825
  %v3827 = vpop.f32.mrb[0].mxu0
  %3828 = vmatprep.mubr.bf16.mxu0 0
  %3829 = vmatmul.mubr.bf16.gmra.mrb[0].mxu0 %v3599
  %v3830 = vpop.f32.mrb[0].mxu0
  %v3831 = vadd.f32 0.0, %v3830
  %v3832 = vpop.f32.mrb[0].mxu0
  %v3833 = vpop.f32.mrb[0].mxu0
  %v3834 = vadd.f32 0.0, %v3833
  %v3835 = vpop.f32.mrb[0].mxu0
  %3836 = vmatprep.mubr.bf16.mxu0 0
  %3837 = vmatmul.mubr.bf16.gmra.mrb[0].mxu0 %v3602
  %v3838 = vpop.f32.mrb[0].mxu0
  %v3839 = vadd.f32 0.0, %v3838
  %v3840 = vpop.f32.mrb[0].mxu0
  %v3841 = vpop.f32.mrb[0].mxu0
  %v3842 = vadd.f32 0.0, %v3841
  %v3843 = vpop.f32.mrb[0].mxu0
  %3844 = vmatprep.mubr.bf16.mxu0 0
  %3845 = vmatmul.mubr.bf16.gmra.mrb[0].mxu0 %v3605
  %v3846 = vpop.f32.mrb[0].mxu0
  %v3847 = vadd.f32 0.0, %v3846
  %v3848 = vpop.f32.mrb[0].mxu0
  %v3849 = vpop.f32.mrb[0].mxu0
  %v3850 = vadd.f32 0.0, %v3849
  %v3851 = vpop.f32.mrb[0].mxu0
  %3852 = vmatprep.mubr.bf16.mxu0 0
  %3853 = vmatmul.mubr.bf16.gmra.mrb[0].mxu0 %v3608
  %v3854 = vpop.f32.mrb[0].mxu0
  %v3855 = vadd.f32 0.0, %v3854
  %v3856 = vpop.f32.mrb[0].mxu0
  %v3857 = vpop.f32.mrb[0].mxu0
  %v3858 = vadd.f32 0.0, %v3857
  %v3859 = vpop.f32.mrb[0].mxu0
  %3860 = vmatprep.mubr.bf16.mxu0 0
  %3861 = vmatmul.mubr.bf16.gmra.mrb[0].mxu0 %v3611
  %v3862 = vpop.f32.mrb[0].mxu0
  %v3863 = vadd.f32 0.0, %v3862
  %v3864 = vpop.f32.mrb[0].mxu0
  %v3865 = vpop.f32.mrb[0].mxu0
  %v3866 = vpop.f32.mrb[0].mxu0
  %3867 = vdwg.mxu0
  %v3868 = vld [vmem:[%s4] sm:$0xff]
  %v3869 = vld [vmem:[%s4 + $0x8] sm:$0xff]
  %v3870 = vld [vmem:[%s4 + $0x10] sm:$0xff]
  %v3871 = vld [vmem:[%s4 + $0x18] sm:$0xff]
  %v3872 = vld [vmem:[%s4 + $0x20] sm:$0xff]
  %v3873 = vld [vmem:[%s4 + $0x28] sm:$0xff]
  %v3874 = vld [vmem:[%s4 + $0x30] sm:$0xff]
  %v3875 = vld [vmem:[%s4 + $0x38] sm:$0xff]
  %v3876 = vld [vmem:[%s4 + $0x40] sm:$0xff]
  %v3877 = vld [vmem:[%s4 + $0x48] sm:$0xff]
  %v3878 = vld [vmem:[%s4 + $0x50] sm:$0xff]
  %v3879 = vld [vmem:[%s4 + $0x58] sm:$0xff]
  %v3880 = vld [vmem:[%s4 + $0x60] sm:$0xff]
  %v3881 = vld [vmem:[%s4 + $0x68] sm:$0xff]
  %v3882 = vld [vmem:[%s4 + $0x70] sm:$0xff]
  %v3883 = vld [vmem:[%s4 + $0x78] sm:$0xff]
  %v3884 = vld [vmem:[%s4 + $0x80] sm:$0xff]
  %v3885 = vld [vmem:[%s4 + $0x88] sm:$0xff]
  %v3886 = vld [vmem:[%s4 + $0x90] sm:$0xff]
  %v3887 = vld [vmem:[%s4 + $0x98] sm:$0xff]
  %v3888 = vld [vmem:[%s4 + $0xa0] sm:$0xff]
  %v3889 = vld [vmem:[%s4 + $0xa8] sm:$0xff]
  %v3890 = vld [vmem:[%s4 + $0xb0] sm:$0xff]
  %v3891 = vld [vmem:[%s4 + $0xb8] sm:$0xff]
  %v3892 = vld [vmem:[%s4 + $0xc0] sm:$0xff]
  %v3893 = vld [vmem:[%s4 + $0xc8] sm:$0xff]
  %v3894 = vld [vmem:[%s4 + $0xd0] sm:$0xff]
  %v3895 = vld [vmem:[%s4 + $0xd8] sm:$0xff]
  %v3896 = vld [vmem:[%s4 + $0xe0] sm:$0xff]
  %v3897 = vld [vmem:[%s4 + $0xe8] sm:$0xff]
  %v3898 = vld [vmem:[%s4 + $0xf0] sm:$0xff]
  %v3899 = vld [vmem:[%s4 + $0xf8] sm:$0xff]
  %v3900 = vld [vmem:[%s4 + $0x100] sm:$0xff]
  %v3901 = vld [vmem:[%s4 + $0x108] sm:$0xff]
  %v3902 = vld [vmem:[%s4 + $0x110] sm:$0xff]
  %v3903 = vld [vmem:[%s4 + $0x118] sm:$0xff]
  %v3904 = vld [vmem:[%s4 + $0x120] sm:$0xff]
  %v3905 = vld [vmem:[%s4 + $0x128] sm:$0xff]
  %v3906 = vld [vmem:[%s4 + $0x130] sm:$0xff]
  %v3907 = vld [vmem:[%s4 + $0x138] sm:$0xff]
  %v3908 = vld [vmem:[%s4 + $0x140] sm:$0xff]
  %v3909 = vld [vmem:[%s4 + $0x148] sm:$0xff]
  %v3910 = vld [vmem:[%s4 + $0x150] sm:$0xff]
  %v3911 = vld [vmem:[%s4 + $0x158] sm:$0xff]
  %v3912 = vld [vmem:[%s4 + $0x160] sm:$0xff]
  %v3913 = vld [vmem:[%s4 + $0x168] sm:$0xff]
  %v3914 = vld [vmem:[%s4 + $0x170] sm:$0xff]
  %v3915 = vld [vmem:[%s4 + $0x178] sm:$0xff]
  %v3916 = vld [vmem:[%s4 + $0x180] sm:$0xff]
  %v3917 = vld [vmem:[%s4 + $0x188] sm:$0xff]
  %v3918 = vld [vmem:[%s4 + $0x190] sm:$0xff]
  %v3919 = vld [vmem:[%s4 + $0x198] sm:$0xff]
  %v3920 = vld [vmem:[%s4 + $0x1a0] sm:$0xf]
  %3922 = vset.pattern.permute.xlu0 0
  %3923 = vperm.xlu0 %3922, %v3868
  %v3924 = vpop.permute.xlu0 %3923
  %3927 = vset.pattern.permute.xlu0 0
  %3928 = vperm.xlu0 %3927, %v3869
  %v3929 = vpop.permute.xlu0 %3928
  %3932 = vset.pattern.permute.xlu0 0
  %3933 = vperm.xlu0 %3932, %v3870
  %v3934 = vpop.permute.xlu0 %3933
  %3937 = vset.pattern.permute.xlu0 0
  %3938 = vperm.xlu0 %3937, %v3871
  %v3939 = vpop.permute.xlu0 %3938
  %3942 = vset.pattern.permute.xlu0 0
  %3943 = vperm.xlu0 %3942, %v3872
  %v3944 = vpop.permute.xlu0 %3943
  %3947 = vset.pattern.permute.xlu0 0
  %3948 = vperm.xlu0 %3947, %v3873
  %v3949 = vpop.permute.xlu0 %3948
  %3952 = vset.pattern.permute.xlu0 0
  %3953 = vperm.xlu0 %3952, %v3874
  %v3954 = vpop.permute.xlu0 %3953
  %3957 = vset.pattern.permute.xlu0 0
  %3958 = vperm.xlu0 %3957, %v3875
  %v3959 = vpop.permute.xlu0 %3958
  %3962 = vset.pattern.permute.xlu0 0
  %3963 = vperm.xlu0 %3962, %v3876
  %v3964 = vpop.permute.xlu0 %3963
  %3967 = vset.pattern.permute.xlu0 0
  %3968 = vperm.xlu0 %3967, %v3877
  %v3969 = vpop.permute.xlu0 %3968
  %3972 = vset.pattern.permute.xlu0 0
  %3973 = vperm.xlu0 %3972, %v3878
  %v3974 = vpop.permute.xlu0 %3973
  %3977 = vset.pattern.permute.xlu0 0
  %3978 = vperm.xlu0 %3977, %v3879
  %v3979 = vpop.permute.xlu0 %3978
  %3982 = vset.pattern.permute.xlu0 0
  %3983 = vperm.xlu0 %3982, %v3880
  %v3984 = vpop.permute.xlu0 %3983
  %3987 = vset.pattern.permute.xlu0 0
  %3988 = vperm.xlu0 %3987, %v3881
  %v3989 = vpop.permute.xlu0 %3988
  %3992 = vset.pattern.permute.xlu0 0
  %3993 = vperm.xlu0 %3992, %v3882
  %v3994 = vpop.permute.xlu0 %3993
  %3997 = vset.pattern.permute.xlu0 0
  %3998 = vperm.xlu0 %3997, %v3883
  %v3999 = vpop.permute.xlu0 %3998
  %4002 = vset.pattern.permute.xlu0 0
  %4003 = vperm.xlu0 %4002, %v3884
  %v4004 = vpop.permute.xlu0 %4003
  %4007 = vset.pattern.permute.xlu0 0
  %4008 = vperm.xlu0 %4007, %v3885
  %v4009 = vpop.permute.xlu0 %4008
  %4012 = vset.pattern.permute.xlu0 0
  %4013 = vperm.xlu0 %4012, %v3886
  %v4014 = vpop.permute.xlu0 %4013
  %4017 = vset.pattern.permute.xlu0 0
  %4018 = vperm.xlu0 %4017, %v3887
  %v4019 = vpop.permute.xlu0 %4018
  %4022 = vset.pattern.permute.xlu0 0
  %4023 = vperm.xlu0 %4022, %v3888
  %v4024 = vpop.permute.xlu0 %4023
  %4027 = vset.pattern.permute.xlu0 0
  %4028 = vperm.xlu0 %4027, %v3889
  %v4029 = vpop.permute.xlu0 %4028
  %4032 = vset.pattern.permute.xlu0 0
  %4033 = vperm.xlu0 %4032, %v3890
  %v4034 = vpop.permute.xlu0 %4033
  %4037 = vset.pattern.permute.xlu0 0
  %4038 = vperm.xlu0 %4037, %v3891
  %v4039 = vpop.permute.xlu0 %4038
  %4042 = vset.pattern.permute.xlu0 0
  %4043 = vperm.xlu0 %4042, %v3892
  %v4044 = vpop.permute.xlu0 %4043
  %4047 = vset.pattern.permute.xlu0 0
  %4048 = vperm.xlu0 %4047, %v3893
  %v4049 = vpop.permute.xlu0 %4048
  %4052 = vset.pattern.permute.xlu0 0
  %4053 = vperm.xlu0 %4052, %v3894
  %v4054 = vpop.permute.xlu0 %4053
  %4057 = vset.pattern.permute.xlu0 0
  %4058 = vperm.xlu0 %4057, %v3895
  %v4059 = vpop.permute.xlu0 %4058
  %4062 = vset.pattern.permute.xlu0 0
  %4063 = vperm.xlu0 %4062, %v3896
  %v4064 = vpop.permute.xlu0 %4063
  %4067 = vset.pattern.permute.xlu0 0
  %4068 = vperm.xlu0 %4067, %v3897
  %v4069 = vpop.permute.xlu0 %4068
  %4072 = vset.pattern.permute.xlu0 0
  %4073 = vperm.xlu0 %4072, %v3898
  %v4074 = vpop.permute.xlu0 %4073
  %4077 = vset.pattern.permute.xlu0 0
  %4078 = vperm.xlu0 %4077, %v3899
  %v4079 = vpop.permute.xlu0 %4078
  %4082 = vset.pattern.permute.xlu0 0
  %4083 = vperm.xlu0 %4082, %v3900
  %v4084 = vpop.permute.xlu0 %4083
  %4087 = vset.pattern.permute.xlu0 0
  %4088 = vperm.xlu0 %4087, %v3901
  %v4089 = vpop.permute.xlu0 %4088
  %4092 = vset.pattern.permute.xlu0 0
  %4093 = vperm.xlu0 %4092, %v3902
  %v4094 = vpop.permute.xlu0 %4093
  %4097 = vset.pattern.permute.xlu0 0
  %4098 = vperm.xlu0 %4097, %v3903
  %v4099 = vpop.permute.xlu0 %4098
  %4102 = vset.pattern.permute.xlu0 0
  %4103 = vperm.xlu0 %4102, %v3904
  %v4104 = vpop.permute.xlu0 %4103
  %4107 = vset.pattern.permute.xlu0 0
  %4108 = vperm.xlu0 %4107, %v3905
  %v4109 = vpop.permute.xlu0 %4108
  %4112 = vset.pattern.permute.xlu0 0
  %4113 = vperm.xlu0 %4112, %v3906
  %v4114 = vpop.permute.xlu0 %4113
  %4117 = vset.pattern.permute.xlu0 0
  %4118 = vperm.xlu0 %4117, %v3907
  %v4119 = vpop.permute.xlu0 %4118
  %4122 = vset.pattern.permute.xlu0 0
  %4123 = vperm.xlu0 %4122, %v3908
  %v4124 = vpop.permute.xlu0 %4123
  %4127 = vset.pattern.permute.xlu0 0
  %4128 = vperm.xlu0 %4127, %v3909
  %v4129 = vpop.permute.xlu0 %4128
  %4132 = vset.pattern.permute.xlu0 0
  %4133 = vperm.xlu0 %4132, %v3910
  %v4134 = vpop.permute.xlu0 %4133
  %4137 = vset.pattern.permute.xlu0 0
  %4138 = vperm.xlu0 %4137, %v3911
  %v4139 = vpop.permute.xlu0 %4138
  %4142 = vset.pattern.permute.xlu0 0
  %4143 = vperm.xlu0 %4142, %v3912
  %v4144 = vpop.permute.xlu0 %4143
  %4147 = vset.pattern.permute.xlu0 0
  %4148 = vperm.xlu0 %4147, %v3913
  %v4149 = vpop.permute.xlu0 %4148
  %4152 = vset.pattern.permute.xlu0 0
  %4153 = vperm.xlu0 %4152, %v3914
  %v4154 = vpop.permute.xlu0 %4153
  %4157 = vset.pattern.permute.xlu0 0
  %4158 = vperm.xlu0 %4157, %v3915
  %v4159 = vpop.permute.xlu0 %4158
  %4162 = vset.pattern.permute.xlu0 0
  %4163 = vperm.xlu0 %4162, %v3916
  %v4164 = vpop.permute.xlu0 %4163
  %4167 = vset.pattern.permute.xlu0 0
  %4168 = vperm.xlu0 %4167, %v3917
  %v4169 = vpop.permute.xlu0 %4168
  %4172 = vset.pattern.permute.xlu0 0
  %4173 = vperm.xlu0 %4172, %v3918
  %v4174 = vpop.permute.xlu0 %4173
  %4177 = vset.pattern.permute.xlu0 0
  %4178 = vperm.xlu0 %4177, %v3919
  %v4179 = vpop.permute.xlu0 %4178
  %4182 = vset.pattern.permute.xlu0 0
  %4183 = vperm.xlu0 %4182, %v3920
  %v4184 = vpop.permute.xlu0 %4183
  %v4186 = vmul.f32 %v3655, %v3924
  %v4187 = vmul.f32 %v3658, %v3929
  %v4188 = vmul.f32 %v3663, %v3934
  %v4189 = vmul.f32 %v3666, %v3939
  %v4190 = vmul.f32 %v3671, %v3944
  %v4191 = vmul.f32 %v3674, %v3949
  %v4192 = vmul.f32 %v3679, %v3954
  %v4193 = vmul.f32 %v3682, %v3959
  %v4194 = vmul.f32 %v3687, %v3964
  %v4195 = vmul.f32 %v3690, %v3969
  %v4196 = vmul.f32 %v3695, %v3974
  %v4197 = vmul.f32 %v3698, %v3979
  %v4198 = vmul.f32 %v3703, %v3984
  %v4199 = vmul.f32 %v3706, %v3989
  %v4200 = vmul.f32 %v3711, %v3994
  %v4201 = vmul.f32 %v3714, %v3999
  %v4202 = vmul.f32 %v3719, %v4004
  %v4203 = vmul.f32 %v3722, %v4009
  %v4204 = vmul.f32 %v3727, %v4014
  %v4205 = vmul.f32 %v3730, %v4019
  %v4206 = vmul.f32 %v3735, %v4024
  %v4207 = vmul.f32 %v3738, %v4029
  %v4208 = vmul.f32 %v3743, %v4034
  %v4209 = vmul.f32 %v3746, %v4039
  %v4210 = vmul.f32 %v3751, %v4044
  %v4211 = vmul.f32 %v3754, %v4049
  %v4212 = vmul.f32 %v3759, %v4054
  %v4213 = vmul.f32 %v3762, %v4059
  %v4214 = vmul.f32 %v3767, %v4064
  %v4215 = vmul.f32 %v3770, %v4069
  %v4216 = vmul.f32 %v3775, %v4074
  %v4217 = vmul.f32 %v3778, %v4079
  %v4218 = vmul.f32 %v3783, %v4084
  %v4219 = vmul.f32 %v3786, %v4089
  %v4220 = vmul.f32 %v3791, %v4094
  %v4221 = vmul.f32 %v3794, %v4099
  %v4222 = vmul.f32 %v3799, %v4104
  %v4223 = vmul.f32 %v3802, %v4109
  %v4224 = vmul.f32 %v3807, %v4114
  %v4225 = vmul.f32 %v3810, %v4119
  %v4226 = vmul.f32 %v3815, %v4124
  %v4227 = vmul.f32 %v3818, %v4129
  %v4228 = vmul.f32 %v3823, %v4134
  %v4229 = vmul.f32 %v3826, %v4139
  %v4230 = vmul.f32 %v3831, %v4144
  %v4231 = vmul.f32 %v3834, %v4149
  %v4232 = vmul.f32 %v3839, %v4154
  %v4233 = vmul.f32 %v3842, %v4159
  %v4234 = vmul.f32 %v3847, %v4164
  %v4235 = vmul.f32 %v3850, %v4169
  %v4236 = vmul.f32 %v3855, %v4174
  %v4237 = vmul.f32 %v3858, %v4179
  %v4238 = vmul.f32 %v3863, %v4184
  %vm4239 = vcmask 130048
  %v4240 = vsel %vm4239, %v4186, 0.0
  %v4241 = vsel %vm4239, %v4187, 0.0
  %v4242 = vadd.f32 %v4240, %v4241
  %v4243 = vsel %vm4239, %v4188, 0.0
  %v4244 = vadd.f32 %v4242, %v4243
  %v4245 = vsel %vm4239, %v4189, 0.0
  %v4246 = vadd.f32 %v4244, %v4245
  %v4247 = vsel %vm4239, %v4190, 0.0
  %v4248 = vadd.f32 %v4246, %v4247
  %v4249 = vsel %vm4239, %v4191, 0.0
  %v4250 = vadd.f32 %v4248, %v4249
  %v4251 = vsel %vm4239, %v4192, 0.0
  %v4252 = vadd.f32 %v4250, %v4251
  %v4253 = vsel %vm4239, %v4193, 0.0
  %v4254 = vadd.f32 %v4252, %v4253
  %v4255 = vsel %vm4239, %v4194, 0.0
  %v4256 = vadd.f32 %v4254, %v4255
  %v4257 = vsel %vm4239, %v4195, 0.0
  %v4258 = vadd.f32 %v4256, %v4257
  %v4259 = vsel %vm4239, %v4196, 0.0
  %v4260 = vadd.f32 %v4258, %v4259
  %v4261 = vsel %vm4239, %v4197, 0.0
  %v4262 = vadd.f32 %v4260, %v4261
  %v4263 = vsel %vm4239, %v4198, 0.0
  %v4264 = vadd.f32 %v4262, %v4263
  %v4265 = vsel %vm4239, %v4199, 0.0
  %v4266 = vadd.f32 %v4264, %v4265
  %v4267 = vsel %vm4239, %v4200, 0.0
  %v4268 = vadd.f32 %v4266, %v4267
  %v4269 = vsel %vm4239, %v4201, 0.0
  %v4270 = vadd.f32 %v4268, %v4269
  %v4271 = vsel %vm4239, %v4202, 0.0
  %v4272 = vadd.f32 %v4270, %v4271
  %v4273 = vsel %vm4239, %v4203, 0.0
  %v4274 = vadd.f32 %v4272, %v4273
  %v4275 = vsel %vm4239, %v4204, 0.0
  %v4276 = vadd.f32 %v4274, %v4275
  %v4277 = vsel %vm4239, %v4205, 0.0
  %v4278 = vadd.f32 %v4276, %v4277
  %v4279 = vsel %vm4239, %v4206, 0.0
  %v4280 = vadd.f32 %v4278, %v4279
  %v4281 = vsel %vm4239, %v4207, 0.0
  %v4282 = vadd.f32 %v4280, %v4281
  %v4283 = vsel %vm4239, %v4208, 0.0
  %v4284 = vadd.f32 %v4282, %v4283
  %v4285 = vsel %vm4239, %v4209, 0.0
  %v4286 = vadd.f32 %v4284, %v4285
  %v4287 = vsel %vm4239, %v4210, 0.0
  %v4288 = vadd.f32 %v4286, %v4287
  %v4289 = vsel %vm4239, %v4211, 0.0
  %v4290 = vadd.f32 %v4288, %v4289
  %v4291 = vsel %vm4239, %v4212, 0.0
  %v4292 = vadd.f32 %v4290, %v4291
  %v4293 = vsel %vm4239, %v4213, 0.0
  %v4294 = vadd.f32 %v4292, %v4293
  %v4295 = vsel %vm4239, %v4214, 0.0
  %v4296 = vadd.f32 %v4294, %v4295
  %v4297 = vsel %vm4239, %v4215, 0.0
  %v4298 = vadd.f32 %v4296, %v4297
  %v4299 = vsel %vm4239, %v4216, 0.0
  %v4300 = vadd.f32 %v4298, %v4299
  %v4301 = vsel %vm4239, %v4217, 0.0
  %v4302 = vadd.f32 %v4300, %v4301
  %v4303 = vsel %vm4239, %v4218, 0.0
  %v4304 = vadd.f32 %v4302, %v4303
  %v4305 = vsel %vm4239, %v4219, 0.0
  %v4306 = vadd.f32 %v4304, %v4305
  %v4307 = vsel %vm4239, %v4220, 0.0
  %v4308 = vadd.f32 %v4306, %v4307
  %v4309 = vsel %vm4239, %v4221, 0.0
  %v4310 = vadd.f32 %v4308, %v4309
  %v4311 = vsel %vm4239, %v4222, 0.0
  %v4312 = vadd.f32 %v4310, %v4311
  %v4313 = vsel %vm4239, %v4223, 0.0
  %v4314 = vadd.f32 %v4312, %v4313
  %v4315 = vsel %vm4239, %v4224, 0.0
  %v4316 = vadd.f32 %v4314, %v4315
  %v4317 = vsel %vm4239, %v4225, 0.0
  %v4318 = vadd.f32 %v4316, %v4317
  %v4319 = vsel %vm4239, %v4226, 0.0
  %v4320 = vadd.f32 %v4318, %v4319
  %v4321 = vsel %vm4239, %v4227, 0.0
  %v4322 = vadd.f32 %v4320, %v4321
  %v4323 = vsel %vm4239, %v4228, 0.0
  %v4324 = vadd.f32 %v4322, %v4323
  %v4325 = vsel %vm4239, %v4229, 0.0
  %v4326 = vadd.f32 %v4324, %v4325
  %v4327 = vsel %vm4239, %v4230, 0.0
  %v4328 = vadd.f32 %v4326, %v4327
  %v4329 = vsel %vm4239, %v4231, 0.0
  %v4330 = vadd.f32 %v4328, %v4329
  %v4331 = vsel %vm4239, %v4232, 0.0
  %v4332 = vadd.f32 %v4330, %v4331
  %v4333 = vsel %vm4239, %v4233, 0.0
  %v4334 = vadd.f32 %v4332, %v4333
  %v4335 = vsel %vm4239, %v4234, 0.0
  %v4336 = vadd.f32 %v4334, %v4335
  %v4337 = vsel %vm4239, %v4235, 0.0
  %v4338 = vadd.f32 %v4336, %v4337
  %v4339 = vsel %vm4239, %v4236, 0.0
  %v4340 = vadd.f32 %v4338, %v4339
  %v4341 = vsel %vm4239, %v4237, 0.0
  %v4342 = vadd.f32 %v4340, %v4341
  %vm4343 = vcmask 125952
  %v4344 = vsel %vm4343, %v4238, 0.0
  %v4345 = vadd.f32 %v4342, %v4344
  %v4346 = vrot.slane %v4345, 4
  %v4347 = vadd.f32 %v4345, %v4346
  %v4348 = vrot.slane %v4347, 2
  %v4349 = vadd.f32 %v4347, %v4348
  %v4350 = vrot.slane %v4349, 1
  %v4351 = vadd.f32 %v4349, %v4350
  %v4352 = vmul.f32 %v4351, 0.0025510204
  %v4353 = vsub.f32 %v3655, %v4352
  %v4354 = vsub.f32 %v3658, %v4352
  %v4355 = vsub.f32 %v3663, %v4352
  %v4356 = vsub.f32 %v3666, %v4352
  %v4357 = vsub.f32 %v3671, %v4352
  %v4358 = vsub.f32 %v3674, %v4352
  %v4359 = vsub.f32 %v3679, %v4352
  %v4360 = vsub.f32 %v3682, %v4352
  %v4361 = vsub.f32 %v3687, %v4352
  %v4362 = vsub.f32 %v3690, %v4352
  %v4363 = vsub.f32 %v3695, %v4352
  %v4364 = vsub.f32 %v3698, %v4352
  %v4365 = vsub.f32 %v3703, %v4352
  %v4366 = vsub.f32 %v3706, %v4352
  %v4367 = vsub.f32 %v3711, %v4352
  %v4368 = vsub.f32 %v3714, %v4352
  %v4369 = vsub.f32 %v3719, %v4352
  %v4370 = vsub.f32 %v3722, %v4352
  %v4371 = vsub.f32 %v3727, %v4352
  %v4372 = vsub.f32 %v3730, %v4352
  %v4373 = vsub.f32 %v3735, %v4352
  %v4374 = vsub.f32 %v3738, %v4352
  %v4375 = vsub.f32 %v3743, %v4352
  %v4376 = vsub.f32 %v3746, %v4352
  %v4377 = vsub.f32 %v3751, %v4352
  %v4378 = vsub.f32 %v3754, %v4352
  %v4379 = vsub.f32 %v3759, %v4352
  %v4380 = vsub.f32 %v3762, %v4352
  %v4381 = vsub.f32 %v3767, %v4352
  %v4382 = vsub.f32 %v3770, %v4352
  %v4383 = vsub.f32 %v3775, %v4352
  %v4384 = vsub.f32 %v3778, %v4352
  %v4385 = vsub.f32 %v3783, %v4352
  %v4386 = vsub.f32 %v3786, %v4352
  %v4387 = vsub.f32 %v3791, %v4352
  %v4388 = vsub.f32 %v3794, %v4352
  %v4389 = vsub.f32 %v3799, %v4352
  %v4390 = vsub.f32 %v3802, %v4352
  %v4391 = vsub.f32 %v3807, %v4352
  %v4392 = vsub.f32 %v3810, %v4352
  %v4393 = vsub.f32 %v3815, %v4352
  %v4394 = vsub.f32 %v3818, %v4352
  %v4395 = vsub.f32 %v3823, %v4352
  %v4396 = vsub.f32 %v3826, %v4352
  %v4397 = vsub.f32 %v3831, %v4352
  %v4398 = vsub.f32 %v3834, %v4352
  %v4399 = vsub.f32 %v3839, %v4352
  %v4400 = vsub.f32 %v3842, %v4352
  %v4401 = vsub.f32 %v3847, %v4352
  %v4402 = vsub.f32 %v3850, %v4352
  %v4403 = vsub.f32 %v3855, %v4352
  %v4404 = vsub.f32 %v3858, %v4352
  %v4405 = vsub.f32 %v3863, %v4352
  %v4406 = vmul.f32 %v4353, %v4353
  %v4407 = vmul.f32 %v4354, %v4354
  %v4408 = vmul.f32 %v4355, %v4355
  %v4409 = vmul.f32 %v4356, %v4356
  %v4410 = vmul.f32 %v4357, %v4357
  %v4411 = vmul.f32 %v4358, %v4358
  %v4412 = vmul.f32 %v4359, %v4359
  %v4413 = vmul.f32 %v4360, %v4360
  %v4414 = vmul.f32 %v4361, %v4361
  %v4415 = vmul.f32 %v4362, %v4362
  %v4416 = vmul.f32 %v4363, %v4363
  %v4417 = vmul.f32 %v4364, %v4364
  %v4418 = vmul.f32 %v4365, %v4365
  %v4419 = vmul.f32 %v4366, %v4366
  %v4420 = vmul.f32 %v4367, %v4367
  %v4421 = vmul.f32 %v4368, %v4368
  %v4422 = vmul.f32 %v4369, %v4369
  %v4423 = vmul.f32 %v4370, %v4370
  %v4424 = vmul.f32 %v4371, %v4371
  %v4425 = vmul.f32 %v4372, %v4372
  %v4426 = vmul.f32 %v4373, %v4373
  %v4427 = vmul.f32 %v4374, %v4374
  %v4428 = vmul.f32 %v4375, %v4375
  %v4429 = vmul.f32 %v4376, %v4376
  %v4430 = vmul.f32 %v4377, %v4377
  %v4431 = vmul.f32 %v4378, %v4378
  %v4432 = vmul.f32 %v4379, %v4379
  %v4433 = vmul.f32 %v4380, %v4380
  %v4434 = vmul.f32 %v4381, %v4381
  %v4435 = vmul.f32 %v4382, %v4382
  %v4436 = vmul.f32 %v4383, %v4383
  %v4437 = vmul.f32 %v4384, %v4384
  %v4438 = vmul.f32 %v4385, %v4385
  %v4439 = vmul.f32 %v4386, %v4386
  %v4440 = vmul.f32 %v4387, %v4387
  %v4441 = vmul.f32 %v4388, %v4388
  %v4442 = vmul.f32 %v4389, %v4389
  %v4443 = vmul.f32 %v4390, %v4390
  %v4444 = vmul.f32 %v4391, %v4391
  %v4445 = vmul.f32 %v4392, %v4392
  %v4446 = vmul.f32 %v4393, %v4393
  %v4447 = vmul.f32 %v4394, %v4394
  %v4448 = vmul.f32 %v4395, %v4395
  %v4449 = vmul.f32 %v4396, %v4396
  %v4450 = vmul.f32 %v4397, %v4397
  %v4451 = vmul.f32 %v4398, %v4398
  %v4452 = vmul.f32 %v4399, %v4399
  %v4453 = vmul.f32 %v4400, %v4400
  %v4454 = vmul.f32 %v4401, %v4401
  %v4455 = vmul.f32 %v4402, %v4402
  %v4456 = vmul.f32 %v4403, %v4403
  %v4457 = vmul.f32 %v4404, %v4404
  %v4458 = vmul.f32 %v4405, %v4405
  %v4459 = vmul.f32 %v4406, %v3924
  %v4460 = vmul.f32 %v4407, %v3929
  %v4461 = vmul.f32 %v4408, %v3934
  %v4462 = vmul.f32 %v4409, %v3939
  %v4463 = vmul.f32 %v4410, %v3944
  %v4464 = vmul.f32 %v4411, %v3949
  %v4465 = vmul.f32 %v4412, %v3954
  %v4466 = vmul.f32 %v4413, %v3959
  %v4467 = vmul.f32 %v4414, %v3964
  %v4468 = vmul.f32 %v4415, %v3969
  %v4469 = vmul.f32 %v4416, %v3974
  %v4470 = vmul.f32 %v4417, %v3979
  %v4471 = vmul.f32 %v4418, %v3984
  %v4472 = vmul.f32 %v4419, %v3989
  %v4473 = vmul.f32 %v4420, %v3994
  %v4474 = vmul.f32 %v4421, %v3999
  %v4475 = vmul.f32 %v4422, %v4004
  %v4476 = vmul.f32 %v4423, %v4009
  %v4477 = vmul.f32 %v4424, %v4014
  %v4478 = vmul.f32 %v4425, %v4019
  %v4479 = vmul.f32 %v4426, %v4024
  %v4480 = vmul.f32 %v4427, %v4029
  %v4481 = vmul.f32 %v4428, %v4034
  %v4482 = vmul.f32 %v4429, %v4039
  %v4483 = vmul.f32 %v4430, %v4044
  %v4484 = vmul.f32 %v4431, %v4049
  %v4485 = vmul.f32 %v4432, %v4054
  %v4486 = vmul.f32 %v4433, %v4059
  %v4487 = vmul.f32 %v4434, %v4064
  %v4488 = vmul.f32 %v4435, %v4069
  %v4489 = vmul.f32 %v4436, %v4074
  %v4490 = vmul.f32 %v4437, %v4079
  %v4491 = vmul.f32 %v4438, %v4084
  %v4492 = vmul.f32 %v4439, %v4089
  %v4493 = vmul.f32 %v4440, %v4094
  %v4494 = vmul.f32 %v4441, %v4099
  %v4495 = vmul.f32 %v4442, %v4104
  %v4496 = vmul.f32 %v4443, %v4109
  %v4497 = vmul.f32 %v4444, %v4114
  %v4498 = vmul.f32 %v4445, %v4119
  %v4499 = vmul.f32 %v4446, %v4124
  %v4500 = vmul.f32 %v4447, %v4129
  %v4501 = vmul.f32 %v4448, %v4134
  %v4502 = vmul.f32 %v4449, %v4139
  %v4503 = vmul.f32 %v4450, %v4144
  %v4504 = vmul.f32 %v4451, %v4149
  %v4505 = vmul.f32 %v4452, %v4154
  %v4506 = vmul.f32 %v4453, %v4159
  %v4507 = vmul.f32 %v4454, %v4164
  %v4508 = vmul.f32 %v4455, %v4169
  %v4509 = vmul.f32 %v4456, %v4174
  %v4510 = vmul.f32 %v4457, %v4179
  %v4511 = vmul.f32 %v4458, %v4184
  %v4512 = vsel %vm4239, %v4459, 0.0
  %v4513 = vsel %vm4239, %v4460, 0.0
  %v4514 = vadd.f32 %v4512, %v4513
  %v4515 = vsel %vm4239, %v4461, 0.0
  %v4516 = vadd.f32 %v4514, %v4515
  %v4517 = vsel %vm4239, %v4462, 0.0
  %v4518 = vadd.f32 %v4516, %v4517
  %v4519 = vsel %vm4239, %v4463, 0.0
  %v4520 = vadd.f32 %v4518, %v4519
  %v4521 = vsel %vm4239, %v4464, 0.0
  %v4522 = vadd.f32 %v4520, %v4521
  %v4523 = vsel %vm4239, %v4465, 0.0
  %v4524 = vadd.f32 %v4522, %v4523
  %v4525 = vsel %vm4239, %v4466, 0.0
  %v4526 = vadd.f32 %v4524, %v4525
  %v4527 = vsel %vm4239, %v4467, 0.0
  %v4528 = vadd.f32 %v4526, %v4527
  %v4529 = vsel %vm4239, %v4468, 0.0
  %v4530 = vadd.f32 %v4528, %v4529
  %v4531 = vsel %vm4239, %v4469, 0.0
  %v4532 = vadd.f32 %v4530, %v4531
  %v4533 = vsel %vm4239, %v4470, 0.0
  %v4534 = vadd.f32 %v4532, %v4533
  %v4535 = vsel %vm4239, %v4471, 0.0
  %v4536 = vadd.f32 %v4534, %v4535
  %v4537 = vsel %vm4239, %v4472, 0.0
  %v4538 = vadd.f32 %v4536, %v4537
  %v4539 = vsel %vm4239, %v4473, 0.0
  %v4540 = vadd.f32 %v4538, %v4539
  %v4541 = vsel %vm4239, %v4474, 0.0
  %v4542 = vadd.f32 %v4540, %v4541
  %v4543 = vsel %vm4239, %v4475, 0.0
  %v4544 = vadd.f32 %v4542, %v4543
  %v4545 = vsel %vm4239, %v4476, 0.0
  %v4546 = vadd.f32 %v4544, %v4545
  %v4547 = vsel %vm4239, %v4477, 0.0
  %v4548 = vadd.f32 %v4546, %v4547
  %v4549 = vsel %vm4239, %v4478, 0.0
  %v4550 = vadd.f32 %v4548, %v4549
  %v4551 = vsel %vm4239, %v4479, 0.0
  %v4552 = vadd.f32 %v4550, %v4551
  %v4553 = vsel %vm4239, %v4480, 0.0
  %v4554 = vadd.f32 %v4552, %v4553
  %v4555 = vsel %vm4239, %v4481, 0.0
  %v4556 = vadd.f32 %v4554, %v4555
  %v4557 = vsel %vm4239, %v4482, 0.0
  %v4558 = vadd.f32 %v4556, %v4557
  %v4559 = vsel %vm4239, %v4483, 0.0
  %v4560 = vadd.f32 %v4558, %v4559
  %v4561 = vsel %vm4239, %v4484, 0.0
  %v4562 = vadd.f32 %v4560, %v4561
  %v4563 = vsel %vm4239, %v4485, 0.0
  %v4564 = vadd.f32 %v4562, %v4563
  %v4565 = vsel %vm4239, %v4486, 0.0
  %v4566 = vadd.f32 %v4564, %v4565
  %v4567 = vsel %vm4239, %v4487, 0.0
  %v4568 = vadd.f32 %v4566, %v4567
  %v4569 = vsel %vm4239, %v4488, 0.0
  %v4570 = vadd.f32 %v4568, %v4569
  %v4571 = vsel %vm4239, %v4489, 0.0
  %v4572 = vadd.f32 %v4570, %v4571
  %v4573 = vsel %vm4239, %v4490, 0.0
  %v4574 = vadd.f32 %v4572, %v4573
  %v4575 = vsel %vm4239, %v4491, 0.0
  %v4576 = vadd.f32 %v4574, %v4575
  %v4577 = vsel %vm4239, %v4492, 0.0
  %v4578 = vadd.f32 %v4576, %v4577
  %v4579 = vsel %vm4239, %v4493, 0.0
  %v4580 = vadd.f32 %v4578, %v4579
  %v4581 = vsel %vm4239, %v4494, 0.0
  %v4582 = vadd.f32 %v4580, %v4581
  %v4583 = vsel %vm4239, %v4495, 0.0
  %v4584 = vadd.f32 %v4582, %v4583
  %v4585 = vsel %vm4239, %v4496, 0.0
  %v4586 = vadd.f32 %v4584, %v4585
  %v4587 = vsel %vm4239, %v4497, 0.0
  %v4588 = vadd.f32 %v4586, %v4587
  %v4589 = vsel %vm4239, %v4498, 0.0
  %v4590 = vadd.f32 %v4588, %v4589
  %v4591 = vsel %vm4239, %v4499, 0.0
  %v4592 = vadd.f32 %v4590, %v4591
  %v4593 = vsel %vm4239, %v4500, 0.0
  %v4594 = vadd.f32 %v4592, %v4593
  %v4595 = vsel %vm4239, %v4501, 0.0
  %v4596 = vadd.f32 %v4594, %v4595
  %v4597 = vsel %vm4239, %v4502, 0.0
  %v4598 = vadd.f32 %v4596, %v4597
  %v4599 = vsel %vm4239, %v4503, 0.0
  %v4600 = vadd.f32 %v4598, %v4599
  %v4601 = vsel %vm4239, %v4504, 0.0
  %v4602 = vadd.f32 %v4600, %v4601
  %v4603 = vsel %vm4239, %v4505, 0.0
  %v4604 = vadd.f32 %v4602, %v4603
  %v4605 = vsel %vm4239, %v4506, 0.0
  %v4606 = vadd.f32 %v4604, %v4605
  %v4607 = vsel %vm4239, %v4507, 0.0
  %v4608 = vadd.f32 %v4606, %v4607
  %v4609 = vsel %vm4239, %v4508, 0.0
  %v4610 = vadd.f32 %v4608, %v4609
  %v4611 = vsel %vm4239, %v4509, 0.0
  %v4612 = vadd.f32 %v4610, %v4611
  %v4613 = vsel %vm4239, %v4510, 0.0
  %v4614 = vadd.f32 %v4612, %v4613
  %v4615 = vsel %vm4343, %v4511, 0.0
  %v4616 = vadd.f32 %v4614, %v4615
  %v4617 = vrot.slane %v4616, 4
  %v4618 = vadd.f32 %v4616, %v4617
  %v4619 = vrot.slane %v4618, 2
  %v4620 = vadd.f32 %v4618, %v4619
  %v4621 = vrot.slane %v4620, 1
  %v4622 = vadd.f32 %v4620, %v4621
  %v4623 = vmul.f32 %v4622, 0.0025510204
  %v4624 = vld [vmem:[%s2] sm:$0x1]
  %v4625 = vadd.f32 %v4623, 1e-05
  %v4626 = vrsqrt.pop %v4625
  %v4627 = vmul.f32 %v4624, %v4626
  %v4628 = vld [vmem:[%s3] sm:$0x1]
  %v4629 = vmul.f32 %v4352, %v4627
  %v4630 = vsub.f32 %v4628, %v4629
  %v4632 = vlaneseq
  %v4633 = vshrl.u32 %v4632, 7
  %v4634 = vsub.s32 0, %v4633
  %v4635 = vrot.slane %v4627, %v4634
  %v4637 = vmul.f32 %v3655, %v4635
  %v4638 = vmul.f32 %v3658, %v4635
  %v4639 = vmul.f32 %v3663, %v4635
  %v4640 = vmul.f32 %v3666, %v4635
  %v4641 = vmul.f32 %v3671, %v4635
  %v4642 = vmul.f32 %v3674, %v4635
  %v4643 = vmul.f32 %v3679, %v4635
  %v4644 = vmul.f32 %v3682, %v4635
  %v4645 = vmul.f32 %v3687, %v4635
  %v4646 = vmul.f32 %v3690, %v4635
  %v4647 = vmul.f32 %v3695, %v4635
  %v4648 = vmul.f32 %v3698, %v4635
  %v4649 = vmul.f32 %v3703, %v4635
  %v4650 = vmul.f32 %v3706, %v4635
  %v4651 = vmul.f32 %v3711, %v4635
  %v4652 = vmul.f32 %v3714, %v4635
  %v4653 = vmul.f32 %v3719, %v4635
  %v4654 = vmul.f32 %v3722, %v4635
  %v4655 = vmul.f32 %v3727, %v4635
  %v4656 = vmul.f32 %v3730, %v4635
  %v4657 = vmul.f32 %v3735, %v4635
  %v4658 = vmul.f32 %v3738, %v4635
  %v4659 = vmul.f32 %v3743, %v4635
  %v4660 = vmul.f32 %v3746, %v4635
  %v4661 = vmul.f32 %v3751, %v4635
  %v4662 = vmul.f32 %v3754, %v4635
  %v4663 = vmul.f32 %v3759, %v4635
  %v4664 = vmul.f32 %v3762, %v4635
  %v4665 = vmul.f32 %v3767, %v4635
  %v4666 = vmul.f32 %v3770, %v4635
  %v4667 = vmul.f32 %v3775, %v4635
  %v4668 = vmul.f32 %v3778, %v4635
  %v4669 = vmul.f32 %v3783, %v4635
  %v4670 = vmul.f32 %v3786, %v4635
  %v4671 = vmul.f32 %v3791, %v4635
  %v4672 = vmul.f32 %v3794, %v4635
  %v4673 = vmul.f32 %v3799, %v4635
  %v4674 = vmul.f32 %v3802, %v4635
  %v4675 = vmul.f32 %v3807, %v4635
  %v4676 = vmul.f32 %v3810, %v4635
  %v4677 = vmul.f32 %v3815, %v4635
  %v4678 = vmul.f32 %v3818, %v4635
  %v4679 = vmul.f32 %v3823, %v4635
  %v4680 = vmul.f32 %v3826, %v4635
  %v4681 = vmul.f32 %v3831, %v4635
  %v4682 = vmul.f32 %v3834, %v4635
  %v4683 = vmul.f32 %v3839, %v4635
  %v4684 = vmul.f32 %v3842, %v4635
  %v4685 = vmul.f32 %v3847, %v4635
  %v4686 = vmul.f32 %v3850, %v4635
  %v4687 = vmul.f32 %v3855, %v4635
  %v4688 = vmul.f32 %v3858, %v4635
  %v4689 = vmul.f32 %v3863, %v4635
  %v4691 = vlaneseq
  %v4692 = vshrl.u32 %v4691, 7
  %v4693 = vsub.s32 0, %v4692
  %v4694 = vrot.slane %v4630, %v4693
  %v4696 = vadd.f32 %v4637, %v4694
  %v4697 = vadd.f32 %v4638, %v4694
  %v4698 = vadd.f32 %v4639, %v4694
  %v4699 = vadd.f32 %v4640, %v4694
  %v4700 = vadd.f32 %v4641, %v4694
  %v4701 = vadd.f32 %v4642, %v4694
  %v4702 = vadd.f32 %v4643, %v4694
  %v4703 = vadd.f32 %v4644, %v4694
  %v4704 = vadd.f32 %v4645, %v4694
  %v4705 = vadd.f32 %v4646, %v4694
  %v4706 = vadd.f32 %v4647, %v4694
  %v4707 = vadd.f32 %v4648, %v4694
  %v4708 = vadd.f32 %v4649, %v4694
  %v4709 = vadd.f32 %v4650, %v4694
  %v4710 = vadd.f32 %v4651, %v4694
  %v4711 = vadd.f32 %v4652, %v4694
  %v4712 = vadd.f32 %v4653, %v4694
  %v4713 = vadd.f32 %v4654, %v4694
  %v4714 = vadd.f32 %v4655, %v4694
  %v4715 = vadd.f32 %v4656, %v4694
  %v4716 = vadd.f32 %v4657, %v4694
  %v4717 = vadd.f32 %v4658, %v4694
  %v4718 = vadd.f32 %v4659, %v4694
  %v4719 = vadd.f32 %v4660, %v4694
  %v4720 = vadd.f32 %v4661, %v4694
  %v4721 = vadd.f32 %v4662, %v4694
  %v4722 = vadd.f32 %v4663, %v4694
  %v4723 = vadd.f32 %v4664, %v4694
  %v4724 = vadd.f32 %v4665, %v4694
  %v4725 = vadd.f32 %v4666, %v4694
  %v4726 = vadd.f32 %v4667, %v4694
  %v4727 = vadd.f32 %v4668, %v4694
  %v4728 = vadd.f32 %v4669, %v4694
  %v4729 = vadd.f32 %v4670, %v4694
  %v4730 = vadd.f32 %v4671, %v4694
  %v4731 = vadd.f32 %v4672, %v4694
  %v4732 = vadd.f32 %v4673, %v4694
  %v4733 = vadd.f32 %v4674, %v4694
  %v4734 = vadd.f32 %v4675, %v4694
  %v4735 = vadd.f32 %v4676, %v4694
  %v4736 = vadd.f32 %v4677, %v4694
  %v4737 = vadd.f32 %v4678, %v4694
  %v4738 = vadd.f32 %v4679, %v4694
  %v4739 = vadd.f32 %v4680, %v4694
  %v4740 = vadd.f32 %v4681, %v4694
  %v4741 = vadd.f32 %v4682, %v4694
  %v4742 = vadd.f32 %v4683, %v4694
  %v4743 = vadd.f32 %v4684, %v4694
  %v4744 = vadd.f32 %v4685, %v4694
  %v4745 = vadd.f32 %v4686, %v4694
  %v4746 = vadd.f32 %v4687, %v4694
  %v4747 = vadd.f32 %v4688, %v4694
  %v4748 = vadd.f32 %v4689, %v4694
  %v4749 = vmax.f32 %v4696, 0.0
  %v4750 = vmax.f32 %v4697, 0.0
  %v4751 = vmax.f32 %v4698, 0.0
  %v4752 = vmax.f32 %v4699, 0.0
  %v4753 = vmax.f32 %v4700, 0.0
  %v4754 = vmax.f32 %v4701, 0.0
  %v4755 = vmax.f32 %v4702, 0.0
  %v4756 = vmax.f32 %v4703, 0.0
  %v4757 = vmax.f32 %v4704, 0.0
  %v4758 = vmax.f32 %v4705, 0.0
  %v4759 = vmax.f32 %v4706, 0.0
  %v4760 = vmax.f32 %v4707, 0.0
  %v4761 = vmax.f32 %v4708, 0.0
  %v4762 = vmax.f32 %v4709, 0.0
  %v4763 = vmax.f32 %v4710, 0.0
  %v4764 = vmax.f32 %v4711, 0.0
  %v4765 = vmax.f32 %v4712, 0.0
  %v4766 = vmax.f32 %v4713, 0.0
  %v4767 = vmax.f32 %v4714, 0.0
  %v4768 = vmax.f32 %v4715, 0.0
  %v4769 = vmax.f32 %v4716, 0.0
  %v4770 = vmax.f32 %v4717, 0.0
  %v4771 = vmax.f32 %v4718, 0.0
  %v4772 = vmax.f32 %v4719, 0.0
  %v4773 = vmax.f32 %v4720, 0.0
  %v4774 = vmax.f32 %v4721, 0.0
  %v4775 = vmax.f32 %v4722, 0.0
  %v4776 = vmax.f32 %v4723, 0.0
  %v4777 = vmax.f32 %v4724, 0.0
  %v4778 = vmax.f32 %v4725, 0.0
  %v4779 = vmax.f32 %v4726, 0.0
  %v4780 = vmax.f32 %v4727, 0.0
  %v4781 = vmax.f32 %v4728, 0.0
  %v4782 = vmax.f32 %v4729, 0.0
  %v4783 = vmax.f32 %v4730, 0.0
  %v4784 = vmax.f32 %v4731, 0.0
  %v4785 = vmax.f32 %v4732, 0.0
  %v4786 = vmax.f32 %v4733, 0.0
  %v4787 = vmax.f32 %v4734, 0.0
  %v4788 = vmax.f32 %v4735, 0.0
  %v4789 = vmax.f32 %v4736, 0.0
  %v4790 = vmax.f32 %v4737, 0.0
  %v4791 = vmax.f32 %v4738, 0.0
  %v4792 = vmax.f32 %v4739, 0.0
  %v4793 = vmax.f32 %v4740, 0.0
  %v4794 = vmax.f32 %v4741, 0.0
  %v4795 = vmax.f32 %v4742, 0.0
  %v4796 = vmax.f32 %v4743, 0.0
  %v4797 = vmax.f32 %v4744, 0.0
  %v4798 = vmax.f32 %v4745, 0.0
  %v4799 = vmax.f32 %v4746, 0.0
  %v4800 = vmax.f32 %v4747, 0.0
  %v4801 = vmax.f32 %v4748, 0.0
  %v4802 = vpack.c.bf16 %v4750, %v4749
  %v4803 = vpack.c.bf16 %v4752, %v4751
  %v4804 = vpack.c.bf16 %v4754, %v4753
  %v4805 = vpack.c.bf16 %v4756, %v4755
  %v4806 = vpack.c.bf16 %v4758, %v4757
  %v4807 = vpack.c.bf16 %v4760, %v4759
  %v4808 = vpack.c.bf16 %v4762, %v4761
  %v4809 = vpack.c.bf16 %v4764, %v4763
  %v4810 = vpack.c.bf16 %v4766, %v4765
  %v4811 = vpack.c.bf16 %v4768, %v4767
  %v4812 = vpack.c.bf16 %v4770, %v4769
  %v4813 = vpack.c.bf16 %v4772, %v4771
  %v4814 = vpack.c.bf16 %v4774, %v4773
  %v4815 = vpack.c.bf16 %v4776, %v4775
  %v4816 = vpack.c.bf16 %v4778, %v4777
  %v4817 = vpack.c.bf16 %v4780, %v4779
  %v4818 = vpack.c.bf16 %v4782, %v4781
  %v4819 = vpack.c.bf16 %v4784, %v4783
  %v4820 = vpack.c.bf16 %v4786, %v4785
  %v4821 = vpack.c.bf16 %v4788, %v4787
  %v4822 = vpack.c.bf16 %v4790, %v4789
  %v4823 = vpack.c.bf16 %v4792, %v4791
  %v4824 = vpack.c.bf16 %v4794, %v4793
  %v4825 = vpack.c.bf16 %v4796, %v4795
  %v4826 = vpack.c.bf16 %v4798, %v4797
  %v4827 = vpack.c.bf16 %v4800, %v4799
  %v4828 = vpack.c.bf16 %v4801, %v4801
  %v4856 = vunpack.c.l.b16 %v4802
  %v4857 = vunpack.c.h.b16 %v4802
  %v4858 = vunpack.c.l.b16 %v4803
  %v4859 = vunpack.c.h.b16 %v4803
  %v4860 = vunpack.c.l.b16 %v4804
  %v4861 = vunpack.c.h.b16 %v4804
  %v4862 = vunpack.c.l.b16 %v4805
  %v4863 = vunpack.c.h.b16 %v4805
  %v4864 = vunpack.c.l.b16 %v4806
  %v4865 = vunpack.c.h.b16 %v4806
  %v4866 = vunpack.c.l.b16 %v4807
  %v4867 = vunpack.c.h.b16 %v4807
  %v4868 = vunpack.c.l.b16 %v4808
  %v4869 = vunpack.c.h.b16 %v4808
  %v4870 = vunpack.c.l.b16 %v4809
  %v4871 = vunpack.c.h.b16 %v4809
  %v4872 = vunpack.c.l.b16 %v4810
  %v4873 = vunpack.c.h.b16 %v4810
  %v4874 = vunpack.c.l.b16 %v4811
  %v4875 = vunpack.c.h.b16 %v4811
  %v4876 = vunpack.c.l.b16 %v4812
  %v4877 = vunpack.c.h.b16 %v4812
  %v4878 = vunpack.c.l.b16 %v4813
  %v4879 = vunpack.c.h.b16 %v4813
  %v4880 = vunpack.c.l.b16 %v4814
  %v4881 = vunpack.c.h.b16 %v4814
  %v4882 = vunpack.c.l.b16 %v4815
  %v4883 = vunpack.c.h.b16 %v4815
  %v4884 = vunpack.c.l.b16 %v4816
  %v4885 = vunpack.c.h.b16 %v4816
  %v4886 = vunpack.c.l.b16 %v4817
  %v4887 = vunpack.c.h.b16 %v4817
  %v4888 = vunpack.c.l.b16 %v4818
  %v4889 = vunpack.c.h.b16 %v4818
  %v4890 = vunpack.c.l.b16 %v4819
  %v4891 = vunpack.c.h.b16 %v4819
  %v4892 = vunpack.c.l.b16 %v4820
  %v4893 = vunpack.c.h.b16 %v4820
  %v4894 = vunpack.c.l.b16 %v4821
  %v4895 = vunpack.c.h.b16 %v4821
  %v4896 = vunpack.c.l.b16 %v4822
  %v4897 = vunpack.c.h.b16 %v4822
  %v4898 = vunpack.c.l.b16 %v4823
  %v4899 = vunpack.c.h.b16 %v4823
  %v4900 = vunpack.c.l.b16 %v4824
  %v4901 = vunpack.c.h.b16 %v4824
  %v4902 = vunpack.c.l.b16 %v4825
  %v4903 = vunpack.c.h.b16 %v4825
  %v4904 = vunpack.c.l.b16 %v4826
  %v4905 = vunpack.c.h.b16 %v4826
  %v4906 = vunpack.c.l.b16 %v4827
  %v4907 = vunpack.c.h.b16 %v4827
  %v4908 = vunpack.c.l.b16 %v4828
  %v4909 = vpack.c.b16 %v4856, %v4856
  %v4910 = vpack.c.b16 %v4857, %v4857
  %v4911 = vpack.c.b16 %v4858, %v4858
  %v4912 = vpack.c.b16 %v4859, %v4859
  %v4913 = vpack.c.b16 %v4860, %v4860
  %v4914 = vpack.c.b16 %v4861, %v4861
  %v4915 = vpack.c.b16 %v4862, %v4862
  %v4916 = vpack.c.b16 %v4863, %v4863
  %v4917 = vpack.c.b16 %v4864, %v4864
  %v4918 = vpack.c.b16 %v4865, %v4865
  %v4919 = vpack.c.b16 %v4866, %v4866
  %v4920 = vpack.c.b16 %v4867, %v4867
  %v4921 = vpack.c.b16 %v4868, %v4868
  %v4922 = vpack.c.b16 %v4869, %v4869
  %v4923 = vpack.c.b16 %v4870, %v4870
  %v4924 = vpack.c.b16 %v4871, %v4871
  %v4925 = vpack.c.b16 %v4872, %v4872
  %v4926 = vpack.c.b16 %v4873, %v4873
  %v4927 = vpack.c.b16 %v4874, %v4874
  %v4928 = vpack.c.b16 %v4875, %v4875
  %v4929 = vpack.c.b16 %v4876, %v4876
  %v4930 = vpack.c.b16 %v4877, %v4877
  %v4931 = vpack.c.b16 %v4878, %v4878
  %v4932 = vpack.c.b16 %v4879, %v4879
  %v4933 = vpack.c.b16 %v4880, %v4880
  %v4934 = vpack.c.b16 %v4881, %v4881
  %v4935 = vpack.c.b16 %v4882, %v4882
  %v4936 = vpack.c.b16 %v4883, %v4883
  %v4937 = vpack.c.b16 %v4884, %v4884
  %v4938 = vpack.c.b16 %v4885, %v4885
  %v4939 = vpack.c.b16 %v4886, %v4886
  %v4940 = vpack.c.b16 %v4887, %v4887
  %v4941 = vpack.c.b16 %v4888, %v4888
  %v4942 = vpack.c.b16 %v4889, %v4889
  %v4943 = vpack.c.b16 %v4890, %v4890
  %v4944 = vpack.c.b16 %v4891, %v4891
  %v4945 = vpack.c.b16 %v4892, %v4892
  %v4946 = vpack.c.b16 %v4893, %v4893
  %v4947 = vpack.c.b16 %v4894, %v4894
  %v4948 = vpack.c.b16 %v4895, %v4895
  %v4949 = vpack.c.b16 %v4896, %v4896
  %v4950 = vpack.c.b16 %v4897, %v4897
  %v4951 = vpack.c.b16 %v4898, %v4898
  %v4952 = vpack.c.b16 %v4899, %v4899
  %v4953 = vpack.c.b16 %v4900, %v4900
  %v4954 = vpack.c.b16 %v4901, %v4901
  %v4955 = vpack.c.b16 %v4902, %v4902
  %v4956 = vpack.c.b16 %v4903, %v4903
  %v4957 = vpack.c.b16 %v4904, %v4904
  %v4958 = vpack.c.b16 %v4905, %v4905
  %v4959 = vpack.c.b16 %v4906, %v4906
  %v4960 = vpack.c.b16 %v4907, %v4907
  %v4961 = vpack.c.b16 %v4908, %v4908
  %5015 = vst.msk [vmem:[%s5] sm:$0xf] %vm4343, %v4909
  %5016 = vst.msk [vmem:[%s5 + $0x4] sm:$0xf] %vm4343, %v4910
  %5017 = vst.msk [vmem:[%s5 + $0x8] sm:$0xf] %vm4343, %v4911
  %5018 = vst.msk [vmem:[%s5 + $0xc] sm:$0xf] %vm4343, %v4912
  %5019 = vst.msk [vmem:[%s5 + $0x10] sm:$0xf] %vm4343, %v4913
  %5020 = vst.msk [vmem:[%s5 + $0x14] sm:$0xf] %vm4343, %v4914
  %5021 = vst.msk [vmem:[%s5 + $0x18] sm:$0xf] %vm4343, %v4915
  %5022 = vst.msk [vmem:[%s5 + $0x1c] sm:$0xf] %vm4343, %v4916
  %5023 = vst.msk [vmem:[%s5 + $0x20] sm:$0xf] %vm4343, %v4917
  %5024 = vst.msk [vmem:[%s5 + $0x24] sm:$0xf] %vm4343, %v4918
  %5025 = vst.msk [vmem:[%s5 + $0x28] sm:$0xf] %vm4343, %v4919
  %5026 = vst.msk [vmem:[%s5 + $0x2c] sm:$0xf] %vm4343, %v4920
  %5027 = vst.msk [vmem:[%s5 + $0x30] sm:$0xf] %vm4343, %v4921
  %5028 = vst.msk [vmem:[%s5 + $0x34] sm:$0xf] %vm4343, %v4922
  %5029 = vst.msk [vmem:[%s5 + $0x38] sm:$0xf] %vm4343, %v4923
  %5030 = vst.msk [vmem:[%s5 + $0x3c] sm:$0xf] %vm4343, %v4924
  %5031 = vst.msk [vmem:[%s5 + $0x40] sm:$0xf] %vm4343, %v4925
  %5032 = vst.msk [vmem:[%s5 + $0x44] sm:$0xf] %vm4343, %v4926
  %5033 = vst.msk [vmem:[%s5 + $0x48] sm:$0xf] %vm4343, %v4927
  %5034 = vst.msk [vmem:[%s5 + $0x4c] sm:$0xf] %vm4343, %v4928
  %5035 = vst.msk [vmem:[%s5 + $0x50] sm:$0xf] %vm4343, %v4929
  %5036 = vst.msk [vmem:[%s5 + $0x54] sm:$0xf] %vm4343, %v4930
  %5037 = vst.msk [vmem:[%s5 + $0x58] sm:$0xf] %vm4343, %v4931
  %5038 = vst.msk [vmem:[%s5 + $0x5c] sm:$0xf] %vm4343, %v4932
  %5039 = vst.msk [vmem:[%s5 + $0x60] sm:$0xf] %vm4343, %v4933
  %5040 = vst.msk [vmem:[%s5 + $0x64] sm:$0xf] %vm4343, %v4934
  %5041 = vst.msk [vmem:[%s5 + $0x68] sm:$0xf] %vm4343, %v4935
  %5042 = vst.msk [vmem:[%s5 + $0x6c] sm:$0xf] %vm4343, %v4936
  %5043 = vst.msk [vmem:[%s5 + $0x70] sm:$0xf] %vm4343, %v4937
  %5044 = vst.msk [vmem:[%s5 + $0x74] sm:$0xf] %vm4343, %v4938
  %5045 = vst.msk [vmem:[%s5 + $0x78] sm:$0xf] %vm4343, %v4939
  %5046 = vst.msk [vmem:[%s5 + $0x7c] sm:$0xf] %vm4343, %v4940
  %5047 = vst.msk [vmem:[%s5 + $0x80] sm:$0xf] %vm4343, %v4941
  %5048 = vst.msk [vmem:[%s5 + $0x84] sm:$0xf] %vm4343, %v4942
  %5049 = vst.msk [vmem:[%s5 + $0x88] sm:$0xf] %vm4343, %v4943
  %5050 = vst.msk [vmem:[%s5 + $0x8c] sm:$0xf] %vm4343, %v4944
  %5051 = vst.msk [vmem:[%s5 + $0x90] sm:$0xf] %vm4343, %v4945
  %5052 = vst.msk [vmem:[%s5 + $0x94] sm:$0xf] %vm4343, %v4946
  %5053 = vst.msk [vmem:[%s5 + $0x98] sm:$0xf] %vm4343, %v4947
  %5054 = vst.msk [vmem:[%s5 + $0x9c] sm:$0xf] %vm4343, %v4948
  %5055 = vst.msk [vmem:[%s5 + $0xa0] sm:$0xf] %vm4343, %v4949
  %5056 = vst.msk [vmem:[%s5 + $0xa4] sm:$0xf] %vm4343, %v4950
  %5057 = vst.msk [vmem:[%s5 + $0xa8] sm:$0xf] %vm4343, %v4951
  %5058 = vst.msk [vmem:[%s5 + $0xac] sm:$0xf] %vm4343, %v4952
  %5059 = vst.msk [vmem:[%s5 + $0xb0] sm:$0xf] %vm4343, %v4953
  %5060 = vst.msk [vmem:[%s5 + $0xb4] sm:$0xf] %vm4343, %v4954
  %5061 = vst.msk [vmem:[%s5 + $0xb8] sm:$0xf] %vm4343, %v4955
  %5062 = vst.msk [vmem:[%s5 + $0xbc] sm:$0xf] %vm4343, %v4956
  %5063 = vst.msk [vmem:[%s5 + $0xc0] sm:$0xf] %vm4343, %v4957
  %5064 = vst.msk [vmem:[%s5 + $0xc4] sm:$0xf] %vm4343, %v4958
  %5065 = vst.msk [vmem:[%s5 + $0xc8] sm:$0xf] %vm4343, %v4959
  %5066 = vst.msk [vmem:[%s5 + $0xcc] sm:$0xf] %vm4343, %v4960
  %vm5067 = vcmask 123904
  %5068 = vst.msk [vmem:[%s5 + $0xd0] sm:$0x3] %vm5067, %v4961
  // Predicated region
  $region22: #{cnnnet_forward.4} parent=0 // pred_check
    _
  $region23: #{cnnnet_forward.4} parent=0 // pred_check_branch
    %5070 = sbr.rel (0) target = $region25
  $region24: #{cnnnet_forward.4} parent=0 // pred_region
    _
  $region25: #{cnnnet_forward.4} parent=0 // pred_fallthru
    _
  // Predicated region
  $region26: #{cnnnet_forward.4} parent=0 // pred_check
    _
  $region27: #{cnnnet_forward.4} parent=0 // pred_check_branch
    %5072 = sbr.rel (0) target = $region29
  $region28: #{cnnnet_forward.4} parent=0 // pred_region
    _
  $region29: #{cnnnet_forward.4} parent=0 // pred_fallthru
    _

// kernel: cnnnet_forward.7
$region0: #{cnnnet_forward.7}
  #allocation0 [shape = 'u32[]', space=smem, size = 0x4, offset = 0x4, fixed_abs, tag = 'smem constant byte address 0x4 - core index']
  #allocation1 [shape = 'u32[144,128]{1,0:T(1,128)}', space=vmem, size = 0x12000, scoped, tag = 'internal scratch']
  #allocation2 [shape = 'bf16[8,256]{1,0:T(8,128)(2,1)}', space=vmem, size = 0x1000, scoped, tag = 'scratch operand']
  #allocation3 [shape = 'bf16[8,64]{1,0:T(8,128)(2,1)}', space=vmem, size = 0x800, scoped, tag = 'scratch operand']
  #allocation4 [shape = 'bf16[2,256]{1,0:T(2,128)(2,1)}', space=vmem, size = 0x400, scoped, tag = 'scratch operand']
  %s0 = inlined_call_operand.vmem [shape: bf16[2,2,8,64], index: 0, kind: input, shape index: {}]
  %s1 = inlined_call_operand.vmem [shape: bf16[256,64], index: 1, kind: input, shape index: {}]
  %s2 = inlined_call_operand.vmem [shape: f32[1,64], index: 2, kind: input, shape index: {}]
  %s3 = inlined_call_operand.vmem [shape: f32[1,64], index: 3, kind: input, shape index: {}]
  %s4 = inlined_call_operand.vmem [shape: bf16[256,128], index: 4, kind: input, shape index: {}]
  %s5 = inlined_call_operand.vmem [shape: f32[1,128], index: 5, kind: input, shape index: {}]
  %s6 = inlined_call_operand.vmem [shape: bf16[128,128], index: 6, kind: input, shape index: {}]
  %s7 = inlined_call_operand.vmem [shape: f32[1,128], index: 7, kind: input, shape index: {}]
  %s8 = inlined_call_operand.hbm [shape: f32[2,128], index: 8, kind: output, shape index: {}]
  %s9 = sld [smem:[#allocation0]]
  $region42: #{cnnnet_forward.7} parent=0
    _
  %s11 = ssub.s32 1, %s9
  %s12 = scalar_select 0, %s11, %s9
  $region1: #{cnnnet_forward.7} parent=0
    #allocation5 [shape = 'u8[1024]{0}', space=vmem, size = 0x400, scoped, tag = 'output window, operand 0, single buffered']
    #allocation6 [shape = 's32[1]{0}', space=sflag, size = 0x4, scoped, tag = 'scoped memory for cnnnet_forward.7']
    %13 = vsyncpa [#allocation6], 0
    // Predicated region
    $region2: #{cnnnet_forward.7} parent=1 // pred_check
      _
    $region3: #{cnnnet_forward.7} parent=1 // pred_check_branch
      %15 = sbr.rel (0) target = $region5
    $region4: #{cnnnet_forward.7} parent=1 // pred_region
      _
    $region5: #{cnnnet_forward.7} parent=1 // pred_fallthru
      _
    // Predicated region
    $region6: #{cnnnet_forward.7} parent=1 // pred_check
      _
    $region7: #{cnnnet_forward.7} parent=1 // pred_check_branch
      %17 = sbr.rel (0) target = $region9
    $region8: #{cnnnet_forward.7} parent=1 // pred_region
      _
    $region9: #{cnnnet_forward.7} parent=1 // pred_fallthru
      _
    // Predicated region
    $region10: #{cnnnet_forward.7} parent=1 // pred_check
      _
    $region11: #{cnnnet_forward.7} parent=1 // pred_check_branch
      %19 = sbr.rel (0) target = $region13
    $region12: #{cnnnet_forward.7} parent=1 // pred_region
      _
    $region13: #{cnnnet_forward.7} parent=1 // pred_fallthru
      _
    // Predicated region
    $region14: #{cnnnet_forward.7} parent=1 // pred_check
      _
    $region15: #{cnnnet_forward.7} parent=1 // pred_check_branch
      %21 = sbr.rel (0) target = $region17
    $region16: #{cnnnet_forward.7} parent=1 // pred_region
      _
    $region17: #{cnnnet_forward.7} parent=1 // pred_fallthru
      _
    // Predicated region
    $region18: #{cnnnet_forward.7} parent=1 // pred_check
      _
    $region19: #{cnnnet_forward.7} parent=1 // pred_check_branch
      %23 = sbr.rel (0) target = $region21
    $region20: #{cnnnet_forward.7} parent=1 // pred_region
      _
    $region21: #{cnnnet_forward.7} parent=1 // pred_fallthru
      _
    // Predicated region
    $region22: #{cnnnet_forward.7} parent=1 // pred_check
      _
    $region23: #{cnnnet_forward.7} parent=1 // pred_check_branch
      %25 = sbr.rel (0) target = $region25
    $region24: #{cnnnet_forward.7} parent=1 // pred_region
      _
    $region25: #{cnnnet_forward.7} parent=1 // pred_fallthru
      _
    // Predicated region
    $region26: #{cnnnet_forward.7} parent=1 // pred_check
      _
    $region27: #{cnnnet_forward.7} parent=1 // pred_check_branch
      %27 = sbr.rel (0) target = $region29
    $region28: #{cnnnet_forward.7} parent=1 // pred_region
      _
    $region29: #{cnnnet_forward.7} parent=1 // pred_fallthru
      _
    // Predicated region
    $region30: #{cnnnet_forward.7} parent=1 // pred_check
      _
    $region31: #{cnnnet_forward.7} parent=1 // pred_check_branch
      %29 = sbr.rel (0) target = $region33
    $region32: #{cnnnet_forward.7} parent=1 // pred_region
      _
    $region33: #{cnnnet_forward.7} parent=1 // pred_fallthru
      _
    %v31 = vld [vmem:[%s0] sm:$0xf]
    %vm32 = vcmask 519168
    %33 = vst.msk [vmem:[#allocation2] sm:$0xf] %vm32, %v31
    %s34 = scalar_lea.vmem %s0, 4
    %v35 = vld [vmem:[%s34] sm:$0xf]
    %37 = vrot.lane.b32.xlu0 %v35, 64
    %v38 = vpop.permute.xlu0 %37
    %vm40 = vcmask 1043968
    %41 = vst.msk [vmem:[#allocation2] sm:$0xf] %vm40, %v38
    %s42 = scalar_lea.vmem %s0, 8
    %v43 = vld [vmem:[%s42] sm:$0xf]
    %44 = vst.msk [vmem:[#allocation2 + $0x4] sm:$0xf] %vm32, %v43
    %s45 = scalar_lea.vmem %s0, 12
    %v46 = vld [vmem:[%s45] sm:$0xf]
    %48 = vrot.lane.b32.xlu0 %v46, 64
    %v49 = vpop.permute.xlu0 %48
    %51 = vst.msk [vmem:[#allocation2 + $0x4] sm:$0xf] %vm40, %v49
    %v52 = vld [vmem:[#allocation2] sm:$0xff]
    %v53 = vld [vmem:[%s1] sm:$0xf]
    %v54 = vld [vmem:[%s1 + $0x4] sm:$0xf]
    %v55 = vld [vmem:[%s1 + $0x8] sm:$0xf]
    %v56 = vld [vmem:[%s1 + $0xc] sm:$0xf]
    %v57 = vld [vmem:[%s1 + $0x10] sm:$0xf]
    %v58 = vld [vmem:[%s1 + $0x14] sm:$0xf]
    %v59 = vld [vmem:[%s1 + $0x18] sm:$0xf]
    %v60 = vld [vmem:[%s1 + $0x1c] sm:$0xf]
    %v61 = vld [vmem:[%s1 + $0x20] sm:$0xf]
    %v62 = vld [vmem:[%s1 + $0x24] sm:$0xf]
    %v63 = vld [vmem:[%s1 + $0x28] sm:$0xf]
    %v64 = vld [vmem:[%s1 + $0x2c] sm:$0xf]
    %v65 = vld [vmem:[%s1 + $0x30] sm:$0xf]
    %v66 = vld [vmem:[%s1 + $0x34] sm:$0xf]
    %v67 = vld [vmem:[%s1 + $0x38] sm:$0xf]
    %v68 = vld [vmem:[%s1 + $0x3c] sm:$0xf]
    %v69 = vld [vmem:[%s1 + $0x40] sm:$0xf]
    %v70 = vld [vmem:[%s1 + $0x44] sm:$0xf]
    %v71 = vld [vmem:[%s1 + $0x48] sm:$0xf]
    %v72 = vld [vmem:[%s1 + $0x4c] sm:$0xf]
    %v73 = vld [vmem:[%s1 + $0x50] sm:$0xf]
    %v74 = vld [vmem:[%s1 + $0x54] sm:$0xf]
    %v75 = vld [vmem:[%s1 + $0x58] sm:$0xf]
    %v76 = vld [vmem:[%s1 + $0x5c] sm:$0xf]
    %v77 = vld [vmem:[%s1 + $0x60] sm:$0xf]
    %v78 = vld [vmem:[%s1 + $0x64] sm:$0xf]
    %v79 = vld [vmem:[%s1 + $0x68] sm:$0xf]
    %v80 = vld [vmem:[%s1 + $0x6c] sm:$0xf]
    %v81 = vld [vmem:[%s1 + $0x70] sm:$0xf]
    %v82 = vld [vmem:[%s1 + $0x74] sm:$0xf]
    %v83 = vld [vmem:[%s1 + $0x78] sm:$0xf]
    %v84 = vld [vmem:[%s1 + $0x7c] sm:$0xf]
    %v86 = vunpack.c.l.b16 %v52
    %v87 = vunpack.c.h.b16 %v52
    %v88 = vpack.c.b16 %v86, %v86
    %v89 = vpack.c.b16 %v87, %v87
    %v124 = vunpack.c.l.b16 %v53
    %v125 = vunpack.c.l.b16 %v54
    %v126 = vunpack.c.l.b16 %v55
    %v127 = vunpack.c.l.b16 %v56
    %v128 = vunpack.c.l.b16 %v57
    %v129 = vunpack.c.l.b16 %v58
    %v130 = vunpack.c.l.b16 %v59
    %v131 = vunpack.c.l.b16 %v60
    %v132 = vunpack.c.l.b16 %v61
    %v133 = vunpack.c.l.b16 %v62
    %v134 = vunpack.c.l.b16 %v63
    %v135 = vunpack.c.l.b16 %v64
    %v136 = vunpack.c.l.b16 %v65
    %v137 = vunpack.c.l.b16 %v66
    %v138 = vunpack.c.l.b16 %v67
    %v139 = vunpack.c.l.b16 %v68
    %v140 = vunpack.c.l.b16 %v69
    %v141 = vunpack.c.l.b16 %v70
    %v142 = vunpack.c.l.b16 %v71
    %v143 = vunpack.c.l.b16 %v72
    %v144 = vunpack.c.l.b16 %v73
    %v145 = vunpack.c.l.b16 %v74
    %v146 = vunpack.c.l.b16 %v75
    %v147 = vunpack.c.l.b16 %v76
    %v148 = vunpack.c.l.b16 %v77
    %v149 = vunpack.c.l.b16 %v78
    %v150 = vunpack.c.l.b16 %v79
    %v151 = vunpack.c.l.b16 %v80
    %v152 = vunpack.c.l.b16 %v81
    %v153 = vunpack.c.l.b16 %v82
    %v154 = vunpack.c.l.b16 %v83
    %v155 = vunpack.c.l.b16 %v84
    %v156 = vpack.c.b16 %v125, %v124
    %v157 = vpack.c.b16 %v127, %v126
    %v158 = vpack.c.b16 %v129, %v128
    %v159 = vpack.c.b16 %v131, %v130
    %v160 = vpack.c.b16 %v133, %v132
    %v161 = vpack.c.b16 %v135, %v134
    %v162 = vpack.c.b16 %v137, %v136
    %v163 = vpack.c.b16 %v139, %v138
    %v164 = vpack.c.b16 %v141, %v140
    %v165 = vpack.c.b16 %v143, %v142
    %v166 = vpack.c.b16 %v145, %v144
    %v167 = vpack.c.b16 %v147, %v146
    %v168 = vpack.c.b16 %v149, %v148
    %v169 = vpack.c.b16 %v151, %v150
    %v170 = vpack.c.b16 %v153, %v152
    %v171 = vpack.c.b16 %v155, %v154
    %188 = vmatprep.subr.bf16.mxu0 0
    %189 = vmatpush1.bf16.msra.mxu0 %v156
    %190 = vmatprep.subr.bf16.mxu0 0
    %191 = vmatpush1.bf16.msra.mxu0 %v157
    %192 = vmatprep.subr.bf16.mxu0 0
    %193 = vmatpush1.bf16.msra.mxu0 %v158
    %194 = vmatprep.subr.bf16.mxu0 0
    %195 = vmatpush1.bf16.msra.mxu0 %v159
    %196 = vmatprep.subr.bf16.mxu0 0
    %197 = vmatpush1.bf16.msra.mxu0 %v160
    %198 = vmatprep.subr.bf16.mxu0 0
    %199 = vmatpush1.bf16.msra.mxu0 %v161
    %200 = vmatprep.subr.bf16.mxu0 0
    %201 = vmatpush1.bf16.msra.mxu0 %v162
    %202 = vmatprep.subr.bf16.mxu0 0
    %203 = vmatpush1.bf16.msra.mxu0 %v163
    %204 = vmatprep.subr.bf16.mxu0 0
    %205 = vmatpush1.bf16.msra.mxu0 %v164
    %206 = vmatprep.subr.bf16.mxu0 0
    %207 = vmatpush1.bf16.msra.mxu0 %v165
    %208 = vmatprep.subr.bf16.mxu0 0
    %209 = vmatpush1.bf16.msra.mxu0 %v166
    %210 = vmatprep.subr.bf16.mxu0 0
    %211 = vmatpush1.bf16.msra.mxu0 %v167
    %212 = vmatprep.subr.bf16.mxu0 0
    %213 = vmatpush1.bf16.msra.mxu0 %v168
    %214 = vmatprep.subr.bf16.mxu0 0
    %215 = vmatpush1.bf16.msra.mxu0 %v169
    %216 = vmatprep.subr.bf16.mxu0 0
    %217 = vmatpush1.bf16.msra.mxu0 %v170
    %218 = vmatprep.subr.bf16.mxu0 0
    %219 = vmatpush1.bf16.msra.mxu0 %v171
    %220 = vmatprep.mubr.bf16.mxu0 %v89
    %221 = vmatmul.mubr.bf16.gmra.mrb[0].mxu0 %v88
    %v222 = vpop.f32.mrb[0].mxu0
    %v223 = vadd.f32 0.0, %v222
    %v224 = vpop.f32.mrb[0].mxu0
    %v225 = vpop.f32.mrb[0].mxu0
    %v226 = vpop.f32.mrb[0].mxu0
    %227 = vdwg.mxu0
    %vm228 = vcmask 523264
    %v229 = vsel %vm228, %v223, 0.0
    %v230 = vrot.slane %v229, 4
    %v231 = vadd.f32 %v229, %v230
    %v232 = vrot.slane %v231, 2
    %v233 = vadd.f32 %v231, %v232
    %v234 = vrot.slane %v233, 1
    %v235 = vadd.f32 %v233, %v234
    %v236 = vrcp.pop 8.0
    %v237 = vmul.f32 %v235, %v236
    %v238 = vsub.f32 %v223, %v237
    %v239 = vmul.f32 %v238, %v238
    %v240 = vsel %vm228, %v239, 0.0
    %v241 = vrot.slane %v240, 4
    %v242 = vadd.f32 %v240, %v241
    %v243 = vrot.slane %v242, 2
    %v244 = vadd.f32 %v242, %v243
    %v245 = vrot.slane %v244, 1
    %v246 = vadd.f32 %v244, %v245
    %v247 = vmul.f32 %v246, %v236
    %v248 = vld [vmem:[%s2] sm:$0x1]
    %v249 = vadd.f32 %v247, 1e-05
    %v250 = vrsqrt.pop %v249
    %v251 = vmul.f32 %v248, %v250
    %v252 = vld [vmem:[%s3] sm:$0x1]
    %v253 = vmul.f32 %v237, %v251
    %v254 = vsub.f32 %v252, %v253
    %v256 = vlaneseq
    %v257 = vshrl.u32 %v256, 7
    %v258 = vsub.s32 0, %v257
    %v259 = vrot.slane %v251, %v258
    %v261 = vmul.f32 %v223, %v259
    %v263 = vlaneseq
    %v264 = vshrl.u32 %v263, 7
    %v265 = vsub.s32 0, %v264
    %v266 = vrot.slane %v254, %v265
    %v268 = vadd.f32 %v261, %v266
    %v269 = vmax.f32 %v268, 0.0
    %v270 = vpack.c.bf16 %v269, %v269
    %271 = vst.msk [vmem:[#allocation3] sm:$0xf] %vm32, %v270
    %v272 = vld [vmem:[#allocation3] sm:$0x1]
    %vm273 = vcmask 516096
    %274 = vst.msk [vmem:[#allocation4] sm:$0x1] %vm273, %v272
    %v275 = vld [vmem:[#allocation3] sm:$0x2]
    %v278 = vunpack.c.l.s4 1966171168
    %v279 = vunpack.c.0.s8 %v278
    %v280 = vlaneseq
    %v281 = vshrl.u32 %v280, 7
    %v282 = vsub.s32 %v279, %v281
    %v283 = vrot.slane %v275, %v282
    %v284 = vcombine.high %v283, %v283
    %v286 = vunpack.c.l.s4 1966171168
    %v287 = vunpack.c.0.s8 %v286
    %v288 = vlaneseq
    %v289 = vshrl.u32 %v288, 7
    %v290 = vsub.s32 %v287, %v289
    %v291 = vrot.slane %v284, %v290
    %292 = vrot.lane.b32.xlu0 %v291, 64
    %v293 = vpop.permute.xlu0 %292
    %vm295 = vcmask 1040896
    %296 = vst.msk [vmem:[#allocation4] sm:$0x1] %vm295, %v293
    %v297 = vld [vmem:[#allocation3] sm:$0x4]
    %v300 = vunpack.c.l.s4 1966171168
    %v301 = vunpack.c.0.s8 %v300
    %v302 = vlaneseq
    %v303 = vshrl.u32 %v302, 7
    %v304 = vsub.s32 %v301, %v303
    %v305 = vrot.slane %v297, %v304
    %v307 = vunpack.c.l.s4 1966171168
    %v308 = vunpack.c.0.s8 %v307
    %v309 = vlaneseq
    %v310 = vshrl.u32 %v309, 7
    %v311 = vsub.s32 %v308, %v310
    %v312 = vrot.slane %v305, %v311
    %v313 = vcombine.high %v312, %v312
    %315 = vst.msk [vmem:[#allocation4 + $0x1] sm:$0x1] %vm273, %v313
    %v316 = vld [vmem:[#allocation3] sm:$0x8]
    %v319 = vunpack.c.l.s4 1966171168
    %v320 = vunpack.c.0.s8 %v319
    %v321 = vlaneseq
    %v322 = vshrl.u32 %v321, 7
    %v323 = vsub.s32 %v320, %v322
    %v324 = vrot.slane %v316, %v323
    %v325 = vcombine.high %v324, %v324
    %v327 = vunpack.c.l.s4 1966171168
    %v328 = vunpack.c.0.s8 %v327
    %v329 = vlaneseq
    %v330 = vshrl.u32 %v329, 7
    %v331 = vsub.s32 %v328, %v330
    %v332 = vrot.slane %v325, %v331
    %v333 = vcombine.high %v332, %v332
    %334 = vrot.lane.b32.xlu0 %v333, 64
    %v335 = vpop.permute.xlu0 %334
    %337 = vst.msk [vmem:[#allocation4 + $0x1] sm:$0x1] %vm295, %v335
    %v338 = vld [vmem:[#allocation4] sm:$0x3]
    %v339 = vld [vmem:[%s4] sm:$0xf]
    %v340 = vld [vmem:[%s4 + $0x4] sm:$0xf]
    %v341 = vld [vmem:[%s4 + $0x8] sm:$0xf]
    %v342 = vld [vmem:[%s4 + $0xc] sm:$0xf]
    %v343 = vld [vmem:[%s4 + $0x10] sm:$0xf]
    %v344 = vld [vmem:[%s4 + $0x14] sm:$0xf]
    %v345 = vld [vmem:[%s4 + $0x18] sm:$0xf]
    %v346 = vld [vmem:[%s4 + $0x1c] sm:$0xf]
    %v347 = vld [vmem:[%s4 + $0x20] sm:$0xf]
    %v348 = vld [vmem:[%s4 + $0x24] sm:$0xf]
    %v349 = vld [vmem:[%s4 + $0x28] sm:$0xf]
    %v350 = vld [vmem:[%s4 + $0x2c] sm:$0xf]
    %v351 = vld [vmem:[%s4 + $0x30] sm:$0xf]
    %v352 = vld [vmem:[%s4 + $0x34] sm:$0xf]
    %v353 = vld [vmem:[%s4 + $0x38] sm:$0xf]
    %v354 = vld [vmem:[%s4 + $0x3c] sm:$0xf]
    %v355 = vld [vmem:[%s4 + $0x40] sm:$0xf]
    %v356 = vld [vmem:[%s4 + $0x44] sm:$0xf]
    %v357 = vld [vmem:[%s4 + $0x48] sm:$0xf]
    %v358 = vld [vmem:[%s4 + $0x4c] sm:$0xf]
    %v359 = vld [vmem:[%s4 + $0x50] sm:$0xf]
    %v360 = vld [vmem:[%s4 + $0x54] sm:$0xf]
    %v361 = vld [vmem:[%s4 + $0x58] sm:$0xf]
    %v362 = vld [vmem:[%s4 + $0x5c] sm:$0xf]
    %v363 = vld [vmem:[%s4 + $0x60] sm:$0xf]
    %v364 = vld [vmem:[%s4 + $0x64] sm:$0xf]
    %v365 = vld [vmem:[%s4 + $0x68] sm:$0xf]
    %v366 = vld [vmem:[%s4 + $0x6c] sm:$0xf]
    %v367 = vld [vmem:[%s4 + $0x70] sm:$0xf]
    %v368 = vld [vmem:[%s4 + $0x74] sm:$0xf]
    %v369 = vld [vmem:[%s4 + $0x78] sm:$0xf]
    %v370 = vld [vmem:[%s4 + $0x7c] sm:$0xf]
    %v371 = vld [vmem:[%s5] sm:$0x1]
    %v373 = vlaneseq
    %v374 = vshrl.u32 %v373, 7
    %v375 = vsub.s32 0, %v374
    %v376 = vrot.slane %v371, %v375
    %v380 = vunpack.c.l.s4 1966171168
    %v381 = vunpack.c.0.s8 %v380
    %v382 = vlaneseq
    %v383 = vshrl.u32 %v382, 7
    %v384 = vsub.s32 %v381, %v383
    %v385 = vrot.slane %v338, %v384
    %v386 = vcombine.high %v385, %v385
    %v388 = vunpack.c.l.s4 1966171168
    %v389 = vunpack.c.0.s8 %v388
    %v390 = vlaneseq
    %v391 = vshrl.u32 %v390, 7
    %v392 = vsub.s32 %v389, %v391
    %v393 = vrot.slane %v385, %v392
    %v395 = vunpack.c.l.s4 1966171168
    %v396 = vunpack.c.0.s8 %v395
    %v397 = vlaneseq
    %v398 = vshrl.u32 %v397, 7
    %v399 = vsub.s32 %v396, %v398
    %v400 = vrot.slane %v386, %v399
    %v435 = vunpack.c.l.b16 %v339
    %v436 = vunpack.c.l.b16 %v340
    %v437 = vunpack.c.l.b16 %v341
    %v438 = vunpack.c.l.b16 %v342
    %v439 = vunpack.c.l.b16 %v343
    %v440 = vunpack.c.l.b16 %v344
    %v441 = vunpack.c.l.b16 %v345
    %v442 = vunpack.c.l.b16 %v346
    %v443 = vunpack.c.l.b16 %v347
    %v444 = vunpack.c.l.b16 %v348
    %v445 = vunpack.c.l.b16 %v349
    %v446 = vunpack.c.l.b16 %v350
    %v447 = vunpack.c.l.b16 %v351
    %v448 = vunpack.c.l.b16 %v352
    %v449 = vunpack.c.l.b16 %v353
    %v450 = vunpack.c.l.b16 %v354
    %v451 = vunpack.c.l.b16 %v355
    %v452 = vunpack.c.l.b16 %v356
    %v453 = vunpack.c.l.b16 %v357
    %v454 = vunpack.c.l.b16 %v358
    %v455 = vunpack.c.l.b16 %v359
    %v456 = vunpack.c.l.b16 %v360
    %v457 = vunpack.c.l.b16 %v361
    %v458 = vunpack.c.l.b16 %v362
    %v459 = vunpack.c.l.b16 %v363
    %v460 = vunpack.c.l.b16 %v364
    %v461 = vunpack.c.l.b16 %v365
    %v462 = vunpack.c.l.b16 %v366
    %v463 = vunpack.c.l.b16 %v367
    %v464 = vunpack.c.l.b16 %v368
    %v465 = vunpack.c.l.b16 %v369
    %v466 = vunpack.c.l.b16 %v370
    %v467 = vpack.c.b16 %v436, %v435
    %v468 = vpack.c.b16 %v438, %v437
    %v469 = vpack.c.b16 %v440, %v439
    %v470 = vpack.c.b16 %v442, %v441
    %v471 = vpack.c.b16 %v444, %v443
    %v472 = vpack.c.b16 %v446, %v445
    %v473 = vpack.c.b16 %v448, %v447
    %v474 = vpack.c.b16 %v450, %v449
    %v475 = vpack.c.b16 %v452, %v451
    %v476 = vpack.c.b16 %v454, %v453
    %v477 = vpack.c.b16 %v456, %v455
    %v478 = vpack.c.b16 %v458, %v457
    %v479 = vpack.c.b16 %v460, %v459
    %v480 = vpack.c.b16 %v462, %v461
    %v481 = vpack.c.b16 %v464, %v463
    %v482 = vpack.c.b16 %v466, %v465
    %499 = vmatprep.subr.bf16.mxu0 0
    %500 = vmatpush1.bf16.msra.mxu0 %v467
    %501 = vmatprep.subr.bf16.mxu0 0
    %502 = vmatpush1.bf16.msra.mxu0 %v468
    %503 = vmatprep.subr.bf16.mxu0 0
    %504 = vmatpush1.bf16.msra.mxu0 %v469
    %505 = vmatprep.subr.bf16.mxu0 0
    %506 = vmatpush1.bf16.msra.mxu0 %v470
    %507 = vmatprep.subr.bf16.mxu0 0
    %508 = vmatpush1.bf16.msra.mxu0 %v471
    %509 = vmatprep.subr.bf16.mxu0 0
    %510 = vmatpush1.bf16.msra.mxu0 %v472
    %511 = vmatprep.subr.bf16.mxu0 0
    %512 = vmatpush1.bf16.msra.mxu0 %v473
    %513 = vmatprep.subr.bf16.mxu0 0
    %514 = vmatpush1.bf16.msra.mxu0 %v474
    %515 = vmatprep.subr.bf16.mxu0 0
    %516 = vmatpush1.bf16.msra.mxu0 %v475
    %517 = vmatprep.subr.bf16.mxu0 0
    %518 = vmatpush1.bf16.msra.mxu0 %v476
    %519 = vmatprep.subr.bf16.mxu0 0
    %520 = vmatpush1.bf16.msra.mxu0 %v477
    %521 = vmatprep.subr.bf16.mxu0 0
    %522 = vmatpush1.bf16.msra.mxu0 %v478
    %523 = vmatprep.subr.bf16.mxu0 0
    %524 = vmatpush1.bf16.msra.mxu0 %v479
    %525 = vmatprep.subr.bf16.mxu0 0
    %526 = vmatpush1.bf16.msra.mxu0 %v480
    %527 = vmatprep.subr.bf16.mxu0 0
    %528 = vmatpush1.bf16.msra.mxu0 %v481
    %529 = vmatprep.subr.bf16.mxu0 0
    %530 = vmatpush1.bf16.msra.mxu0 %v482
    %531 = vmatprep.mubr.bf16.mxu0 %v400
    %532 = vmatmul.mubr.bf16.gmra.mrb[0].mxu0 %v393
    %v533 = vpop.f32.mrb[0].mxu0
    %v534 = vadd.f32 %v376, %v533
    %v535 = vpop.f32.mrb[0].mxu0
    %v536 = vpop.f32.mrb[0].mxu0
    %v537 = vpop.f32.mrb[0].mxu0
    %538 = vdwg.mxu0
    %v539 = vpack.c.bf16 %v534, %v534
    %v540 = vld [vmem:[%s6] sm:$0xf]
    %v541 = vld [vmem:[%s6 + $0x4] sm:$0xf]
    %v542 = vld [vmem:[%s6 + $0x8] sm:$0xf]
    %v543 = vld [vmem:[%s6 + $0xc] sm:$0xf]
    %v544 = vld [vmem:[%s6 + $0x10] sm:$0xf]
    %v545 = vld [vmem:[%s6 + $0x14] sm:$0xf]
    %v546 = vld [vmem:[%s6 + $0x18] sm:$0xf]
    %v547 = vld [vmem:[%s6 + $0x1c] sm:$0xf]
    %v548 = vld [vmem:[%s6 + $0x20] sm:$0xf]
    %v549 = vld [vmem:[%s6 + $0x24] sm:$0xf]
    %v550 = vld [vmem:[%s6 + $0x28] sm:$0xf]
    %v551 = vld [vmem:[%s6 + $0x2c] sm:$0xf]
    %v552 = vld [vmem:[%s6 + $0x30] sm:$0xf]
    %v553 = vld [vmem:[%s6 + $0x34] sm:$0xf]
    %v554 = vld [vmem:[%s6 + $0x38] sm:$0xf]
    %v555 = vld [vmem:[%s6 + $0x3c] sm:$0xf]
    %v556 = vld [vmem:[%s7] sm:$0x1]
    %v558 = vlaneseq
    %v559 = vshrl.u32 %v558, 7
    %v560 = vsub.s32 0, %v559
    %v561 = vrot.slane %v556, %v560
    %v579 = vunpack.c.l.b16 %v540
    %v580 = vunpack.c.l.b16 %v541
    %v581 = vunpack.c.l.b16 %v542
    %v582 = vunpack.c.l.b16 %v543
    %v583 = vunpack.c.l.b16 %v544
    %v584 = vunpack.c.l.b16 %v545
    %v585 = vunpack.c.l.b16 %v546
    %v586 = vunpack.c.l.b16 %v547
    %v587 = vunpack.c.l.b16 %v548
    %v588 = vunpack.c.l.b16 %v549
    %v589 = vunpack.c.l.b16 %v550
    %v590 = vunpack.c.l.b16 %v551
    %v591 = vunpack.c.l.b16 %v552
    %v592 = vunpack.c.l.b16 %v553
    %v593 = vunpack.c.l.b16 %v554
    %v594 = vunpack.c.l.b16 %v555
    %v595 = vpack.c.b16 %v580, %v579
    %v596 = vpack.c.b16 %v582, %v581
    %v597 = vpack.c.b16 %v584, %v583
    %v598 = vpack.c.b16 %v586, %v585
    %v599 = vpack.c.b16 %v588, %v587
    %v600 = vpack.c.b16 %v590, %v589
    %v601 = vpack.c.b16 %v592, %v591
    %v602 = vpack.c.b16 %v594, %v593
    %611 = vmatprep.subr.bf16.mxu0 0
    %612 = vmatpush1.bf16.msra.mxu0 %v595
    %613 = vmatprep.subr.bf16.mxu0 0
    %614 = vmatpush1.bf16.msra.mxu0 %v596
    %615 = vmatprep.subr.bf16.mxu0 0
    %616 = vmatpush1.bf16.msra.mxu0 %v597
    %617 = vmatprep.subr.bf16.mxu0 0
    %618 = vmatpush1.bf16.msra.mxu0 %v598
    %619 = vmatprep.subr.bf16.mxu0 0
    %620 = vmatpush1.bf16.msra.mxu0 %v599
    %621 = vmatprep.subr.bf16.mxu0 0
    %622 = vmatpush1.bf16.msra.mxu0 %v600
    %623 = vmatprep.subr.bf16.mxu0 0
    %624 = vmatpush1.bf16.msra.mxu0 %v601
    %625 = vmatprep.subr.bf16.mxu0 0
    %626 = vmatpush1.bf16.msra.mxu0 %v602
    %627 = vmatprep.subr.bf16.mxu0 0
    %628 = vmatpush1.bf16.msra.mxu0 0
    %629 = vmatprep.subr.bf16.mxu0 0
    %630 = vmatpush1.bf16.msra.mxu0 0
    %631 = vmatprep.subr.bf16.mxu0 0
    %632 = vmatpush1.bf16.msra.mxu0 0
    %633 = vmatprep.subr.bf16.mxu0 0
    %634 = vmatpush1.bf16.msra.mxu0 0
    %635 = vmatprep.subr.bf16.mxu0 0
    %636 = vmatpush1.bf16.msra.mxu0 0
    %637 = vmatprep.subr.bf16.mxu0 0
    %638 = vmatpush1.bf16.msra.mxu0 0
    %639 = vmatprep.subr.bf16.mxu0 0
    %640 = vmatpush1.bf16.msra.mxu0 0
    %641 = vmatprep.subr.bf16.mxu0 0
    %642 = vmatpush1.bf16.msra.mxu0 0
    %643 = vmatprep.mubr.bf16.mxu0 0
    %644 = vmatmul.mubr.bf16.gmra.mrb[0].mxu0 %v539
    %v645 = vpop.f32.mrb[0].mxu0
    %v646 = vadd.f32 %v561, %v645
    %v647 = vpop.f32.mrb[0].mxu0
    %v648 = vpop.f32.mrb[0].mxu0
    %v649 = vpop.f32.mrb[0].mxu0
    %650 = vdwg.mxu0
    %651 = vst [vmem:[#allocation5] sm:$0x3] %v646
    // Predicated region
    $region34: #{cnnnet_forward.7} parent=1 // pred_check
      _
    $region35: #{cnnnet_forward.7} parent=1 // pred_check_branch
      %653 = sbr.rel (0) target = $region37
    $region36: #{cnnnet_forward.7} parent=1 // pred_region
      %s655 = ssub.s32 32, 32
      %656 = vsyncadd [#allocation6], %s655
      %s658 = sshll.u32 [#allocation5], 4
      %s659 = int_to_ptr.vmem [resolvable:$true] %s658
      %661 = dma.vmem_to_hbm [thread:$0]  %s659, 32, %s8, [#allocation6]
    $region37: #{cnnnet_forward.7} parent=1 // pred_fallthru
      _
    // Predicated region
    $region38: #{cnnnet_forward.7} parent=1 // pred_check
      _
    $region39: #{cnnnet_forward.7} parent=1 // pred_check_branch
      %663 = sbr.rel (0) target = $region41
    $region40: #{cnnnet_forward.7} parent=1 // pred_region
      %664 = dma.done [#allocation6], 32
    $region41: #{cnnnet_forward.7} parent=1 // pred_fallthru
      _
    %665 = vsyncpa [#allocation6], 1

</llo_original>
